<compile_context>
chip_gen: v7x
topology: tpu7x:2x2x1
jax: 0.10.0
libtpu: 0.0.40
codegen_flags: <defaults>
</compile_context>

<pallas_src>
import math
import functools

import jax
import jax.numpy as jnp
import numpy as np
from jax.experimental import pallas as pl
from jax.experimental.pallas import tpu as pltpu


def convlstm_kernel(xpad_ref, hpad_ref, c_ref,
                    wx_ref, bx_ref, gx_ref, bex_ref,
                    wh_ref, bh_ref, gh_ref, beh_ref,
                    gc_ref, bec_ref,
                    out_ref, *, Hd, H, W):
    HW = H * W
    C4 = 4 * Hd

    # Horizontal-boundary masks for the dw = -1 / +1 taps, indexed by the
    # flattened output row p (column index c = p mod W).
    p_idx = jax.lax.broadcasted_iota(jnp.int32, (HW, 1), 0)
    if (W & (W - 1)) == 0:
        col = p_idx & (W - 1)
    else:
        col = jax.lax.rem(p_idx, W)
    mask_l = col >= 1          # tap reads column c-1  (kw == 0)
    mask_r = col <= W - 2      # tap reads column c+1  (kw == 2)

    def conv3x3(pad_ref, w_ref, b_ref):
        # In-kernel im2col: 9 statically-offset row windows of the zero-padded,
        # row-flattened activation slab, masked at the horizontal image
        # boundary, matmul'd (bf16 x bf16 -> f32) against the per-tap weights
        # and accumulated in f32.  Vertical padding is handled by the W+1 zero
        # rows at the top/bottom of the slab.
        acc = None
        for kh in range(3):
            for kw in range(3):
                off = (W + 1) + (kh - 1) * W + (kw - 1)
                tap = pad_ref[0, off:off + HW, :]
                if kw == 0:
                    tap = jnp.where(mask_l, tap, 0.0)
                elif kw == 2:
                    tap = jnp.where(mask_r, tap, 0.0)
                d = jnp.dot(tap.astype(jnp.bfloat16), w_ref[kh * 3 + kw],
                            preferred_element_type=jnp.float32)
                acc = d if acc is None else acc + d
        return acc + b_ref[...]                      # (HW, C4) f32, bias included

    def stats(v):
        # Per-sample GroupNorm(1, C) statistics, two-pass (mean-subtracted) variance.
        n = v.shape[0] * v.shape[1]
        mean = jnp.sum(v) / n
        var = jnp.sum(jnp.square(v - mean)) / n
        return mean, jax.lax.rsqrt(var + 1e-5)

    raw_i = conv3x3(xpad_ref, wx_ref, bx_ref)        # conv_i2h(x) + b
    raw_h = conv3x3(hpad_ref, wh_ref, bh_ref)        # conv_h2h(h) + b

    # Fused GroupNorm affines folded into the combine:
    #   GN(raw_i) + GN(raw_h) = raw_i*scale_i + raw_h*scale_h + shift
    m_i, inv_i = stats(raw_i)
    m_h, inv_h = stats(raw_h)
    scale_i = inv_i * gx_ref[...]                    # (1, C4)
    scale_h = inv_h * gh_ref[...]
    shift = bex_ref[...] + beh_ref[...] - m_i * scale_i - m_h * scale_h
    comb = raw_i * scale_i + raw_h * scale_h + shift  # (HW, C4), order [i|f|o|g]

    sig = jax.nn.sigmoid(comb[:, :3 * Hd])           # one sigmoid over [i|f|o]
    g = jnp.tanh(comb[:, 3 * Hd:])
    i = sig[:, :Hd]
    f = sig[:, Hd:2 * Hd]
    o = sig[:, 2 * Hd:]

    c_pre = f * c_ref[0] + i * g                     # (HW, Hd)
    m_c, inv_c = stats(c_pre)
    c_next = (c_pre - m_c) * (inv_c * gc_ref[...]) + bec_ref[...]
    h_next = o * jnp.tanh(c_next)

    # Packed, lane-denser output: [h_next | c_next] -> (HW, 2*Hd).
    out_ref[0] = jnp.concatenate([h_next, c_next], axis=-1)


def _flat_pad(a):
    """(B,H,W,C) -> (B, H*W + 2*(W+1), C): row-flatten and zero-pad W+1 rows
    top/bottom so every 3x3 tap is a contiguous in-bounds row window."""
    B, H, W, C = a.shape
    flat = a.reshape(B, H * W, C)
    return jnp.pad(flat, ((0, 0), (W + 1, W + 1), (0, 0)))


def prepare_params(p):
    """One-time (hoisted out of the recurrence) weight folding: HWIO (3,3,Cin,C4)
    -> per-tap (9, Cin, C4) in bf16 for the MXU; everything else stays f32."""
    C4 = p["w_i2h"].shape[-1]
    return dict(
        wx=p["w_i2h"].reshape(9, -1, C4).astype(jnp.bfloat16),
        bx=p["b_i2h"].astype(jnp.float32),
        gx=p["g_i2h"], bex=p["be_i2h"],
        wh=p["w_h2h"].reshape(9, -1, C4).astype(jnp.bfloat16),
        bh=p["b_h2h"].astype(jnp.float32),
        gh=p["g_h2h"], beh=p["be_h2h"],
        gc=p["g_cell"], bec=p["be_cell"],
    )


def convlstm_cell(x, h_cur, c_cur, prep):
    """x: (B,H,W,Cin), h_cur/c_cur: (B,H,W,Hd).  Returns (h_next, c_next) NHWC."""
    B, H, W, Cin = x.shape
    Hd = prep["gc"].shape[-1]
    HW = H * W
    C4 = 4 * Hd
    HP = HW + 2 * (W + 1)

    x_pad = _flat_pad(x)                 # (B, HP, Cin)  f32
    h_pad = _flat_pad(h_cur)             # (B, HP, Hd)   f32
    c_flat = c_cur.reshape(B, HW, Hd)    # (B, HW, Hd)   f32

    kernel = functools.partial(convlstm_kernel, Hd=Hd, H=H, W=W)

    def per_sample(shape):
        nd = len(shape)
        return pl.BlockSpec((1,) + shape, lambda b, _n=nd: (b,) + (0,) * _n)

    def shared(shape):
        nd = len(shape)
        return pl.BlockSpec(shape, lambda b, _n=nd: (0,) * _n)

    grid_spec = pltpu.PrefetchScalarGridSpec(
        num_scalar_prefetch=0,
        grid=(B,),                        # one sample/step; "parallel" -> both v7x TCs busy
        in_specs=[
            per_sample((HP, Cin)),        # x   (padded, row-flattened)
            per_sample((HP, Hd)),         # h   (padded, row-flattened)
            per_sample((HW, Hd)),         # c
            shared((9, Cin, C4)),         # w_i2h taps (bf16)
            shared((1, C4)),              # b_i2h
            shared((1, C4)),              # gamma ln_i2h
            shared((1, C4)),              # beta  ln_i2h
            shared((9, Hd, C4)),          # w_h2h taps (bf16)
            shared((1, C4)),              # b_h2h
            shared((1, C4)),              # gamma ln_h2h
            shared((1, C4)),              # beta  ln_h2h
            shared((1, Hd)),              # gamma ln_cell
            shared((1, Hd)),              # beta  ln_cell
        ],
        out_specs=per_sample((HW, 2 * Hd)),
    )

    flops = B * (2 * HW * 9 * (Cin + Hd) * C4 + 8 * HW * C4 + 12 * HW * Hd)
    transcendentals = B * HW * 5 * Hd
    bytes_accessed = (4 * (x_pad.size + h_pad.size + c_flat.size)
                      + 2 * (9 * (Cin + Hd) * C4)
                      + 4 * (6 * C4 + 2 * Hd)
                      + 4 * B * HW * 2 * Hd)

    hc = pl.pallas_call(
        kernel,
        out_shape=jax.ShapeDtypeStruct((B, HW, 2 * Hd), jnp.float32),
        grid_spec=grid_spec,
        compiler_params=pltpu.CompilerParams(
            dimension_semantics=("parallel",)),
        cost_estimate=pl.CostEstimate(flops=flops,
                                      transcendentals=transcendentals,
                                      bytes_accessed=bytes_accessed),
    )(x_pad, h_pad, c_flat,
      prep["wx"], prep["bx"], prep["gx"], prep["bex"],
      prep["wh"], prep["bh"], prep["gh"], prep["beh"],
      prep["gc"], prep["bec"])

    h_next = hc[:, :, :Hd].reshape(B, H, W, Hd)
    c_next = hc[:, :, Hd:].reshape(B, H, W, Hd)
    return h_next, c_next


def init_params(key, Cin, Hd):
    # reset_parameters(): every parameter ~ U(-1/sqrt(hidden_dim), +1/sqrt(hidden_dim)),
    # including the GroupNorm affine params.
    std = 1.0 / math.sqrt(Hd)
    ks = jax.random.split(key, 10)
    u = lambda k, s: jax.random.uniform(k, s, jnp.float32, -std, std)
    return dict(
        w_i2h=u(ks[0], (3, 3, Cin, 4 * Hd)),
        b_i2h=u(ks[1], (1, 4 * Hd)),
        g_i2h=u(ks[2], (1, 4 * Hd)),
        be_i2h=u(ks[3], (1, 4 * Hd)),
        w_h2h=u(ks[4], (3, 3, Hd, 4 * Hd)),
        b_h2h=u(ks[5], (1, 4 * Hd)),
        g_h2h=u(ks[6], (1, 4 * Hd)),
        be_h2h=u(ks[7], (1, 4 * Hd)),
        g_cell=u(ks[8], (1, Hd)),
        be_cell=u(ks[9], (1, Hd)),
    )


def reference(x, h, c, p):
    # Pure-JAX f32 reference (same math as the PyTorch module, in NHWC).
    def conv(inp, w, b):
        out = jax.lax.conv_general_dilated(
            inp, w, window_strides=(1, 1), padding="SAME",
            dimension_numbers=("NHWC", "HWIO", "NHWC"))
        return out + b.reshape(1, 1, 1, -1)

    def gn1(t, gamma, beta, eps=1e-5):
        mean = jnp.mean(t, axis=(1, 2, 3), keepdims=True)
        var = jnp.mean((t - mean) ** 2, axis=(1, 2, 3), keepdims=True)
        return ((t - mean) * jax.lax.rsqrt(var + eps)
                * gamma.reshape(1, 1, 1, -1) + beta.reshape(1, 1, 1, -1))

    Hd = c.shape[-1]
    i2h = gn1(conv(x, p["w_i2h"], p["b_i2h"]), p["g_i2h"], p["be_i2h"])
    h2h = gn1(conv(h, p["w_h2h"], p["b_h2h"]), p["g_h2h"], p["be_h2h"])
    comb = i2h + h2h
    i = jax.nn.sigmoid(comb[..., :Hd])
    f = jax.nn.sigmoid(comb[..., Hd:2 * Hd])
    o = jax.nn.sigmoid(comb[..., 2 * Hd:3 * Hd])
    g = jnp.tanh(comb[..., 3 * Hd:])
    c_next = gn1(f * c + i * g, p["g_cell"], p["be_cell"])
    h_next = o * jnp.tanh(c_next)
    return h_next, c_next


if __name__ == "__main__":
    B, H, W, Cin, Hd = 2, 16, 16, 4, 32
    key = jax.random.PRNGKey(0)
    kx, kp, kh, kc = jax.random.split(key, 4)
    x = jax.random.normal(kx, (B, H, W, Cin), jnp.float32)
    params = init_params(kp, Cin, Hd)
    prep = prepare_params(params)   # hoisted: folded bf16 weights built once

    # Step 1: cur_state=None in the torch module -> zero-initialized (h, c).
    h0 = jnp.zeros((B, H, W, Hd), jnp.float32)
    c0 = jnp.zeros((B, H, W, Hd), jnp.float32)
    h1, c1 = convlstm_cell(x, h0, c0, prep)
    jax.block_until_ready((h1, c1))
    rh1, rc1 = reference(x, h0, c0, params)
    np.testing.assert_allclose(np.asarray(h1), np.asarray(rh1), rtol=5e-3, atol=5e-3)
    np.testing.assert_allclose(np.asarray(c1), np.asarray(rc1), rtol=5e-3, atol=5e-3)

    # Step with a nonzero recurrent state (exercises the h2h/cell paths fully).
    hr = jax.random.normal(kh, (B, H, W, Hd), jnp.float32)
    cr = jax.random.normal(kc, (B, H, W, Hd), jnp.float32)
    h2, c2 = convlstm_cell(x, hr, cr, prep)
    jax.block_until_ready((h2, c2))
    rh2, rc2 = reference(x, hr, cr, params)
    np.testing.assert_allclose(np.asarray(h2), np.asarray(rh2), rtol=5e-3, atol=5e-3)
    np.testing.assert_allclose(np.asarray(c2), np.asarray(rc2), rtol=5e-3, atol=5e-3)

    print("KERNEL_OK")
</pallas_src>

<mosaic_0001>
module attributes {stable_mosaic.version = 11 : i64} {
  func.func @convlstm_kernel(%arg0: i32, %arg1: memref<1x290x4xf32, #tpu.memory_space<vmem>>, %arg2: memref<1x290x32xf32, #tpu.memory_space<vmem>>, %arg3: memref<1x256x32xf32, #tpu.memory_space<vmem>>, %arg4: memref<9x4x128xbf16, #tpu.memory_space<vmem>>, %arg5: memref<1x128xf32, #tpu.memory_space<vmem>>, %arg6: memref<1x128xf32, #tpu.memory_space<vmem>>, %arg7: memref<1x128xf32, #tpu.memory_space<vmem>>, %arg8: memref<9x32x128xbf16, #tpu.memory_space<vmem>>, %arg9: memref<1x128xf32, #tpu.memory_space<vmem>>, %arg10: memref<1x128xf32, #tpu.memory_space<vmem>>, %arg11: memref<1x128xf32, #tpu.memory_space<vmem>>, %arg12: memref<1x32xf32, #tpu.memory_space<vmem>>, %arg13: memref<1x32xf32, #tpu.memory_space<vmem>>, %arg14: memref<1x256x64xf32, #tpu.memory_space<vmem>>) attributes {dimension_semantics = [#tpu.dimension_semantics<parallel>], iteration_bounds = array<i64: 2>, scalar_prefetch = 0 : i64, scratch_operands = 0 : i64, tpu.core_type = #tpu.core_type<tc>, window_params = [{transform_indices = @transform_0, window_bounds = array<i64: 1, 290, 4>}, {transform_indices = @transform_1, window_bounds = array<i64: 1, 290, 32>}, {transform_indices = @transform_2, window_bounds = array<i64: 1, 256, 32>}, {pipeline_mode = #tpu.pipeline_mode<synchronous>, transform_indices = @transform_3, window_bounds = array<i64: 9, 4, 128>}, {pipeline_mode = #tpu.pipeline_mode<synchronous>, transform_indices = @transform_4, window_bounds = array<i64: 1, 128>}, {pipeline_mode = #tpu.pipeline_mode<synchronous>, transform_indices = @transform_5, window_bounds = array<i64: 1, 128>}, {pipeline_mode = #tpu.pipeline_mode<synchronous>, transform_indices = @transform_6, window_bounds = array<i64: 1, 128>}, {pipeline_mode = #tpu.pipeline_mode<synchronous>, transform_indices = @transform_7, window_bounds = array<i64: 9, 32, 128>}, {pipeline_mode = #tpu.pipeline_mode<synchronous>, transform_indices = @transform_8, window_bounds = array<i64: 1, 128>}, {pipeline_mode = #tpu.pipeline_mode<synchronous>, transform_indices = @transform_9, window_bounds = array<i64: 1, 128>}, {pipeline_mode = #tpu.pipeline_mode<synchronous>, transform_indices = @transform_10, window_bounds = array<i64: 1, 128>}, {pipeline_mode = #tpu.pipeline_mode<synchronous>, transform_indices = @transform_11, window_bounds = array<i64: 1, 32>}, {pipeline_mode = #tpu.pipeline_mode<synchronous>, transform_indices = @transform_12, window_bounds = array<i64: 1, 32>}, {transform_indices = @transform_13, window_bounds = array<i64: 1, 256, 64>}]} {
    %0 = tpu.iota {dimensions = array<i32: 0>} : vector<256x1xi32>
    %c15_i32 = arith.constant 15 : i32
    %1 = vector.broadcast %c15_i32 : i32 to vector<256x1xi32>
    %2 = arith.andi %0, %1 : vector<256x1xi32>
    %c1_i32 = arith.constant 1 : i32
    %3 = vector.broadcast %c1_i32 : i32 to vector<256x1xi32>
    %4 = arith.cmpi sge, %2, %3 : vector<256x1xi32>
    %c14_i32 = arith.constant 14 : i32
    %5 = vector.broadcast %c14_i32 : i32 to vector<256x1xi32>
    %6 = arith.cmpi sle, %2, %5 : vector<256x1xi32>
    %c0 = arith.constant 0 : index
    %c0_0 = arith.constant 0 : index
    %c0_1 = arith.constant 0 : index
    %7 = vector.load %arg1[%c0, %c0_0, %c0_1] : memref<1x290x4xf32, #tpu.memory_space<vmem>>, vector<1x256x4xf32>
    %8 = vector.shape_cast %7 : vector<1x256x4xf32> to vector<256x4xf32>
    %cst = arith.constant 0.000000e+00 : f32
    %9 = vector.shape_cast %4 : vector<256x1xi1> to vector<256x1xi1>
    %10 = vector.broadcast %9 : vector<256x1xi1> to vector<256x4xi1>
    %11 = vector.broadcast %cst : f32 to vector<256x4xf32>
    %12 = arith.select %10, %8, %11 : vector<256x4xi1>, vector<256x4xf32>
    %13 = arith.truncf %12 : vector<256x4xf32> to vector<256x4xbf16>
    %c0_2 = arith.constant 0 : index
    %c0_3 = arith.constant 0 : index
    %c0_4 = arith.constant 0 : index
    %14 = vector.load %arg4[%c0_2, %c0_3, %c0_4] : memref<9x4x128xbf16, #tpu.memory_space<vmem>>, vector<1x4x128xbf16>
    %15 = vector.shape_cast %14 : vector<1x4x128xbf16> to vector<4x128xbf16>
    %cst_5 = arith.constant dense<0.000000e+00> : vector<256x128xf32>
    %16 = tpu.matmul %13, %15, %cst_5 {dimension_numbers = #tpu.dot_dimension_numbers<[1], [0], [0], [1], [0, 0, 1, 1], [], []>} : vector<256x4xbf16>, vector<4x128xbf16>, vector<256x128xf32> -> vector<256x128xf32>
    %c0_6 = arith.constant 0 : index
    %c1 = arith.constant 1 : index
    %c0_7 = arith.constant 0 : index
    %17 = vector.load %arg1[%c0_6, %c1, %c0_7] : memref<1x290x4xf32, #tpu.memory_space<vmem>>, vector<1x256x4xf32>
    %18 = vector.shape_cast %17 : vector<1x256x4xf32> to vector<256x4xf32>
    %19 = arith.truncf %18 : vector<256x4xf32> to vector<256x4xbf16>
    %c1_8 = arith.constant 1 : index
    %c0_9 = arith.constant 0 : index
    %c0_10 = arith.constant 0 : index
    %20 = vector.load %arg4[%c1_8, %c0_9, %c0_10] : memref<9x4x128xbf16, #tpu.memory_space<vmem>>, vector<1x4x128xbf16>
    %21 = vector.shape_cast %20 : vector<1x4x128xbf16> to vector<4x128xbf16>
    %cst_11 = arith.constant dense<0.000000e+00> : vector<256x128xf32>
    %22 = tpu.matmul %19, %21, %cst_11 {dimension_numbers = #tpu.dot_dimension_numbers<[1], [0], [0], [1], [0, 0, 1, 1], [], []>} : vector<256x4xbf16>, vector<4x128xbf16>, vector<256x128xf32> -> vector<256x128xf32>
    %23 = arith.addf %16, %22 : vector<256x128xf32>
    %c0_12 = arith.constant 0 : index
    %c2 = arith.constant 2 : index
    %c0_13 = arith.constant 0 : index
    %24 = vector.load %arg1[%c0_12, %c2, %c0_13] : memref<1x290x4xf32, #tpu.memory_space<vmem>>, vector<1x256x4xf32>
    %25 = vector.shape_cast %24 : vector<1x256x4xf32> to vector<256x4xf32>
    %cst_14 = arith.constant 0.000000e+00 : f32
    %26 = vector.shape_cast %6 : vector<256x1xi1> to vector<256x1xi1>
    %27 = vector.broadcast %26 : vector<256x1xi1> to vector<256x4xi1>
    %28 = vector.broadcast %cst_14 : f32 to vector<256x4xf32>
    %29 = arith.select %27, %25, %28 : vector<256x4xi1>, vector<256x4xf32>
    %30 = arith.truncf %29 : vector<256x4xf32> to vector<256x4xbf16>
    %c2_15 = arith.constant 2 : index
    %c0_16 = arith.constant 0 : index
    %c0_17 = arith.constant 0 : index
    %31 = vector.load %arg4[%c2_15, %c0_16, %c0_17] : memref<9x4x128xbf16, #tpu.memory_space<vmem>>, vector<1x4x128xbf16>
    %32 = vector.shape_cast %31 : vector<1x4x128xbf16> to vector<4x128xbf16>
    %cst_18 = arith.constant dense<0.000000e+00> : vector<256x128xf32>
    %33 = tpu.matmul %30, %32, %cst_18 {dimension_numbers = #tpu.dot_dimension_numbers<[1], [0], [0], [1], [0, 0, 1, 1], [], []>} : vector<256x4xbf16>, vector<4x128xbf16>, vector<256x128xf32> -> vector<256x128xf32>
    %34 = arith.addf %23, %33 : vector<256x128xf32>
    %c0_19 = arith.constant 0 : index
    %c16 = arith.constant 16 : index
    %c0_20 = arith.constant 0 : index
    %35 = vector.load %arg1[%c0_19, %c16, %c0_20] : memref<1x290x4xf32, #tpu.memory_space<vmem>>, vector<1x256x4xf32>
    %36 = vector.shape_cast %35 : vector<1x256x4xf32> to vector<256x4xf32>
    %cst_21 = arith.constant 0.000000e+00 : f32
    %37 = vector.shape_cast %4 : vector<256x1xi1> to vector<256x1xi1>
    %38 = vector.broadcast %37 : vector<256x1xi1> to vector<256x4xi1>
    %39 = vector.broadcast %cst_21 : f32 to vector<256x4xf32>
    %40 = arith.select %38, %36, %39 : vector<256x4xi1>, vector<256x4xf32>
    %41 = arith.truncf %40 : vector<256x4xf32> to vector<256x4xbf16>
    %c3 = arith.constant 3 : index
    %c0_22 = arith.constant 0 : index
    %c0_23 = arith.constant 0 : index
    %42 = vector.load %arg4[%c3, %c0_22, %c0_23] : memref<9x4x128xbf16, #tpu.memory_space<vmem>>, vector<1x4x128xbf16>
    %43 = vector.shape_cast %42 : vector<1x4x128xbf16> to vector<4x128xbf16>
    %cst_24 = arith.constant dense<0.000000e+00> : vector<256x128xf32>
    %44 = tpu.matmul %41, %43, %cst_24 {dimension_numbers = #tpu.dot_dimension_numbers<[1], [0], [0], [1], [0, 0, 1, 1], [], []>} : vector<256x4xbf16>, vector<4x128xbf16>, vector<256x128xf32> -> vector<256x128xf32>
    %45 = arith.addf %34, %44 : vector<256x128xf32>
    %c0_25 = arith.constant 0 : index
    %c17 = arith.constant 17 : index
    %c0_26 = arith.constant 0 : index
    %46 = vector.load %arg1[%c0_25, %c17, %c0_26] : memref<1x290x4xf32, #tpu.memory_space<vmem>>, vector<1x256x4xf32>
    %47 = vector.shape_cast %46 : vector<1x256x4xf32> to vector<256x4xf32>
    %48 = arith.truncf %47 : vector<256x4xf32> to vector<256x4xbf16>
    %c4 = arith.constant 4 : index
    %c0_27 = arith.constant 0 : index
    %c0_28 = arith.constant 0 : index
    %49 = vector.load %arg4[%c4, %c0_27, %c0_28] : memref<9x4x128xbf16, #tpu.memory_space<vmem>>, vector<1x4x128xbf16>
    %50 = vector.shape_cast %49 : vector<1x4x128xbf16> to vector<4x128xbf16>
    %cst_29 = arith.constant dense<0.000000e+00> : vector<256x128xf32>
    %51 = tpu.matmul %48, %50, %cst_29 {dimension_numbers = #tpu.dot_dimension_numbers<[1], [0], [0], [1], [0, 0, 1, 1], [], []>} : vector<256x4xbf16>, vector<4x128xbf16>, vector<256x128xf32> -> vector<256x128xf32>
    %52 = arith.addf %45, %51 : vector<256x128xf32>
    %c0_30 = arith.constant 0 : index
    %c18 = arith.constant 18 : index
    %c0_31 = arith.constant 0 : index
    %53 = vector.load %arg1[%c0_30, %c18, %c0_31] : memref<1x290x4xf32, #tpu.memory_space<vmem>>, vector<1x256x4xf32>
    %54 = vector.shape_cast %53 : vector<1x256x4xf32> to vector<256x4xf32>
    %cst_32 = arith.constant 0.000000e+00 : f32
    %55 = vector.shape_cast %6 : vector<256x1xi1> to vector<256x1xi1>
    %56 = vector.broadcast %55 : vector<256x1xi1> to vector<256x4xi1>
    %57 = vector.broadcast %cst_32 : f32 to vector<256x4xf32>
    %58 = arith.select %56, %54, %57 : vector<256x4xi1>, vector<256x4xf32>
    %59 = arith.truncf %58 : vector<256x4xf32> to vector<256x4xbf16>
    %c5 = arith.constant 5 : index
    %c0_33 = arith.constant 0 : index
    %c0_34 = arith.constant 0 : index
    %60 = vector.load %arg4[%c5, %c0_33, %c0_34] : memref<9x4x128xbf16, #tpu.memory_space<vmem>>, vector<1x4x128xbf16>
    %61 = vector.shape_cast %60 : vector<1x4x128xbf16> to vector<4x128xbf16>
    %cst_35 = arith.constant dense<0.000000e+00> : vector<256x128xf32>
    %62 = tpu.matmul %59, %61, %cst_35 {dimension_numbers = #tpu.dot_dimension_numbers<[1], [0], [0], [1], [0, 0, 1, 1], [], []>} : vector<256x4xbf16>, vector<4x128xbf16>, vector<256x128xf32> -> vector<256x128xf32>
    %63 = arith.addf %52, %62 : vector<256x128xf32>
    %c0_36 = arith.constant 0 : index
    %c32 = arith.constant 32 : index
    %c0_37 = arith.constant 0 : index
    %64 = vector.load %arg1[%c0_36, %c32, %c0_37] : memref<1x290x4xf32, #tpu.memory_space<vmem>>, vector<1x256x4xf32>
    %65 = vector.shape_cast %64 : vector<1x256x4xf32> to vector<256x4xf32>
    %cst_38 = arith.constant 0.000000e+00 : f32
    %66 = vector.shape_cast %4 : vector<256x1xi1> to vector<256x1xi1>
    %67 = vector.broadcast %66 : vector<256x1xi1> to vector<256x4xi1>
    %68 = vector.broadcast %cst_38 : f32 to vector<256x4xf32>
    %69 = arith.select %67, %65, %68 : vector<256x4xi1>, vector<256x4xf32>
    %70 = arith.truncf %69 : vector<256x4xf32> to vector<256x4xbf16>
    %c6 = arith.constant 6 : index
    %c0_39 = arith.constant 0 : index
    %c0_40 = arith.constant 0 : index
    %71 = vector.load %arg4[%c6, %c0_39, %c0_40] : memref<9x4x128xbf16, #tpu.memory_space<vmem>>, vector<1x4x128xbf16>
    %72 = vector.shape_cast %71 : vector<1x4x128xbf16> to vector<4x128xbf16>
    %cst_41 = arith.constant dense<0.000000e+00> : vector<256x128xf32>
    %73 = tpu.matmul %70, %72, %cst_41 {dimension_numbers = #tpu.dot_dimension_numbers<[1], [0], [0], [1], [0, 0, 1, 1], [], []>} : vector<256x4xbf16>, vector<4x128xbf16>, vector<256x128xf32> -> vector<256x128xf32>
    %74 = arith.addf %63, %73 : vector<256x128xf32>
    %c0_42 = arith.constant 0 : index
    %c33 = arith.constant 33 : index
    %c0_43 = arith.constant 0 : index
    %75 = vector.load %arg1[%c0_42, %c33, %c0_43] : memref<1x290x4xf32, #tpu.memory_space<vmem>>, vector<1x256x4xf32>
    %76 = vector.shape_cast %75 : vector<1x256x4xf32> to vector<256x4xf32>
    %77 = arith.truncf %76 : vector<256x4xf32> to vector<256x4xbf16>
    %c7 = arith.constant 7 : index
    %c0_44 = arith.constant 0 : index
    %c0_45 = arith.constant 0 : index
    %78 = vector.load %arg4[%c7, %c0_44, %c0_45] : memref<9x4x128xbf16, #tpu.memory_space<vmem>>, vector<1x4x128xbf16>
    %79 = vector.shape_cast %78 : vector<1x4x128xbf16> to vector<4x128xbf16>
    %cst_46 = arith.constant dense<0.000000e+00> : vector<256x128xf32>
    %80 = tpu.matmul %77, %79, %cst_46 {dimension_numbers = #tpu.dot_dimension_numbers<[1], [0], [0], [1], [0, 0, 1, 1], [], []>} : vector<256x4xbf16>, vector<4x128xbf16>, vector<256x128xf32> -> vector<256x128xf32>
    %81 = arith.addf %74, %80 : vector<256x128xf32>
    %c0_47 = arith.constant 0 : index
    %c34 = arith.constant 34 : index
    %c0_48 = arith.constant 0 : index
    %82 = vector.load %arg1[%c0_47, %c34, %c0_48] : memref<1x290x4xf32, #tpu.memory_space<vmem>>, vector<1x256x4xf32>
    %83 = vector.shape_cast %82 : vector<1x256x4xf32> to vector<256x4xf32>
    %cst_49 = arith.constant 0.000000e+00 : f32
    %84 = vector.shape_cast %6 : vector<256x1xi1> to vector<256x1xi1>
    %85 = vector.broadcast %84 : vector<256x1xi1> to vector<256x4xi1>
    %86 = vector.broadcast %cst_49 : f32 to vector<256x4xf32>
    %87 = arith.select %85, %83, %86 : vector<256x4xi1>, vector<256x4xf32>
    %88 = arith.truncf %87 : vector<256x4xf32> to vector<256x4xbf16>
    %c8 = arith.constant 8 : index
    %c0_50 = arith.constant 0 : index
    %c0_51 = arith.constant 0 : index
    %89 = vector.load %arg4[%c8, %c0_50, %c0_51] : memref<9x4x128xbf16, #tpu.memory_space<vmem>>, vector<1x4x128xbf16>
    %90 = vector.shape_cast %89 : vector<1x4x128xbf16> to vector<4x128xbf16>
    %cst_52 = arith.constant dense<0.000000e+00> : vector<256x128xf32>
    %91 = tpu.matmul %88, %90, %cst_52 {dimension_numbers = #tpu.dot_dimension_numbers<[1], [0], [0], [1], [0, 0, 1, 1], [], []>} : vector<256x4xbf16>, vector<4x128xbf16>, vector<256x128xf32> -> vector<256x128xf32>
    %92 = arith.addf %81, %91 : vector<256x128xf32>
    %c0_53 = arith.constant 0 : index
    %c0_54 = arith.constant 0 : index
    %93 = vector.load %arg5[%c0_53, %c0_54] : memref<1x128xf32, #tpu.memory_space<vmem>>, vector<1x128xf32>
    %94 = vector.broadcast %93 : vector<1x128xf32> to vector<256x128xf32>
    %95 = arith.addf %92, %94 : vector<256x128xf32>
    %c0_55 = arith.constant 0 : index
    %c0_56 = arith.constant 0 : index
    %c0_57 = arith.constant 0 : index
    %96 = vector.load %arg2[%c0_55, %c0_56, %c0_57] : memref<1x290x32xf32, #tpu.memory_space<vmem>>, vector<1x256x32xf32>
    %97 = vector.shape_cast %96 : vector<1x256x32xf32> to vector<256x32xf32>
    %cst_58 = arith.constant 0.000000e+00 : f32
    %98 = vector.shape_cast %4 : vector<256x1xi1> to vector<256x1xi1>
    %99 = vector.broadcast %98 : vector<256x1xi1> to vector<256x32xi1>
    %100 = vector.broadcast %cst_58 : f32 to vector<256x32xf32>
    %101 = arith.select %99, %97, %100 : vector<256x32xi1>, vector<256x32xf32>
    %102 = arith.truncf %101 : vector<256x32xf32> to vector<256x32xbf16>
    %c0_59 = arith.constant 0 : index
    %c0_60 = arith.constant 0 : index
    %c0_61 = arith.constant 0 : index
    %103 = vector.load %arg8[%c0_59, %c0_60, %c0_61] : memref<9x32x128xbf16, #tpu.memory_space<vmem>>, vector<1x32x128xbf16>
    %104 = vector.shape_cast %103 : vector<1x32x128xbf16> to vector<32x128xbf16>
    %cst_62 = arith.constant dense<0.000000e+00> : vector<256x128xf32>
    %105 = tpu.matmul %102, %104, %cst_62 {dimension_numbers = #tpu.dot_dimension_numbers<[1], [0], [0], [1], [0, 0, 1, 1], [], []>} : vector<256x32xbf16>, vector<32x128xbf16>, vector<256x128xf32> -> vector<256x128xf32>
    %c0_63 = arith.constant 0 : index
    %c1_64 = arith.constant 1 : index
    %c0_65 = arith.constant 0 : index
    %106 = vector.load %arg2[%c0_63, %c1_64, %c0_65] : memref<1x290x32xf32, #tpu.memory_space<vmem>>, vector<1x256x32xf32>
    %107 = vector.shape_cast %106 : vector<1x256x32xf32> to vector<256x32xf32>
    %108 = arith.truncf %107 : vector<256x32xf32> to vector<256x32xbf16>
    %c1_66 = arith.constant 1 : index
    %c0_67 = arith.constant 0 : index
    %c0_68 = arith.constant 0 : index
    %109 = vector.load %arg8[%c1_66, %c0_67, %c0_68] : memref<9x32x128xbf16, #tpu.memory_space<vmem>>, vector<1x32x128xbf16>
    %110 = vector.shape_cast %109 : vector<1x32x128xbf16> to vector<32x128xbf16>
    %cst_69 = arith.constant dense<0.000000e+00> : vector<256x128xf32>
    %111 = tpu.matmul %108, %110, %cst_69 {dimension_numbers = #tpu.dot_dimension_numbers<[1], [0], [0], [1], [0, 0, 1, 1], [], []>} : vector<256x32xbf16>, vector<32x128xbf16>, vector<256x128xf32> -> vector<256x128xf32>
    %112 = arith.addf %105, %111 : vector<256x128xf32>
    %c0_70 = arith.constant 0 : index
    %c2_71 = arith.constant 2 : index
    %c0_72 = arith.constant 0 : index
    %113 = vector.load %arg2[%c0_70, %c2_71, %c0_72] : memref<1x290x32xf32, #tpu.memory_space<vmem>>, vector<1x256x32xf32>
    %114 = vector.shape_cast %113 : vector<1x256x32xf32> to vector<256x32xf32>
    %cst_73 = arith.constant 0.000000e+00 : f32
    %115 = vector.shape_cast %6 : vector<256x1xi1> to vector<256x1xi1>
    %116 = vector.broadcast %115 : vector<256x1xi1> to vector<256x32xi1>
    %117 = vector.broadcast %cst_73 : f32 to vector<256x32xf32>
    %118 = arith.select %116, %114, %117 : vector<256x32xi1>, vector<256x32xf32>
    %119 = arith.truncf %118 : vector<256x32xf32> to vector<256x32xbf16>
    %c2_74 = arith.constant 2 : index
    %c0_75 = arith.constant 0 : index
    %c0_76 = arith.constant 0 : index
    %120 = vector.load %arg8[%c2_74, %c0_75, %c0_76] : memref<9x32x128xbf16, #tpu.memory_space<vmem>>, vector<1x32x128xbf16>
    %121 = vector.shape_cast %120 : vector<1x32x128xbf16> to vector<32x128xbf16>
    %cst_77 = arith.constant dense<0.000000e+00> : vector<256x128xf32>
    %122 = tpu.matmul %119, %121, %cst_77 {dimension_numbers = #tpu.dot_dimension_numbers<[1], [0], [0], [1], [0, 0, 1, 1], [], []>} : vector<256x32xbf16>, vector<32x128xbf16>, vector<256x128xf32> -> vector<256x128xf32>
    %123 = arith.addf %112, %122 : vector<256x128xf32>
    %c0_78 = arith.constant 0 : index
    %c16_79 = arith.constant 16 : index
    %c0_80 = arith.constant 0 : index
    %124 = vector.load %arg2[%c0_78, %c16_79, %c0_80] : memref<1x290x32xf32, #tpu.memory_space<vmem>>, vector<1x256x32xf32>
    %125 = vector.shape_cast %124 : vector<1x256x32xf32> to vector<256x32xf32>
    %cst_81 = arith.constant 0.000000e+00 : f32
    %126 = vector.shape_cast %4 : vector<256x1xi1> to vector<256x1xi1>
    %127 = vector.broadcast %126 : vector<256x1xi1> to vector<256x32xi1>
    %128 = vector.broadcast %cst_81 : f32 to vector<256x32xf32>
    %129 = arith.select %127, %125, %128 : vector<256x32xi1>, vector<256x32xf32>
    %130 = arith.truncf %129 : vector<256x32xf32> to vector<256x32xbf16>
    %c3_82 = arith.constant 3 : index
    %c0_83 = arith.constant 0 : index
    %c0_84 = arith.constant 0 : index
    %131 = vector.load %arg8[%c3_82, %c0_83, %c0_84] : memref<9x32x128xbf16, #tpu.memory_space<vmem>>, vector<1x32x128xbf16>
    %132 = vector.shape_cast %131 : vector<1x32x128xbf16> to vector<32x128xbf16>
    %cst_85 = arith.constant dense<0.000000e+00> : vector<256x128xf32>
    %133 = tpu.matmul %130, %132, %cst_85 {dimension_numbers = #tpu.dot_dimension_numbers<[1], [0], [0], [1], [0, 0, 1, 1], [], []>} : vector<256x32xbf16>, vector<32x128xbf16>, vector<256x128xf32> -> vector<256x128xf32>
    %134 = arith.addf %123, %133 : vector<256x128xf32>
    %c0_86 = arith.constant 0 : index
    %c17_87 = arith.constant 17 : index
    %c0_88 = arith.constant 0 : index
    %135 = vector.load %arg2[%c0_86, %c17_87, %c0_88] : memref<1x290x32xf32, #tpu.memory_space<vmem>>, vector<1x256x32xf32>
    %136 = vector.shape_cast %135 : vector<1x256x32xf32> to vector<256x32xf32>
    %137 = arith.truncf %136 : vector<256x32xf32> to vector<256x32xbf16>
    %c4_89 = arith.constant 4 : index
    %c0_90 = arith.constant 0 : index
    %c0_91 = arith.constant 0 : index
    %138 = vector.load %arg8[%c4_89, %c0_90, %c0_91] : memref<9x32x128xbf16, #tpu.memory_space<vmem>>, vector<1x32x128xbf16>
    %139 = vector.shape_cast %138 : vector<1x32x128xbf16> to vector<32x128xbf16>
    %cst_92 = arith.constant dense<0.000000e+00> : vector<256x128xf32>
    %140 = tpu.matmul %137, %139, %cst_92 {dimension_numbers = #tpu.dot_dimension_numbers<[1], [0], [0], [1], [0, 0, 1, 1], [], []>} : vector<256x32xbf16>, vector<32x128xbf16>, vector<256x128xf32> -> vector<256x128xf32>
    %141 = arith.addf %134, %140 : vector<256x128xf32>
    %c0_93 = arith.constant 0 : index
    %c18_94 = arith.constant 18 : index
    %c0_95 = arith.constant 0 : index
    %142 = vector.load %arg2[%c0_93, %c18_94, %c0_95] : memref<1x290x32xf32, #tpu.memory_space<vmem>>, vector<1x256x32xf32>
    %143 = vector.shape_cast %142 : vector<1x256x32xf32> to vector<256x32xf32>
    %cst_96 = arith.constant 0.000000e+00 : f32
    %144 = vector.shape_cast %6 : vector<256x1xi1> to vector<256x1xi1>
    %145 = vector.broadcast %144 : vector<256x1xi1> to vector<256x32xi1>
    %146 = vector.broadcast %cst_96 : f32 to vector<256x32xf32>
    %147 = arith.select %145, %143, %146 : vector<256x32xi1>, vector<256x32xf32>
    %148 = arith.truncf %147 : vector<256x32xf32> to vector<256x32xbf16>
    %c5_97 = arith.constant 5 : index
    %c0_98 = arith.constant 0 : index
    %c0_99 = arith.constant 0 : index
    %149 = vector.load %arg8[%c5_97, %c0_98, %c0_99] : memref<9x32x128xbf16, #tpu.memory_space<vmem>>, vector<1x32x128xbf16>
    %150 = vector.shape_cast %149 : vector<1x32x128xbf16> to vector<32x128xbf16>
    %cst_100 = arith.constant dense<0.000000e+00> : vector<256x128xf32>
    %151 = tpu.matmul %148, %150, %cst_100 {dimension_numbers = #tpu.dot_dimension_numbers<[1], [0], [0], [1], [0, 0, 1, 1], [], []>} : vector<256x32xbf16>, vector<32x128xbf16>, vector<256x128xf32> -> vector<256x128xf32>
    %152 = arith.addf %141, %151 : vector<256x128xf32>
    %c0_101 = arith.constant 0 : index
    %c32_102 = arith.constant 32 : index
    %c0_103 = arith.constant 0 : index
    %153 = vector.load %arg2[%c0_101, %c32_102, %c0_103] : memref<1x290x32xf32, #tpu.memory_space<vmem>>, vector<1x256x32xf32>
    %154 = vector.shape_cast %153 : vector<1x256x32xf32> to vector<256x32xf32>
    %cst_104 = arith.constant 0.000000e+00 : f32
    %155 = vector.shape_cast %4 : vector<256x1xi1> to vector<256x1xi1>
    %156 = vector.broadcast %155 : vector<256x1xi1> to vector<256x32xi1>
    %157 = vector.broadcast %cst_104 : f32 to vector<256x32xf32>
    %158 = arith.select %156, %154, %157 : vector<256x32xi1>, vector<256x32xf32>
    %159 = arith.truncf %158 : vector<256x32xf32> to vector<256x32xbf16>
    %c6_105 = arith.constant 6 : index
    %c0_106 = arith.constant 0 : index
    %c0_107 = arith.constant 0 : index
    %160 = vector.load %arg8[%c6_105, %c0_106, %c0_107] : memref<9x32x128xbf16, #tpu.memory_space<vmem>>, vector<1x32x128xbf16>
    %161 = vector.shape_cast %160 : vector<1x32x128xbf16> to vector<32x128xbf16>
    %cst_108 = arith.constant dense<0.000000e+00> : vector<256x128xf32>
    %162 = tpu.matmul %159, %161, %cst_108 {dimension_numbers = #tpu.dot_dimension_numbers<[1], [0], [0], [1], [0, 0, 1, 1], [], []>} : vector<256x32xbf16>, vector<32x128xbf16>, vector<256x128xf32> -> vector<256x128xf32>
    %163 = arith.addf %152, %162 : vector<256x128xf32>
    %c0_109 = arith.constant 0 : index
    %c33_110 = arith.constant 33 : index
    %c0_111 = arith.constant 0 : index
    %164 = vector.load %arg2[%c0_109, %c33_110, %c0_111] : memref<1x290x32xf32, #tpu.memory_space<vmem>>, vector<1x256x32xf32>
    %165 = vector.shape_cast %164 : vector<1x256x32xf32> to vector<256x32xf32>
    %166 = arith.truncf %165 : vector<256x32xf32> to vector<256x32xbf16>
    %c7_112 = arith.constant 7 : index
    %c0_113 = arith.constant 0 : index
    %c0_114 = arith.constant 0 : index
    %167 = vector.load %arg8[%c7_112, %c0_113, %c0_114] : memref<9x32x128xbf16, #tpu.memory_space<vmem>>, vector<1x32x128xbf16>
    %168 = vector.shape_cast %167 : vector<1x32x128xbf16> to vector<32x128xbf16>
    %cst_115 = arith.constant dense<0.000000e+00> : vector<256x128xf32>
    %169 = tpu.matmul %166, %168, %cst_115 {dimension_numbers = #tpu.dot_dimension_numbers<[1], [0], [0], [1], [0, 0, 1, 1], [], []>} : vector<256x32xbf16>, vector<32x128xbf16>, vector<256x128xf32> -> vector<256x128xf32>
    %170 = arith.addf %163, %169 : vector<256x128xf32>
    %c0_116 = arith.constant 0 : index
    %c34_117 = arith.constant 34 : index
    %c0_118 = arith.constant 0 : index
    %171 = vector.load %arg2[%c0_116, %c34_117, %c0_118] : memref<1x290x32xf32, #tpu.memory_space<vmem>>, vector<1x256x32xf32>
    %172 = vector.shape_cast %171 : vector<1x256x32xf32> to vector<256x32xf32>
    %cst_119 = arith.constant 0.000000e+00 : f32
    %173 = vector.shape_cast %6 : vector<256x1xi1> to vector<256x1xi1>
    %174 = vector.broadcast %173 : vector<256x1xi1> to vector<256x32xi1>
    %175 = vector.broadcast %cst_119 : f32 to vector<256x32xf32>
    %176 = arith.select %174, %172, %175 : vector<256x32xi1>, vector<256x32xf32>
    %177 = arith.truncf %176 : vector<256x32xf32> to vector<256x32xbf16>
    %c8_120 = arith.constant 8 : index
    %c0_121 = arith.constant 0 : index
    %c0_122 = arith.constant 0 : index
    %178 = vector.load %arg8[%c8_120, %c0_121, %c0_122] : memref<9x32x128xbf16, #tpu.memory_space<vmem>>, vector<1x32x128xbf16>
    %179 = vector.shape_cast %178 : vector<1x32x128xbf16> to vector<32x128xbf16>
    %cst_123 = arith.constant dense<0.000000e+00> : vector<256x128xf32>
    %180 = tpu.matmul %177, %179, %cst_123 {dimension_numbers = #tpu.dot_dimension_numbers<[1], [0], [0], [1], [0, 0, 1, 1], [], []>} : vector<256x32xbf16>, vector<32x128xbf16>, vector<256x128xf32> -> vector<256x128xf32>
    %181 = arith.addf %170, %180 : vector<256x128xf32>
    %c0_124 = arith.constant 0 : index
    %c0_125 = arith.constant 0 : index
    %182 = vector.load %arg9[%c0_124, %c0_125] : memref<1x128xf32, #tpu.memory_space<vmem>>, vector<1x128xf32>
    %183 = vector.broadcast %182 : vector<1x128xf32> to vector<256x128xf32>
    %184 = arith.addf %181, %183 : vector<256x128xf32>
    %185 = vector.shape_cast %95 : vector<256x128xf32> to vector<1x256x128xf32>
    %cst_126 = arith.constant dense<0.000000e+00> : vector<1xf32>
    %186 = vector.multi_reduction <add>, %185, %cst_126 [1, 2] : vector<1x256x128xf32> to vector<1xf32>
    %187 = vector.shape_cast %186 : vector<1xf32> to vector<1x1x1xf32>
    %188 = vector.extract %187[0, 0, 0] : f32 from vector<1x1x1xf32>
    %cst_127 = arith.constant 3.276800e+04 : f32
    %189 = arith.divf %188, %cst_127 : f32
    %190 = vector.broadcast %189 : f32 to vector<256x128xf32>
    %191 = arith.subf %95, %190 : vector<256x128xf32>
    %192 = arith.mulf %191, %191 : vector<256x128xf32>
    %193 = vector.shape_cast %192 : vector<256x128xf32> to vector<1x256x128xf32>
    %cst_128 = arith.constant dense<0.000000e+00> : vector<1xf32>
    %194 = vector.multi_reduction <add>, %193, %cst_128 [1, 2] : vector<1x256x128xf32> to vector<1xf32>
    %195 = vector.shape_cast %194 : vector<1xf32> to vector<1x1x1xf32>
    %196 = vector.extract %195[0, 0, 0] : f32 from vector<1x1x1xf32>
    %cst_129 = arith.constant 3.276800e+04 : f32
    %197 = arith.divf %196, %cst_129 : f32
    %cst_130 = arith.constant 9.99999974E-6 : f32
    %198 = arith.addf %197, %cst_130 : f32
    %199 = math.rsqrt %198 : f32
    %200 = vector.shape_cast %184 : vector<256x128xf32> to vector<1x256x128xf32>
    %cst_131 = arith.constant dense<0.000000e+00> : vector<1xf32>
    %201 = vector.multi_reduction <add>, %200, %cst_131 [1, 2] : vector<1x256x128xf32> to vector<1xf32>
    %202 = vector.shape_cast %201 : vector<1xf32> to vector<1x1x1xf32>
    %203 = vector.extract %202[0, 0, 0] : f32 from vector<1x1x1xf32>
    %cst_132 = arith.constant 3.276800e+04 : f32
    %204 = arith.divf %203, %cst_132 : f32
    %205 = vector.broadcast %204 : f32 to vector<256x128xf32>
    %206 = arith.subf %184, %205 : vector<256x128xf32>
    %207 = arith.mulf %206, %206 : vector<256x128xf32>
    %208 = vector.shape_cast %207 : vector<256x128xf32> to vector<1x256x128xf32>
    %cst_133 = arith.constant dense<0.000000e+00> : vector<1xf32>
    %209 = vector.multi_reduction <add>, %208, %cst_133 [1, 2] : vector<1x256x128xf32> to vector<1xf32>
    %210 = vector.shape_cast %209 : vector<1xf32> to vector<1x1x1xf32>
    %211 = vector.extract %210[0, 0, 0] : f32 from vector<1x1x1xf32>
    %cst_134 = arith.constant 3.276800e+04 : f32
    %212 = arith.divf %211, %cst_134 : f32
    %cst_135 = arith.constant 9.99999974E-6 : f32
    %213 = arith.addf %212, %cst_135 : f32
    %214 = math.rsqrt %213 : f32
    %c0_136 = arith.constant 0 : index
    %c0_137 = arith.constant 0 : index
    %215 = vector.load %arg6[%c0_136, %c0_137] : memref<1x128xf32, #tpu.memory_space<vmem>>, vector<1x128xf32>
    %216 = vector.broadcast %199 : f32 to vector<1x128xf32>
    %217 = arith.mulf %216, %215 : vector<1x128xf32>
    %c0_138 = arith.constant 0 : index
    %c0_139 = arith.constant 0 : index
    %218 = vector.load %arg10[%c0_138, %c0_139] : memref<1x128xf32, #tpu.memory_space<vmem>>, vector<1x128xf32>
    %219 = vector.broadcast %214 : f32 to vector<1x128xf32>
    %220 = arith.mulf %219, %218 : vector<1x128xf32>
    %c0_140 = arith.constant 0 : index
    %c0_141 = arith.constant 0 : index
    %221 = vector.load %arg7[%c0_140, %c0_141] : memref<1x128xf32, #tpu.memory_space<vmem>>, vector<1x128xf32>
    %c0_142 = arith.constant 0 : index
    %c0_143 = arith.constant 0 : index
    %222 = vector.load %arg11[%c0_142, %c0_143] : memref<1x128xf32, #tpu.memory_space<vmem>>, vector<1x128xf32>
    %223 = arith.addf %221, %222 : vector<1x128xf32>
    %224 = vector.broadcast %189 : f32 to vector<1x128xf32>
    %225 = arith.mulf %224, %217 : vector<1x128xf32>
    %226 = arith.subf %223, %225 : vector<1x128xf32>
    %227 = vector.broadcast %204 : f32 to vector<1x128xf32>
    %228 = arith.mulf %227, %220 : vector<1x128xf32>
    %229 = arith.subf %226, %228 : vector<1x128xf32>
    %230 = vector.broadcast %217 : vector<1x128xf32> to vector<256x128xf32>
    %231 = arith.mulf %95, %230 : vector<256x128xf32>
    %232 = vector.broadcast %220 : vector<1x128xf32> to vector<256x128xf32>
    %233 = arith.mulf %184, %232 : vector<256x128xf32>
    %234 = arith.addf %231, %233 : vector<256x128xf32>
    %235 = vector.broadcast %229 : vector<1x128xf32> to vector<256x128xf32>
    %236 = arith.addf %234, %235 : vector<256x128xf32>
    %237 = vector.extract_strided_slice %236 {offsets = [0, 0], sizes = [256, 96], strides = [1, 1]} : vector<256x128xf32> to vector<256x96xf32>
    %238 = arith.negf %237 : vector<256x96xf32>
    %239 = math.exp %238 : vector<256x96xf32>
    %cst_144 = arith.constant 1.000000e+00 : f32
    %240 = vector.broadcast %cst_144 : f32 to vector<256x96xf32>
    %241 = arith.addf %240, %239 : vector<256x96xf32>
    %242 = arith.divf %240, %241 : vector<256x96xf32>
    %243 = vector.extract_strided_slice %236 {offsets = [0, 96], sizes = [256, 32], strides = [1, 1]} : vector<256x128xf32> to vector<256x32xf32>
    %244 = math.tanh %243 : vector<256x32xf32>
    %245 = vector.extract_strided_slice %242 {offsets = [0, 0], sizes = [256, 32], strides = [1, 1]} : vector<256x96xf32> to vector<256x32xf32>
    %246 = vector.extract_strided_slice %242 {offsets = [0, 32], sizes = [256, 32], strides = [1, 1]} : vector<256x96xf32> to vector<256x32xf32>
    %247 = vector.extract_strided_slice %242 {offsets = [0, 64], sizes = [256, 32], strides = [1, 1]} : vector<256x96xf32> to vector<256x32xf32>
    %c0_145 = arith.constant 0 : index
    %c0_146 = arith.constant 0 : index
    %c0_147 = arith.constant 0 : index
    %248 = vector.load %arg3[%c0_145, %c0_146, %c0_147] : memref<1x256x32xf32, #tpu.memory_space<vmem>>, vector<1x256x32xf32>
    %249 = vector.shape_cast %248 : vector<1x256x32xf32> to vector<256x32xf32>
    %250 = arith.mulf %246, %249 : vector<256x32xf32>
    %251 = arith.mulf %245, %244 : vector<256x32xf32>
    %252 = arith.addf %250, %251 : vector<256x32xf32>
    %253 = vector.shape_cast %252 : vector<256x32xf32> to vector<1x256x32xf32>
    %cst_148 = arith.constant dense<0.000000e+00> : vector<1xf32>
    %254 = vector.multi_reduction <add>, %253, %cst_148 [1, 2] : vector<1x256x32xf32> to vector<1xf32>
    %255 = vector.shape_cast %254 : vector<1xf32> to vector<1x1x1xf32>
    %256 = vector.extract %255[0, 0, 0] : f32 from vector<1x1x1xf32>
    %cst_149 = arith.constant 8.192000e+03 : f32
    %257 = arith.divf %256, %cst_149 : f32
    %258 = vector.broadcast %257 : f32 to vector<256x32xf32>
    %259 = arith.subf %252, %258 : vector<256x32xf32>
    %260 = arith.mulf %259, %259 : vector<256x32xf32>
    %261 = vector.shape_cast %260 : vector<256x32xf32> to vector<1x256x32xf32>
    %cst_150 = arith.constant dense<0.000000e+00> : vector<1xf32>
    %262 = vector.multi_reduction <add>, %261, %cst_150 [1, 2] : vector<1x256x32xf32> to vector<1xf32>
    %263 = vector.shape_cast %262 : vector<1xf32> to vector<1x1x1xf32>
    %264 = vector.extract %263[0, 0, 0] : f32 from vector<1x1x1xf32>
    %cst_151 = arith.constant 8.192000e+03 : f32
    %265 = arith.divf %264, %cst_151 : f32
    %cst_152 = arith.constant 9.99999974E-6 : f32
    %266 = arith.addf %265, %cst_152 : f32
    %267 = math.rsqrt %266 : f32
    %268 = vector.broadcast %257 : f32 to vector<256x32xf32>
    %269 = arith.subf %252, %268 : vector<256x32xf32>
    %c0_153 = arith.constant 0 : index
    %c0_154 = arith.constant 0 : index
    %270 = vector.load %arg12[%c0_153, %c0_154] : memref<1x32xf32, #tpu.memory_space<vmem>>, vector<1x32xf32>
    %271 = vector.broadcast %267 : f32 to vector<1x32xf32>
    %272 = arith.mulf %271, %270 : vector<1x32xf32>
    %273 = vector.broadcast %272 : vector<1x32xf32> to vector<256x32xf32>
    %274 = arith.mulf %269, %273 : vector<256x32xf32>
    %c0_155 = arith.constant 0 : index
    %c0_156 = arith.constant 0 : index
    %275 = vector.load %arg13[%c0_155, %c0_156] : memref<1x32xf32, #tpu.memory_space<vmem>>, vector<1x32xf32>
    %276 = vector.broadcast %275 : vector<1x32xf32> to vector<256x32xf32>
    %277 = arith.addf %274, %276 : vector<256x32xf32>
    %278 = math.tanh %277 : vector<256x32xf32>
    %279 = arith.mulf %247, %278 : vector<256x32xf32>
    %280 = tpu.concatenate %279, %277 in 1 : vector<256x32xf32>, vector<256x32xf32> -> vector<256x64xf32>
    %c0_157 = arith.constant 0 : index
    %c0_158 = arith.constant 0 : index
    %c0_159 = arith.constant 0 : index
    %281 = vector.load %arg14[%c0_157, %c0_158, %c0_159] : memref<1x256x64xf32, #tpu.memory_space<vmem>>, vector<1x256x64xf32>
    %282 = vector.shape_cast %281 : vector<1x256x64xf32> to vector<256x64xf32>
    %283 = vector.shape_cast %280 : vector<256x64xf32> to vector<1x256x64xf32>
    tpu.vector_store %arg14[%c0_157, %c0_158, %c0_159], %283 {strides = array<i32>} : memref<1x256x64xf32, #tpu.memory_space<vmem>>, vector<1x256x64xf32>,
    return
  }
  func.func @transform_0(%arg0: i32) -> (i32, i32, i32) {
    %c0_i32 = arith.constant 0 : i32
    %c0_i32_0 = arith.constant 0 : i32
    %c0_i32_1 = arith.constant 0 : i32
    return %arg0, %c0_i32, %c0_i32_0 : i32, i32, i32
  }
  func.func @transform_1(%arg0: i32) -> (i32, i32, i32) {
    %c0_i32 = arith.constant 0 : i32
    %c0_i32_0 = arith.constant 0 : i32
    %c0_i32_1 = arith.constant 0 : i32
    return %arg0, %c0_i32, %c0_i32_0 : i32, i32, i32
  }
  func.func @transform_2(%arg0: i32) -> (i32, i32, i32) {
    %c0_i32 = arith.constant 0 : i32
    %c0_i32_0 = arith.constant 0 : i32
    %c0_i32_1 = arith.constant 0 : i32
    return %arg0, %c0_i32, %c0_i32_0 : i32, i32, i32
  }
  func.func @transform_3(%arg0: i32) -> (i32, i32, i32) {
    %c0_i32 = arith.constant 0 : i32
    %c0_i32_0 = arith.constant 0 : i32
    %c0_i32_1 = arith.constant 0 : i32
    %c0_i32_2 = arith.constant 0 : i32
    return %c0_i32, %c0_i32_0, %c0_i32_1 : i32, i32, i32
  }
  func.func @transform_4(%arg0: i32) -> (i32, i32) {
    %c0_i32 = arith.constant 0 : i32
    %c0_i32_0 = arith.constant 0 : i32
    %c0_i32_1 = arith.constant 0 : i32
    return %c0_i32, %c0_i32_0 : i32, i32
  }
  func.func @transform_5(%arg0: i32) -> (i32, i32) {
    %c0_i32 = arith.constant 0 : i32
    %c0_i32_0 = arith.constant 0 : i32
    %c0_i32_1 = arith.constant 0 : i32
    return %c0_i32, %c0_i32_0 : i32, i32
  }
  func.func @transform_6(%arg0: i32) -> (i32, i32) {
    %c0_i32 = arith.constant 0 : i32
    %c0_i32_0 = arith.constant 0 : i32
    %c0_i32_1 = arith.constant 0 : i32
    return %c0_i32, %c0_i32_0 : i32, i32
  }
  func.func @transform_7(%arg0: i32) -> (i32, i32, i32) {
    %c0_i32 = arith.constant 0 : i32
    %c0_i32_0 = arith.constant 0 : i32
    %c0_i32_1 = arith.constant 0 : i32
    %c0_i32_2 = arith.constant 0 : i32
    return %c0_i32, %c0_i32_0, %c0_i32_1 : i32, i32, i32
  }
  func.func @transform_8(%arg0: i32) -> (i32, i32) {
    %c0_i32 = arith.constant 0 : i32
    %c0_i32_0 = arith.constant 0 : i32
    %c0_i32_1 = arith.constant 0 : i32
    return %c0_i32, %c0_i32_0 : i32, i32
  }
  func.func @transform_9(%arg0: i32) -> (i32, i32) {
    %c0_i32 = arith.constant 0 : i32
    %c0_i32_0 = arith.constant 0 : i32
    %c0_i32_1 = arith.constant 0 : i32
    return %c0_i32, %c0_i32_0 : i32, i32
  }
  func.func @transform_10(%arg0: i32) -> (i32, i32) {
    %c0_i32 = arith.constant 0 : i32
    %c0_i32_0 = arith.constant 0 : i32
    %c0_i32_1 = arith.constant 0 : i32
    return %c0_i32, %c0_i32_0 : i32, i32
  }
  func.func @transform_11(%arg0: i32) -> (i32, i32) {
    %c0_i32 = arith.constant 0 : i32
    %c0_i32_0 = arith.constant 0 : i32
    %c0_i32_1 = arith.constant 0 : i32
    return %c0_i32, %c0_i32_0 : i32, i32
  }
  func.func @transform_12(%arg0: i32) -> (i32, i32) {
    %c0_i32 = arith.constant 0 : i32
    %c0_i32_0 = arith.constant 0 : i32
    %c0_i32_1 = arith.constant 0 : i32
    return %c0_i32, %c0_i32_0 : i32, i32
  }
  func.func @transform_13(%arg0: i32) -> (i32, i32, i32) {
    %c0_i32 = arith.constant 0 : i32
    %c0_i32_0 = arith.constant 0 : i32
    %c0_i32_1 = arith.constant 0 : i32
    return %arg0, %c0_i32, %c0_i32_0 : i32, i32, i32
  }
}

</mosaic_0001>

<llo_original>
// kernel: tpu_custom_call.1
$region0: #{tpu_custom_call.1}
  #allocation0 [shape = 'u32[]', space=smem, size = 0x4, offset = 0x4, fixed_abs, tag = 'smem constant byte address 0x4 - core index']
  #allocation1 [shape = 'u32[144,128]{1,0:T(1,128)}', space=vmem, size = 0x12000, scoped, tag = 'internal scratch']
  %s0 = inlined_call_operand.vmem [shape: f32[2,290,4], index: 0, kind: input, shape index: {}]
  %s1 = inlined_call_operand.vmem [shape: f32[2,290,32], index: 1, kind: input, shape index: {}]
  %s2 = inlined_call_operand.vmem [shape: f32[2,256,32], index: 2, kind: input, shape index: {}]
  %s3 = inlined_call_operand.vmem [shape: bf16[9,4,128], index: 3, kind: input, shape index: {}]
  %s4 = inlined_call_operand.vmem [shape: f32[1,128], index: 4, kind: input, shape index: {}]
  %s5 = inlined_call_operand.vmem [shape: f32[1,128], index: 5, kind: input, shape index: {}]
  %s6 = inlined_call_operand.vmem [shape: f32[1,128], index: 6, kind: input, shape index: {}]
  %s7 = inlined_call_operand.vmem [shape: bf16[9,32,128], index: 7, kind: input, shape index: {}]
  %s8 = inlined_call_operand.vmem [shape: f32[1,128], index: 8, kind: input, shape index: {}]
  %s9 = inlined_call_operand.vmem [shape: f32[1,128], index: 9, kind: input, shape index: {}]
  %s10 = inlined_call_operand.vmem [shape: f32[1,128], index: 10, kind: input, shape index: {}]
  %s11 = inlined_call_operand.vmem [shape: f32[1,32], index: 11, kind: input, shape index: {}]
  %s12 = inlined_call_operand.vmem [shape: f32[1,32], index: 12, kind: input, shape index: {}]
  %s13 = inlined_call_operand.vmem [shape: f32[2,256,64], index: 13, kind: output, shape index: {}]
  %s14 = sld [smem:[#allocation0]]
  $region85: #{tpu_custom_call.1} parent=0
    _
  %s16 = ssub.s32 1, %s14
  %s17 = scalar_select 0, %s16, %s14
  loop: start=0, step=1, limit=4
  $region2: #{tpu_custom_call.1} parent=0 // loop_pre_header
    _
  $region3: #{tpu_custom_call.1} parent=0 // loop_header
    %s19 = sphi 0, %s23
    %p20 = scmp.ge.s32.totalorder %s19, 4
    %s29 = sphi 0, %s31
    %s32 = sphi 0, %s29
    %s33 = sphi 0, %s32
    %s49 = sphi 0, %s33
    %s55 = sphi 0, %s57
    %s58 = sphi 0, %s55
    %s59 = sphi 0, %s58
    %s75 = sphi 0, %s59
    %s81 = sphi 0, %s83
    %s84 = sphi 0, %s81
    %s85 = sphi 0, %s84
    %s101 = sphi 0, %s85
    %s105 = sphi 0, %s105
    %s107 = sphi 0, %s105
    %s108 = sphi 0, %s107
    %s122 = sphi 0, %s108
    %s126 = sphi 0, %s126
    %s128 = sphi 0, %s126
    %s129 = sphi 0, %s128
    %s143 = sphi 0, %s129
    %s147 = sphi 0, %s147
    %s149 = sphi 0, %s147
    %s150 = sphi 0, %s149
    %s164 = sphi 0, %s150
    %s168 = sphi 0, %s168
    %s170 = sphi 0, %s168
    %s171 = sphi 0, %s170
    %s185 = sphi 0, %s171
    %s189 = sphi 0, %s189
    %s191 = sphi 0, %s189
    %s192 = sphi 0, %s191
    %s206 = sphi 0, %s192
    %s210 = sphi 0, %s210
    %s212 = sphi 0, %s210
    %s213 = sphi 0, %s212
    %s227 = sphi 0, %s213
    %s231 = sphi 0, %s231
    %s233 = sphi 0, %s231
    %s234 = sphi 0, %s233
    %s248 = sphi 0, %s234
    %s252 = sphi 0, %s252
    %s254 = sphi 0, %s252
    %s255 = sphi 0, %s254
    %s269 = sphi 0, %s255
    %s273 = sphi 0, %s273
    %s275 = sphi 0, %s273
    %s276 = sphi 0, %s275
    %s290 = sphi 0, %s276
    %s294 = sphi 0, %s294
    %s296 = sphi 0, %s294
    %s297 = sphi 0, %s296
    %s311 = sphi 0, %s297
    %s317 = sphi 0, %s319
    %s320 = sphi 0, %s317
    %s321 = sphi 0, %s320
    %s337 = sphi 0, %s321
  $region4: #{tpu_custom_call.1} parent=0 // loop_header_branch
    %22 = sbr.rel (%p20) target = $region8
  $region5: #{tpu_custom_call.1} parent=0 // loop_body
    %s24 = ssub.s32 %s19, 1
    %s25 = ssub.s32 %s19, 2
    %s26 = sadd.s32 %s19, 1
    %s27 = ssub.s32 %s19, %s26
    %p28 = scmp.eq.s32.totalorder %s27, 0
    %s30 = sadd.s32 %s29, 1
    %s31 = scalar_select %p28, %s29, %s30
    %p34 = pneg %p28
    %p35 = scmp.eq.s32.totalorder %s19, 1
    %p36 = por %p34, %p35
    %p37 = scmp.ne.s32.totalorder %s29, %s32
    %p38 = scmp.eq.s32.totalorder %s19, 0
    %p39 = por %p37, %p38
    %p40 = scmp.ne.s32.totalorder %s29, %s32
    %p41 = scmp.eq.s32.totalorder %s24, 1
    %p42 = por %p40, %p41
    %p43 = scmp.ne.s32.totalorder %s32, %s33
    %p44 = scmp.eq.s32.totalorder %s24, 0
    %p45 = por %p43, %p44
    %p46 = scmp.ne.s32.totalorder %s32, %s33
    %p47 = scmp.eq.s32.totalorder %s25, 1
    %p48 = por %p46, %p47
    %p50 = scmp.ne.s32.totalorder %s33, %s49
    %p51 = scmp.eq.s32.totalorder %s25, 0
    %p52 = por %p50, %p51
    %s53 = ssub.s32 %s19, %s26
    %p54 = scmp.eq.s32.totalorder %s53, 0
    %s56 = sadd.s32 %s55, 1
    %s57 = scalar_select %p54, %s55, %s56
    %p60 = pneg %p54
    %p61 = scmp.eq.s32.totalorder %s19, 1
    %p62 = por %p60, %p61
    %p63 = scmp.ne.s32.totalorder %s55, %s58
    %p64 = scmp.eq.s32.totalorder %s19, 0
    %p65 = por %p63, %p64
    %p66 = scmp.ne.s32.totalorder %s55, %s58
    %p67 = scmp.eq.s32.totalorder %s24, 1
    %p68 = por %p66, %p67
    %p69 = scmp.ne.s32.totalorder %s58, %s59
    %p70 = scmp.eq.s32.totalorder %s24, 0
    %p71 = por %p69, %p70
    %p72 = scmp.ne.s32.totalorder %s58, %s59
    %p73 = scmp.eq.s32.totalorder %s25, 1
    %p74 = por %p72, %p73
    %p76 = scmp.ne.s32.totalorder %s59, %s75
    %p77 = scmp.eq.s32.totalorder %s25, 0
    %p78 = por %p76, %p77
    %s79 = ssub.s32 %s19, %s26
    %p80 = scmp.eq.s32.totalorder %s79, 0
    %s82 = sadd.s32 %s81, 1
    %s83 = scalar_select %p80, %s81, %s82
    %p86 = pneg %p80
    %p87 = scmp.eq.s32.totalorder %s19, 1
    %p88 = por %p86, %p87
    %p89 = scmp.ne.s32.totalorder %s81, %s84
    %p90 = scmp.eq.s32.totalorder %s19, 0
    %p91 = por %p89, %p90
    %p92 = scmp.ne.s32.totalorder %s81, %s84
    %p93 = scmp.eq.s32.totalorder %s24, 1
    %p94 = por %p92, %p93
    %p95 = scmp.ne.s32.totalorder %s84, %s85
    %p96 = scmp.eq.s32.totalorder %s24, 0
    %p97 = por %p95, %p96
    %p98 = scmp.ne.s32.totalorder %s84, %s85
    %p99 = scmp.eq.s32.totalorder %s25, 1
    %p100 = por %p98, %p99
    %p102 = scmp.ne.s32.totalorder %s85, %s101
    %p103 = scmp.eq.s32.totalorder %s25, 0
    %p104 = por %p102, %p103
    %s106 = sadd.s32 %s105, 1
    %p109 = scmp.eq.s32.totalorder %s19, 1
    %p110 = scmp.ne.s32.totalorder %s105, %s107
    %p111 = scmp.eq.s32.totalorder %s19, 0
    %p112 = por %p110, %p111
    %p113 = scmp.ne.s32.totalorder %s105, %s107
    %p114 = scmp.eq.s32.totalorder %s24, 1
    %p115 = por %p113, %p114
    %p116 = scmp.ne.s32.totalorder %s107, %s108
    %p117 = scmp.eq.s32.totalorder %s24, 0
    %p118 = por %p116, %p117
    %p119 = scmp.ne.s32.totalorder %s107, %s108
    %p120 = scmp.eq.s32.totalorder %s25, 1
    %p121 = por %p119, %p120
    %p123 = scmp.ne.s32.totalorder %s108, %s122
    %p124 = scmp.eq.s32.totalorder %s25, 0
    %p125 = por %p123, %p124
    %s127 = sadd.s32 %s126, 1
    %p130 = scmp.eq.s32.totalorder %s19, 1
    %p131 = scmp.ne.s32.totalorder %s126, %s128
    %p132 = scmp.eq.s32.totalorder %s19, 0
    %p133 = por %p131, %p132
    %p134 = scmp.ne.s32.totalorder %s126, %s128
    %p135 = scmp.eq.s32.totalorder %s24, 1
    %p136 = por %p134, %p135
    %p137 = scmp.ne.s32.totalorder %s128, %s129
    %p138 = scmp.eq.s32.totalorder %s24, 0
    %p139 = por %p137, %p138
    %p140 = scmp.ne.s32.totalorder %s128, %s129
    %p141 = scmp.eq.s32.totalorder %s25, 1
    %p142 = por %p140, %p141
    %p144 = scmp.ne.s32.totalorder %s129, %s143
    %p145 = scmp.eq.s32.totalorder %s25, 0
    %p146 = por %p144, %p145
    %s148 = sadd.s32 %s147, 1
    %p151 = scmp.eq.s32.totalorder %s19, 1
    %p152 = scmp.ne.s32.totalorder %s147, %s149
    %p153 = scmp.eq.s32.totalorder %s19, 0
    %p154 = por %p152, %p153
    %p155 = scmp.ne.s32.totalorder %s147, %s149
    %p156 = scmp.eq.s32.totalorder %s24, 1
    %p157 = por %p155, %p156
    %p158 = scmp.ne.s32.totalorder %s149, %s150
    %p159 = scmp.eq.s32.totalorder %s24, 0
    %p160 = por %p158, %p159
    %p161 = scmp.ne.s32.totalorder %s149, %s150
    %p162 = scmp.eq.s32.totalorder %s25, 1
    %p163 = por %p161, %p162
    %p165 = scmp.ne.s32.totalorder %s150, %s164
    %p166 = scmp.eq.s32.totalorder %s25, 0
    %p167 = por %p165, %p166
    %s169 = sadd.s32 %s168, 1
    %p172 = scmp.eq.s32.totalorder %s19, 1
    %p173 = scmp.ne.s32.totalorder %s168, %s170
    %p174 = scmp.eq.s32.totalorder %s19, 0
    %p175 = por %p173, %p174
    %p176 = scmp.ne.s32.totalorder %s168, %s170
    %p177 = scmp.eq.s32.totalorder %s24, 1
    %p178 = por %p176, %p177
    %p179 = scmp.ne.s32.totalorder %s170, %s171
    %p180 = scmp.eq.s32.totalorder %s24, 0
    %p181 = por %p179, %p180
    %p182 = scmp.ne.s32.totalorder %s170, %s171
    %p183 = scmp.eq.s32.totalorder %s25, 1
    %p184 = por %p182, %p183
    %p186 = scmp.ne.s32.totalorder %s171, %s185
    %p187 = scmp.eq.s32.totalorder %s25, 0
    %p188 = por %p186, %p187
    %s190 = sadd.s32 %s189, 1
    %p193 = scmp.eq.s32.totalorder %s19, 1
    %p194 = scmp.ne.s32.totalorder %s189, %s191
    %p195 = scmp.eq.s32.totalorder %s19, 0
    %p196 = por %p194, %p195
    %p197 = scmp.ne.s32.totalorder %s189, %s191
    %p198 = scmp.eq.s32.totalorder %s24, 1
    %p199 = por %p197, %p198
    %p200 = scmp.ne.s32.totalorder %s191, %s192
    %p201 = scmp.eq.s32.totalorder %s24, 0
    %p202 = por %p200, %p201
    %p203 = scmp.ne.s32.totalorder %s191, %s192
    %p204 = scmp.eq.s32.totalorder %s25, 1
    %p205 = por %p203, %p204
    %p207 = scmp.ne.s32.totalorder %s192, %s206
    %p208 = scmp.eq.s32.totalorder %s25, 0
    %p209 = por %p207, %p208
    %s211 = sadd.s32 %s210, 1
    %p214 = scmp.eq.s32.totalorder %s19, 1
    %p215 = scmp.ne.s32.totalorder %s210, %s212
    %p216 = scmp.eq.s32.totalorder %s19, 0
    %p217 = por %p215, %p216
    %p218 = scmp.ne.s32.totalorder %s210, %s212
    %p219 = scmp.eq.s32.totalorder %s24, 1
    %p220 = por %p218, %p219
    %p221 = scmp.ne.s32.totalorder %s212, %s213
    %p222 = scmp.eq.s32.totalorder %s24, 0
    %p223 = por %p221, %p222
    %p224 = scmp.ne.s32.totalorder %s212, %s213
    %p225 = scmp.eq.s32.totalorder %s25, 1
    %p226 = por %p224, %p225
    %p228 = scmp.ne.s32.totalorder %s213, %s227
    %p229 = scmp.eq.s32.totalorder %s25, 0
    %p230 = por %p228, %p229
    %s232 = sadd.s32 %s231, 1
    %p235 = scmp.eq.s32.totalorder %s19, 1
    %p236 = scmp.ne.s32.totalorder %s231, %s233
    %p237 = scmp.eq.s32.totalorder %s19, 0
    %p238 = por %p236, %p237
    %p239 = scmp.ne.s32.totalorder %s231, %s233
    %p240 = scmp.eq.s32.totalorder %s24, 1
    %p241 = por %p239, %p240
    %p242 = scmp.ne.s32.totalorder %s233, %s234
    %p243 = scmp.eq.s32.totalorder %s24, 0
    %p244 = por %p242, %p243
    %p245 = scmp.ne.s32.totalorder %s233, %s234
    %p246 = scmp.eq.s32.totalorder %s25, 1
    %p247 = por %p245, %p246
    %p249 = scmp.ne.s32.totalorder %s234, %s248
    %p250 = scmp.eq.s32.totalorder %s25, 0
    %p251 = por %p249, %p250
    %s253 = sadd.s32 %s252, 1
    %p256 = scmp.eq.s32.totalorder %s19, 1
    %p257 = scmp.ne.s32.totalorder %s252, %s254
    %p258 = scmp.eq.s32.totalorder %s19, 0
    %p259 = por %p257, %p258
    %p260 = scmp.ne.s32.totalorder %s252, %s254
    %p261 = scmp.eq.s32.totalorder %s24, 1
    %p262 = por %p260, %p261
    %p263 = scmp.ne.s32.totalorder %s254, %s255
    %p264 = scmp.eq.s32.totalorder %s24, 0
    %p265 = por %p263, %p264
    %p266 = scmp.ne.s32.totalorder %s254, %s255
    %p267 = scmp.eq.s32.totalorder %s25, 1
    %p268 = por %p266, %p267
    %p270 = scmp.ne.s32.totalorder %s255, %s269
    %p271 = scmp.eq.s32.totalorder %s25, 0
    %p272 = por %p270, %p271
    %s274 = sadd.s32 %s273, 1
    %p277 = scmp.eq.s32.totalorder %s19, 1
    %p278 = scmp.ne.s32.totalorder %s273, %s275
    %p279 = scmp.eq.s32.totalorder %s19, 0
    %p280 = por %p278, %p279
    %p281 = scmp.ne.s32.totalorder %s273, %s275
    %p282 = scmp.eq.s32.totalorder %s24, 1
    %p283 = por %p281, %p282
    %p284 = scmp.ne.s32.totalorder %s275, %s276
    %p285 = scmp.eq.s32.totalorder %s24, 0
    %p286 = por %p284, %p285
    %p287 = scmp.ne.s32.totalorder %s275, %s276
    %p288 = scmp.eq.s32.totalorder %s25, 1
    %p289 = por %p287, %p288
    %p291 = scmp.ne.s32.totalorder %s276, %s290
    %p292 = scmp.eq.s32.totalorder %s25, 0
    %p293 = por %p291, %p292
    %s295 = sadd.s32 %s294, 1
    %p298 = scmp.eq.s32.totalorder %s19, 1
    %p299 = scmp.ne.s32.totalorder %s294, %s296
    %p300 = scmp.eq.s32.totalorder %s19, 0
    %p301 = por %p299, %p300
    %p302 = scmp.ne.s32.totalorder %s294, %s296
    %p303 = scmp.eq.s32.totalorder %s24, 1
    %p304 = por %p302, %p303
    %p305 = scmp.ne.s32.totalorder %s296, %s297
    %p306 = scmp.eq.s32.totalorder %s24, 0
    %p307 = por %p305, %p306
    %p308 = scmp.ne.s32.totalorder %s296, %s297
    %p309 = scmp.eq.s32.totalorder %s25, 1
    %p310 = por %p308, %p309
    %p312 = scmp.ne.s32.totalorder %s297, %s311
    %p313 = scmp.eq.s32.totalorder %s25, 0
    %p314 = por %p312, %p313
    %s315 = ssub.s32 %s19, %s26
    %p316 = scmp.eq.s32.totalorder %s315, 0
    %s318 = sadd.s32 %s317, 1
    %s319 = scalar_select %p316, %s317, %s318
    %p322 = pneg %p316
    %p323 = scmp.eq.s32.totalorder %s19, 1
    %p324 = por %p322, %p323
    %p325 = scmp.ne.s32.totalorder %s317, %s320
    %p326 = scmp.eq.s32.totalorder %s19, 0
    %p327 = por %p325, %p326
    %p328 = scmp.ne.s32.totalorder %s317, %s320
    %p329 = scmp.eq.s32.totalorder %s24, 1
    %p330 = por %p328, %p329
    %p331 = scmp.ne.s32.totalorder %s320, %s321
    %p332 = scmp.eq.s32.totalorder %s24, 0
    %p333 = por %p331, %p332
    %p334 = scmp.ne.s32.totalorder %s320, %s321
    %p335 = scmp.eq.s32.totalorder %s25, 1
    %p336 = por %p334, %p335
    %p338 = scmp.ne.s32.totalorder %s321, %s337
    %p339 = scmp.eq.s32.totalorder %s25, 0
    %p340 = por %p338, %p339
    %p341 = scmp.le.s32.totalorder 1, %s19
    %p342 = scmp.lt.s32.totalorder %s19, 3
    %p343 = pnand %p341, %p342
    %p344 = pneg %p343
    // Predicated region
    $region9: #{tpu_custom_call.1} parent=5 // pred_check
      _
    $region10: #{tpu_custom_call.1} parent=5 // pred_check_branch
      %346 = sbr.rel (%p343) target = $region12
    $region11: #{tpu_custom_call.1} parent=5 // pred_region
      %s347 = ssub.s32 %s19, 1
      // Predicated region
      $region13: #{tpu_custom_call.1} parent=11 // pred_check
        %p348 = pneg %p118
      $region14: #{tpu_custom_call.1} parent=11 // pred_check_branch
        %350 = sbr.rel (%p348) target = $region16
      $region15: #{tpu_custom_call.1} parent=11 // pred_region
        _
      $region16: #{tpu_custom_call.1} parent=11 // pred_fallthru
        _
      // Predicated region
      $region17: #{tpu_custom_call.1} parent=11 // pred_check
        %p351 = pneg %p139
      $region18: #{tpu_custom_call.1} parent=11 // pred_check_branch
        %353 = sbr.rel (%p351) target = $region20
      $region19: #{tpu_custom_call.1} parent=11 // pred_region
        _
      $region20: #{tpu_custom_call.1} parent=11 // pred_fallthru
        _
      // Predicated region
      $region21: #{tpu_custom_call.1} parent=11 // pred_check
        %p354 = pneg %p160
      $region22: #{tpu_custom_call.1} parent=11 // pred_check_branch
        %356 = sbr.rel (%p354) target = $region24
      $region23: #{tpu_custom_call.1} parent=11 // pred_region
        _
      $region24: #{tpu_custom_call.1} parent=11 // pred_fallthru
        _
      // Predicated region
      $region25: #{tpu_custom_call.1} parent=11 // pred_check
        %p357 = pneg %p181
      $region26: #{tpu_custom_call.1} parent=11 // pred_check_branch
        %359 = sbr.rel (%p357) target = $region28
      $region27: #{tpu_custom_call.1} parent=11 // pred_region
        _
      $region28: #{tpu_custom_call.1} parent=11 // pred_fallthru
        _
      // Predicated region
      $region29: #{tpu_custom_call.1} parent=11 // pred_check
        %p360 = pneg %p202
      $region30: #{tpu_custom_call.1} parent=11 // pred_check_branch
        %362 = sbr.rel (%p360) target = $region32
      $region31: #{tpu_custom_call.1} parent=11 // pred_region
        _
      $region32: #{tpu_custom_call.1} parent=11 // pred_fallthru
        _
      // Predicated region
      $region33: #{tpu_custom_call.1} parent=11 // pred_check
        %p363 = pneg %p223
      $region34: #{tpu_custom_call.1} parent=11 // pred_check_branch
        %365 = sbr.rel (%p363) target = $region36
      $region35: #{tpu_custom_call.1} parent=11 // pred_region
        _
      $region36: #{tpu_custom_call.1} parent=11 // pred_fallthru
        _
      // Predicated region
      $region37: #{tpu_custom_call.1} parent=11 // pred_check
        %p366 = pneg %p244
      $region38: #{tpu_custom_call.1} parent=11 // pred_check_branch
        %368 = sbr.rel (%p366) target = $region40
      $region39: #{tpu_custom_call.1} parent=11 // pred_region
        _
      $region40: #{tpu_custom_call.1} parent=11 // pred_fallthru
        _
      // Predicated region
      $region41: #{tpu_custom_call.1} parent=11 // pred_check
        %p369 = pneg %p265
      $region42: #{tpu_custom_call.1} parent=11 // pred_check_branch
        %371 = sbr.rel (%p369) target = $region44
      $region43: #{tpu_custom_call.1} parent=11 // pred_region
        _
      $region44: #{tpu_custom_call.1} parent=11 // pred_fallthru
        _
      // Predicated region
      $region45: #{tpu_custom_call.1} parent=11 // pred_check
        %p372 = pneg %p286
      $region46: #{tpu_custom_call.1} parent=11 // pred_check_branch
        %374 = sbr.rel (%p372) target = $region48
      $region47: #{tpu_custom_call.1} parent=11 // pred_region
        _
      $region48: #{tpu_custom_call.1} parent=11 // pred_fallthru
        _
      // Predicated region
      $region49: #{tpu_custom_call.1} parent=11 // pred_check
        %p375 = pneg %p307
      $region50: #{tpu_custom_call.1} parent=11 // pred_check_branch
        %377 = sbr.rel (%p375) target = $region52
      $region51: #{tpu_custom_call.1} parent=11 // pred_region
        _
      $region52: #{tpu_custom_call.1} parent=11 // pred_fallthru
        _
    $region12: #{tpu_custom_call.1} parent=5 // pred_fallthru
      _
    %p378 = scmp.lt.s32.totalorder %s19, 2
    // Predicated region
    $region53: #{tpu_custom_call.1} parent=5 // pred_check
      %p379 = pneg %p378
    $region54: #{tpu_custom_call.1} parent=5 // pred_check_branch
      %381 = sbr.rel (%p379) target = $region56
    $region55: #{tpu_custom_call.1} parent=5 // pred_region
      // Predicated region
      $region57: #{tpu_custom_call.1} parent=55 // pred_check
        %p382 = pneg %p39
      $region58: #{tpu_custom_call.1} parent=55 // pred_check_branch
        %384 = sbr.rel (%p382) target = $region60
      $region59: #{tpu_custom_call.1} parent=55 // pred_region
        %p385 = scmp.lt.s32.totalorder %s19, 1
        %s386 = scalar_select %p385, %s19, 1
        %s387 = smul.addr %s386, 37
        %s388 = smul.addr %s387, 8
        %s389 = scalar_lea.vmem %s0, %s388
      $region60: #{tpu_custom_call.1} parent=55 // pred_fallthru
        _
      // Predicated region
      $region61: #{tpu_custom_call.1} parent=55 // pred_check
        %p390 = pneg %p65
      $region62: #{tpu_custom_call.1} parent=55 // pred_check_branch
        %392 = sbr.rel (%p390) target = $region64
      $region63: #{tpu_custom_call.1} parent=55 // pred_region
        %p393 = scmp.lt.s32.totalorder %s19, 1
        %s394 = scalar_select %p393, %s19, 1
        %s395 = smul.addr %s394, 37
        %s396 = smul.addr %s395, 8
        %s397 = scalar_lea.vmem %s1, %s396
      $region64: #{tpu_custom_call.1} parent=55 // pred_fallthru
        _
      // Predicated region
      $region65: #{tpu_custom_call.1} parent=55 // pred_check
        %p398 = pneg %p91
      $region66: #{tpu_custom_call.1} parent=55 // pred_check_branch
        %400 = sbr.rel (%p398) target = $region68
      $region67: #{tpu_custom_call.1} parent=55 // pred_region
        %p401 = scmp.lt.s32.totalorder %s19, 1
        %s402 = scalar_select %p401, %s19, 1
        %s403 = smul.addr %s402, 32
        %s404 = smul.addr %s403, 8
        %s405 = scalar_lea.vmem %s2, %s404
      $region68: #{tpu_custom_call.1} parent=55 // pred_fallthru
        _
    $region56: #{tpu_custom_call.1} parent=5 // pred_fallthru
      _
    %p406 = scmp.le.s32.totalorder 1, %s19
    %p407 = scmp.lt.s32.totalorder %s19, 3
    %p408 = pnand %p406, %p407
    %p409 = pneg %p408
    // Predicated region
    $region69: #{tpu_custom_call.1} parent=5 // pred_check
      _
    $region70: #{tpu_custom_call.1} parent=5 // pred_check_branch
      %411 = sbr.rel (%p408) target = $region72
    $region71: #{tpu_custom_call.1} parent=5 // pred_region
      %s412 = ssub.s32 %s19, 1
      %p413 = scmp.lt.s32.totalorder %s24, 1
      %s414 = scalar_select %p413, %s24, 1
      %s415 = smul.addr %s414, 37
      %s416 = smul.addr %s415, 8
      %s417 = scalar_lea.vmem %s0, %s416
      %p418 = pneg %p45
      %p419 = pneg %p42
      %p420 = scmp.lt.s32.totalorder %s24, 1
      %s421 = scalar_select %p420, %s24, 1
      %s422 = smul.addr %s421, 37
      %s423 = smul.addr %s422, 8
      %s424 = scalar_lea.vmem %s1, %s423
      %p425 = pneg %p71
      %p426 = pneg %p68
      %p427 = scmp.lt.s32.totalorder %s24, 1
      %s428 = scalar_select %p427, %s24, 1
      %s429 = smul.addr %s428, 32
      %s430 = smul.addr %s429, 8
      %s431 = scalar_lea.vmem %s2, %s430
      %p432 = pneg %p97
      %p433 = pneg %p94
      %p434 = pneg %p118
      %p435 = pneg %p115
      %p436 = pneg %p139
      %p437 = pneg %p136
      %p438 = pneg %p160
      %p439 = pneg %p157
      %p440 = pneg %p181
      %p441 = pneg %p178
      %p442 = pneg %p202
      %p443 = pneg %p199
      %p444 = pneg %p223
      %p445 = pneg %p220
      %p446 = pneg %p244
      %p447 = pneg %p241
      %p448 = pneg %p265
      %p449 = pneg %p262
      %p450 = pneg %p286
      %p451 = pneg %p283
      %p452 = pneg %p307
      %p453 = pneg %p304
      %p454 = pneg %p333
      %p455 = pneg %p330
      %p456 = scmp.lt.s32.totalorder %s24, 1
      %s457 = scalar_select %p456, %s24, 1
      %s458 = smul.addr %s457, 32
      %s459 = smul.addr %s458, 8
      %s460 = scalar_lea.vmem %s13, %s459
      %p461 = scmp.lt.s32.totalorder %s24, 1
      %s462 = scalar_select %p461, %s24, 1
      %s463 = smul.addr %s462, 37
      %s464 = smul.addr %s463, 8
      %s465 = scalar_lea.vmem %s0, %s464
      %p466 = scmp.lt.s32.totalorder %s24, 1
      %s467 = scalar_select %p466, %s24, 1
      %s468 = smul.addr %s467, 37
      %s469 = smul.addr %s468, 8
      %s470 = scalar_lea.vmem %s1, %s469
      %p471 = scmp.lt.s32.totalorder %s24, 1
      %s472 = scalar_select %p471, %s24, 1
      %s473 = smul.addr %s472, 32
      %s474 = smul.addr %s473, 8
      %s475 = scalar_lea.vmem %s2, %s474
      %p476 = scmp.lt.s32.totalorder %s24, 1
      %s477 = scalar_select %p476, %s24, 1
      %s478 = smul.addr %s477, 32
      %s479 = smul.addr %s478, 8
      %s480 = scalar_lea.vmem %s13, %s479
      %v482 = vlaneseq
      %v483 = vshrl.u32 %v482, 7
      %v484 = vadd.s32 %v483, 8
      %v485 = vadd.s32 %v483, 16
      %v486 = vadd.s32 %v483, 24
      %v487 = vadd.s32 %v483, 32
      %v488 = vadd.s32 %v483, 40
      %v489 = vadd.s32 %v483, 48
      %v490 = vadd.s32 %v483, 56
      %v491 = vadd.s32 %v483, 64
      %v492 = vadd.s32 %v483, 72
      %v493 = vadd.s32 %v483, 80
      %v494 = vadd.s32 %v483, 88
      %v495 = vadd.s32 %v483, 96
      %v496 = vadd.s32 %v483, 104
      %v497 = vadd.s32 %v483, 112
      %v498 = vadd.s32 %v483, 120
      %v499 = vadd.s32 %v483, 128
      %v500 = vadd.s32 %v483, 136
      %v501 = vadd.s32 %v483, 144
      %v502 = vadd.s32 %v483, 152
      %v503 = vadd.s32 %v483, 160
      %v504 = vadd.s32 %v483, 168
      %v505 = vadd.s32 %v483, 176
      %v506 = vadd.s32 %v483, 184
      %v507 = vadd.s32 %v483, 192
      %v508 = vadd.s32 %v483, 200
      %v509 = vadd.s32 %v483, 208
      %v510 = vadd.s32 %v483, 216
      %v511 = vadd.s32 %v483, 224
      %v512 = vadd.s32 %v483, 232
      %v513 = vadd.s32 %v483, 240
      %v514 = vadd.s32 %v483, 248
      %v515 = vand.u32 %v483, 15
      %v516 = vand.u32 %v484, 15
      %v517 = vand.u32 %v485, 15
      %v518 = vand.u32 %v486, 15
      %v519 = vand.u32 %v487, 15
      %v520 = vand.u32 %v488, 15
      %v521 = vand.u32 %v489, 15
      %v522 = vand.u32 %v490, 15
      %v523 = vand.u32 %v491, 15
      %v524 = vand.u32 %v492, 15
      %v525 = vand.u32 %v493, 15
      %v526 = vand.u32 %v494, 15
      %v527 = vand.u32 %v495, 15
      %v528 = vand.u32 %v496, 15
      %v529 = vand.u32 %v497, 15
      %v530 = vand.u32 %v498, 15
      %v531 = vand.u32 %v499, 15
      %v532 = vand.u32 %v500, 15
      %v533 = vand.u32 %v501, 15
      %v534 = vand.u32 %v502, 15
      %v535 = vand.u32 %v503, 15
      %v536 = vand.u32 %v504, 15
      %v537 = vand.u32 %v505, 15
      %v538 = vand.u32 %v506, 15
      %v539 = vand.u32 %v507, 15
      %v540 = vand.u32 %v508, 15
      %v541 = vand.u32 %v509, 15
      %v542 = vand.u32 %v510, 15
      %v543 = vand.u32 %v511, 15
      %v544 = vand.u32 %v512, 15
      %v545 = vand.u32 %v513, 15
      %v546 = vand.u32 %v514, 15
      %vm547 = vcmp.ge.s32.totalorder %v515, 1
      %vm548 = vcmp.ge.s32.totalorder %v516, 1
      %vm549 = vcmp.ge.s32.totalorder %v517, 1
      %vm550 = vcmp.ge.s32.totalorder %v518, 1
      %vm551 = vcmp.ge.s32.totalorder %v519, 1
      %vm552 = vcmp.ge.s32.totalorder %v520, 1
      %vm553 = vcmp.ge.s32.totalorder %v521, 1
      %vm554 = vcmp.ge.s32.totalorder %v522, 1
      %vm555 = vcmp.ge.s32.totalorder %v523, 1
      %vm556 = vcmp.ge.s32.totalorder %v524, 1
      %vm557 = vcmp.ge.s32.totalorder %v525, 1
      %vm558 = vcmp.ge.s32.totalorder %v526, 1
      %vm559 = vcmp.ge.s32.totalorder %v527, 1
      %vm560 = vcmp.ge.s32.totalorder %v528, 1
      %vm561 = vcmp.ge.s32.totalorder %v529, 1
      %vm562 = vcmp.ge.s32.totalorder %v530, 1
      %vm563 = vcmp.ge.s32.totalorder %v531, 1
      %vm564 = vcmp.ge.s32.totalorder %v532, 1
      %vm565 = vcmp.ge.s32.totalorder %v533, 1
      %vm566 = vcmp.ge.s32.totalorder %v534, 1
      %vm567 = vcmp.ge.s32.totalorder %v535, 1
      %vm568 = vcmp.ge.s32.totalorder %v536, 1
      %vm569 = vcmp.ge.s32.totalorder %v537, 1
      %vm570 = vcmp.ge.s32.totalorder %v538, 1
      %vm571 = vcmp.ge.s32.totalorder %v539, 1
      %vm572 = vcmp.ge.s32.totalorder %v540, 1
      %vm573 = vcmp.ge.s32.totalorder %v541, 1
      %vm574 = vcmp.ge.s32.totalorder %v542, 1
      %vm575 = vcmp.ge.s32.totalorder %v543, 1
      %vm576 = vcmp.ge.s32.totalorder %v544, 1
      %vm577 = vcmp.ge.s32.totalorder %v545, 1
      %vm578 = vcmp.ge.s32.totalorder %v546, 1
      %vm579 = vcmp.le.s32.totalorder %v515, 14
      %vm580 = vcmp.le.s32.totalorder %v516, 14
      %vm581 = vcmp.le.s32.totalorder %v517, 14
      %vm582 = vcmp.le.s32.totalorder %v518, 14
      %vm583 = vcmp.le.s32.totalorder %v519, 14
      %vm584 = vcmp.le.s32.totalorder %v520, 14
      %vm585 = vcmp.le.s32.totalorder %v521, 14
      %vm586 = vcmp.le.s32.totalorder %v522, 14
      %vm587 = vcmp.le.s32.totalorder %v523, 14
      %vm588 = vcmp.le.s32.totalorder %v524, 14
      %vm589 = vcmp.le.s32.totalorder %v525, 14
      %vm590 = vcmp.le.s32.totalorder %v526, 14
      %vm591 = vcmp.le.s32.totalorder %v527, 14
      %vm592 = vcmp.le.s32.totalorder %v528, 14
      %vm593 = vcmp.le.s32.totalorder %v529, 14
      %vm594 = vcmp.le.s32.totalorder %v530, 14
      %vm595 = vcmp.le.s32.totalorder %v531, 14
      %vm596 = vcmp.le.s32.totalorder %v532, 14
      %vm597 = vcmp.le.s32.totalorder %v533, 14
      %vm598 = vcmp.le.s32.totalorder %v534, 14
      %vm599 = vcmp.le.s32.totalorder %v535, 14
      %vm600 = vcmp.le.s32.totalorder %v536, 14
      %vm601 = vcmp.le.s32.totalorder %v537, 14
      %vm602 = vcmp.le.s32.totalorder %v538, 14
      %vm603 = vcmp.le.s32.totalorder %v539, 14
      %vm604 = vcmp.le.s32.totalorder %v540, 14
      %vm605 = vcmp.le.s32.totalorder %v541, 14
      %vm606 = vcmp.le.s32.totalorder %v542, 14
      %vm607 = vcmp.le.s32.totalorder %v543, 14
      %vm608 = vcmp.le.s32.totalorder %v544, 14
      %vm609 = vcmp.le.s32.totalorder %v545, 14
      %vm610 = vcmp.le.s32.totalorder %v546, 14
      %v611 = vld [vmem:[%s465] sm:$0xff]
      %v612 = vld [vmem:[%s465 + $0x8] sm:$0xff]
      %v613 = vld [vmem:[%s465 + $0x10] sm:$0xff]
      %v614 = vld [vmem:[%s465 + $0x18] sm:$0xff]
      %v615 = vld [vmem:[%s465 + $0x20] sm:$0xff]
      %v616 = vld [vmem:[%s465 + $0x28] sm:$0xff]
      %v617 = vld [vmem:[%s465 + $0x30] sm:$0xff]
      %v618 = vld [vmem:[%s465 + $0x38] sm:$0xff]
      %v619 = vld [vmem:[%s465 + $0x40] sm:$0xff]
      %v620 = vld [vmem:[%s465 + $0x48] sm:$0xff]
      %v621 = vld [vmem:[%s465 + $0x50] sm:$0xff]
      %v622 = vld [vmem:[%s465 + $0x58] sm:$0xff]
      %v623 = vld [vmem:[%s465 + $0x60] sm:$0xff]
      %v624 = vld [vmem:[%s465 + $0x68] sm:$0xff]
      %v625 = vld [vmem:[%s465 + $0x70] sm:$0xff]
      %v626 = vld [vmem:[%s465 + $0x78] sm:$0xff]
      %v627 = vld [vmem:[%s465 + $0x80] sm:$0xff]
      %v628 = vld [vmem:[%s465 + $0x88] sm:$0xff]
      %v629 = vld [vmem:[%s465 + $0x90] sm:$0xff]
      %v630 = vld [vmem:[%s465 + $0x98] sm:$0xff]
      %v631 = vld [vmem:[%s465 + $0xa0] sm:$0xff]
      %v632 = vld [vmem:[%s465 + $0xa8] sm:$0xff]
      %v633 = vld [vmem:[%s465 + $0xb0] sm:$0xff]
      %v634 = vld [vmem:[%s465 + $0xb8] sm:$0xff]
      %v635 = vld [vmem:[%s465 + $0xc0] sm:$0xff]
      %v636 = vld [vmem:[%s465 + $0xc8] sm:$0xff]
      %v637 = vld [vmem:[%s465 + $0xd0] sm:$0xff]
      %v638 = vld [vmem:[%s465 + $0xd8] sm:$0xff]
      %v639 = vld [vmem:[%s465 + $0xe0] sm:$0xff]
      %v640 = vld [vmem:[%s465 + $0xe8] sm:$0xff]
      %v641 = vld [vmem:[%s465 + $0xf0] sm:$0xff]
      %v642 = vld [vmem:[%s465 + $0xf8] sm:$0xff]
      %v643 = vsel %vm547, 1, 0
      %v644 = vsel %vm548, 1, 0
      %v645 = vsel %vm549, 1, 0
      %v646 = vsel %vm550, 1, 0
      %v647 = vsel %vm551, 1, 0
      %v648 = vsel %vm552, 1, 0
      %v649 = vsel %vm553, 1, 0
      %v650 = vsel %vm554, 1, 0
      %v651 = vsel %vm555, 1, 0
      %v652 = vsel %vm556, 1, 0
      %v653 = vsel %vm557, 1, 0
      %v654 = vsel %vm558, 1, 0
      %v655 = vsel %vm559, 1, 0
      %v656 = vsel %vm560, 1, 0
      %v657 = vsel %vm561, 1, 0
      %v658 = vsel %vm562, 1, 0
      %v659 = vsel %vm563, 1, 0
      %v660 = vsel %vm564, 1, 0
      %v661 = vsel %vm565, 1, 0
      %v662 = vsel %vm566, 1, 0
      %v663 = vsel %vm567, 1, 0
      %v664 = vsel %vm568, 1, 0
      %v665 = vsel %vm569, 1, 0
      %v666 = vsel %vm570, 1, 0
      %v667 = vsel %vm571, 1, 0
      %v668 = vsel %vm572, 1, 0
      %v669 = vsel %vm573, 1, 0
      %v670 = vsel %vm574, 1, 0
      %v671 = vsel %vm575, 1, 0
      %v672 = vsel %vm576, 1, 0
      %v673 = vsel %vm577, 1, 0
      %v674 = vsel %vm578, 1, 0
      %vm675 = vcmp.eq.s32.totalorder %v643, 1
      %vm676 = vcmp.eq.s32.totalorder %v644, 1
      %vm677 = vcmp.eq.s32.totalorder %v645, 1
      %vm678 = vcmp.eq.s32.totalorder %v646, 1
      %vm679 = vcmp.eq.s32.totalorder %v647, 1
      %vm680 = vcmp.eq.s32.totalorder %v648, 1
      %vm681 = vcmp.eq.s32.totalorder %v649, 1
      %vm682 = vcmp.eq.s32.totalorder %v650, 1
      %vm683 = vcmp.eq.s32.totalorder %v651, 1
      %vm684 = vcmp.eq.s32.totalorder %v652, 1
      %vm685 = vcmp.eq.s32.totalorder %v653, 1
      %vm686 = vcmp.eq.s32.totalorder %v654, 1
      %vm687 = vcmp.eq.s32.totalorder %v655, 1
      %vm688 = vcmp.eq.s32.totalorder %v656, 1
      %vm689 = vcmp.eq.s32.totalorder %v657, 1
      %vm690 = vcmp.eq.s32.totalorder %v658, 1
      %vm691 = vcmp.eq.s32.totalorder %v659, 1
      %vm692 = vcmp.eq.s32.totalorder %v660, 1
      %vm693 = vcmp.eq.s32.totalorder %v661, 1
      %vm694 = vcmp.eq.s32.totalorder %v662, 1
      %vm695 = vcmp.eq.s32.totalorder %v663, 1
      %vm696 = vcmp.eq.s32.totalorder %v664, 1
      %vm697 = vcmp.eq.s32.totalorder %v665, 1
      %vm698 = vcmp.eq.s32.totalorder %v666, 1
      %vm699 = vcmp.eq.s32.totalorder %v667, 1
      %vm700 = vcmp.eq.s32.totalorder %v668, 1
      %vm701 = vcmp.eq.s32.totalorder %v669, 1
      %vm702 = vcmp.eq.s32.totalorder %v670, 1
      %vm703 = vcmp.eq.s32.totalorder %v671, 1
      %vm704 = vcmp.eq.s32.totalorder %v672, 1
      %vm705 = vcmp.eq.s32.totalorder %v673, 1
      %vm706 = vcmp.eq.s32.totalorder %v674, 1
      %v707 = vsel %vm675, %v611, 0.0
      %v708 = vsel %vm676, %v612, 0.0
      %v709 = vsel %vm677, %v613, 0.0
      %v710 = vsel %vm678, %v614, 0.0
      %v711 = vsel %vm679, %v615, 0.0
      %v712 = vsel %vm680, %v616, 0.0
      %v713 = vsel %vm681, %v617, 0.0
      %v714 = vsel %vm682, %v618, 0.0
      %v715 = vsel %vm683, %v619, 0.0
      %v716 = vsel %vm684, %v620, 0.0
      %v717 = vsel %vm685, %v621, 0.0
      %v718 = vsel %vm686, %v622, 0.0
      %v719 = vsel %vm687, %v623, 0.0
      %v720 = vsel %vm688, %v624, 0.0
      %v721 = vsel %vm689, %v625, 0.0
      %v722 = vsel %vm690, %v626, 0.0
      %v723 = vsel %vm691, %v627, 0.0
      %v724 = vsel %vm692, %v628, 0.0
      %v725 = vsel %vm693, %v629, 0.0
      %v726 = vsel %vm694, %v630, 0.0
      %v727 = vsel %vm695, %v631, 0.0
      %v728 = vsel %vm696, %v632, 0.0
      %v729 = vsel %vm697, %v633, 0.0
      %v730 = vsel %vm698, %v634, 0.0
      %v731 = vsel %vm699, %v635, 0.0
      %v732 = vsel %vm700, %v636, 0.0
      %v733 = vsel %vm701, %v637, 0.0
      %v734 = vsel %vm702, %v638, 0.0
      %v735 = vsel %vm703, %v639, 0.0
      %v736 = vsel %vm704, %v640, 0.0
      %v737 = vsel %vm705, %v641, 0.0
      %v738 = vsel %vm706, %v642, 0.0
      %v739 = vpack.c.bf16 %v708, %v707
      %v740 = vpack.c.bf16 %v710, %v709
      %v741 = vpack.c.bf16 %v712, %v711
      %v742 = vpack.c.bf16 %v714, %v713
      %v743 = vpack.c.bf16 %v716, %v715
      %v744 = vpack.c.bf16 %v718, %v717
      %v745 = vpack.c.bf16 %v720, %v719
      %v746 = vpack.c.bf16 %v722, %v721
      %v747 = vpack.c.bf16 %v724, %v723
      %v748 = vpack.c.bf16 %v726, %v725
      %v749 = vpack.c.bf16 %v728, %v727
      %v750 = vpack.c.bf16 %v730, %v729
      %v751 = vpack.c.bf16 %v732, %v731
      %v752 = vpack.c.bf16 %v734, %v733
      %v753 = vpack.c.bf16 %v736, %v735
      %v754 = vpack.c.bf16 %v738, %v737
      %v755 = vld [vmem:[%s3] sm:$0x3]
      %v756 = vld [vmem:[%s465 + $0x1] sm:$0xff]
      %v757 = vld [vmem:[%s465 + $0x9] sm:$0xff]
      %v758 = vld [vmem:[%s465 + $0x11] sm:$0xff]
      %v759 = vld [vmem:[%s465 + $0x19] sm:$0xff]
      %v760 = vld [vmem:[%s465 + $0x21] sm:$0xff]
      %v761 = vld [vmem:[%s465 + $0x29] sm:$0xff]
      %v762 = vld [vmem:[%s465 + $0x31] sm:$0xff]
      %v763 = vld [vmem:[%s465 + $0x39] sm:$0xff]
      %v764 = vld [vmem:[%s465 + $0x41] sm:$0xff]
      %v765 = vld [vmem:[%s465 + $0x49] sm:$0xff]
      %v766 = vld [vmem:[%s465 + $0x51] sm:$0xff]
      %v767 = vld [vmem:[%s465 + $0x59] sm:$0xff]
      %v768 = vld [vmem:[%s465 + $0x61] sm:$0xff]
      %v769 = vld [vmem:[%s465 + $0x69] sm:$0xff]
      %v770 = vld [vmem:[%s465 + $0x71] sm:$0xff]
      %v771 = vld [vmem:[%s465 + $0x79] sm:$0xff]
      %v772 = vld [vmem:[%s465 + $0x81] sm:$0xff]
      %v773 = vld [vmem:[%s465 + $0x89] sm:$0xff]
      %v774 = vld [vmem:[%s465 + $0x91] sm:$0xff]
      %v775 = vld [vmem:[%s465 + $0x99] sm:$0xff]
      %v776 = vld [vmem:[%s465 + $0xa1] sm:$0xff]
      %v777 = vld [vmem:[%s465 + $0xa9] sm:$0xff]
      %v778 = vld [vmem:[%s465 + $0xb1] sm:$0xff]
      %v779 = vld [vmem:[%s465 + $0xb9] sm:$0xff]
      %v780 = vld [vmem:[%s465 + $0xc1] sm:$0xff]
      %v781 = vld [vmem:[%s465 + $0xc9] sm:$0xff]
      %v782 = vld [vmem:[%s465 + $0xd1] sm:$0xff]
      %v783 = vld [vmem:[%s465 + $0xd9] sm:$0xff]
      %v784 = vld [vmem:[%s465 + $0xe1] sm:$0xff]
      %v785 = vld [vmem:[%s465 + $0xe9] sm:$0xff]
      %v786 = vld [vmem:[%s465 + $0xf1] sm:$0xff]
      %v787 = vld [vmem:[%s465 + $0xf9] sm:$0xff]
      %v788 = vpack.c.bf16 %v757, %v756
      %v789 = vpack.c.bf16 %v759, %v758
      %v790 = vpack.c.bf16 %v761, %v760
      %v791 = vpack.c.bf16 %v763, %v762
      %v792 = vpack.c.bf16 %v765, %v764
      %v793 = vpack.c.bf16 %v767, %v766
      %v794 = vpack.c.bf16 %v769, %v768
      %v795 = vpack.c.bf16 %v771, %v770
      %v796 = vpack.c.bf16 %v773, %v772
      %v797 = vpack.c.bf16 %v775, %v774
      %v798 = vpack.c.bf16 %v777, %v776
      %v799 = vpack.c.bf16 %v779, %v778
      %v800 = vpack.c.bf16 %v781, %v780
      %v801 = vpack.c.bf16 %v783, %v782
      %v802 = vpack.c.bf16 %v785, %v784
      %v803 = vpack.c.bf16 %v787, %v786
      %s804 = scalar_lea.vmem %s3, 2
      %v805 = vld [vmem:[%s804] sm:$0x3]
      %vm806 = vcmask 31744
      %v808 = vsel %vm806, %v788, 0
      %v811 = vsel %vm806, %v789, 0
      %v814 = vsel %vm806, %v790, 0
      %v817 = vsel %vm806, %v791, 0
      %v820 = vsel %vm806, %v792, 0
      %v823 = vsel %vm806, %v793, 0
      %v826 = vsel %vm806, %v794, 0
      %v829 = vsel %vm806, %v795, 0
      %v832 = vsel %vm806, %v796, 0
      %v835 = vsel %vm806, %v797, 0
      %v838 = vsel %vm806, %v798, 0
      %v841 = vsel %vm806, %v799, 0
      %v844 = vsel %vm806, %v800, 0
      %v847 = vsel %vm806, %v801, 0
      %v850 = vsel %vm806, %v802, 0
      %v853 = vsel %vm806, %v803, 0
      %vm855 = vcmask 1041408
      %v857 = vsel %vm855, %v805, 0
      %859 = vmatprep.subr.bf16.mxu0 0
      %860 = vmatpush1.bf16.msra.mxu0 %v857
      %861 = vmatprep.subr.bf16.mxu0 0
      %862 = vmatpush1.bf16.msra.mxu0 0
      %863 = vmatprep.subr.bf16.mxu0 0
      %864 = vmatpush1.bf16.msra.mxu0 0
      %865 = vmatprep.subr.bf16.mxu0 0
      %866 = vmatpush1.bf16.msra.mxu0 0
      %867 = vmatprep.subr.bf16.mxu0 0
      %868 = vmatpush1.bf16.msra.mxu0 0
      %869 = vmatprep.subr.bf16.mxu0 0
      %870 = vmatpush1.bf16.msra.mxu0 0
      %871 = vmatprep.subr.bf16.mxu0 0
      %872 = vmatpush1.bf16.msra.mxu0 0
      %873 = vmatprep.subr.bf16.mxu0 0
      %874 = vmatpush1.bf16.msra.mxu0 0
      %875 = vmatprep.subr.bf16.mxu0 0
      %876 = vmatpush1.bf16.msra.mxu0 0
      %877 = vmatprep.subr.bf16.mxu0 0
      %878 = vmatpush1.bf16.msra.mxu0 0
      %879 = vmatprep.subr.bf16.mxu0 0
      %880 = vmatpush1.bf16.msra.mxu0 0
      %881 = vmatprep.subr.bf16.mxu0 0
      %882 = vmatpush1.bf16.msra.mxu0 0
      %883 = vmatprep.subr.bf16.mxu0 0
      %884 = vmatpush1.bf16.msra.mxu0 0
      %885 = vmatprep.subr.bf16.mxu0 0
      %886 = vmatpush1.bf16.msra.mxu0 0
      %887 = vmatprep.subr.bf16.mxu0 0
      %888 = vmatpush1.bf16.msra.mxu0 0
      %889 = vmatprep.subr.bf16.mxu0 0
      %890 = vmatpush1.bf16.msra.mxu0 0
      %891 = vmatprep.mubr.bf16.mxu0 0
      %892 = vmatmul.mubr.bf16.gmra.mrb[0].mxu0 %v808
      %v893 = vpop.f32.mrb[0].mxu0
      %v894 = vadd.f32 0.0, %v893
      %v895 = vpop.f32.mrb[0].mxu0
      %v896 = vpop.f32.mrb[0].mxu0
      %v897 = vadd.f32 0.0, %v896
      %v898 = vpop.f32.mrb[0].mxu0
      %899 = vmatprep.mubr.bf16.mxu0 0
      %900 = vmatmul.mubr.bf16.gmra.mrb[0].mxu0 %v811
      %v901 = vpop.f32.mrb[0].mxu0
      %v902 = vadd.f32 0.0, %v901
      %v903 = vpop.f32.mrb[0].mxu0
      %v904 = vpop.f32.mrb[0].mxu0
      %v905 = vadd.f32 0.0, %v904
      %v906 = vpop.f32.mrb[0].mxu0
      %907 = vmatprep.mubr.bf16.mxu0 0
      %908 = vmatmul.mubr.bf16.gmra.mrb[0].mxu0 %v814
      %v909 = vpop.f32.mrb[0].mxu0
      %v910 = vadd.f32 0.0, %v909
      %v911 = vpop.f32.mrb[0].mxu0
      %v912 = vpop.f32.mrb[0].mxu0
      %v913 = vadd.f32 0.0, %v912
      %v914 = vpop.f32.mrb[0].mxu0
      %915 = vmatprep.mubr.bf16.mxu0 0
      %916 = vmatmul.mubr.bf16.gmra.mrb[0].mxu0 %v817
      %v917 = vpop.f32.mrb[0].mxu0
      %v918 = vadd.f32 0.0, %v917
      %v919 = vpop.f32.mrb[0].mxu0
      %v920 = vpop.f32.mrb[0].mxu0
      %v921 = vadd.f32 0.0, %v920
      %v922 = vpop.f32.mrb[0].mxu0
      %923 = vmatprep.mubr.bf16.mxu0 0
      %924 = vmatmul.mubr.bf16.gmra.mrb[0].mxu0 %v820
      %v925 = vpop.f32.mrb[0].mxu0
      %v926 = vadd.f32 0.0, %v925
      %v927 = vpop.f32.mrb[0].mxu0
      %v928 = vpop.f32.mrb[0].mxu0
      %v929 = vadd.f32 0.0, %v928
      %v930 = vpop.f32.mrb[0].mxu0
      %931 = vmatprep.mubr.bf16.mxu0 0
      %932 = vmatmul.mubr.bf16.gmra.mrb[0].mxu0 %v823
      %v933 = vpop.f32.mrb[0].mxu0
      %v934 = vadd.f32 0.0, %v933
      %v935 = vpop.f32.mrb[0].mxu0
      %v936 = vpop.f32.mrb[0].mxu0
      %v937 = vadd.f32 0.0, %v936
      %v938 = vpop.f32.mrb[0].mxu0
      %939 = vmatprep.mubr.bf16.mxu0 0
      %940 = vmatmul.mubr.bf16.gmra.mrb[0].mxu0 %v826
      %v941 = vpop.f32.mrb[0].mxu0
      %v942 = vadd.f32 0.0, %v941
      %v943 = vpop.f32.mrb[0].mxu0
      %v944 = vpop.f32.mrb[0].mxu0
      %v945 = vadd.f32 0.0, %v944
      %v946 = vpop.f32.mrb[0].mxu0
      %947 = vmatprep.mubr.bf16.mxu0 0
      %948 = vmatmul.mubr.bf16.gmra.mrb[0].mxu0 %v829
      %v949 = vpop.f32.mrb[0].mxu0
      %v950 = vadd.f32 0.0, %v949
      %v951 = vpop.f32.mrb[0].mxu0
      %v952 = vpop.f32.mrb[0].mxu0
      %v953 = vadd.f32 0.0, %v952
      %v954 = vpop.f32.mrb[0].mxu0
      %955 = vmatprep.mubr.bf16.mxu0 0
      %956 = vmatmul.mubr.bf16.gmra.mrb[0].mxu0 %v832
      %v957 = vpop.f32.mrb[0].mxu0
      %v958 = vadd.f32 0.0, %v957
      %v959 = vpop.f32.mrb[0].mxu0
      %v960 = vpop.f32.mrb[0].mxu0
      %v961 = vadd.f32 0.0, %v960
      %v962 = vpop.f32.mrb[0].mxu0
      %963 = vmatprep.mubr.bf16.mxu0 0
      %964 = vmatmul.mubr.bf16.gmra.mrb[0].mxu0 %v835
      %v965 = vpop.f32.mrb[0].mxu0
      %v966 = vadd.f32 0.0, %v965
      %v967 = vpop.f32.mrb[0].mxu0
      %v968 = vpop.f32.mrb[0].mxu0
      %v969 = vadd.f32 0.0, %v968
      %v970 = vpop.f32.mrb[0].mxu0
      %971 = vmatprep.mubr.bf16.mxu0 0
      %972 = vmatmul.mubr.bf16.gmra.mrb[0].mxu0 %v838
      %v973 = vpop.f32.mrb[0].mxu0
      %v974 = vadd.f32 0.0, %v973
      %v975 = vpop.f32.mrb[0].mxu0
      %v976 = vpop.f32.mrb[0].mxu0
      %v977 = vadd.f32 0.0, %v976
      %v978 = vpop.f32.mrb[0].mxu0
      %979 = vmatprep.mubr.bf16.mxu0 0
      %980 = vmatmul.mubr.bf16.gmra.mrb[0].mxu0 %v841
      %v981 = vpop.f32.mrb[0].mxu0
      %v982 = vadd.f32 0.0, %v981
      %v983 = vpop.f32.mrb[0].mxu0
      %v984 = vpop.f32.mrb[0].mxu0
      %v985 = vadd.f32 0.0, %v984
      %v986 = vpop.f32.mrb[0].mxu0
      %987 = vmatprep.mubr.bf16.mxu0 0
      %988 = vmatmul.mubr.bf16.gmra.mrb[0].mxu0 %v844
      %v989 = vpop.f32.mrb[0].mxu0
      %v990 = vadd.f32 0.0, %v989
      %v991 = vpop.f32.mrb[0].mxu0
      %v992 = vpop.f32.mrb[0].mxu0
      %v993 = vadd.f32 0.0, %v992
      %v994 = vpop.f32.mrb[0].mxu0
      %995 = vmatprep.mubr.bf16.mxu0 0
      %996 = vmatmul.mubr.bf16.gmra.mrb[0].mxu0 %v847
      %v997 = vpop.f32.mrb[0].mxu0
      %v998 = vadd.f32 0.0, %v997
      %v999 = vpop.f32.mrb[0].mxu0
      %v1000 = vpop.f32.mrb[0].mxu0
      %v1001 = vadd.f32 0.0, %v1000
      %v1002 = vpop.f32.mrb[0].mxu0
      %1003 = vmatprep.mubr.bf16.mxu0 0
      %1004 = vmatmul.mubr.bf16.gmra.mrb[0].mxu0 %v850
      %v1005 = vpop.f32.mrb[0].mxu0
      %v1006 = vadd.f32 0.0, %v1005
      %v1007 = vpop.f32.mrb[0].mxu0
      %v1008 = vpop.f32.mrb[0].mxu0
      %v1009 = vadd.f32 0.0, %v1008
      %v1010 = vpop.f32.mrb[0].mxu0
      %1011 = vmatprep.mubr.bf16.mxu0 0
      %1012 = vmatmul.mubr.bf16.gmra.mrb[0].mxu0 %v853
      %v1013 = vpop.f32.mrb[0].mxu0
      %v1014 = vadd.f32 0.0, %v1013
      %v1015 = vpop.f32.mrb[0].mxu0
      %v1016 = vpop.f32.mrb[0].mxu0
      %v1017 = vadd.f32 0.0, %v1016
      %v1018 = vpop.f32.mrb[0].mxu0
      %1019 = vdwg.mxu0
      %v1021 = vsel %vm806, %v739, 0
      %v1024 = vsel %vm806, %v740, 0
      %v1027 = vsel %vm806, %v741, 0
      %v1030 = vsel %vm806, %v742, 0
      %v1033 = vsel %vm806, %v743, 0
      %v1036 = vsel %vm806, %v744, 0
      %v1039 = vsel %vm806, %v745, 0
      %v1042 = vsel %vm806, %v746, 0
      %v1045 = vsel %vm806, %v747, 0
      %v1048 = vsel %vm806, %v748, 0
      %v1051 = vsel %vm806, %v749, 0
      %v1054 = vsel %vm806, %v750, 0
      %v1057 = vsel %vm806, %v751, 0
      %v1060 = vsel %vm806, %v752, 0
      %v1063 = vsel %vm806, %v753, 0
      %v1066 = vsel %vm806, %v754, 0
      %v1069 = vsel %vm855, %v755, 0
      %1071 = vmatprep.subr.bf16.mxu0 0
      %1072 = vmatpush1.bf16.msra.mxu0 %v1069
      %1073 = vmatprep.subr.bf16.mxu0 0
      %1074 = vmatpush1.bf16.msra.mxu0 0
      %1075 = vmatprep.subr.bf16.mxu0 0
      %1076 = vmatpush1.bf16.msra.mxu0 0
      %1077 = vmatprep.subr.bf16.mxu0 0
      %1078 = vmatpush1.bf16.msra.mxu0 0
      %1079 = vmatprep.subr.bf16.mxu0 0
      %1080 = vmatpush1.bf16.msra.mxu0 0
      %1081 = vmatprep.subr.bf16.mxu0 0
      %1082 = vmatpush1.bf16.msra.mxu0 0
      %1083 = vmatprep.subr.bf16.mxu0 0
      %1084 = vmatpush1.bf16.msra.mxu0 0
      %1085 = vmatprep.subr.bf16.mxu0 0
      %1086 = vmatpush1.bf16.msra.mxu0 0
      %1087 = vmatprep.subr.bf16.mxu0 0
      %1088 = vmatpush1.bf16.msra.mxu0 0
      %1089 = vmatprep.subr.bf16.mxu0 0
      %1090 = vmatpush1.bf16.msra.mxu0 0
      %1091 = vmatprep.subr.bf16.mxu0 0
      %1092 = vmatpush1.bf16.msra.mxu0 0
      %1093 = vmatprep.subr.bf16.mxu0 0
      %1094 = vmatpush1.bf16.msra.mxu0 0
      %1095 = vmatprep.subr.bf16.mxu0 0
      %1096 = vmatpush1.bf16.msra.mxu0 0
      %1097 = vmatprep.subr.bf16.mxu0 0
      %1098 = vmatpush1.bf16.msra.mxu0 0
      %1099 = vmatprep.subr.bf16.mxu0 0
      %1100 = vmatpush1.bf16.msra.mxu0 0
      %1101 = vmatprep.subr.bf16.mxu0 0
      %1102 = vmatpush1.bf16.msra.mxu0 0
      %1103 = vmatprep.mubr.bf16.mxu0 0
      %1104 = vmatmul.mubr.bf16.gmra.mrb[0].mxu0 %v1021
      %v1105 = vpop.f32.mrb[0].mxu0
      %v1106 = vadd.f32 %v894, %v1105
      %v1107 = vpop.f32.mrb[0].mxu0
      %v1108 = vpop.f32.mrb[0].mxu0
      %v1109 = vadd.f32 %v897, %v1108
      %v1110 = vpop.f32.mrb[0].mxu0
      %1111 = vmatprep.mubr.bf16.mxu0 0
      %1112 = vmatmul.mubr.bf16.gmra.mrb[0].mxu0 %v1024
      %v1113 = vpop.f32.mrb[0].mxu0
      %v1114 = vadd.f32 %v902, %v1113
      %v1115 = vpop.f32.mrb[0].mxu0
      %v1116 = vpop.f32.mrb[0].mxu0
      %v1117 = vadd.f32 %v905, %v1116
      %v1118 = vpop.f32.mrb[0].mxu0
      %1119 = vmatprep.mubr.bf16.mxu0 0
      %1120 = vmatmul.mubr.bf16.gmra.mrb[0].mxu0 %v1027
      %v1121 = vpop.f32.mrb[0].mxu0
      %v1122 = vadd.f32 %v910, %v1121
      %v1123 = vpop.f32.mrb[0].mxu0
      %v1124 = vpop.f32.mrb[0].mxu0
      %v1125 = vadd.f32 %v913, %v1124
      %v1126 = vpop.f32.mrb[0].mxu0
      %1127 = vmatprep.mubr.bf16.mxu0 0
      %1128 = vmatmul.mubr.bf16.gmra.mrb[0].mxu0 %v1030
      %v1129 = vpop.f32.mrb[0].mxu0
      %v1130 = vadd.f32 %v918, %v1129
      %v1131 = vpop.f32.mrb[0].mxu0
      %v1132 = vpop.f32.mrb[0].mxu0
      %v1133 = vadd.f32 %v921, %v1132
      %v1134 = vpop.f32.mrb[0].mxu0
      %1135 = vmatprep.mubr.bf16.mxu0 0
      %1136 = vmatmul.mubr.bf16.gmra.mrb[0].mxu0 %v1033
      %v1137 = vpop.f32.mrb[0].mxu0
      %v1138 = vadd.f32 %v926, %v1137
      %v1139 = vpop.f32.mrb[0].mxu0
      %v1140 = vpop.f32.mrb[0].mxu0
      %v1141 = vadd.f32 %v929, %v1140
      %v1142 = vpop.f32.mrb[0].mxu0
      %1143 = vmatprep.mubr.bf16.mxu0 0
      %1144 = vmatmul.mubr.bf16.gmra.mrb[0].mxu0 %v1036
      %v1145 = vpop.f32.mrb[0].mxu0
      %v1146 = vadd.f32 %v934, %v1145
      %v1147 = vpop.f32.mrb[0].mxu0
      %v1148 = vpop.f32.mrb[0].mxu0
      %v1149 = vadd.f32 %v937, %v1148
      %v1150 = vpop.f32.mrb[0].mxu0
      %1151 = vmatprep.mubr.bf16.mxu0 0
      %1152 = vmatmul.mubr.bf16.gmra.mrb[0].mxu0 %v1039
      %v1153 = vpop.f32.mrb[0].mxu0
      %v1154 = vadd.f32 %v942, %v1153
      %v1155 = vpop.f32.mrb[0].mxu0
      %v1156 = vpop.f32.mrb[0].mxu0
      %v1157 = vadd.f32 %v945, %v1156
      %v1158 = vpop.f32.mrb[0].mxu0
      %1159 = vmatprep.mubr.bf16.mxu0 0
      %1160 = vmatmul.mubr.bf16.gmra.mrb[0].mxu0 %v1042
      %v1161 = vpop.f32.mrb[0].mxu0
      %v1162 = vadd.f32 %v950, %v1161
      %v1163 = vpop.f32.mrb[0].mxu0
      %v1164 = vpop.f32.mrb[0].mxu0
      %v1165 = vadd.f32 %v953, %v1164
      %v1166 = vpop.f32.mrb[0].mxu0
      %1167 = vmatprep.mubr.bf16.mxu0 0
      %1168 = vmatmul.mubr.bf16.gmra.mrb[0].mxu0 %v1045
      %v1169 = vpop.f32.mrb[0].mxu0
      %v1170 = vadd.f32 %v958, %v1169
      %v1171 = vpop.f32.mrb[0].mxu0
      %v1172 = vpop.f32.mrb[0].mxu0
      %v1173 = vadd.f32 %v961, %v1172
      %v1174 = vpop.f32.mrb[0].mxu0
      %1175 = vmatprep.mubr.bf16.mxu0 0
      %1176 = vmatmul.mubr.bf16.gmra.mrb[0].mxu0 %v1048
      %v1177 = vpop.f32.mrb[0].mxu0
      %v1178 = vadd.f32 %v966, %v1177
      %v1179 = vpop.f32.mrb[0].mxu0
      %v1180 = vpop.f32.mrb[0].mxu0
      %v1181 = vadd.f32 %v969, %v1180
      %v1182 = vpop.f32.mrb[0].mxu0
      %1183 = vmatprep.mubr.bf16.mxu0 0
      %1184 = vmatmul.mubr.bf16.gmra.mrb[0].mxu0 %v1051
      %v1185 = vpop.f32.mrb[0].mxu0
      %v1186 = vadd.f32 %v974, %v1185
      %v1187 = vpop.f32.mrb[0].mxu0
      %v1188 = vpop.f32.mrb[0].mxu0
      %v1189 = vadd.f32 %v977, %v1188
      %v1190 = vpop.f32.mrb[0].mxu0
      %1191 = vmatprep.mubr.bf16.mxu0 0
      %1192 = vmatmul.mubr.bf16.gmra.mrb[0].mxu0 %v1054
      %v1193 = vpop.f32.mrb[0].mxu0
      %v1194 = vadd.f32 %v982, %v1193
      %v1195 = vpop.f32.mrb[0].mxu0
      %v1196 = vpop.f32.mrb[0].mxu0
      %v1197 = vadd.f32 %v985, %v1196
      %v1198 = vpop.f32.mrb[0].mxu0
      %1199 = vmatprep.mubr.bf16.mxu0 0
      %1200 = vmatmul.mubr.bf16.gmra.mrb[0].mxu0 %v1057
      %v1201 = vpop.f32.mrb[0].mxu0
      %v1202 = vadd.f32 %v990, %v1201
      %v1203 = vpop.f32.mrb[0].mxu0
      %v1204 = vpop.f32.mrb[0].mxu0
      %v1205 = vadd.f32 %v993, %v1204
      %v1206 = vpop.f32.mrb[0].mxu0
      %1207 = vmatprep.mubr.bf16.mxu0 0
      %1208 = vmatmul.mubr.bf16.gmra.mrb[0].mxu0 %v1060
      %v1209 = vpop.f32.mrb[0].mxu0
      %v1210 = vadd.f32 %v998, %v1209
      %v1211 = vpop.f32.mrb[0].mxu0
      %v1212 = vpop.f32.mrb[0].mxu0
      %v1213 = vadd.f32 %v1001, %v1212
      %v1214 = vpop.f32.mrb[0].mxu0
      %1215 = vmatprep.mubr.bf16.mxu0 0
      %1216 = vmatmul.mubr.bf16.gmra.mrb[0].mxu0 %v1063
      %v1217 = vpop.f32.mrb[0].mxu0
      %v1218 = vadd.f32 %v1006, %v1217
      %v1219 = vpop.f32.mrb[0].mxu0
      %v1220 = vpop.f32.mrb[0].mxu0
      %v1221 = vadd.f32 %v1009, %v1220
      %v1222 = vpop.f32.mrb[0].mxu0
      %1223 = vmatprep.mubr.bf16.mxu0 0
      %1224 = vmatmul.mubr.bf16.gmra.mrb[0].mxu0 %v1066
      %v1225 = vpop.f32.mrb[0].mxu0
      %v1226 = vadd.f32 %v1014, %v1225
      %v1227 = vpop.f32.mrb[0].mxu0
      %v1228 = vpop.f32.mrb[0].mxu0
      %v1229 = vadd.f32 %v1017, %v1228
      %v1230 = vpop.f32.mrb[0].mxu0
      %1231 = vdwg.mxu0
      %v1232 = vld [vmem:[%s465 + $0x2] sm:$0xff]
      %v1233 = vld [vmem:[%s465 + $0xa] sm:$0xff]
      %v1234 = vld [vmem:[%s465 + $0x12] sm:$0xff]
      %v1235 = vld [vmem:[%s465 + $0x1a] sm:$0xff]
      %v1236 = vld [vmem:[%s465 + $0x22] sm:$0xff]
      %v1237 = vld [vmem:[%s465 + $0x2a] sm:$0xff]
      %v1238 = vld [vmem:[%s465 + $0x32] sm:$0xff]
      %v1239 = vld [vmem:[%s465 + $0x3a] sm:$0xff]
      %v1240 = vld [vmem:[%s465 + $0x42] sm:$0xff]
      %v1241 = vld [vmem:[%s465 + $0x4a] sm:$0xff]
      %v1242 = vld [vmem:[%s465 + $0x52] sm:$0xff]
      %v1243 = vld [vmem:[%s465 + $0x5a] sm:$0xff]
      %v1244 = vld [vmem:[%s465 + $0x62] sm:$0xff]
      %v1245 = vld [vmem:[%s465 + $0x6a] sm:$0xff]
      %v1246 = vld [vmem:[%s465 + $0x72] sm:$0xff]
      %v1247 = vld [vmem:[%s465 + $0x7a] sm:$0xff]
      %v1248 = vld [vmem:[%s465 + $0x82] sm:$0xff]
      %v1249 = vld [vmem:[%s465 + $0x8a] sm:$0xff]
      %v1250 = vld [vmem:[%s465 + $0x92] sm:$0xff]
      %v1251 = vld [vmem:[%s465 + $0x9a] sm:$0xff]
      %v1252 = vld [vmem:[%s465 + $0xa2] sm:$0xff]
      %v1253 = vld [vmem:[%s465 + $0xaa] sm:$0xff]
      %v1254 = vld [vmem:[%s465 + $0xb2] sm:$0xff]
      %v1255 = vld [vmem:[%s465 + $0xba] sm:$0xff]
      %v1256 = vld [vmem:[%s465 + $0xc2] sm:$0xff]
      %v1257 = vld [vmem:[%s465 + $0xca] sm:$0xff]
      %v1258 = vld [vmem:[%s465 + $0xd2] sm:$0xff]
      %v1259 = vld [vmem:[%s465 + $0xda] sm:$0xff]
      %v1260 = vld [vmem:[%s465 + $0xe2] sm:$0xff]
      %v1261 = vld [vmem:[%s465 + $0xea] sm:$0xff]
      %v1262 = vld [vmem:[%s465 + $0xf2] sm:$0xff]
      %v1263 = vld [vmem:[%s465 + $0xfa] sm:$0xff]
      %v1264 = vsel %vm579, 1, 0
      %v1265 = vsel %vm580, 1, 0
      %v1266 = vsel %vm581, 1, 0
      %v1267 = vsel %vm582, 1, 0
      %v1268 = vsel %vm583, 1, 0
      %v1269 = vsel %vm584, 1, 0
      %v1270 = vsel %vm585, 1, 0
      %v1271 = vsel %vm586, 1, 0
      %v1272 = vsel %vm587, 1, 0
      %v1273 = vsel %vm588, 1, 0
      %v1274 = vsel %vm589, 1, 0
      %v1275 = vsel %vm590, 1, 0
      %v1276 = vsel %vm591, 1, 0
      %v1277 = vsel %vm592, 1, 0
      %v1278 = vsel %vm593, 1, 0
      %v1279 = vsel %vm594, 1, 0
      %v1280 = vsel %vm595, 1, 0
      %v1281 = vsel %vm596, 1, 0
      %v1282 = vsel %vm597, 1, 0
      %v1283 = vsel %vm598, 1, 0
      %v1284 = vsel %vm599, 1, 0
      %v1285 = vsel %vm600, 1, 0
      %v1286 = vsel %vm601, 1, 0
      %v1287 = vsel %vm602, 1, 0
      %v1288 = vsel %vm603, 1, 0
      %v1289 = vsel %vm604, 1, 0
      %v1290 = vsel %vm605, 1, 0
      %v1291 = vsel %vm606, 1, 0
      %v1292 = vsel %vm607, 1, 0
      %v1293 = vsel %vm608, 1, 0
      %v1294 = vsel %vm609, 1, 0
      %v1295 = vsel %vm610, 1, 0
      %vm1296 = vcmp.eq.s32.totalorder %v1264, 1
      %vm1297 = vcmp.eq.s32.totalorder %v1265, 1
      %vm1298 = vcmp.eq.s32.totalorder %v1266, 1
      %vm1299 = vcmp.eq.s32.totalorder %v1267, 1
      %vm1300 = vcmp.eq.s32.totalorder %v1268, 1
      %vm1301 = vcmp.eq.s32.totalorder %v1269, 1
      %vm1302 = vcmp.eq.s32.totalorder %v1270, 1
      %vm1303 = vcmp.eq.s32.totalorder %v1271, 1
      %vm1304 = vcmp.eq.s32.totalorder %v1272, 1
      %vm1305 = vcmp.eq.s32.totalorder %v1273, 1
      %vm1306 = vcmp.eq.s32.totalorder %v1274, 1
      %vm1307 = vcmp.eq.s32.totalorder %v1275, 1
      %vm1308 = vcmp.eq.s32.totalorder %v1276, 1
      %vm1309 = vcmp.eq.s32.totalorder %v1277, 1
      %vm1310 = vcmp.eq.s32.totalorder %v1278, 1
      %vm1311 = vcmp.eq.s32.totalorder %v1279, 1
      %vm1312 = vcmp.eq.s32.totalorder %v1280, 1
      %vm1313 = vcmp.eq.s32.totalorder %v1281, 1
      %vm1314 = vcmp.eq.s32.totalorder %v1282, 1
      %vm1315 = vcmp.eq.s32.totalorder %v1283, 1
      %vm1316 = vcmp.eq.s32.totalorder %v1284, 1
      %vm1317 = vcmp.eq.s32.totalorder %v1285, 1
      %vm1318 = vcmp.eq.s32.totalorder %v1286, 1
      %vm1319 = vcmp.eq.s32.totalorder %v1287, 1
      %vm1320 = vcmp.eq.s32.totalorder %v1288, 1
      %vm1321 = vcmp.eq.s32.totalorder %v1289, 1
      %vm1322 = vcmp.eq.s32.totalorder %v1290, 1
      %vm1323 = vcmp.eq.s32.totalorder %v1291, 1
      %vm1324 = vcmp.eq.s32.totalorder %v1292, 1
      %vm1325 = vcmp.eq.s32.totalorder %v1293, 1
      %vm1326 = vcmp.eq.s32.totalorder %v1294, 1
      %vm1327 = vcmp.eq.s32.totalorder %v1295, 1
      %v1328 = vsel %vm1296, %v1232, 0.0
      %v1329 = vsel %vm1297, %v1233, 0.0
      %v1330 = vsel %vm1298, %v1234, 0.0
      %v1331 = vsel %vm1299, %v1235, 0.0
      %v1332 = vsel %vm1300, %v1236, 0.0
      %v1333 = vsel %vm1301, %v1237, 0.0
      %v1334 = vsel %vm1302, %v1238, 0.0
      %v1335 = vsel %vm1303, %v1239, 0.0
      %v1336 = vsel %vm1304, %v1240, 0.0
      %v1337 = vsel %vm1305, %v1241, 0.0
      %v1338 = vsel %vm1306, %v1242, 0.0
      %v1339 = vsel %vm1307, %v1243, 0.0
      %v1340 = vsel %vm1308, %v1244, 0.0
      %v1341 = vsel %vm1309, %v1245, 0.0
      %v1342 = vsel %vm1310, %v1246, 0.0
      %v1343 = vsel %vm1311, %v1247, 0.0
      %v1344 = vsel %vm1312, %v1248, 0.0
      %v1345 = vsel %vm1313, %v1249, 0.0
      %v1346 = vsel %vm1314, %v1250, 0.0
      %v1347 = vsel %vm1315, %v1251, 0.0
      %v1348 = vsel %vm1316, %v1252, 0.0
      %v1349 = vsel %vm1317, %v1253, 0.0
      %v1350 = vsel %vm1318, %v1254, 0.0
      %v1351 = vsel %vm1319, %v1255, 0.0
      %v1352 = vsel %vm1320, %v1256, 0.0
      %v1353 = vsel %vm1321, %v1257, 0.0
      %v1354 = vsel %vm1322, %v1258, 0.0
      %v1355 = vsel %vm1323, %v1259, 0.0
      %v1356 = vsel %vm1324, %v1260, 0.0
      %v1357 = vsel %vm1325, %v1261, 0.0
      %v1358 = vsel %vm1326, %v1262, 0.0
      %v1359 = vsel %vm1327, %v1263, 0.0
      %v1360 = vpack.c.bf16 %v1329, %v1328
      %v1361 = vpack.c.bf16 %v1331, %v1330
      %v1362 = vpack.c.bf16 %v1333, %v1332
      %v1363 = vpack.c.bf16 %v1335, %v1334
      %v1364 = vpack.c.bf16 %v1337, %v1336
      %v1365 = vpack.c.bf16 %v1339, %v1338
      %v1366 = vpack.c.bf16 %v1341, %v1340
      %v1367 = vpack.c.bf16 %v1343, %v1342
      %v1368 = vpack.c.bf16 %v1345, %v1344
      %v1369 = vpack.c.bf16 %v1347, %v1346
      %v1370 = vpack.c.bf16 %v1349, %v1348
      %v1371 = vpack.c.bf16 %v1351, %v1350
      %v1372 = vpack.c.bf16 %v1353, %v1352
      %v1373 = vpack.c.bf16 %v1355, %v1354
      %v1374 = vpack.c.bf16 %v1357, %v1356
      %v1375 = vpack.c.bf16 %v1359, %v1358
      %s1376 = scalar_lea.vmem %s3, 4
      %v1377 = vld [vmem:[%s1376] sm:$0x3]
      %v1379 = vsel %vm806, %v1360, 0
      %v1382 = vsel %vm806, %v1361, 0
      %v1385 = vsel %vm806, %v1362, 0
      %v1388 = vsel %vm806, %v1363, 0
      %v1391 = vsel %vm806, %v1364, 0
      %v1394 = vsel %vm806, %v1365, 0
      %v1397 = vsel %vm806, %v1366, 0
      %v1400 = vsel %vm806, %v1367, 0
      %v1403 = vsel %vm806, %v1368, 0
      %v1406 = vsel %vm806, %v1369, 0
      %v1409 = vsel %vm806, %v1370, 0
      %v1412 = vsel %vm806, %v1371, 0
      %v1415 = vsel %vm806, %v1372, 0
      %v1418 = vsel %vm806, %v1373, 0
      %v1421 = vsel %vm806, %v1374, 0
      %v1424 = vsel %vm806, %v1375, 0
      %v1427 = vsel %vm855, %v1377, 0
      %1429 = vmatprep.subr.bf16.mxu0 0
      %1430 = vmatpush1.bf16.msra.mxu0 %v1427
      %1431 = vmatprep.subr.bf16.mxu0 0
      %1432 = vmatpush1.bf16.msra.mxu0 0
      %1433 = vmatprep.subr.bf16.mxu0 0
      %1434 = vmatpush1.bf16.msra.mxu0 0
      %1435 = vmatprep.subr.bf16.mxu0 0
      %1436 = vmatpush1.bf16.msra.mxu0 0
      %1437 = vmatprep.subr.bf16.mxu0 0
      %1438 = vmatpush1.bf16.msra.mxu0 0
      %1439 = vmatprep.subr.bf16.mxu0 0
      %1440 = vmatpush1.bf16.msra.mxu0 0
      %1441 = vmatprep.subr.bf16.mxu0 0
      %1442 = vmatpush1.bf16.msra.mxu0 0
      %1443 = vmatprep.subr.bf16.mxu0 0
      %1444 = vmatpush1.bf16.msra.mxu0 0
      %1445 = vmatprep.subr.bf16.mxu0 0
      %1446 = vmatpush1.bf16.msra.mxu0 0
      %1447 = vmatprep.subr.bf16.mxu0 0
      %1448 = vmatpush1.bf16.msra.mxu0 0
      %1449 = vmatprep.subr.bf16.mxu0 0
      %1450 = vmatpush1.bf16.msra.mxu0 0
      %1451 = vmatprep.subr.bf16.mxu0 0
      %1452 = vmatpush1.bf16.msra.mxu0 0
      %1453 = vmatprep.subr.bf16.mxu0 0
      %1454 = vmatpush1.bf16.msra.mxu0 0
      %1455 = vmatprep.subr.bf16.mxu0 0
      %1456 = vmatpush1.bf16.msra.mxu0 0
      %1457 = vmatprep.subr.bf16.mxu0 0
      %1458 = vmatpush1.bf16.msra.mxu0 0
      %1459 = vmatprep.subr.bf16.mxu0 0
      %1460 = vmatpush1.bf16.msra.mxu0 0
      %1461 = vmatprep.mubr.bf16.mxu0 0
      %1462 = vmatmul.mubr.bf16.gmra.mrb[0].mxu0 %v1379
      %v1463 = vpop.f32.mrb[0].mxu0
      %v1464 = vadd.f32 0.0, %v1463
      %v1465 = vpop.f32.mrb[0].mxu0
      %v1466 = vpop.f32.mrb[0].mxu0
      %v1467 = vadd.f32 0.0, %v1466
      %v1468 = vpop.f32.mrb[0].mxu0
      %1469 = vmatprep.mubr.bf16.mxu0 0
      %1470 = vmatmul.mubr.bf16.gmra.mrb[0].mxu0 %v1382
      %v1471 = vpop.f32.mrb[0].mxu0
      %v1472 = vadd.f32 0.0, %v1471
      %v1473 = vpop.f32.mrb[0].mxu0
      %v1474 = vpop.f32.mrb[0].mxu0
      %v1475 = vadd.f32 0.0, %v1474
      %v1476 = vpop.f32.mrb[0].mxu0
      %1477 = vmatprep.mubr.bf16.mxu0 0
      %1478 = vmatmul.mubr.bf16.gmra.mrb[0].mxu0 %v1385
      %v1479 = vpop.f32.mrb[0].mxu0
      %v1480 = vadd.f32 0.0, %v1479
      %v1481 = vpop.f32.mrb[0].mxu0
      %v1482 = vpop.f32.mrb[0].mxu0
      %v1483 = vadd.f32 0.0, %v1482
      %v1484 = vpop.f32.mrb[0].mxu0
      %1485 = vmatprep.mubr.bf16.mxu0 0
      %1486 = vmatmul.mubr.bf16.gmra.mrb[0].mxu0 %v1388
      %v1487 = vpop.f32.mrb[0].mxu0
      %v1488 = vadd.f32 0.0, %v1487
      %v1489 = vpop.f32.mrb[0].mxu0
      %v1490 = vpop.f32.mrb[0].mxu0
      %v1491 = vadd.f32 0.0, %v1490
      %v1492 = vpop.f32.mrb[0].mxu0
      %1493 = vmatprep.mubr.bf16.mxu0 0
      %1494 = vmatmul.mubr.bf16.gmra.mrb[0].mxu0 %v1391
      %v1495 = vpop.f32.mrb[0].mxu0
      %v1496 = vadd.f32 0.0, %v1495
      %v1497 = vpop.f32.mrb[0].mxu0
      %v1498 = vpop.f32.mrb[0].mxu0
      %v1499 = vadd.f32 0.0, %v1498
      %v1500 = vpop.f32.mrb[0].mxu0
      %1501 = vmatprep.mubr.bf16.mxu0 0
      %1502 = vmatmul.mubr.bf16.gmra.mrb[0].mxu0 %v1394
      %v1503 = vpop.f32.mrb[0].mxu0
      %v1504 = vadd.f32 0.0, %v1503
      %v1505 = vpop.f32.mrb[0].mxu0
      %v1506 = vpop.f32.mrb[0].mxu0
      %v1507 = vadd.f32 0.0, %v1506
      %v1508 = vpop.f32.mrb[0].mxu0
      %1509 = vmatprep.mubr.bf16.mxu0 0
      %1510 = vmatmul.mubr.bf16.gmra.mrb[0].mxu0 %v1397
      %v1511 = vpop.f32.mrb[0].mxu0
      %v1512 = vadd.f32 0.0, %v1511
      %v1513 = vpop.f32.mrb[0].mxu0
      %v1514 = vpop.f32.mrb[0].mxu0
      %v1515 = vadd.f32 0.0, %v1514
      %v1516 = vpop.f32.mrb[0].mxu0
      %1517 = vmatprep.mubr.bf16.mxu0 0
      %1518 = vmatmul.mubr.bf16.gmra.mrb[0].mxu0 %v1400
      %v1519 = vpop.f32.mrb[0].mxu0
      %v1520 = vadd.f32 0.0, %v1519
      %v1521 = vpop.f32.mrb[0].mxu0
      %v1522 = vpop.f32.mrb[0].mxu0
      %v1523 = vadd.f32 0.0, %v1522
      %v1524 = vpop.f32.mrb[0].mxu0
      %1525 = vmatprep.mubr.bf16.mxu0 0
      %1526 = vmatmul.mubr.bf16.gmra.mrb[0].mxu0 %v1403
      %v1527 = vpop.f32.mrb[0].mxu0
      %v1528 = vadd.f32 0.0, %v1527
      %v1529 = vpop.f32.mrb[0].mxu0
      %v1530 = vpop.f32.mrb[0].mxu0
      %v1531 = vadd.f32 0.0, %v1530
      %v1532 = vpop.f32.mrb[0].mxu0
      %1533 = vmatprep.mubr.bf16.mxu0 0
      %1534 = vmatmul.mubr.bf16.gmra.mrb[0].mxu0 %v1406
      %v1535 = vpop.f32.mrb[0].mxu0
      %v1536 = vadd.f32 0.0, %v1535
      %v1537 = vpop.f32.mrb[0].mxu0
      %v1538 = vpop.f32.mrb[0].mxu0
      %v1539 = vadd.f32 0.0, %v1538
      %v1540 = vpop.f32.mrb[0].mxu0
      %1541 = vmatprep.mubr.bf16.mxu0 0
      %1542 = vmatmul.mubr.bf16.gmra.mrb[0].mxu0 %v1409
      %v1543 = vpop.f32.mrb[0].mxu0
      %v1544 = vadd.f32 0.0, %v1543
      %v1545 = vpop.f32.mrb[0].mxu0
      %v1546 = vpop.f32.mrb[0].mxu0
      %v1547 = vadd.f32 0.0, %v1546
      %v1548 = vpop.f32.mrb[0].mxu0
      %1549 = vmatprep.mubr.bf16.mxu0 0
      %1550 = vmatmul.mubr.bf16.gmra.mrb[0].mxu0 %v1412
      %v1551 = vpop.f32.mrb[0].mxu0
      %v1552 = vadd.f32 0.0, %v1551
      %v1553 = vpop.f32.mrb[0].mxu0
      %v1554 = vpop.f32.mrb[0].mxu0
      %v1555 = vadd.f32 0.0, %v1554
      %v1556 = vpop.f32.mrb[0].mxu0
      %1557 = vmatprep.mubr.bf16.mxu0 0
      %1558 = vmatmul.mubr.bf16.gmra.mrb[0].mxu0 %v1415
      %v1559 = vpop.f32.mrb[0].mxu0
      %v1560 = vadd.f32 0.0, %v1559
      %v1561 = vpop.f32.mrb[0].mxu0
      %v1562 = vpop.f32.mrb[0].mxu0
      %v1563 = vadd.f32 0.0, %v1562
      %v1564 = vpop.f32.mrb[0].mxu0
      %1565 = vmatprep.mubr.bf16.mxu0 0
      %1566 = vmatmul.mubr.bf16.gmra.mrb[0].mxu0 %v1418
      %v1567 = vpop.f32.mrb[0].mxu0
      %v1568 = vadd.f32 0.0, %v1567
      %v1569 = vpop.f32.mrb[0].mxu0
      %v1570 = vpop.f32.mrb[0].mxu0
      %v1571 = vadd.f32 0.0, %v1570
      %v1572 = vpop.f32.mrb[0].mxu0
      %1573 = vmatprep.mubr.bf16.mxu0 0
      %1574 = vmatmul.mubr.bf16.gmra.mrb[0].mxu0 %v1421
      %v1575 = vpop.f32.mrb[0].mxu0
      %v1576 = vadd.f32 0.0, %v1575
      %v1577 = vpop.f32.mrb[0].mxu0
      %v1578 = vpop.f32.mrb[0].mxu0
      %v1579 = vadd.f32 0.0, %v1578
      %v1580 = vpop.f32.mrb[0].mxu0
      %1581 = vmatprep.mubr.bf16.mxu0 0
      %1582 = vmatmul.mubr.bf16.gmra.mrb[0].mxu0 %v1424
      %v1583 = vpop.f32.mrb[0].mxu0
      %v1584 = vadd.f32 0.0, %v1583
      %v1585 = vpop.f32.mrb[0].mxu0
      %v1586 = vpop.f32.mrb[0].mxu0
      %v1587 = vadd.f32 0.0, %v1586
      %v1588 = vpop.f32.mrb[0].mxu0
      %1589 = vdwg.mxu0
      %v1590 = vadd.f32 %v1106, %v1464
      %v1591 = vadd.f32 %v1109, %v1467
      %v1592 = vadd.f32 %v1114, %v1472
      %v1593 = vadd.f32 %v1117, %v1475
      %v1594 = vadd.f32 %v1122, %v1480
      %v1595 = vadd.f32 %v1125, %v1483
      %v1596 = vadd.f32 %v1130, %v1488
      %v1597 = vadd.f32 %v1133, %v1491
      %v1598 = vadd.f32 %v1138, %v1496
      %v1599 = vadd.f32 %v1141, %v1499
      %v1600 = vadd.f32 %v1146, %v1504
      %v1601 = vadd.f32 %v1149, %v1507
      %v1602 = vadd.f32 %v1154, %v1512
      %v1603 = vadd.f32 %v1157, %v1515
      %v1604 = vadd.f32 %v1162, %v1520
      %v1605 = vadd.f32 %v1165, %v1523
      %v1606 = vadd.f32 %v1170, %v1528
      %v1607 = vadd.f32 %v1173, %v1531
      %v1608 = vadd.f32 %v1178, %v1536
      %v1609 = vadd.f32 %v1181, %v1539
      %v1610 = vadd.f32 %v1186, %v1544
      %v1611 = vadd.f32 %v1189, %v1547
      %v1612 = vadd.f32 %v1194, %v1552
      %v1613 = vadd.f32 %v1197, %v1555
      %v1614 = vadd.f32 %v1202, %v1560
      %v1615 = vadd.f32 %v1205, %v1563
      %v1616 = vadd.f32 %v1210, %v1568
      %v1617 = vadd.f32 %v1213, %v1571
      %v1618 = vadd.f32 %v1218, %v1576
      %v1619 = vadd.f32 %v1221, %v1579
      %v1620 = vadd.f32 %v1226, %v1584
      %v1621 = vadd.f32 %v1229, %v1587
      %v1622 = vld [vmem:[%s465 + $0x10] sm:$0xff]
      %v1623 = vld [vmem:[%s465 + $0x18] sm:$0xff]
      %v1624 = vld [vmem:[%s465 + $0x20] sm:$0xff]
      %v1625 = vld [vmem:[%s465 + $0x28] sm:$0xff]
      %v1626 = vld [vmem:[%s465 + $0x30] sm:$0xff]
      %v1627 = vld [vmem:[%s465 + $0x38] sm:$0xff]
      %v1628 = vld [vmem:[%s465 + $0x40] sm:$0xff]
      %v1629 = vld [vmem:[%s465 + $0x48] sm:$0xff]
      %v1630 = vld [vmem:[%s465 + $0x50] sm:$0xff]
      %v1631 = vld [vmem:[%s465 + $0x58] sm:$0xff]
      %v1632 = vld [vmem:[%s465 + $0x60] sm:$0xff]
      %v1633 = vld [vmem:[%s465 + $0x68] sm:$0xff]
      %v1634 = vld [vmem:[%s465 + $0x70] sm:$0xff]
      %v1635 = vld [vmem:[%s465 + $0x78] sm:$0xff]
      %v1636 = vld [vmem:[%s465 + $0x80] sm:$0xff]
      %v1637 = vld [vmem:[%s465 + $0x88] sm:$0xff]
      %v1638 = vld [vmem:[%s465 + $0x90] sm:$0xff]
      %v1639 = vld [vmem:[%s465 + $0x98] sm:$0xff]
      %v1640 = vld [vmem:[%s465 + $0xa0] sm:$0xff]
      %v1641 = vld [vmem:[%s465 + $0xa8] sm:$0xff]
      %v1642 = vld [vmem:[%s465 + $0xb0] sm:$0xff]
      %v1643 = vld [vmem:[%s465 + $0xb8] sm:$0xff]
      %v1644 = vld [vmem:[%s465 + $0xc0] sm:$0xff]
      %v1645 = vld [vmem:[%s465 + $0xc8] sm:$0xff]
      %v1646 = vld [vmem:[%s465 + $0xd0] sm:$0xff]
      %v1647 = vld [vmem:[%s465 + $0xd8] sm:$0xff]
      %v1648 = vld [vmem:[%s465 + $0xe0] sm:$0xff]
      %v1649 = vld [vmem:[%s465 + $0xe8] sm:$0xff]
      %v1650 = vld [vmem:[%s465 + $0xf0] sm:$0xff]
      %v1651 = vld [vmem:[%s465 + $0xf8] sm:$0xff]
      %v1652 = vld [vmem:[%s465 + $0x100] sm:$0xff]
      %v1653 = vld [vmem:[%s465 + $0x108] sm:$0xff]
      %v1654 = vsel %vm675, %v1622, 0.0
      %v1655 = vsel %vm676, %v1623, 0.0
      %v1656 = vsel %vm677, %v1624, 0.0
      %v1657 = vsel %vm678, %v1625, 0.0
      %v1658 = vsel %vm679, %v1626, 0.0
      %v1659 = vsel %vm680, %v1627, 0.0
      %v1660 = vsel %vm681, %v1628, 0.0
      %v1661 = vsel %vm682, %v1629, 0.0
      %v1662 = vsel %vm683, %v1630, 0.0
      %v1663 = vsel %vm684, %v1631, 0.0
      %v1664 = vsel %vm685, %v1632, 0.0
      %v1665 = vsel %vm686, %v1633, 0.0
      %v1666 = vsel %vm687, %v1634, 0.0
      %v1667 = vsel %vm688, %v1635, 0.0
      %v1668 = vsel %vm689, %v1636, 0.0
      %v1669 = vsel %vm690, %v1637, 0.0
      %v1670 = vsel %vm691, %v1638, 0.0
      %v1671 = vsel %vm692, %v1639, 0.0
      %v1672 = vsel %vm693, %v1640, 0.0
      %v1673 = vsel %vm694, %v1641, 0.0
      %v1674 = vsel %vm695, %v1642, 0.0
      %v1675 = vsel %vm696, %v1643, 0.0
      %v1676 = vsel %vm697, %v1644, 0.0
      %v1677 = vsel %vm698, %v1645, 0.0
      %v1678 = vsel %vm699, %v1646, 0.0
      %v1679 = vsel %vm700, %v1647, 0.0
      %v1680 = vsel %vm701, %v1648, 0.0
      %v1681 = vsel %vm702, %v1649, 0.0
      %v1682 = vsel %vm703, %v1650, 0.0
      %v1683 = vsel %vm704, %v1651, 0.0
      %v1684 = vsel %vm705, %v1652, 0.0
      %v1685 = vsel %vm706, %v1653, 0.0
      %v1686 = vpack.c.bf16 %v1655, %v1654
      %v1687 = vpack.c.bf16 %v1657, %v1656
      %v1688 = vpack.c.bf16 %v1659, %v1658
      %v1689 = vpack.c.bf16 %v1661, %v1660
      %v1690 = vpack.c.bf16 %v1663, %v1662
      %v1691 = vpack.c.bf16 %v1665, %v1664
      %v1692 = vpack.c.bf16 %v1667, %v1666
      %v1693 = vpack.c.bf16 %v1669, %v1668
      %v1694 = vpack.c.bf16 %v1671, %v1670
      %v1695 = vpack.c.bf16 %v1673, %v1672
      %v1696 = vpack.c.bf16 %v1675, %v1674
      %v1697 = vpack.c.bf16 %v1677, %v1676
      %v1698 = vpack.c.bf16 %v1679, %v1678
      %v1699 = vpack.c.bf16 %v1681, %v1680
      %v1700 = vpack.c.bf16 %v1683, %v1682
      %v1701 = vpack.c.bf16 %v1685, %v1684
      %s1702 = scalar_lea.vmem %s3, 6
      %v1703 = vld [vmem:[%s1702] sm:$0x3]
      %v1705 = vsel %vm806, %v1686, 0
      %v1708 = vsel %vm806, %v1687, 0
      %v1711 = vsel %vm806, %v1688, 0
      %v1714 = vsel %vm806, %v1689, 0
      %v1717 = vsel %vm806, %v1690, 0
      %v1720 = vsel %vm806, %v1691, 0
      %v1723 = vsel %vm806, %v1692, 0
      %v1726 = vsel %vm806, %v1693, 0
      %v1729 = vsel %vm806, %v1694, 0
      %v1732 = vsel %vm806, %v1695, 0
      %v1735 = vsel %vm806, %v1696, 0
      %v1738 = vsel %vm806, %v1697, 0
      %v1741 = vsel %vm806, %v1698, 0
      %v1744 = vsel %vm806, %v1699, 0
      %v1747 = vsel %vm806, %v1700, 0
      %v1750 = vsel %vm806, %v1701, 0
      %v1753 = vsel %vm855, %v1703, 0
      %1755 = vmatprep.subr.bf16.mxu0 0
      %1756 = vmatpush1.bf16.msra.mxu0 %v1753
      %1757 = vmatprep.subr.bf16.mxu0 0
      %1758 = vmatpush1.bf16.msra.mxu0 0
      %1759 = vmatprep.subr.bf16.mxu0 0
      %1760 = vmatpush1.bf16.msra.mxu0 0
      %1761 = vmatprep.subr.bf16.mxu0 0
      %1762 = vmatpush1.bf16.msra.mxu0 0
      %1763 = vmatprep.subr.bf16.mxu0 0
      %1764 = vmatpush1.bf16.msra.mxu0 0
      %1765 = vmatprep.subr.bf16.mxu0 0
      %1766 = vmatpush1.bf16.msra.mxu0 0
      %1767 = vmatprep.subr.bf16.mxu0 0
      %1768 = vmatpush1.bf16.msra.mxu0 0
      %1769 = vmatprep.subr.bf16.mxu0 0
      %1770 = vmatpush1.bf16.msra.mxu0 0
      %1771 = vmatprep.subr.bf16.mxu0 0
      %1772 = vmatpush1.bf16.msra.mxu0 0
      %1773 = vmatprep.subr.bf16.mxu0 0
      %1774 = vmatpush1.bf16.msra.mxu0 0
      %1775 = vmatprep.subr.bf16.mxu0 0
      %1776 = vmatpush1.bf16.msra.mxu0 0
      %1777 = vmatprep.subr.bf16.mxu0 0
      %1778 = vmatpush1.bf16.msra.mxu0 0
      %1779 = vmatprep.subr.bf16.mxu0 0
      %1780 = vmatpush1.bf16.msra.mxu0 0
      %1781 = vmatprep.subr.bf16.mxu0 0
      %1782 = vmatpush1.bf16.msra.mxu0 0
      %1783 = vmatprep.subr.bf16.mxu0 0
      %1784 = vmatpush1.bf16.msra.mxu0 0
      %1785 = vmatprep.subr.bf16.mxu0 0
      %1786 = vmatpush1.bf16.msra.mxu0 0
      %1787 = vmatprep.mubr.bf16.mxu0 0
      %1788 = vmatmul.mubr.bf16.gmra.mrb[0].mxu0 %v1705
      %v1789 = vpop.f32.mrb[0].mxu0
      %v1790 = vadd.f32 0.0, %v1789
      %v1791 = vpop.f32.mrb[0].mxu0
      %v1792 = vpop.f32.mrb[0].mxu0
      %v1793 = vadd.f32 0.0, %v1792
      %v1794 = vpop.f32.mrb[0].mxu0
      %1795 = vmatprep.mubr.bf16.mxu0 0
      %1796 = vmatmul.mubr.bf16.gmra.mrb[0].mxu0 %v1708
      %v1797 = vpop.f32.mrb[0].mxu0
      %v1798 = vadd.f32 0.0, %v1797
      %v1799 = vpop.f32.mrb[0].mxu0
      %v1800 = vpop.f32.mrb[0].mxu0
      %v1801 = vadd.f32 0.0, %v1800
      %v1802 = vpop.f32.mrb[0].mxu0
      %1803 = vmatprep.mubr.bf16.mxu0 0
      %1804 = vmatmul.mubr.bf16.gmra.mrb[0].mxu0 %v1711
      %v1805 = vpop.f32.mrb[0].mxu0
      %v1806 = vadd.f32 0.0, %v1805
      %v1807 = vpop.f32.mrb[0].mxu0
      %v1808 = vpop.f32.mrb[0].mxu0
      %v1809 = vadd.f32 0.0, %v1808
      %v1810 = vpop.f32.mrb[0].mxu0
      %1811 = vmatprep.mubr.bf16.mxu0 0
      %1812 = vmatmul.mubr.bf16.gmra.mrb[0].mxu0 %v1714
      %v1813 = vpop.f32.mrb[0].mxu0
      %v1814 = vadd.f32 0.0, %v1813
      %v1815 = vpop.f32.mrb[0].mxu0
      %v1816 = vpop.f32.mrb[0].mxu0
      %v1817 = vadd.f32 0.0, %v1816
      %v1818 = vpop.f32.mrb[0].mxu0
      %1819 = vmatprep.mubr.bf16.mxu0 0
      %1820 = vmatmul.mubr.bf16.gmra.mrb[0].mxu0 %v1717
      %v1821 = vpop.f32.mrb[0].mxu0
      %v1822 = vadd.f32 0.0, %v1821
      %v1823 = vpop.f32.mrb[0].mxu0
      %v1824 = vpop.f32.mrb[0].mxu0
      %v1825 = vadd.f32 0.0, %v1824
      %v1826 = vpop.f32.mrb[0].mxu0
      %1827 = vmatprep.mubr.bf16.mxu0 0
      %1828 = vmatmul.mubr.bf16.gmra.mrb[0].mxu0 %v1720
      %v1829 = vpop.f32.mrb[0].mxu0
      %v1830 = vadd.f32 0.0, %v1829
      %v1831 = vpop.f32.mrb[0].mxu0
      %v1832 = vpop.f32.mrb[0].mxu0
      %v1833 = vadd.f32 0.0, %v1832
      %v1834 = vpop.f32.mrb[0].mxu0
      %1835 = vmatprep.mubr.bf16.mxu0 0
      %1836 = vmatmul.mubr.bf16.gmra.mrb[0].mxu0 %v1723
      %v1837 = vpop.f32.mrb[0].mxu0
      %v1838 = vadd.f32 0.0, %v1837
      %v1839 = vpop.f32.mrb[0].mxu0
      %v1840 = vpop.f32.mrb[0].mxu0
      %v1841 = vadd.f32 0.0, %v1840
      %v1842 = vpop.f32.mrb[0].mxu0
      %1843 = vmatprep.mubr.bf16.mxu0 0
      %1844 = vmatmul.mubr.bf16.gmra.mrb[0].mxu0 %v1726
      %v1845 = vpop.f32.mrb[0].mxu0
      %v1846 = vadd.f32 0.0, %v1845
      %v1847 = vpop.f32.mrb[0].mxu0
      %v1848 = vpop.f32.mrb[0].mxu0
      %v1849 = vadd.f32 0.0, %v1848
      %v1850 = vpop.f32.mrb[0].mxu0
      %1851 = vmatprep.mubr.bf16.mxu0 0
      %1852 = vmatmul.mubr.bf16.gmra.mrb[0].mxu0 %v1729
      %v1853 = vpop.f32.mrb[0].mxu0
      %v1854 = vadd.f32 0.0, %v1853
      %v1855 = vpop.f32.mrb[0].mxu0
      %v1856 = vpop.f32.mrb[0].mxu0
      %v1857 = vadd.f32 0.0, %v1856
      %v1858 = vpop.f32.mrb[0].mxu0
      %1859 = vmatprep.mubr.bf16.mxu0 0
      %1860 = vmatmul.mubr.bf16.gmra.mrb[0].mxu0 %v1732
      %v1861 = vpop.f32.mrb[0].mxu0
      %v1862 = vadd.f32 0.0, %v1861
      %v1863 = vpop.f32.mrb[0].mxu0
      %v1864 = vpop.f32.mrb[0].mxu0
      %v1865 = vadd.f32 0.0, %v1864
      %v1866 = vpop.f32.mrb[0].mxu0
      %1867 = vmatprep.mubr.bf16.mxu0 0
      %1868 = vmatmul.mubr.bf16.gmra.mrb[0].mxu0 %v1735
      %v1869 = vpop.f32.mrb[0].mxu0
      %v1870 = vadd.f32 0.0, %v1869
      %v1871 = vpop.f32.mrb[0].mxu0
      %v1872 = vpop.f32.mrb[0].mxu0
      %v1873 = vadd.f32 0.0, %v1872
      %v1874 = vpop.f32.mrb[0].mxu0
      %1875 = vmatprep.mubr.bf16.mxu0 0
      %1876 = vmatmul.mubr.bf16.gmra.mrb[0].mxu0 %v1738
      %v1877 = vpop.f32.mrb[0].mxu0
      %v1878 = vadd.f32 0.0, %v1877
      %v1879 = vpop.f32.mrb[0].mxu0
      %v1880 = vpop.f32.mrb[0].mxu0
      %v1881 = vadd.f32 0.0, %v1880
      %v1882 = vpop.f32.mrb[0].mxu0
      %1883 = vmatprep.mubr.bf16.mxu0 0
      %1884 = vmatmul.mubr.bf16.gmra.mrb[0].mxu0 %v1741
      %v1885 = vpop.f32.mrb[0].mxu0
      %v1886 = vadd.f32 0.0, %v1885
      %v1887 = vpop.f32.mrb[0].mxu0
      %v1888 = vpop.f32.mrb[0].mxu0
      %v1889 = vadd.f32 0.0, %v1888
      %v1890 = vpop.f32.mrb[0].mxu0
      %1891 = vmatprep.mubr.bf16.mxu0 0
      %1892 = vmatmul.mubr.bf16.gmra.mrb[0].mxu0 %v1744
      %v1893 = vpop.f32.mrb[0].mxu0
      %v1894 = vadd.f32 0.0, %v1893
      %v1895 = vpop.f32.mrb[0].mxu0
      %v1896 = vpop.f32.mrb[0].mxu0
      %v1897 = vadd.f32 0.0, %v1896
      %v1898 = vpop.f32.mrb[0].mxu0
      %1899 = vmatprep.mubr.bf16.mxu0 0
      %1900 = vmatmul.mubr.bf16.gmra.mrb[0].mxu0 %v1747
      %v1901 = vpop.f32.mrb[0].mxu0
      %v1902 = vadd.f32 0.0, %v1901
      %v1903 = vpop.f32.mrb[0].mxu0
      %v1904 = vpop.f32.mrb[0].mxu0
      %v1905 = vadd.f32 0.0, %v1904
      %v1906 = vpop.f32.mrb[0].mxu0
      %1907 = vmatprep.mubr.bf16.mxu0 0
      %1908 = vmatmul.mubr.bf16.gmra.mrb[0].mxu0 %v1750
      %v1909 = vpop.f32.mrb[0].mxu0
      %v1910 = vadd.f32 0.0, %v1909
      %v1911 = vpop.f32.mrb[0].mxu0
      %v1912 = vpop.f32.mrb[0].mxu0
      %v1913 = vadd.f32 0.0, %v1912
      %v1914 = vpop.f32.mrb[0].mxu0
      %1915 = vdwg.mxu0
      %v1916 = vadd.f32 %v1590, %v1790
      %v1917 = vadd.f32 %v1591, %v1793
      %v1918 = vadd.f32 %v1592, %v1798
      %v1919 = vadd.f32 %v1593, %v1801
      %v1920 = vadd.f32 %v1594, %v1806
      %v1921 = vadd.f32 %v1595, %v1809
      %v1922 = vadd.f32 %v1596, %v1814
      %v1923 = vadd.f32 %v1597, %v1817
      %v1924 = vadd.f32 %v1598, %v1822
      %v1925 = vadd.f32 %v1599, %v1825
      %v1926 = vadd.f32 %v1600, %v1830
      %v1927 = vadd.f32 %v1601, %v1833
      %v1928 = vadd.f32 %v1602, %v1838
      %v1929 = vadd.f32 %v1603, %v1841
      %v1930 = vadd.f32 %v1604, %v1846
      %v1931 = vadd.f32 %v1605, %v1849
      %v1932 = vadd.f32 %v1606, %v1854
      %v1933 = vadd.f32 %v1607, %v1857
      %v1934 = vadd.f32 %v1608, %v1862
      %v1935 = vadd.f32 %v1609, %v1865
      %v1936 = vadd.f32 %v1610, %v1870
      %v1937 = vadd.f32 %v1611, %v1873
      %v1938 = vadd.f32 %v1612, %v1878
      %v1939 = vadd.f32 %v1613, %v1881
      %v1940 = vadd.f32 %v1614, %v1886
      %v1941 = vadd.f32 %v1615, %v1889
      %v1942 = vadd.f32 %v1616, %v1894
      %v1943 = vadd.f32 %v1617, %v1897
      %v1944 = vadd.f32 %v1618, %v1902
      %v1945 = vadd.f32 %v1619, %v1905
      %v1946 = vadd.f32 %v1620, %v1910
      %v1947 = vadd.f32 %v1621, %v1913
      %v1948 = vld [vmem:[%s465 + $0x11] sm:$0xff]
      %v1949 = vld [vmem:[%s465 + $0x19] sm:$0xff]
      %v1950 = vld [vmem:[%s465 + $0x21] sm:$0xff]
      %v1951 = vld [vmem:[%s465 + $0x29] sm:$0xff]
      %v1952 = vld [vmem:[%s465 + $0x31] sm:$0xff]
      %v1953 = vld [vmem:[%s465 + $0x39] sm:$0xff]
      %v1954 = vld [vmem:[%s465 + $0x41] sm:$0xff]
      %v1955 = vld [vmem:[%s465 + $0x49] sm:$0xff]
      %v1956 = vld [vmem:[%s465 + $0x51] sm:$0xff]
      %v1957 = vld [vmem:[%s465 + $0x59] sm:$0xff]
      %v1958 = vld [vmem:[%s465 + $0x61] sm:$0xff]
      %v1959 = vld [vmem:[%s465 + $0x69] sm:$0xff]
      %v1960 = vld [vmem:[%s465 + $0x71] sm:$0xff]
      %v1961 = vld [vmem:[%s465 + $0x79] sm:$0xff]
      %v1962 = vld [vmem:[%s465 + $0x81] sm:$0xff]
      %v1963 = vld [vmem:[%s465 + $0x89] sm:$0xff]
      %v1964 = vld [vmem:[%s465 + $0x91] sm:$0xff]
      %v1965 = vld [vmem:[%s465 + $0x99] sm:$0xff]
      %v1966 = vld [vmem:[%s465 + $0xa1] sm:$0xff]
      %v1967 = vld [vmem:[%s465 + $0xa9] sm:$0xff]
      %v1968 = vld [vmem:[%s465 + $0xb1] sm:$0xff]
      %v1969 = vld [vmem:[%s465 + $0xb9] sm:$0xff]
      %v1970 = vld [vmem:[%s465 + $0xc1] sm:$0xff]
      %v1971 = vld [vmem:[%s465 + $0xc9] sm:$0xff]
      %v1972 = vld [vmem:[%s465 + $0xd1] sm:$0xff]
      %v1973 = vld [vmem:[%s465 + $0xd9] sm:$0xff]
      %v1974 = vld [vmem:[%s465 + $0xe1] sm:$0xff]
      %v1975 = vld [vmem:[%s465 + $0xe9] sm:$0xff]
      %v1976 = vld [vmem:[%s465 + $0xf1] sm:$0xff]
      %v1977 = vld [vmem:[%s465 + $0xf9] sm:$0xff]
      %v1978 = vld [vmem:[%s465 + $0x101] sm:$0xff]
      %v1979 = vld [vmem:[%s465 + $0x109] sm:$0xff]
      %v1980 = vpack.c.bf16 %v1949, %v1948
      %v1981 = vpack.c.bf16 %v1951, %v1950
      %v1982 = vpack.c.bf16 %v1953, %v1952
      %v1983 = vpack.c.bf16 %v1955, %v1954
      %v1984 = vpack.c.bf16 %v1957, %v1956
      %v1985 = vpack.c.bf16 %v1959, %v1958
      %v1986 = vpack.c.bf16 %v1961, %v1960
      %v1987 = vpack.c.bf16 %v1963, %v1962
      %v1988 = vpack.c.bf16 %v1965, %v1964
      %v1989 = vpack.c.bf16 %v1967, %v1966
      %v1990 = vpack.c.bf16 %v1969, %v1968
      %v1991 = vpack.c.bf16 %v1971, %v1970
      %v1992 = vpack.c.bf16 %v1973, %v1972
      %v1993 = vpack.c.bf16 %v1975, %v1974
      %v1994 = vpack.c.bf16 %v1977, %v1976
      %v1995 = vpack.c.bf16 %v1979, %v1978
      %s1996 = scalar_lea.vmem %s3, 8
      %v1997 = vld [vmem:[%s1996] sm:$0x3]
      %v1999 = vsel %vm806, %v1980, 0
      %v2002 = vsel %vm806, %v1981, 0
      %v2005 = vsel %vm806, %v1982, 0
      %v2008 = vsel %vm806, %v1983, 0
      %v2011 = vsel %vm806, %v1984, 0
      %v2014 = vsel %vm806, %v1985, 0
      %v2017 = vsel %vm806, %v1986, 0
      %v2020 = vsel %vm806, %v1987, 0
      %v2023 = vsel %vm806, %v1988, 0
      %v2026 = vsel %vm806, %v1989, 0
      %v2029 = vsel %vm806, %v1990, 0
      %v2032 = vsel %vm806, %v1991, 0
      %v2035 = vsel %vm806, %v1992, 0
      %v2038 = vsel %vm806, %v1993, 0
      %v2041 = vsel %vm806, %v1994, 0
      %v2044 = vsel %vm806, %v1995, 0
      %v2047 = vsel %vm855, %v1997, 0
      %2049 = vmatprep.subr.bf16.mxu0 0
      %2050 = vmatpush1.bf16.msra.mxu0 %v2047
      %2051 = vmatprep.subr.bf16.mxu0 0
      %2052 = vmatpush1.bf16.msra.mxu0 0
      %2053 = vmatprep.subr.bf16.mxu0 0
      %2054 = vmatpush1.bf16.msra.mxu0 0
      %2055 = vmatprep.subr.bf16.mxu0 0
      %2056 = vmatpush1.bf16.msra.mxu0 0
      %2057 = vmatprep.subr.bf16.mxu0 0
      %2058 = vmatpush1.bf16.msra.mxu0 0
      %2059 = vmatprep.subr.bf16.mxu0 0
      %2060 = vmatpush1.bf16.msra.mxu0 0
      %2061 = vmatprep.subr.bf16.mxu0 0
      %2062 = vmatpush1.bf16.msra.mxu0 0
      %2063 = vmatprep.subr.bf16.mxu0 0
      %2064 = vmatpush1.bf16.msra.mxu0 0
      %2065 = vmatprep.subr.bf16.mxu0 0
      %2066 = vmatpush1.bf16.msra.mxu0 0
      %2067 = vmatprep.subr.bf16.mxu0 0
      %2068 = vmatpush1.bf16.msra.mxu0 0
      %2069 = vmatprep.subr.bf16.mxu0 0
      %2070 = vmatpush1.bf16.msra.mxu0 0
      %2071 = vmatprep.subr.bf16.mxu0 0
      %2072 = vmatpush1.bf16.msra.mxu0 0
      %2073 = vmatprep.subr.bf16.mxu0 0
      %2074 = vmatpush1.bf16.msra.mxu0 0
      %2075 = vmatprep.subr.bf16.mxu0 0
      %2076 = vmatpush1.bf16.msra.mxu0 0
      %2077 = vmatprep.subr.bf16.mxu0 0
      %2078 = vmatpush1.bf16.msra.mxu0 0
      %2079 = vmatprep.subr.bf16.mxu0 0
      %2080 = vmatpush1.bf16.msra.mxu0 0
      %2081 = vmatprep.mubr.bf16.mxu0 0
      %2082 = vmatmul.mubr.bf16.gmra.mrb[0].mxu0 %v1999
      %v2083 = vpop.f32.mrb[0].mxu0
      %v2084 = vadd.f32 0.0, %v2083
      %v2085 = vpop.f32.mrb[0].mxu0
      %v2086 = vpop.f32.mrb[0].mxu0
      %v2087 = vadd.f32 0.0, %v2086
      %v2088 = vpop.f32.mrb[0].mxu0
      %2089 = vmatprep.mubr.bf16.mxu0 0
      %2090 = vmatmul.mubr.bf16.gmra.mrb[0].mxu0 %v2002
      %v2091 = vpop.f32.mrb[0].mxu0
      %v2092 = vadd.f32 0.0, %v2091
      %v2093 = vpop.f32.mrb[0].mxu0
      %v2094 = vpop.f32.mrb[0].mxu0
      %v2095 = vadd.f32 0.0, %v2094
      %v2096 = vpop.f32.mrb[0].mxu0
      %2097 = vmatprep.mubr.bf16.mxu0 0
      %2098 = vmatmul.mubr.bf16.gmra.mrb[0].mxu0 %v2005
      %v2099 = vpop.f32.mrb[0].mxu0
      %v2100 = vadd.f32 0.0, %v2099
      %v2101 = vpop.f32.mrb[0].mxu0
      %v2102 = vpop.f32.mrb[0].mxu0
      %v2103 = vadd.f32 0.0, %v2102
      %v2104 = vpop.f32.mrb[0].mxu0
      %2105 = vmatprep.mubr.bf16.mxu0 0
      %2106 = vmatmul.mubr.bf16.gmra.mrb[0].mxu0 %v2008
      %v2107 = vpop.f32.mrb[0].mxu0
      %v2108 = vadd.f32 0.0, %v2107
      %v2109 = vpop.f32.mrb[0].mxu0
      %v2110 = vpop.f32.mrb[0].mxu0
      %v2111 = vadd.f32 0.0, %v2110
      %v2112 = vpop.f32.mrb[0].mxu0
      %2113 = vmatprep.mubr.bf16.mxu0 0
      %2114 = vmatmul.mubr.bf16.gmra.mrb[0].mxu0 %v2011
      %v2115 = vpop.f32.mrb[0].mxu0
      %v2116 = vadd.f32 0.0, %v2115
      %v2117 = vpop.f32.mrb[0].mxu0
      %v2118 = vpop.f32.mrb[0].mxu0
      %v2119 = vadd.f32 0.0, %v2118
      %v2120 = vpop.f32.mrb[0].mxu0
      %2121 = vmatprep.mubr.bf16.mxu0 0
      %2122 = vmatmul.mubr.bf16.gmra.mrb[0].mxu0 %v2014
      %v2123 = vpop.f32.mrb[0].mxu0
      %v2124 = vadd.f32 0.0, %v2123
      %v2125 = vpop.f32.mrb[0].mxu0
      %v2126 = vpop.f32.mrb[0].mxu0
      %v2127 = vadd.f32 0.0, %v2126
      %v2128 = vpop.f32.mrb[0].mxu0
      %2129 = vmatprep.mubr.bf16.mxu0 0
      %2130 = vmatmul.mubr.bf16.gmra.mrb[0].mxu0 %v2017
      %v2131 = vpop.f32.mrb[0].mxu0
      %v2132 = vadd.f32 0.0, %v2131
      %v2133 = vpop.f32.mrb[0].mxu0
      %v2134 = vpop.f32.mrb[0].mxu0
      %v2135 = vadd.f32 0.0, %v2134
      %v2136 = vpop.f32.mrb[0].mxu0
      %2137 = vmatprep.mubr.bf16.mxu0 0
      %2138 = vmatmul.mubr.bf16.gmra.mrb[0].mxu0 %v2020
      %v2139 = vpop.f32.mrb[0].mxu0
      %v2140 = vadd.f32 0.0, %v2139
      %v2141 = vpop.f32.mrb[0].mxu0
      %v2142 = vpop.f32.mrb[0].mxu0
      %v2143 = vadd.f32 0.0, %v2142
      %v2144 = vpop.f32.mrb[0].mxu0
      %2145 = vmatprep.mubr.bf16.mxu0 0
      %2146 = vmatmul.mubr.bf16.gmra.mrb[0].mxu0 %v2023
      %v2147 = vpop.f32.mrb[0].mxu0
      %v2148 = vadd.f32 0.0, %v2147
      %v2149 = vpop.f32.mrb[0].mxu0
      %v2150 = vpop.f32.mrb[0].mxu0
      %v2151 = vadd.f32 0.0, %v2150
      %v2152 = vpop.f32.mrb[0].mxu0
      %2153 = vmatprep.mubr.bf16.mxu0 0
      %2154 = vmatmul.mubr.bf16.gmra.mrb[0].mxu0 %v2026
      %v2155 = vpop.f32.mrb[0].mxu0
      %v2156 = vadd.f32 0.0, %v2155
      %v2157 = vpop.f32.mrb[0].mxu0
      %v2158 = vpop.f32.mrb[0].mxu0
      %v2159 = vadd.f32 0.0, %v2158
      %v2160 = vpop.f32.mrb[0].mxu0
      %2161 = vmatprep.mubr.bf16.mxu0 0
      %2162 = vmatmul.mubr.bf16.gmra.mrb[0].mxu0 %v2029
      %v2163 = vpop.f32.mrb[0].mxu0
      %v2164 = vadd.f32 0.0, %v2163
      %v2165 = vpop.f32.mrb[0].mxu0
      %v2166 = vpop.f32.mrb[0].mxu0
      %v2167 = vadd.f32 0.0, %v2166
      %v2168 = vpop.f32.mrb[0].mxu0
      %2169 = vmatprep.mubr.bf16.mxu0 0
      %2170 = vmatmul.mubr.bf16.gmra.mrb[0].mxu0 %v2032
      %v2171 = vpop.f32.mrb[0].mxu0
      %v2172 = vadd.f32 0.0, %v2171
      %v2173 = vpop.f32.mrb[0].mxu0
      %v2174 = vpop.f32.mrb[0].mxu0
      %v2175 = vadd.f32 0.0, %v2174
      %v2176 = vpop.f32.mrb[0].mxu0
      %2177 = vmatprep.mubr.bf16.mxu0 0
      %2178 = vmatmul.mubr.bf16.gmra.mrb[0].mxu0 %v2035
      %v2179 = vpop.f32.mrb[0].mxu0
      %v2180 = vadd.f32 0.0, %v2179
      %v2181 = vpop.f32.mrb[0].mxu0
      %v2182 = vpop.f32.mrb[0].mxu0
      %v2183 = vadd.f32 0.0, %v2182
      %v2184 = vpop.f32.mrb[0].mxu0
      %2185 = vmatprep.mubr.bf16.mxu0 0
      %2186 = vmatmul.mubr.bf16.gmra.mrb[0].mxu0 %v2038
      %v2187 = vpop.f32.mrb[0].mxu0
      %v2188 = vadd.f32 0.0, %v2187
      %v2189 = vpop.f32.mrb[0].mxu0
      %v2190 = vpop.f32.mrb[0].mxu0
      %v2191 = vadd.f32 0.0, %v2190
      %v2192 = vpop.f32.mrb[0].mxu0
      %2193 = vmatprep.mubr.bf16.mxu0 0
      %2194 = vmatmul.mubr.bf16.gmra.mrb[0].mxu0 %v2041
      %v2195 = vpop.f32.mrb[0].mxu0
      %v2196 = vadd.f32 0.0, %v2195
      %v2197 = vpop.f32.mrb[0].mxu0
      %v2198 = vpop.f32.mrb[0].mxu0
      %v2199 = vadd.f32 0.0, %v2198
      %v2200 = vpop.f32.mrb[0].mxu0
      %2201 = vmatprep.mubr.bf16.mxu0 0
      %2202 = vmatmul.mubr.bf16.gmra.mrb[0].mxu0 %v2044
      %v2203 = vpop.f32.mrb[0].mxu0
      %v2204 = vadd.f32 0.0, %v2203
      %v2205 = vpop.f32.mrb[0].mxu0
      %v2206 = vpop.f32.mrb[0].mxu0
      %v2207 = vadd.f32 0.0, %v2206
      %v2208 = vpop.f32.mrb[0].mxu0
      %2209 = vdwg.mxu0
      %v2210 = vadd.f32 %v1916, %v2084
      %v2211 = vadd.f32 %v1917, %v2087
      %v2212 = vadd.f32 %v1918, %v2092
      %v2213 = vadd.f32 %v1919, %v2095
      %v2214 = vadd.f32 %v1920, %v2100
      %v2215 = vadd.f32 %v1921, %v2103
      %v2216 = vadd.f32 %v1922, %v2108
      %v2217 = vadd.f32 %v1923, %v2111
      %v2218 = vadd.f32 %v1924, %v2116
      %v2219 = vadd.f32 %v1925, %v2119
      %v2220 = vadd.f32 %v1926, %v2124
      %v2221 = vadd.f32 %v1927, %v2127
      %v2222 = vadd.f32 %v1928, %v2132
      %v2223 = vadd.f32 %v1929, %v2135
      %v2224 = vadd.f32 %v1930, %v2140
      %v2225 = vadd.f32 %v1931, %v2143
      %v2226 = vadd.f32 %v1932, %v2148
      %v2227 = vadd.f32 %v1933, %v2151
      %v2228 = vadd.f32 %v1934, %v2156
      %v2229 = vadd.f32 %v1935, %v2159
      %v2230 = vadd.f32 %v1936, %v2164
      %v2231 = vadd.f32 %v1937, %v2167
      %v2232 = vadd.f32 %v1938, %v2172
      %v2233 = vadd.f32 %v1939, %v2175
      %v2234 = vadd.f32 %v1940, %v2180
      %v2235 = vadd.f32 %v1941, %v2183
      %v2236 = vadd.f32 %v1942, %v2188
      %v2237 = vadd.f32 %v1943, %v2191
      %v2238 = vadd.f32 %v1944, %v2196
      %v2239 = vadd.f32 %v1945, %v2199
      %v2240 = vadd.f32 %v1946, %v2204
      %v2241 = vadd.f32 %v1947, %v2207
      %v2242 = vld [vmem:[%s465 + $0x12] sm:$0xff]
      %v2243 = vld [vmem:[%s465 + $0x1a] sm:$0xff]
      %v2244 = vld [vmem:[%s465 + $0x22] sm:$0xff]
      %v2245 = vld [vmem:[%s465 + $0x2a] sm:$0xff]
      %v2246 = vld [vmem:[%s465 + $0x32] sm:$0xff]
      %v2247 = vld [vmem:[%s465 + $0x3a] sm:$0xff]
      %v2248 = vld [vmem:[%s465 + $0x42] sm:$0xff]
      %v2249 = vld [vmem:[%s465 + $0x4a] sm:$0xff]
      %v2250 = vld [vmem:[%s465 + $0x52] sm:$0xff]
      %v2251 = vld [vmem:[%s465 + $0x5a] sm:$0xff]
      %v2252 = vld [vmem:[%s465 + $0x62] sm:$0xff]
      %v2253 = vld [vmem:[%s465 + $0x6a] sm:$0xff]
      %v2254 = vld [vmem:[%s465 + $0x72] sm:$0xff]
      %v2255 = vld [vmem:[%s465 + $0x7a] sm:$0xff]
      %v2256 = vld [vmem:[%s465 + $0x82] sm:$0xff]
      %v2257 = vld [vmem:[%s465 + $0x8a] sm:$0xff]
      %v2258 = vld [vmem:[%s465 + $0x92] sm:$0xff]
      %v2259 = vld [vmem:[%s465 + $0x9a] sm:$0xff]
      %v2260 = vld [vmem:[%s465 + $0xa2] sm:$0xff]
      %v2261 = vld [vmem:[%s465 + $0xaa] sm:$0xff]
      %v2262 = vld [vmem:[%s465 + $0xb2] sm:$0xff]
      %v2263 = vld [vmem:[%s465 + $0xba] sm:$0xff]
      %v2264 = vld [vmem:[%s465 + $0xc2] sm:$0xff]
      %v2265 = vld [vmem:[%s465 + $0xca] sm:$0xff]
      %v2266 = vld [vmem:[%s465 + $0xd2] sm:$0xff]
      %v2267 = vld [vmem:[%s465 + $0xda] sm:$0xff]
      %v2268 = vld [vmem:[%s465 + $0xe2] sm:$0xff]
      %v2269 = vld [vmem:[%s465 + $0xea] sm:$0xff]
      %v2270 = vld [vmem:[%s465 + $0xf2] sm:$0xff]
      %v2271 = vld [vmem:[%s465 + $0xfa] sm:$0xff]
      %v2272 = vld [vmem:[%s465 + $0x102] sm:$0xff]
      %v2273 = vld [vmem:[%s465 + $0x10a] sm:$0xff]
      %v2274 = vsel %vm1296, %v2242, 0.0
      %v2275 = vsel %vm1297, %v2243, 0.0
      %v2276 = vsel %vm1298, %v2244, 0.0
      %v2277 = vsel %vm1299, %v2245, 0.0
      %v2278 = vsel %vm1300, %v2246, 0.0
      %v2279 = vsel %vm1301, %v2247, 0.0
      %v2280 = vsel %vm1302, %v2248, 0.0
      %v2281 = vsel %vm1303, %v2249, 0.0
      %v2282 = vsel %vm1304, %v2250, 0.0
      %v2283 = vsel %vm1305, %v2251, 0.0
      %v2284 = vsel %vm1306, %v2252, 0.0
      %v2285 = vsel %vm1307, %v2253, 0.0
      %v2286 = vsel %vm1308, %v2254, 0.0
      %v2287 = vsel %vm1309, %v2255, 0.0
      %v2288 = vsel %vm1310, %v2256, 0.0
      %v2289 = vsel %vm1311, %v2257, 0.0
      %v2290 = vsel %vm1312, %v2258, 0.0
      %v2291 = vsel %vm1313, %v2259, 0.0
      %v2292 = vsel %vm1314, %v2260, 0.0
      %v2293 = vsel %vm1315, %v2261, 0.0
      %v2294 = vsel %vm1316, %v2262, 0.0
      %v2295 = vsel %vm1317, %v2263, 0.0
      %v2296 = vsel %vm1318, %v2264, 0.0
      %v2297 = vsel %vm1319, %v2265, 0.0
      %v2298 = vsel %vm1320, %v2266, 0.0
      %v2299 = vsel %vm1321, %v2267, 0.0
      %v2300 = vsel %vm1322, %v2268, 0.0
      %v2301 = vsel %vm1323, %v2269, 0.0
      %v2302 = vsel %vm1324, %v2270, 0.0
      %v2303 = vsel %vm1325, %v2271, 0.0
      %v2304 = vsel %vm1326, %v2272, 0.0
      %v2305 = vsel %vm1327, %v2273, 0.0
      %v2306 = vpack.c.bf16 %v2275, %v2274
      %v2307 = vpack.c.bf16 %v2277, %v2276
      %v2308 = vpack.c.bf16 %v2279, %v2278
      %v2309 = vpack.c.bf16 %v2281, %v2280
      %v2310 = vpack.c.bf16 %v2283, %v2282
      %v2311 = vpack.c.bf16 %v2285, %v2284
      %v2312 = vpack.c.bf16 %v2287, %v2286
      %v2313 = vpack.c.bf16 %v2289, %v2288
      %v2314 = vpack.c.bf16 %v2291, %v2290
      %v2315 = vpack.c.bf16 %v2293, %v2292
      %v2316 = vpack.c.bf16 %v2295, %v2294
      %v2317 = vpack.c.bf16 %v2297, %v2296
      %v2318 = vpack.c.bf16 %v2299, %v2298
      %v2319 = vpack.c.bf16 %v2301, %v2300
      %v2320 = vpack.c.bf16 %v2303, %v2302
      %v2321 = vpack.c.bf16 %v2305, %v2304
      %s2322 = scalar_lea.vmem %s3, 10
      %v2323 = vld [vmem:[%s2322] sm:$0x3]
      %v2325 = vsel %vm806, %v2306, 0
      %v2328 = vsel %vm806, %v2307, 0
      %v2331 = vsel %vm806, %v2308, 0
      %v2334 = vsel %vm806, %v2309, 0
      %v2337 = vsel %vm806, %v2310, 0
      %v2340 = vsel %vm806, %v2311, 0
      %v2343 = vsel %vm806, %v2312, 0
      %v2346 = vsel %vm806, %v2313, 0
      %v2349 = vsel %vm806, %v2314, 0
      %v2352 = vsel %vm806, %v2315, 0
      %v2355 = vsel %vm806, %v2316, 0
      %v2358 = vsel %vm806, %v2317, 0
      %v2361 = vsel %vm806, %v2318, 0
      %v2364 = vsel %vm806, %v2319, 0
      %v2367 = vsel %vm806, %v2320, 0
      %v2370 = vsel %vm806, %v2321, 0
      %v2373 = vsel %vm855, %v2323, 0
      %2375 = vmatprep.subr.bf16.mxu0 0
      %2376 = vmatpush1.bf16.msra.mxu0 %v2373
      %2377 = vmatprep.subr.bf16.mxu0 0
      %2378 = vmatpush1.bf16.msra.mxu0 0
      %2379 = vmatprep.subr.bf16.mxu0 0
      %2380 = vmatpush1.bf16.msra.mxu0 0
      %2381 = vmatprep.subr.bf16.mxu0 0
      %2382 = vmatpush1.bf16.msra.mxu0 0
      %2383 = vmatprep.subr.bf16.mxu0 0
      %2384 = vmatpush1.bf16.msra.mxu0 0
      %2385 = vmatprep.subr.bf16.mxu0 0
      %2386 = vmatpush1.bf16.msra.mxu0 0
      %2387 = vmatprep.subr.bf16.mxu0 0
      %2388 = vmatpush1.bf16.msra.mxu0 0
      %2389 = vmatprep.subr.bf16.mxu0 0
      %2390 = vmatpush1.bf16.msra.mxu0 0
      %2391 = vmatprep.subr.bf16.mxu0 0
      %2392 = vmatpush1.bf16.msra.mxu0 0
      %2393 = vmatprep.subr.bf16.mxu0 0
      %2394 = vmatpush1.bf16.msra.mxu0 0
      %2395 = vmatprep.subr.bf16.mxu0 0
      %2396 = vmatpush1.bf16.msra.mxu0 0
      %2397 = vmatprep.subr.bf16.mxu0 0
      %2398 = vmatpush1.bf16.msra.mxu0 0
      %2399 = vmatprep.subr.bf16.mxu0 0
      %2400 = vmatpush1.bf16.msra.mxu0 0
      %2401 = vmatprep.subr.bf16.mxu0 0
      %2402 = vmatpush1.bf16.msra.mxu0 0
      %2403 = vmatprep.subr.bf16.mxu0 0
      %2404 = vmatpush1.bf16.msra.mxu0 0
      %2405 = vmatprep.subr.bf16.mxu0 0
      %2406 = vmatpush1.bf16.msra.mxu0 0
      %2407 = vmatprep.mubr.bf16.mxu0 0
      %2408 = vmatmul.mubr.bf16.gmra.mrb[0].mxu0 %v2325
      %v2409 = vpop.f32.mrb[0].mxu0
      %v2410 = vadd.f32 0.0, %v2409
      %v2411 = vpop.f32.mrb[0].mxu0
      %v2412 = vpop.f32.mrb[0].mxu0
      %v2413 = vadd.f32 0.0, %v2412
      %v2414 = vpop.f32.mrb[0].mxu0
      %2415 = vmatprep.mubr.bf16.mxu0 0
      %2416 = vmatmul.mubr.bf16.gmra.mrb[0].mxu0 %v2328
      %v2417 = vpop.f32.mrb[0].mxu0
      %v2418 = vadd.f32 0.0, %v2417
      %v2419 = vpop.f32.mrb[0].mxu0
      %v2420 = vpop.f32.mrb[0].mxu0
      %v2421 = vadd.f32 0.0, %v2420
      %v2422 = vpop.f32.mrb[0].mxu0
      %2423 = vmatprep.mubr.bf16.mxu0 0
      %2424 = vmatmul.mubr.bf16.gmra.mrb[0].mxu0 %v2331
      %v2425 = vpop.f32.mrb[0].mxu0
      %v2426 = vadd.f32 0.0, %v2425
      %v2427 = vpop.f32.mrb[0].mxu0
      %v2428 = vpop.f32.mrb[0].mxu0
      %v2429 = vadd.f32 0.0, %v2428
      %v2430 = vpop.f32.mrb[0].mxu0
      %2431 = vmatprep.mubr.bf16.mxu0 0
      %2432 = vmatmul.mubr.bf16.gmra.mrb[0].mxu0 %v2334
      %v2433 = vpop.f32.mrb[0].mxu0
      %v2434 = vadd.f32 0.0, %v2433
      %v2435 = vpop.f32.mrb[0].mxu0
      %v2436 = vpop.f32.mrb[0].mxu0
      %v2437 = vadd.f32 0.0, %v2436
      %v2438 = vpop.f32.mrb[0].mxu0
      %2439 = vmatprep.mubr.bf16.mxu0 0
      %2440 = vmatmul.mubr.bf16.gmra.mrb[0].mxu0 %v2337
      %v2441 = vpop.f32.mrb[0].mxu0
      %v2442 = vadd.f32 0.0, %v2441
      %v2443 = vpop.f32.mrb[0].mxu0
      %v2444 = vpop.f32.mrb[0].mxu0
      %v2445 = vadd.f32 0.0, %v2444
      %v2446 = vpop.f32.mrb[0].mxu0
      %2447 = vmatprep.mubr.bf16.mxu0 0
      %2448 = vmatmul.mubr.bf16.gmra.mrb[0].mxu0 %v2340
      %v2449 = vpop.f32.mrb[0].mxu0
      %v2450 = vadd.f32 0.0, %v2449
      %v2451 = vpop.f32.mrb[0].mxu0
      %v2452 = vpop.f32.mrb[0].mxu0
      %v2453 = vadd.f32 0.0, %v2452
      %v2454 = vpop.f32.mrb[0].mxu0
      %2455 = vmatprep.mubr.bf16.mxu0 0
      %2456 = vmatmul.mubr.bf16.gmra.mrb[0].mxu0 %v2343
      %v2457 = vpop.f32.mrb[0].mxu0
      %v2458 = vadd.f32 0.0, %v2457
      %v2459 = vpop.f32.mrb[0].mxu0
      %v2460 = vpop.f32.mrb[0].mxu0
      %v2461 = vadd.f32 0.0, %v2460
      %v2462 = vpop.f32.mrb[0].mxu0
      %2463 = vmatprep.mubr.bf16.mxu0 0
      %2464 = vmatmul.mubr.bf16.gmra.mrb[0].mxu0 %v2346
      %v2465 = vpop.f32.mrb[0].mxu0
      %v2466 = vadd.f32 0.0, %v2465
      %v2467 = vpop.f32.mrb[0].mxu0
      %v2468 = vpop.f32.mrb[0].mxu0
      %v2469 = vadd.f32 0.0, %v2468
      %v2470 = vpop.f32.mrb[0].mxu0
      %2471 = vmatprep.mubr.bf16.mxu0 0
      %2472 = vmatmul.mubr.bf16.gmra.mrb[0].mxu0 %v2349
      %v2473 = vpop.f32.mrb[0].mxu0
      %v2474 = vadd.f32 0.0, %v2473
      %v2475 = vpop.f32.mrb[0].mxu0
      %v2476 = vpop.f32.mrb[0].mxu0
      %v2477 = vadd.f32 0.0, %v2476
      %v2478 = vpop.f32.mrb[0].mxu0
      %2479 = vmatprep.mubr.bf16.mxu0 0
      %2480 = vmatmul.mubr.bf16.gmra.mrb[0].mxu0 %v2352
      %v2481 = vpop.f32.mrb[0].mxu0
      %v2482 = vadd.f32 0.0, %v2481
      %v2483 = vpop.f32.mrb[0].mxu0
      %v2484 = vpop.f32.mrb[0].mxu0
      %v2485 = vadd.f32 0.0, %v2484
      %v2486 = vpop.f32.mrb[0].mxu0
      %2487 = vmatprep.mubr.bf16.mxu0 0
      %2488 = vmatmul.mubr.bf16.gmra.mrb[0].mxu0 %v2355
      %v2489 = vpop.f32.mrb[0].mxu0
      %v2490 = vadd.f32 0.0, %v2489
      %v2491 = vpop.f32.mrb[0].mxu0
      %v2492 = vpop.f32.mrb[0].mxu0
      %v2493 = vadd.f32 0.0, %v2492
      %v2494 = vpop.f32.mrb[0].mxu0
      %2495 = vmatprep.mubr.bf16.mxu0 0
      %2496 = vmatmul.mubr.bf16.gmra.mrb[0].mxu0 %v2358
      %v2497 = vpop.f32.mrb[0].mxu0
      %v2498 = vadd.f32 0.0, %v2497
      %v2499 = vpop.f32.mrb[0].mxu0
      %v2500 = vpop.f32.mrb[0].mxu0
      %v2501 = vadd.f32 0.0, %v2500
      %v2502 = vpop.f32.mrb[0].mxu0
      %2503 = vmatprep.mubr.bf16.mxu0 0
      %2504 = vmatmul.mubr.bf16.gmra.mrb[0].mxu0 %v2361
      %v2505 = vpop.f32.mrb[0].mxu0
      %v2506 = vadd.f32 0.0, %v2505
      %v2507 = vpop.f32.mrb[0].mxu0
      %v2508 = vpop.f32.mrb[0].mxu0
      %v2509 = vadd.f32 0.0, %v2508
      %v2510 = vpop.f32.mrb[0].mxu0
      %2511 = vmatprep.mubr.bf16.mxu0 0
      %2512 = vmatmul.mubr.bf16.gmra.mrb[0].mxu0 %v2364
      %v2513 = vpop.f32.mrb[0].mxu0
      %v2514 = vadd.f32 0.0, %v2513
      %v2515 = vpop.f32.mrb[0].mxu0
      %v2516 = vpop.f32.mrb[0].mxu0
      %v2517 = vadd.f32 0.0, %v2516
      %v2518 = vpop.f32.mrb[0].mxu0
      %2519 = vmatprep.mubr.bf16.mxu0 0
      %2520 = vmatmul.mubr.bf16.gmra.mrb[0].mxu0 %v2367
      %v2521 = vpop.f32.mrb[0].mxu0
      %v2522 = vadd.f32 0.0, %v2521
      %v2523 = vpop.f32.mrb[0].mxu0
      %v2524 = vpop.f32.mrb[0].mxu0
      %v2525 = vadd.f32 0.0, %v2524
      %v2526 = vpop.f32.mrb[0].mxu0
      %2527 = vmatprep.mubr.bf16.mxu0 0
      %2528 = vmatmul.mubr.bf16.gmra.mrb[0].mxu0 %v2370
      %v2529 = vpop.f32.mrb[0].mxu0
      %v2530 = vadd.f32 0.0, %v2529
      %v2531 = vpop.f32.mrb[0].mxu0
      %v2532 = vpop.f32.mrb[0].mxu0
      %v2533 = vadd.f32 0.0, %v2532
      %v2534 = vpop.f32.mrb[0].mxu0
      %2535 = vdwg.mxu0
      %v2536 = vadd.f32 %v2210, %v2410
      %v2537 = vadd.f32 %v2211, %v2413
      %v2538 = vadd.f32 %v2212, %v2418
      %v2539 = vadd.f32 %v2213, %v2421
      %v2540 = vadd.f32 %v2214, %v2426
      %v2541 = vadd.f32 %v2215, %v2429
      %v2542 = vadd.f32 %v2216, %v2434
      %v2543 = vadd.f32 %v2217, %v2437
      %v2544 = vadd.f32 %v2218, %v2442
      %v2545 = vadd.f32 %v2219, %v2445
      %v2546 = vadd.f32 %v2220, %v2450
      %v2547 = vadd.f32 %v2221, %v2453
      %v2548 = vadd.f32 %v2222, %v2458
      %v2549 = vadd.f32 %v2223, %v2461
      %v2550 = vadd.f32 %v2224, %v2466
      %v2551 = vadd.f32 %v2225, %v2469
      %v2552 = vadd.f32 %v2226, %v2474
      %v2553 = vadd.f32 %v2227, %v2477
      %v2554 = vadd.f32 %v2228, %v2482
      %v2555 = vadd.f32 %v2229, %v2485
      %v2556 = vadd.f32 %v2230, %v2490
      %v2557 = vadd.f32 %v2231, %v2493
      %v2558 = vadd.f32 %v2232, %v2498
      %v2559 = vadd.f32 %v2233, %v2501
      %v2560 = vadd.f32 %v2234, %v2506
      %v2561 = vadd.f32 %v2235, %v2509
      %v2562 = vadd.f32 %v2236, %v2514
      %v2563 = vadd.f32 %v2237, %v2517
      %v2564 = vadd.f32 %v2238, %v2522
      %v2565 = vadd.f32 %v2239, %v2525
      %v2566 = vadd.f32 %v2240, %v2530
      %v2567 = vadd.f32 %v2241, %v2533
      %v2568 = vld [vmem:[%s465 + $0x20] sm:$0xff]
      %v2569 = vld [vmem:[%s465 + $0x28] sm:$0xff]
      %v2570 = vld [vmem:[%s465 + $0x30] sm:$0xff]
      %v2571 = vld [vmem:[%s465 + $0x38] sm:$0xff]
      %v2572 = vld [vmem:[%s465 + $0x40] sm:$0xff]
      %v2573 = vld [vmem:[%s465 + $0x48] sm:$0xff]
      %v2574 = vld [vmem:[%s465 + $0x50] sm:$0xff]
      %v2575 = vld [vmem:[%s465 + $0x58] sm:$0xff]
      %v2576 = vld [vmem:[%s465 + $0x60] sm:$0xff]
      %v2577 = vld [vmem:[%s465 + $0x68] sm:$0xff]
      %v2578 = vld [vmem:[%s465 + $0x70] sm:$0xff]
      %v2579 = vld [vmem:[%s465 + $0x78] sm:$0xff]
      %v2580 = vld [vmem:[%s465 + $0x80] sm:$0xff]
      %v2581 = vld [vmem:[%s465 + $0x88] sm:$0xff]
      %v2582 = vld [vmem:[%s465 + $0x90] sm:$0xff]
      %v2583 = vld [vmem:[%s465 + $0x98] sm:$0xff]
      %v2584 = vld [vmem:[%s465 + $0xa0] sm:$0xff]
      %v2585 = vld [vmem:[%s465 + $0xa8] sm:$0xff]
      %v2586 = vld [vmem:[%s465 + $0xb0] sm:$0xff]
      %v2587 = vld [vmem:[%s465 + $0xb8] sm:$0xff]
      %v2588 = vld [vmem:[%s465 + $0xc0] sm:$0xff]
      %v2589 = vld [vmem:[%s465 + $0xc8] sm:$0xff]
      %v2590 = vld [vmem:[%s465 + $0xd0] sm:$0xff]
      %v2591 = vld [vmem:[%s465 + $0xd8] sm:$0xff]
      %v2592 = vld [vmem:[%s465 + $0xe0] sm:$0xff]
      %v2593 = vld [vmem:[%s465 + $0xe8] sm:$0xff]
      %v2594 = vld [vmem:[%s465 + $0xf0] sm:$0xff]
      %v2595 = vld [vmem:[%s465 + $0xf8] sm:$0xff]
      %v2596 = vld [vmem:[%s465 + $0x100] sm:$0xff]
      %v2597 = vld [vmem:[%s465 + $0x108] sm:$0xff]
      %v2598 = vld [vmem:[%s465 + $0x110] sm:$0xff]
      %v2599 = vld [vmem:[%s465 + $0x118] sm:$0xff]
      %v2600 = vsel %vm675, %v2568, 0.0
      %v2601 = vsel %vm676, %v2569, 0.0
      %v2602 = vsel %vm677, %v2570, 0.0
      %v2603 = vsel %vm678, %v2571, 0.0
      %v2604 = vsel %vm679, %v2572, 0.0
      %v2605 = vsel %vm680, %v2573, 0.0
      %v2606 = vsel %vm681, %v2574, 0.0
      %v2607 = vsel %vm682, %v2575, 0.0
      %v2608 = vsel %vm683, %v2576, 0.0
      %v2609 = vsel %vm684, %v2577, 0.0
      %v2610 = vsel %vm685, %v2578, 0.0
      %v2611 = vsel %vm686, %v2579, 0.0
      %v2612 = vsel %vm687, %v2580, 0.0
      %v2613 = vsel %vm688, %v2581, 0.0
      %v2614 = vsel %vm689, %v2582, 0.0
      %v2615 = vsel %vm690, %v2583, 0.0
      %v2616 = vsel %vm691, %v2584, 0.0
      %v2617 = vsel %vm692, %v2585, 0.0
      %v2618 = vsel %vm693, %v2586, 0.0
      %v2619 = vsel %vm694, %v2587, 0.0
      %v2620 = vsel %vm695, %v2588, 0.0
      %v2621 = vsel %vm696, %v2589, 0.0
      %v2622 = vsel %vm697, %v2590, 0.0
      %v2623 = vsel %vm698, %v2591, 0.0
      %v2624 = vsel %vm699, %v2592, 0.0
      %v2625 = vsel %vm700, %v2593, 0.0
      %v2626 = vsel %vm701, %v2594, 0.0
      %v2627 = vsel %vm702, %v2595, 0.0
      %v2628 = vsel %vm703, %v2596, 0.0
      %v2629 = vsel %vm704, %v2597, 0.0
      %v2630 = vsel %vm705, %v2598, 0.0
      %v2631 = vsel %vm706, %v2599, 0.0
      %v2632 = vpack.c.bf16 %v2601, %v2600
      %v2633 = vpack.c.bf16 %v2603, %v2602
      %v2634 = vpack.c.bf16 %v2605, %v2604
      %v2635 = vpack.c.bf16 %v2607, %v2606
      %v2636 = vpack.c.bf16 %v2609, %v2608
      %v2637 = vpack.c.bf16 %v2611, %v2610
      %v2638 = vpack.c.bf16 %v2613, %v2612
      %v2639 = vpack.c.bf16 %v2615, %v2614
      %v2640 = vpack.c.bf16 %v2617, %v2616
      %v2641 = vpack.c.bf16 %v2619, %v2618
      %v2642 = vpack.c.bf16 %v2621, %v2620
      %v2643 = vpack.c.bf16 %v2623, %v2622
      %v2644 = vpack.c.bf16 %v2625, %v2624
      %v2645 = vpack.c.bf16 %v2627, %v2626
      %v2646 = vpack.c.bf16 %v2629, %v2628
      %v2647 = vpack.c.bf16 %v2631, %v2630
      %s2648 = scalar_lea.vmem %s3, 12
      %v2649 = vld [vmem:[%s2648] sm:$0x3]
      %v2651 = vsel %vm806, %v2632, 0
      %v2654 = vsel %vm806, %v2633, 0
      %v2657 = vsel %vm806, %v2634, 0
      %v2660 = vsel %vm806, %v2635, 0
      %v2663 = vsel %vm806, %v2636, 0
      %v2666 = vsel %vm806, %v2637, 0
      %v2669 = vsel %vm806, %v2638, 0
      %v2672 = vsel %vm806, %v2639, 0
      %v2675 = vsel %vm806, %v2640, 0
      %v2678 = vsel %vm806, %v2641, 0
      %v2681 = vsel %vm806, %v2642, 0
      %v2684 = vsel %vm806, %v2643, 0
      %v2687 = vsel %vm806, %v2644, 0
      %v2690 = vsel %vm806, %v2645, 0
      %v2693 = vsel %vm806, %v2646, 0
      %v2696 = vsel %vm806, %v2647, 0
      %v2699 = vsel %vm855, %v2649, 0
      %2701 = vmatprep.subr.bf16.mxu0 0
      %2702 = vmatpush1.bf16.msra.mxu0 %v2699
      %2703 = vmatprep.subr.bf16.mxu0 0
      %2704 = vmatpush1.bf16.msra.mxu0 0
      %2705 = vmatprep.subr.bf16.mxu0 0
      %2706 = vmatpush1.bf16.msra.mxu0 0
      %2707 = vmatprep.subr.bf16.mxu0 0
      %2708 = vmatpush1.bf16.msra.mxu0 0
      %2709 = vmatprep.subr.bf16.mxu0 0
      %2710 = vmatpush1.bf16.msra.mxu0 0
      %2711 = vmatprep.subr.bf16.mxu0 0
      %2712 = vmatpush1.bf16.msra.mxu0 0
      %2713 = vmatprep.subr.bf16.mxu0 0
      %2714 = vmatpush1.bf16.msra.mxu0 0
      %2715 = vmatprep.subr.bf16.mxu0 0
      %2716 = vmatpush1.bf16.msra.mxu0 0
      %2717 = vmatprep.subr.bf16.mxu0 0
      %2718 = vmatpush1.bf16.msra.mxu0 0
      %2719 = vmatprep.subr.bf16.mxu0 0
      %2720 = vmatpush1.bf16.msra.mxu0 0
      %2721 = vmatprep.subr.bf16.mxu0 0
      %2722 = vmatpush1.bf16.msra.mxu0 0
      %2723 = vmatprep.subr.bf16.mxu0 0
      %2724 = vmatpush1.bf16.msra.mxu0 0
      %2725 = vmatprep.subr.bf16.mxu0 0
      %2726 = vmatpush1.bf16.msra.mxu0 0
      %2727 = vmatprep.subr.bf16.mxu0 0
      %2728 = vmatpush1.bf16.msra.mxu0 0
      %2729 = vmatprep.subr.bf16.mxu0 0
      %2730 = vmatpush1.bf16.msra.mxu0 0
      %2731 = vmatprep.subr.bf16.mxu0 0
      %2732 = vmatpush1.bf16.msra.mxu0 0
      %2733 = vmatprep.mubr.bf16.mxu0 0
      %2734 = vmatmul.mubr.bf16.gmra.mrb[0].mxu0 %v2651
      %v2735 = vpop.f32.mrb[0].mxu0
      %v2736 = vadd.f32 0.0, %v2735
      %v2737 = vpop.f32.mrb[0].mxu0
      %v2738 = vpop.f32.mrb[0].mxu0
      %v2739 = vadd.f32 0.0, %v2738
      %v2740 = vpop.f32.mrb[0].mxu0
      %2741 = vmatprep.mubr.bf16.mxu0 0
      %2742 = vmatmul.mubr.bf16.gmra.mrb[0].mxu0 %v2654
      %v2743 = vpop.f32.mrb[0].mxu0
      %v2744 = vadd.f32 0.0, %v2743
      %v2745 = vpop.f32.mrb[0].mxu0
      %v2746 = vpop.f32.mrb[0].mxu0
      %v2747 = vadd.f32 0.0, %v2746
      %v2748 = vpop.f32.mrb[0].mxu0
      %2749 = vmatprep.mubr.bf16.mxu0 0
      %2750 = vmatmul.mubr.bf16.gmra.mrb[0].mxu0 %v2657
      %v2751 = vpop.f32.mrb[0].mxu0
      %v2752 = vadd.f32 0.0, %v2751
      %v2753 = vpop.f32.mrb[0].mxu0
      %v2754 = vpop.f32.mrb[0].mxu0
      %v2755 = vadd.f32 0.0, %v2754
      %v2756 = vpop.f32.mrb[0].mxu0
      %2757 = vmatprep.mubr.bf16.mxu0 0
      %2758 = vmatmul.mubr.bf16.gmra.mrb[0].mxu0 %v2660
      %v2759 = vpop.f32.mrb[0].mxu0
      %v2760 = vadd.f32 0.0, %v2759
      %v2761 = vpop.f32.mrb[0].mxu0
      %v2762 = vpop.f32.mrb[0].mxu0
      %v2763 = vadd.f32 0.0, %v2762
      %v2764 = vpop.f32.mrb[0].mxu0
      %2765 = vmatprep.mubr.bf16.mxu0 0
      %2766 = vmatmul.mubr.bf16.gmra.mrb[0].mxu0 %v2663
      %v2767 = vpop.f32.mrb[0].mxu0
      %v2768 = vadd.f32 0.0, %v2767
      %v2769 = vpop.f32.mrb[0].mxu0
      %v2770 = vpop.f32.mrb[0].mxu0
      %v2771 = vadd.f32 0.0, %v2770
      %v2772 = vpop.f32.mrb[0].mxu0
      %2773 = vmatprep.mubr.bf16.mxu0 0
      %2774 = vmatmul.mubr.bf16.gmra.mrb[0].mxu0 %v2666
      %v2775 = vpop.f32.mrb[0].mxu0
      %v2776 = vadd.f32 0.0, %v2775
      %v2777 = vpop.f32.mrb[0].mxu0
      %v2778 = vpop.f32.mrb[0].mxu0
      %v2779 = vadd.f32 0.0, %v2778
      %v2780 = vpop.f32.mrb[0].mxu0
      %2781 = vmatprep.mubr.bf16.mxu0 0
      %2782 = vmatmul.mubr.bf16.gmra.mrb[0].mxu0 %v2669
      %v2783 = vpop.f32.mrb[0].mxu0
      %v2784 = vadd.f32 0.0, %v2783
      %v2785 = vpop.f32.mrb[0].mxu0
      %v2786 = vpop.f32.mrb[0].mxu0
      %v2787 = vadd.f32 0.0, %v2786
      %v2788 = vpop.f32.mrb[0].mxu0
      %2789 = vmatprep.mubr.bf16.mxu0 0
      %2790 = vmatmul.mubr.bf16.gmra.mrb[0].mxu0 %v2672
      %v2791 = vpop.f32.mrb[0].mxu0
      %v2792 = vadd.f32 0.0, %v2791
      %v2793 = vpop.f32.mrb[0].mxu0
      %v2794 = vpop.f32.mrb[0].mxu0
      %v2795 = vadd.f32 0.0, %v2794
      %v2796 = vpop.f32.mrb[0].mxu0
      %2797 = vmatprep.mubr.bf16.mxu0 0
      %2798 = vmatmul.mubr.bf16.gmra.mrb[0].mxu0 %v2675
      %v2799 = vpop.f32.mrb[0].mxu0
      %v2800 = vadd.f32 0.0, %v2799
      %v2801 = vpop.f32.mrb[0].mxu0
      %v2802 = vpop.f32.mrb[0].mxu0
      %v2803 = vadd.f32 0.0, %v2802
      %v2804 = vpop.f32.mrb[0].mxu0
      %2805 = vmatprep.mubr.bf16.mxu0 0
      %2806 = vmatmul.mubr.bf16.gmra.mrb[0].mxu0 %v2678
      %v2807 = vpop.f32.mrb[0].mxu0
      %v2808 = vadd.f32 0.0, %v2807
      %v2809 = vpop.f32.mrb[0].mxu0
      %v2810 = vpop.f32.mrb[0].mxu0
      %v2811 = vadd.f32 0.0, %v2810
      %v2812 = vpop.f32.mrb[0].mxu0
      %2813 = vmatprep.mubr.bf16.mxu0 0
      %2814 = vmatmul.mubr.bf16.gmra.mrb[0].mxu0 %v2681
      %v2815 = vpop.f32.mrb[0].mxu0
      %v2816 = vadd.f32 0.0, %v2815
      %v2817 = vpop.f32.mrb[0].mxu0
      %v2818 = vpop.f32.mrb[0].mxu0
      %v2819 = vadd.f32 0.0, %v2818
      %v2820 = vpop.f32.mrb[0].mxu0
      %2821 = vmatprep.mubr.bf16.mxu0 0
      %2822 = vmatmul.mubr.bf16.gmra.mrb[0].mxu0 %v2684
      %v2823 = vpop.f32.mrb[0].mxu0
      %v2824 = vadd.f32 0.0, %v2823
      %v2825 = vpop.f32.mrb[0].mxu0
      %v2826 = vpop.f32.mrb[0].mxu0
      %v2827 = vadd.f32 0.0, %v2826
      %v2828 = vpop.f32.mrb[0].mxu0
      %2829 = vmatprep.mubr.bf16.mxu0 0
      %2830 = vmatmul.mubr.bf16.gmra.mrb[0].mxu0 %v2687
      %v2831 = vpop.f32.mrb[0].mxu0
      %v2832 = vadd.f32 0.0, %v2831
      %v2833 = vpop.f32.mrb[0].mxu0
      %v2834 = vpop.f32.mrb[0].mxu0
      %v2835 = vadd.f32 0.0, %v2834
      %v2836 = vpop.f32.mrb[0].mxu0
      %2837 = vmatprep.mubr.bf16.mxu0 0
      %2838 = vmatmul.mubr.bf16.gmra.mrb[0].mxu0 %v2690
      %v2839 = vpop.f32.mrb[0].mxu0
      %v2840 = vadd.f32 0.0, %v2839
      %v2841 = vpop.f32.mrb[0].mxu0
      %v2842 = vpop.f32.mrb[0].mxu0
      %v2843 = vadd.f32 0.0, %v2842
      %v2844 = vpop.f32.mrb[0].mxu0
      %2845 = vmatprep.mubr.bf16.mxu0 0
      %2846 = vmatmul.mubr.bf16.gmra.mrb[0].mxu0 %v2693
      %v2847 = vpop.f32.mrb[0].mxu0
      %v2848 = vadd.f32 0.0, %v2847
      %v2849 = vpop.f32.mrb[0].mxu0
      %v2850 = vpop.f32.mrb[0].mxu0
      %v2851 = vadd.f32 0.0, %v2850
      %v2852 = vpop.f32.mrb[0].mxu0
      %2853 = vmatprep.mubr.bf16.mxu0 0
      %2854 = vmatmul.mubr.bf16.gmra.mrb[0].mxu0 %v2696
      %v2855 = vpop.f32.mrb[0].mxu0
      %v2856 = vadd.f32 0.0, %v2855
      %v2857 = vpop.f32.mrb[0].mxu0
      %v2858 = vpop.f32.mrb[0].mxu0
      %v2859 = vadd.f32 0.0, %v2858
      %v2860 = vpop.f32.mrb[0].mxu0
      %2861 = vdwg.mxu0
      %v2862 = vadd.f32 %v2536, %v2736
      %v2863 = vadd.f32 %v2537, %v2739
      %v2864 = vadd.f32 %v2538, %v2744
      %v2865 = vadd.f32 %v2539, %v2747
      %v2866 = vadd.f32 %v2540, %v2752
      %v2867 = vadd.f32 %v2541, %v2755
      %v2868 = vadd.f32 %v2542, %v2760
      %v2869 = vadd.f32 %v2543, %v2763
      %v2870 = vadd.f32 %v2544, %v2768
      %v2871 = vadd.f32 %v2545, %v2771
      %v2872 = vadd.f32 %v2546, %v2776
      %v2873 = vadd.f32 %v2547, %v2779
      %v2874 = vadd.f32 %v2548, %v2784
      %v2875 = vadd.f32 %v2549, %v2787
      %v2876 = vadd.f32 %v2550, %v2792
      %v2877 = vadd.f32 %v2551, %v2795
      %v2878 = vadd.f32 %v2552, %v2800
      %v2879 = vadd.f32 %v2553, %v2803
      %v2880 = vadd.f32 %v2554, %v2808
      %v2881 = vadd.f32 %v2555, %v2811
      %v2882 = vadd.f32 %v2556, %v2816
      %v2883 = vadd.f32 %v2557, %v2819
      %v2884 = vadd.f32 %v2558, %v2824
      %v2885 = vadd.f32 %v2559, %v2827
      %v2886 = vadd.f32 %v2560, %v2832
      %v2887 = vadd.f32 %v2561, %v2835
      %v2888 = vadd.f32 %v2562, %v2840
      %v2889 = vadd.f32 %v2563, %v2843
      %v2890 = vadd.f32 %v2564, %v2848
      %v2891 = vadd.f32 %v2565, %v2851
      %v2892 = vadd.f32 %v2566, %v2856
      %v2893 = vadd.f32 %v2567, %v2859
      %v2894 = vld [vmem:[%s465 + $0x21] sm:$0xff]
      %v2895 = vld [vmem:[%s465 + $0x29] sm:$0xff]
      %v2896 = vld [vmem:[%s465 + $0x31] sm:$0xff]
      %v2897 = vld [vmem:[%s465 + $0x39] sm:$0xff]
      %v2898 = vld [vmem:[%s465 + $0x41] sm:$0xff]
      %v2899 = vld [vmem:[%s465 + $0x49] sm:$0xff]
      %v2900 = vld [vmem:[%s465 + $0x51] sm:$0xff]
      %v2901 = vld [vmem:[%s465 + $0x59] sm:$0xff]
      %v2902 = vld [vmem:[%s465 + $0x61] sm:$0xff]
      %v2903 = vld [vmem:[%s465 + $0x69] sm:$0xff]
      %v2904 = vld [vmem:[%s465 + $0x71] sm:$0xff]
      %v2905 = vld [vmem:[%s465 + $0x79] sm:$0xff]
      %v2906 = vld [vmem:[%s465 + $0x81] sm:$0xff]
      %v2907 = vld [vmem:[%s465 + $0x89] sm:$0xff]
      %v2908 = vld [vmem:[%s465 + $0x91] sm:$0xff]
      %v2909 = vld [vmem:[%s465 + $0x99] sm:$0xff]
      %v2910 = vld [vmem:[%s465 + $0xa1] sm:$0xff]
      %v2911 = vld [vmem:[%s465 + $0xa9] sm:$0xff]
      %v2912 = vld [vmem:[%s465 + $0xb1] sm:$0xff]
      %v2913 = vld [vmem:[%s465 + $0xb9] sm:$0xff]
      %v2914 = vld [vmem:[%s465 + $0xc1] sm:$0xff]
      %v2915 = vld [vmem:[%s465 + $0xc9] sm:$0xff]
      %v2916 = vld [vmem:[%s465 + $0xd1] sm:$0xff]
      %v2917 = vld [vmem:[%s465 + $0xd9] sm:$0xff]
      %v2918 = vld [vmem:[%s465 + $0xe1] sm:$0xff]
      %v2919 = vld [vmem:[%s465 + $0xe9] sm:$0xff]
      %v2920 = vld [vmem:[%s465 + $0xf1] sm:$0xff]
      %v2921 = vld [vmem:[%s465 + $0xf9] sm:$0xff]
      %v2922 = vld [vmem:[%s465 + $0x101] sm:$0xff]
      %v2923 = vld [vmem:[%s465 + $0x109] sm:$0xff]
      %v2924 = vld [vmem:[%s465 + $0x111] sm:$0xff]
      %v2925 = vld [vmem:[%s465 + $0x119] sm:$0xff]
      %v2926 = vpack.c.bf16 %v2895, %v2894
      %v2927 = vpack.c.bf16 %v2897, %v2896
      %v2928 = vpack.c.bf16 %v2899, %v2898
      %v2929 = vpack.c.bf16 %v2901, %v2900
      %v2930 = vpack.c.bf16 %v2903, %v2902
      %v2931 = vpack.c.bf16 %v2905, %v2904
      %v2932 = vpack.c.bf16 %v2907, %v2906
      %v2933 = vpack.c.bf16 %v2909, %v2908
      %v2934 = vpack.c.bf16 %v2911, %v2910
      %v2935 = vpack.c.bf16 %v2913, %v2912
      %v2936 = vpack.c.bf16 %v2915, %v2914
      %v2937 = vpack.c.bf16 %v2917, %v2916
      %v2938 = vpack.c.bf16 %v2919, %v2918
      %v2939 = vpack.c.bf16 %v2921, %v2920
      %v2940 = vpack.c.bf16 %v2923, %v2922
      %v2941 = vpack.c.bf16 %v2925, %v2924
      %s2942 = scalar_lea.vmem %s3, 14
      %v2943 = vld [vmem:[%s2942] sm:$0x3]
      %v2945 = vsel %vm806, %v2926, 0
      %v2948 = vsel %vm806, %v2927, 0
      %v2951 = vsel %vm806, %v2928, 0
      %v2954 = vsel %vm806, %v2929, 0
      %v2957 = vsel %vm806, %v2930, 0
      %v2960 = vsel %vm806, %v2931, 0
      %v2963 = vsel %vm806, %v2932, 0
      %v2966 = vsel %vm806, %v2933, 0
      %v2969 = vsel %vm806, %v2934, 0
      %v2972 = vsel %vm806, %v2935, 0
      %v2975 = vsel %vm806, %v2936, 0
      %v2978 = vsel %vm806, %v2937, 0
      %v2981 = vsel %vm806, %v2938, 0
      %v2984 = vsel %vm806, %v2939, 0
      %v2987 = vsel %vm806, %v2940, 0
      %v2990 = vsel %vm806, %v2941, 0
      %v2993 = vsel %vm855, %v2943, 0
      %2995 = vmatprep.subr.bf16.mxu0 0
      %2996 = vmatpush1.bf16.msra.mxu0 %v2993
      %2997 = vmatprep.subr.bf16.mxu0 0
      %2998 = vmatpush1.bf16.msra.mxu0 0
      %2999 = vmatprep.subr.bf16.mxu0 0
      %3000 = vmatpush1.bf16.msra.mxu0 0
      %3001 = vmatprep.subr.bf16.mxu0 0
      %3002 = vmatpush1.bf16.msra.mxu0 0
      %3003 = vmatprep.subr.bf16.mxu0 0
      %3004 = vmatpush1.bf16.msra.mxu0 0
      %3005 = vmatprep.subr.bf16.mxu0 0
      %3006 = vmatpush1.bf16.msra.mxu0 0
      %3007 = vmatprep.subr.bf16.mxu0 0
      %3008 = vmatpush1.bf16.msra.mxu0 0
      %3009 = vmatprep.subr.bf16.mxu0 0
      %3010 = vmatpush1.bf16.msra.mxu0 0
      %3011 = vmatprep.subr.bf16.mxu0 0
      %3012 = vmatpush1.bf16.msra.mxu0 0
      %3013 = vmatprep.subr.bf16.mxu0 0
      %3014 = vmatpush1.bf16.msra.mxu0 0
      %3015 = vmatprep.subr.bf16.mxu0 0
      %3016 = vmatpush1.bf16.msra.mxu0 0
      %3017 = vmatprep.subr.bf16.mxu0 0
      %3018 = vmatpush1.bf16.msra.mxu0 0
      %3019 = vmatprep.subr.bf16.mxu0 0
      %3020 = vmatpush1.bf16.msra.mxu0 0
      %3021 = vmatprep.subr.bf16.mxu0 0
      %3022 = vmatpush1.bf16.msra.mxu0 0
      %3023 = vmatprep.subr.bf16.mxu0 0
      %3024 = vmatpush1.bf16.msra.mxu0 0
      %3025 = vmatprep.subr.bf16.mxu0 0
      %3026 = vmatpush1.bf16.msra.mxu0 0
      %3027 = vmatprep.mubr.bf16.mxu0 0
      %3028 = vmatmul.mubr.bf16.gmra.mrb[0].mxu0 %v2945
      %v3029 = vpop.f32.mrb[0].mxu0
      %v3030 = vadd.f32 0.0, %v3029
      %v3031 = vpop.f32.mrb[0].mxu0
      %v3032 = vpop.f32.mrb[0].mxu0
      %v3033 = vadd.f32 0.0, %v3032
      %v3034 = vpop.f32.mrb[0].mxu0
      %3035 = vmatprep.mubr.bf16.mxu0 0
      %3036 = vmatmul.mubr.bf16.gmra.mrb[0].mxu0 %v2948
      %v3037 = vpop.f32.mrb[0].mxu0
      %v3038 = vadd.f32 0.0, %v3037
      %v3039 = vpop.f32.mrb[0].mxu0
      %v3040 = vpop.f32.mrb[0].mxu0
      %v3041 = vadd.f32 0.0, %v3040
      %v3042 = vpop.f32.mrb[0].mxu0
      %3043 = vmatprep.mubr.bf16.mxu0 0
      %3044 = vmatmul.mubr.bf16.gmra.mrb[0].mxu0 %v2951
      %v3045 = vpop.f32.mrb[0].mxu0
      %v3046 = vadd.f32 0.0, %v3045
      %v3047 = vpop.f32.mrb[0].mxu0
      %v3048 = vpop.f32.mrb[0].mxu0
      %v3049 = vadd.f32 0.0, %v3048
      %v3050 = vpop.f32.mrb[0].mxu0
      %3051 = vmatprep.mubr.bf16.mxu0 0
      %3052 = vmatmul.mubr.bf16.gmra.mrb[0].mxu0 %v2954
      %v3053 = vpop.f32.mrb[0].mxu0
      %v3054 = vadd.f32 0.0, %v3053
      %v3055 = vpop.f32.mrb[0].mxu0
      %v3056 = vpop.f32.mrb[0].mxu0
      %v3057 = vadd.f32 0.0, %v3056
      %v3058 = vpop.f32.mrb[0].mxu0
      %3059 = vmatprep.mubr.bf16.mxu0 0
      %3060 = vmatmul.mubr.bf16.gmra.mrb[0].mxu0 %v2957
      %v3061 = vpop.f32.mrb[0].mxu0
      %v3062 = vadd.f32 0.0, %v3061
      %v3063 = vpop.f32.mrb[0].mxu0
      %v3064 = vpop.f32.mrb[0].mxu0
      %v3065 = vadd.f32 0.0, %v3064
      %v3066 = vpop.f32.mrb[0].mxu0
      %3067 = vmatprep.mubr.bf16.mxu0 0
      %3068 = vmatmul.mubr.bf16.gmra.mrb[0].mxu0 %v2960
      %v3069 = vpop.f32.mrb[0].mxu0
      %v3070 = vadd.f32 0.0, %v3069
      %v3071 = vpop.f32.mrb[0].mxu0
      %v3072 = vpop.f32.mrb[0].mxu0
      %v3073 = vadd.f32 0.0, %v3072
      %v3074 = vpop.f32.mrb[0].mxu0
      %3075 = vmatprep.mubr.bf16.mxu0 0
      %3076 = vmatmul.mubr.bf16.gmra.mrb[0].mxu0 %v2963
      %v3077 = vpop.f32.mrb[0].mxu0
      %v3078 = vadd.f32 0.0, %v3077
      %v3079 = vpop.f32.mrb[0].mxu0
      %v3080 = vpop.f32.mrb[0].mxu0
      %v3081 = vadd.f32 0.0, %v3080
      %v3082 = vpop.f32.mrb[0].mxu0
      %3083 = vmatprep.mubr.bf16.mxu0 0
      %3084 = vmatmul.mubr.bf16.gmra.mrb[0].mxu0 %v2966
      %v3085 = vpop.f32.mrb[0].mxu0
      %v3086 = vadd.f32 0.0, %v3085
      %v3087 = vpop.f32.mrb[0].mxu0
      %v3088 = vpop.f32.mrb[0].mxu0
      %v3089 = vadd.f32 0.0, %v3088
      %v3090 = vpop.f32.mrb[0].mxu0
      %3091 = vmatprep.mubr.bf16.mxu0 0
      %3092 = vmatmul.mubr.bf16.gmra.mrb[0].mxu0 %v2969
      %v3093 = vpop.f32.mrb[0].mxu0
      %v3094 = vadd.f32 0.0, %v3093
      %v3095 = vpop.f32.mrb[0].mxu0
      %v3096 = vpop.f32.mrb[0].mxu0
      %v3097 = vadd.f32 0.0, %v3096
      %v3098 = vpop.f32.mrb[0].mxu0
      %3099 = vmatprep.mubr.bf16.mxu0 0
      %3100 = vmatmul.mubr.bf16.gmra.mrb[0].mxu0 %v2972
      %v3101 = vpop.f32.mrb[0].mxu0
      %v3102 = vadd.f32 0.0, %v3101
      %v3103 = vpop.f32.mrb[0].mxu0
      %v3104 = vpop.f32.mrb[0].mxu0
      %v3105 = vadd.f32 0.0, %v3104
      %v3106 = vpop.f32.mrb[0].mxu0
      %3107 = vmatprep.mubr.bf16.mxu0 0
      %3108 = vmatmul.mubr.bf16.gmra.mrb[0].mxu0 %v2975
      %v3109 = vpop.f32.mrb[0].mxu0
      %v3110 = vadd.f32 0.0, %v3109
      %v3111 = vpop.f32.mrb[0].mxu0
      %v3112 = vpop.f32.mrb[0].mxu0
      %v3113 = vadd.f32 0.0, %v3112
      %v3114 = vpop.f32.mrb[0].mxu0
      %3115 = vmatprep.mubr.bf16.mxu0 0
      %3116 = vmatmul.mubr.bf16.gmra.mrb[0].mxu0 %v2978
      %v3117 = vpop.f32.mrb[0].mxu0
      %v3118 = vadd.f32 0.0, %v3117
      %v3119 = vpop.f32.mrb[0].mxu0
      %v3120 = vpop.f32.mrb[0].mxu0
      %v3121 = vadd.f32 0.0, %v3120
      %v3122 = vpop.f32.mrb[0].mxu0
      %3123 = vmatprep.mubr.bf16.mxu0 0
      %3124 = vmatmul.mubr.bf16.gmra.mrb[0].mxu0 %v2981
      %v3125 = vpop.f32.mrb[0].mxu0
      %v3126 = vadd.f32 0.0, %v3125
      %v3127 = vpop.f32.mrb[0].mxu0
      %v3128 = vpop.f32.mrb[0].mxu0
      %v3129 = vadd.f32 0.0, %v3128
      %v3130 = vpop.f32.mrb[0].mxu0
      %3131 = vmatprep.mubr.bf16.mxu0 0
      %3132 = vmatmul.mubr.bf16.gmra.mrb[0].mxu0 %v2984
      %v3133 = vpop.f32.mrb[0].mxu0
      %v3134 = vadd.f32 0.0, %v3133
      %v3135 = vpop.f32.mrb[0].mxu0
      %v3136 = vpop.f32.mrb[0].mxu0
      %v3137 = vadd.f32 0.0, %v3136
      %v3138 = vpop.f32.mrb[0].mxu0
      %3139 = vmatprep.mubr.bf16.mxu0 0
      %3140 = vmatmul.mubr.bf16.gmra.mrb[0].mxu0 %v2987
      %v3141 = vpop.f32.mrb[0].mxu0
      %v3142 = vadd.f32 0.0, %v3141
      %v3143 = vpop.f32.mrb[0].mxu0
      %v3144 = vpop.f32.mrb[0].mxu0
      %v3145 = vadd.f32 0.0, %v3144
      %v3146 = vpop.f32.mrb[0].mxu0
      %3147 = vmatprep.mubr.bf16.mxu0 0
      %3148 = vmatmul.mubr.bf16.gmra.mrb[0].mxu0 %v2990
      %v3149 = vpop.f32.mrb[0].mxu0
      %v3150 = vadd.f32 0.0, %v3149
      %v3151 = vpop.f32.mrb[0].mxu0
      %v3152 = vpop.f32.mrb[0].mxu0
      %v3153 = vadd.f32 0.0, %v3152
      %v3154 = vpop.f32.mrb[0].mxu0
      %3155 = vdwg.mxu0
      %v3156 = vadd.f32 %v2862, %v3030
      %v3157 = vadd.f32 %v2863, %v3033
      %v3158 = vadd.f32 %v2864, %v3038
      %v3159 = vadd.f32 %v2865, %v3041
      %v3160 = vadd.f32 %v2866, %v3046
      %v3161 = vadd.f32 %v2867, %v3049
      %v3162 = vadd.f32 %v2868, %v3054
      %v3163 = vadd.f32 %v2869, %v3057
      %v3164 = vadd.f32 %v2870, %v3062
      %v3165 = vadd.f32 %v2871, %v3065
      %v3166 = vadd.f32 %v2872, %v3070
      %v3167 = vadd.f32 %v2873, %v3073
      %v3168 = vadd.f32 %v2874, %v3078
      %v3169 = vadd.f32 %v2875, %v3081
      %v3170 = vadd.f32 %v2876, %v3086
      %v3171 = vadd.f32 %v2877, %v3089
      %v3172 = vadd.f32 %v2878, %v3094
      %v3173 = vadd.f32 %v2879, %v3097
      %v3174 = vadd.f32 %v2880, %v3102
      %v3175 = vadd.f32 %v2881, %v3105
      %v3176 = vadd.f32 %v2882, %v3110
      %v3177 = vadd.f32 %v2883, %v3113
      %v3178 = vadd.f32 %v2884, %v3118
      %v3179 = vadd.f32 %v2885, %v3121
      %v3180 = vadd.f32 %v2886, %v3126
      %v3181 = vadd.f32 %v2887, %v3129
      %v3182 = vadd.f32 %v2888, %v3134
      %v3183 = vadd.f32 %v2889, %v3137
      %v3184 = vadd.f32 %v2890, %v3142
      %v3185 = vadd.f32 %v2891, %v3145
      %v3186 = vadd.f32 %v2892, %v3150
      %v3187 = vadd.f32 %v2893, %v3153
      %v3188 = vld [vmem:[%s465 + $0x22] sm:$0xff]
      %v3189 = vld [vmem:[%s465 + $0x2a] sm:$0xff]
      %v3190 = vld [vmem:[%s465 + $0x32] sm:$0xff]
      %v3191 = vld [vmem:[%s465 + $0x3a] sm:$0xff]
      %v3192 = vld [vmem:[%s465 + $0x42] sm:$0xff]
      %v3193 = vld [vmem:[%s465 + $0x4a] sm:$0xff]
      %v3194 = vld [vmem:[%s465 + $0x52] sm:$0xff]
      %v3195 = vld [vmem:[%s465 + $0x5a] sm:$0xff]
      %v3196 = vld [vmem:[%s465 + $0x62] sm:$0xff]
      %v3197 = vld [vmem:[%s465 + $0x6a] sm:$0xff]
      %v3198 = vld [vmem:[%s465 + $0x72] sm:$0xff]
      %v3199 = vld [vmem:[%s465 + $0x7a] sm:$0xff]
      %v3200 = vld [vmem:[%s465 + $0x82] sm:$0xff]
      %v3201 = vld [vmem:[%s465 + $0x8a] sm:$0xff]
      %v3202 = vld [vmem:[%s465 + $0x92] sm:$0xff]
      %v3203 = vld [vmem:[%s465 + $0x9a] sm:$0xff]
      %v3204 = vld [vmem:[%s465 + $0xa2] sm:$0xff]
      %v3205 = vld [vmem:[%s465 + $0xaa] sm:$0xff]
      %v3206 = vld [vmem:[%s465 + $0xb2] sm:$0xff]
      %v3207 = vld [vmem:[%s465 + $0xba] sm:$0xff]
      %v3208 = vld [vmem:[%s465 + $0xc2] sm:$0xff]
      %v3209 = vld [vmem:[%s465 + $0xca] sm:$0xff]
      %v3210 = vld [vmem:[%s465 + $0xd2] sm:$0xff]
      %v3211 = vld [vmem:[%s465 + $0xda] sm:$0xff]
      %v3212 = vld [vmem:[%s465 + $0xe2] sm:$0xff]
      %v3213 = vld [vmem:[%s465 + $0xea] sm:$0xff]
      %v3214 = vld [vmem:[%s465 + $0xf2] sm:$0xff]
      %v3215 = vld [vmem:[%s465 + $0xfa] sm:$0xff]
      %v3216 = vld [vmem:[%s465 + $0x102] sm:$0xff]
      %v3217 = vld [vmem:[%s465 + $0x10a] sm:$0xff]
      %v3218 = vld [vmem:[%s465 + $0x112] sm:$0xff]
      %v3219 = vld [vmem:[%s465 + $0x11a] sm:$0xff]
      %v3220 = vsel %vm1296, %v3188, 0.0
      %v3221 = vsel %vm1297, %v3189, 0.0
      %v3222 = vsel %vm1298, %v3190, 0.0
      %v3223 = vsel %vm1299, %v3191, 0.0
      %v3224 = vsel %vm1300, %v3192, 0.0
      %v3225 = vsel %vm1301, %v3193, 0.0
      %v3226 = vsel %vm1302, %v3194, 0.0
      %v3227 = vsel %vm1303, %v3195, 0.0
      %v3228 = vsel %vm1304, %v3196, 0.0
      %v3229 = vsel %vm1305, %v3197, 0.0
      %v3230 = vsel %vm1306, %v3198, 0.0
      %v3231 = vsel %vm1307, %v3199, 0.0
      %v3232 = vsel %vm1308, %v3200, 0.0
      %v3233 = vsel %vm1309, %v3201, 0.0
      %v3234 = vsel %vm1310, %v3202, 0.0
      %v3235 = vsel %vm1311, %v3203, 0.0
      %v3236 = vsel %vm1312, %v3204, 0.0
      %v3237 = vsel %vm1313, %v3205, 0.0
      %v3238 = vsel %vm1314, %v3206, 0.0
      %v3239 = vsel %vm1315, %v3207, 0.0
      %v3240 = vsel %vm1316, %v3208, 0.0
      %v3241 = vsel %vm1317, %v3209, 0.0
      %v3242 = vsel %vm1318, %v3210, 0.0
      %v3243 = vsel %vm1319, %v3211, 0.0
      %v3244 = vsel %vm1320, %v3212, 0.0
      %v3245 = vsel %vm1321, %v3213, 0.0
      %v3246 = vsel %vm1322, %v3214, 0.0
      %v3247 = vsel %vm1323, %v3215, 0.0
      %v3248 = vsel %vm1324, %v3216, 0.0
      %v3249 = vsel %vm1325, %v3217, 0.0
      %v3250 = vsel %vm1326, %v3218, 0.0
      %v3251 = vsel %vm1327, %v3219, 0.0
      %v3252 = vpack.c.bf16 %v3221, %v3220
      %v3253 = vpack.c.bf16 %v3223, %v3222
      %v3254 = vpack.c.bf16 %v3225, %v3224
      %v3255 = vpack.c.bf16 %v3227, %v3226
      %v3256 = vpack.c.bf16 %v3229, %v3228
      %v3257 = vpack.c.bf16 %v3231, %v3230
      %v3258 = vpack.c.bf16 %v3233, %v3232
      %v3259 = vpack.c.bf16 %v3235, %v3234
      %v3260 = vpack.c.bf16 %v3237, %v3236
      %v3261 = vpack.c.bf16 %v3239, %v3238
      %v3262 = vpack.c.bf16 %v3241, %v3240
      %v3263 = vpack.c.bf16 %v3243, %v3242
      %v3264 = vpack.c.bf16 %v3245, %v3244
      %v3265 = vpack.c.bf16 %v3247, %v3246
      %v3266 = vpack.c.bf16 %v3249, %v3248
      %v3267 = vpack.c.bf16 %v3251, %v3250
      %s3268 = scalar_lea.vmem %s3, 16
      %v3269 = vld [vmem:[%s3268] sm:$0x3]
      %v3271 = vsel %vm806, %v3252, 0
      %v3274 = vsel %vm806, %v3253, 0
      %v3277 = vsel %vm806, %v3254, 0
      %v3280 = vsel %vm806, %v3255, 0
      %v3283 = vsel %vm806, %v3256, 0
      %v3286 = vsel %vm806, %v3257, 0
      %v3289 = vsel %vm806, %v3258, 0
      %v3292 = vsel %vm806, %v3259, 0
      %v3295 = vsel %vm806, %v3260, 0
      %v3298 = vsel %vm806, %v3261, 0
      %v3301 = vsel %vm806, %v3262, 0
      %v3304 = vsel %vm806, %v3263, 0
      %v3307 = vsel %vm806, %v3264, 0
      %v3310 = vsel %vm806, %v3265, 0
      %v3313 = vsel %vm806, %v3266, 0
      %v3316 = vsel %vm806, %v3267, 0
      %v3319 = vsel %vm855, %v3269, 0
      %3321 = vmatprep.subr.bf16.mxu0 0
      %3322 = vmatpush1.bf16.msra.mxu0 %v3319
      %3323 = vmatprep.subr.bf16.mxu0 0
      %3324 = vmatpush1.bf16.msra.mxu0 0
      %3325 = vmatprep.subr.bf16.mxu0 0
      %3326 = vmatpush1.bf16.msra.mxu0 0
      %3327 = vmatprep.subr.bf16.mxu0 0
      %3328 = vmatpush1.bf16.msra.mxu0 0
      %3329 = vmatprep.subr.bf16.mxu0 0
      %3330 = vmatpush1.bf16.msra.mxu0 0
      %3331 = vmatprep.subr.bf16.mxu0 0
      %3332 = vmatpush1.bf16.msra.mxu0 0
      %3333 = vmatprep.subr.bf16.mxu0 0
      %3334 = vmatpush1.bf16.msra.mxu0 0
      %3335 = vmatprep.subr.bf16.mxu0 0
      %3336 = vmatpush1.bf16.msra.mxu0 0
      %3337 = vmatprep.subr.bf16.mxu0 0
      %3338 = vmatpush1.bf16.msra.mxu0 0
      %3339 = vmatprep.subr.bf16.mxu0 0
      %3340 = vmatpush1.bf16.msra.mxu0 0
      %3341 = vmatprep.subr.bf16.mxu0 0
      %3342 = vmatpush1.bf16.msra.mxu0 0
      %3343 = vmatprep.subr.bf16.mxu0 0
      %3344 = vmatpush1.bf16.msra.mxu0 0
      %3345 = vmatprep.subr.bf16.mxu0 0
      %3346 = vmatpush1.bf16.msra.mxu0 0
      %3347 = vmatprep.subr.bf16.mxu0 0
      %3348 = vmatpush1.bf16.msra.mxu0 0
      %3349 = vmatprep.subr.bf16.mxu0 0
      %3350 = vmatpush1.bf16.msra.mxu0 0
      %3351 = vmatprep.subr.bf16.mxu0 0
      %3352 = vmatpush1.bf16.msra.mxu0 0
      %3353 = vmatprep.mubr.bf16.mxu0 0
      %3354 = vmatmul.mubr.bf16.gmra.mrb[0].mxu0 %v3271
      %v3355 = vpop.f32.mrb[0].mxu0
      %v3356 = vadd.f32 0.0, %v3355
      %v3357 = vpop.f32.mrb[0].mxu0
      %v3358 = vpop.f32.mrb[0].mxu0
      %v3359 = vadd.f32 0.0, %v3358
      %v3360 = vpop.f32.mrb[0].mxu0
      %3361 = vmatprep.mubr.bf16.mxu0 0
      %3362 = vmatmul.mubr.bf16.gmra.mrb[0].mxu0 %v3274
      %v3363 = vpop.f32.mrb[0].mxu0
      %v3364 = vadd.f32 0.0, %v3363
      %v3365 = vpop.f32.mrb[0].mxu0
      %v3366 = vpop.f32.mrb[0].mxu0
      %v3367 = vadd.f32 0.0, %v3366
      %v3368 = vpop.f32.mrb[0].mxu0
      %3369 = vmatprep.mubr.bf16.mxu0 0
      %3370 = vmatmul.mubr.bf16.gmra.mrb[0].mxu0 %v3277
      %v3371 = vpop.f32.mrb[0].mxu0
      %v3372 = vadd.f32 0.0, %v3371
      %v3373 = vpop.f32.mrb[0].mxu0
      %v3374 = vpop.f32.mrb[0].mxu0
      %v3375 = vadd.f32 0.0, %v3374
      %v3376 = vpop.f32.mrb[0].mxu0
      %3377 = vmatprep.mubr.bf16.mxu0 0
      %3378 = vmatmul.mubr.bf16.gmra.mrb[0].mxu0 %v3280
      %v3379 = vpop.f32.mrb[0].mxu0
      %v3380 = vadd.f32 0.0, %v3379
      %v3381 = vpop.f32.mrb[0].mxu0
      %v3382 = vpop.f32.mrb[0].mxu0
      %v3383 = vadd.f32 0.0, %v3382
      %v3384 = vpop.f32.mrb[0].mxu0
      %3385 = vmatprep.mubr.bf16.mxu0 0
      %3386 = vmatmul.mubr.bf16.gmra.mrb[0].mxu0 %v3283
      %v3387 = vpop.f32.mrb[0].mxu0
      %v3388 = vadd.f32 0.0, %v3387
      %v3389 = vpop.f32.mrb[0].mxu0
      %v3390 = vpop.f32.mrb[0].mxu0
      %v3391 = vadd.f32 0.0, %v3390
      %v3392 = vpop.f32.mrb[0].mxu0
      %3393 = vmatprep.mubr.bf16.mxu0 0
      %3394 = vmatmul.mubr.bf16.gmra.mrb[0].mxu0 %v3286
      %v3395 = vpop.f32.mrb[0].mxu0
      %v3396 = vadd.f32 0.0, %v3395
      %v3397 = vpop.f32.mrb[0].mxu0
      %v3398 = vpop.f32.mrb[0].mxu0
      %v3399 = vadd.f32 0.0, %v3398
      %v3400 = vpop.f32.mrb[0].mxu0
      %3401 = vmatprep.mubr.bf16.mxu0 0
      %3402 = vmatmul.mubr.bf16.gmra.mrb[0].mxu0 %v3289
      %v3403 = vpop.f32.mrb[0].mxu0
      %v3404 = vadd.f32 0.0, %v3403
      %v3405 = vpop.f32.mrb[0].mxu0
      %v3406 = vpop.f32.mrb[0].mxu0
      %v3407 = vadd.f32 0.0, %v3406
      %v3408 = vpop.f32.mrb[0].mxu0
      %3409 = vmatprep.mubr.bf16.mxu0 0
      %3410 = vmatmul.mubr.bf16.gmra.mrb[0].mxu0 %v3292
      %v3411 = vpop.f32.mrb[0].mxu0
      %v3412 = vadd.f32 0.0, %v3411
      %v3413 = vpop.f32.mrb[0].mxu0
      %v3414 = vpop.f32.mrb[0].mxu0
      %v3415 = vadd.f32 0.0, %v3414
      %v3416 = vpop.f32.mrb[0].mxu0
      %3417 = vmatprep.mubr.bf16.mxu0 0
      %3418 = vmatmul.mubr.bf16.gmra.mrb[0].mxu0 %v3295
      %v3419 = vpop.f32.mrb[0].mxu0
      %v3420 = vadd.f32 0.0, %v3419
      %v3421 = vpop.f32.mrb[0].mxu0
      %v3422 = vpop.f32.mrb[0].mxu0
      %v3423 = vadd.f32 0.0, %v3422
      %v3424 = vpop.f32.mrb[0].mxu0
      %3425 = vmatprep.mubr.bf16.mxu0 0
      %3426 = vmatmul.mubr.bf16.gmra.mrb[0].mxu0 %v3298
      %v3427 = vpop.f32.mrb[0].mxu0
      %v3428 = vadd.f32 0.0, %v3427
      %v3429 = vpop.f32.mrb[0].mxu0
      %v3430 = vpop.f32.mrb[0].mxu0
      %v3431 = vadd.f32 0.0, %v3430
      %v3432 = vpop.f32.mrb[0].mxu0
      %3433 = vmatprep.mubr.bf16.mxu0 0
      %3434 = vmatmul.mubr.bf16.gmra.mrb[0].mxu0 %v3301
      %v3435 = vpop.f32.mrb[0].mxu0
      %v3436 = vadd.f32 0.0, %v3435
      %v3437 = vpop.f32.mrb[0].mxu0
      %v3438 = vpop.f32.mrb[0].mxu0
      %v3439 = vadd.f32 0.0, %v3438
      %v3440 = vpop.f32.mrb[0].mxu0
      %3441 = vmatprep.mubr.bf16.mxu0 0
      %3442 = vmatmul.mubr.bf16.gmra.mrb[0].mxu0 %v3304
      %v3443 = vpop.f32.mrb[0].mxu0
      %v3444 = vadd.f32 0.0, %v3443
      %v3445 = vpop.f32.mrb[0].mxu0
      %v3446 = vpop.f32.mrb[0].mxu0
      %v3447 = vadd.f32 0.0, %v3446
      %v3448 = vpop.f32.mrb[0].mxu0
      %3449 = vmatprep.mubr.bf16.mxu0 0
      %3450 = vmatmul.mubr.bf16.gmra.mrb[0].mxu0 %v3307
      %v3451 = vpop.f32.mrb[0].mxu0
      %v3452 = vadd.f32 0.0, %v3451
      %v3453 = vpop.f32.mrb[0].mxu0
      %v3454 = vpop.f32.mrb[0].mxu0
      %v3455 = vadd.f32 0.0, %v3454
      %v3456 = vpop.f32.mrb[0].mxu0
      %3457 = vmatprep.mubr.bf16.mxu0 0
      %3458 = vmatmul.mubr.bf16.gmra.mrb[0].mxu0 %v3310
      %v3459 = vpop.f32.mrb[0].mxu0
      %v3460 = vadd.f32 0.0, %v3459
      %v3461 = vpop.f32.mrb[0].mxu0
      %v3462 = vpop.f32.mrb[0].mxu0
      %v3463 = vadd.f32 0.0, %v3462
      %v3464 = vpop.f32.mrb[0].mxu0
      %3465 = vmatprep.mubr.bf16.mxu0 0
      %3466 = vmatmul.mubr.bf16.gmra.mrb[0].mxu0 %v3313
      %v3467 = vpop.f32.mrb[0].mxu0
      %v3468 = vadd.f32 0.0, %v3467
      %v3469 = vpop.f32.mrb[0].mxu0
      %v3470 = vpop.f32.mrb[0].mxu0
      %v3471 = vadd.f32 0.0, %v3470
      %v3472 = vpop.f32.mrb[0].mxu0
      %3473 = vmatprep.mubr.bf16.mxu0 0
      %3474 = vmatmul.mubr.bf16.gmra.mrb[0].mxu0 %v3316
      %v3475 = vpop.f32.mrb[0].mxu0
      %v3476 = vadd.f32 0.0, %v3475
      %v3477 = vpop.f32.mrb[0].mxu0
      %v3478 = vpop.f32.mrb[0].mxu0
      %v3479 = vadd.f32 0.0, %v3478
      %v3480 = vpop.f32.mrb[0].mxu0
      %3481 = vdwg.mxu0
      %v3482 = vadd.f32 %v3156, %v3356
      %v3483 = vadd.f32 %v3157, %v3359
      %v3484 = vadd.f32 %v3158, %v3364
      %v3485 = vadd.f32 %v3159, %v3367
      %v3486 = vadd.f32 %v3160, %v3372
      %v3487 = vadd.f32 %v3161, %v3375
      %v3488 = vadd.f32 %v3162, %v3380
      %v3489 = vadd.f32 %v3163, %v3383
      %v3490 = vadd.f32 %v3164, %v3388
      %v3491 = vadd.f32 %v3165, %v3391
      %v3492 = vadd.f32 %v3166, %v3396
      %v3493 = vadd.f32 %v3167, %v3399
      %v3494 = vadd.f32 %v3168, %v3404
      %v3495 = vadd.f32 %v3169, %v3407
      %v3496 = vadd.f32 %v3170, %v3412
      %v3497 = vadd.f32 %v3171, %v3415
      %v3498 = vadd.f32 %v3172, %v3420
      %v3499 = vadd.f32 %v3173, %v3423
      %v3500 = vadd.f32 %v3174, %v3428
      %v3501 = vadd.f32 %v3175, %v3431
      %v3502 = vadd.f32 %v3176, %v3436
      %v3503 = vadd.f32 %v3177, %v3439
      %v3504 = vadd.f32 %v3178, %v3444
      %v3505 = vadd.f32 %v3179, %v3447
      %v3506 = vadd.f32 %v3180, %v3452
      %v3507 = vadd.f32 %v3181, %v3455
      %v3508 = vadd.f32 %v3182, %v3460
      %v3509 = vadd.f32 %v3183, %v3463
      %v3510 = vadd.f32 %v3184, %v3468
      %v3511 = vadd.f32 %v3185, %v3471
      %v3512 = vadd.f32 %v3186, %v3476
      %v3513 = vadd.f32 %v3187, %v3479
      %v3514 = vld [vmem:[%s4] sm:$0x1]
      %v3516 = vlaneseq
      %v3517 = vshrl.u32 %v3516, 7
      %v3518 = vsub.s32 0, %v3517
      %v3519 = vrot.slane %v3514, %v3518
      %v3521 = vadd.f32 %v3482, %v3519
      %v3522 = vadd.f32 %v3483, %v3519
      %v3523 = vadd.f32 %v3484, %v3519
      %v3524 = vadd.f32 %v3485, %v3519
      %v3525 = vadd.f32 %v3486, %v3519
      %v3526 = vadd.f32 %v3487, %v3519
      %v3527 = vadd.f32 %v3488, %v3519
      %v3528 = vadd.f32 %v3489, %v3519
      %v3529 = vadd.f32 %v3490, %v3519
      %v3530 = vadd.f32 %v3491, %v3519
      %v3531 = vadd.f32 %v3492, %v3519
      %v3532 = vadd.f32 %v3493, %v3519
      %v3533 = vadd.f32 %v3494, %v3519
      %v3534 = vadd.f32 %v3495, %v3519
      %v3535 = vadd.f32 %v3496, %v3519
      %v3536 = vadd.f32 %v3497, %v3519
      %v3537 = vadd.f32 %v3498, %v3519
      %v3538 = vadd.f32 %v3499, %v3519
      %v3539 = vadd.f32 %v3500, %v3519
      %v3540 = vadd.f32 %v3501, %v3519
      %v3541 = vadd.f32 %v3502, %v3519
      %v3542 = vadd.f32 %v3503, %v3519
      %v3543 = vadd.f32 %v3504, %v3519
      %v3544 = vadd.f32 %v3505, %v3519
      %v3545 = vadd.f32 %v3506, %v3519
      %v3546 = vadd.f32 %v3507, %v3519
      %v3547 = vadd.f32 %v3508, %v3519
      %v3548 = vadd.f32 %v3509, %v3519
      %v3549 = vadd.f32 %v3510, %v3519
      %v3550 = vadd.f32 %v3511, %v3519
      %v3551 = vadd.f32 %v3512, %v3519
      %v3552 = vadd.f32 %v3513, %v3519
      %v3553 = vld [vmem:[%s470] sm:$0xff]
      %v3554 = vld [vmem:[%s470 + $0x8] sm:$0xff]
      %v3555 = vld [vmem:[%s470 + $0x10] sm:$0xff]
      %v3556 = vld [vmem:[%s470 + $0x18] sm:$0xff]
      %v3557 = vld [vmem:[%s470 + $0x20] sm:$0xff]
      %v3558 = vld [vmem:[%s470 + $0x28] sm:$0xff]
      %v3559 = vld [vmem:[%s470 + $0x30] sm:$0xff]
      %v3560 = vld [vmem:[%s470 + $0x38] sm:$0xff]
      %v3561 = vld [vmem:[%s470 + $0x40] sm:$0xff]
      %v3562 = vld [vmem:[%s470 + $0x48] sm:$0xff]
      %v3563 = vld [vmem:[%s470 + $0x50] sm:$0xff]
      %v3564 = vld [vmem:[%s470 + $0x58] sm:$0xff]
      %v3565 = vld [vmem:[%s470 + $0x60] sm:$0xff]
      %v3566 = vld [vmem:[%s470 + $0x68] sm:$0xff]
      %v3567 = vld [vmem:[%s470 + $0x70] sm:$0xff]
      %v3568 = vld [vmem:[%s470 + $0x78] sm:$0xff]
      %v3569 = vld [vmem:[%s470 + $0x80] sm:$0xff]
      %v3570 = vld [vmem:[%s470 + $0x88] sm:$0xff]
      %v3571 = vld [vmem:[%s470 + $0x90] sm:$0xff]
      %v3572 = vld [vmem:[%s470 + $0x98] sm:$0xff]
      %v3573 = vld [vmem:[%s470 + $0xa0] sm:$0xff]
      %v3574 = vld [vmem:[%s470 + $0xa8] sm:$0xff]
      %v3575 = vld [vmem:[%s470 + $0xb0] sm:$0xff]
      %v3576 = vld [vmem:[%s470 + $0xb8] sm:$0xff]
      %v3577 = vld [vmem:[%s470 + $0xc0] sm:$0xff]
      %v3578 = vld [vmem:[%s470 + $0xc8] sm:$0xff]
      %v3579 = vld [vmem:[%s470 + $0xd0] sm:$0xff]
      %v3580 = vld [vmem:[%s470 + $0xd8] sm:$0xff]
      %v3581 = vld [vmem:[%s470 + $0xe0] sm:$0xff]
      %v3582 = vld [vmem:[%s470 + $0xe8] sm:$0xff]
      %v3583 = vld [vmem:[%s470 + $0xf0] sm:$0xff]
      %v3584 = vld [vmem:[%s470 + $0xf8] sm:$0xff]
      %v3585 = vsel %vm675, %v3553, 0.0
      %v3586 = vsel %vm676, %v3554, 0.0
      %v3587 = vsel %vm677, %v3555, 0.0
      %v3588 = vsel %vm678, %v3556, 0.0
      %v3589 = vsel %vm679, %v3557, 0.0
      %v3590 = vsel %vm680, %v3558, 0.0
      %v3591 = vsel %vm681, %v3559, 0.0
      %v3592 = vsel %vm682, %v3560, 0.0
      %v3593 = vsel %vm683, %v3561, 0.0
      %v3594 = vsel %vm684, %v3562, 0.0
      %v3595 = vsel %vm685, %v3563, 0.0
      %v3596 = vsel %vm686, %v3564, 0.0
      %v3597 = vsel %vm687, %v3565, 0.0
      %v3598 = vsel %vm688, %v3566, 0.0
      %v3599 = vsel %vm689, %v3567, 0.0
      %v3600 = vsel %vm690, %v3568, 0.0
      %v3601 = vsel %vm691, %v3569, 0.0
      %v3602 = vsel %vm692, %v3570, 0.0
      %v3603 = vsel %vm693, %v3571, 0.0
      %v3604 = vsel %vm694, %v3572, 0.0
      %v3605 = vsel %vm695, %v3573, 0.0
      %v3606 = vsel %vm696, %v3574, 0.0
      %v3607 = vsel %vm697, %v3575, 0.0
      %v3608 = vsel %vm698, %v3576, 0.0
      %v3609 = vsel %vm699, %v3577, 0.0
      %v3610 = vsel %vm700, %v3578, 0.0
      %v3611 = vsel %vm701, %v3579, 0.0
      %v3612 = vsel %vm702, %v3580, 0.0
      %v3613 = vsel %vm703, %v3581, 0.0
      %v3614 = vsel %vm704, %v3582, 0.0
      %v3615 = vsel %vm705, %v3583, 0.0
      %v3616 = vsel %vm706, %v3584, 0.0
      %v3617 = vpack.c.bf16 %v3586, %v3585
      %v3618 = vpack.c.bf16 %v3588, %v3587
      %v3619 = vpack.c.bf16 %v3590, %v3589
      %v3620 = vpack.c.bf16 %v3592, %v3591
      %v3621 = vpack.c.bf16 %v3594, %v3593
      %v3622 = vpack.c.bf16 %v3596, %v3595
      %v3623 = vpack.c.bf16 %v3598, %v3597
      %v3624 = vpack.c.bf16 %v3600, %v3599
      %v3625 = vpack.c.bf16 %v3602, %v3601
      %v3626 = vpack.c.bf16 %v3604, %v3603
      %v3627 = vpack.c.bf16 %v3606, %v3605
      %v3628 = vpack.c.bf16 %v3608, %v3607
      %v3629 = vpack.c.bf16 %v3610, %v3609
      %v3630 = vpack.c.bf16 %v3612, %v3611
      %v3631 = vpack.c.bf16 %v3614, %v3613
      %v3632 = vpack.c.bf16 %v3616, %v3615
      %v3633 = vld [vmem:[%s7] sm:$0xf]
      %v3634 = vld [vmem:[%s7 + $0x4] sm:$0xf]
      %v3635 = vld [vmem:[%s7 + $0x8] sm:$0xf]
      %v3636 = vld [vmem:[%s7 + $0xc] sm:$0xf]
      %v3637 = vld [vmem:[%s470 + $0x1] sm:$0xff]
      %v3638 = vld [vmem:[%s470 + $0x9] sm:$0xff]
      %v3639 = vld [vmem:[%s470 + $0x11] sm:$0xff]
      %v3640 = vld [vmem:[%s470 + $0x19] sm:$0xff]
      %v3641 = vld [vmem:[%s470 + $0x21] sm:$0xff]
      %v3642 = vld [vmem:[%s470 + $0x29] sm:$0xff]
      %v3643 = vld [vmem:[%s470 + $0x31] sm:$0xff]
      %v3644 = vld [vmem:[%s470 + $0x39] sm:$0xff]
      %v3645 = vld [vmem:[%s470 + $0x41] sm:$0xff]
      %v3646 = vld [vmem:[%s470 + $0x49] sm:$0xff]
      %v3647 = vld [vmem:[%s470 + $0x51] sm:$0xff]
      %v3648 = vld [vmem:[%s470 + $0x59] sm:$0xff]
      %v3649 = vld [vmem:[%s470 + $0x61] sm:$0xff]
      %v3650 = vld [vmem:[%s470 + $0x69] sm:$0xff]
      %v3651 = vld [vmem:[%s470 + $0x71] sm:$0xff]
      %v3652 = vld [vmem:[%s470 + $0x79] sm:$0xff]
      %v3653 = vld [vmem:[%s470 + $0x81] sm:$0xff]
      %v3654 = vld [vmem:[%s470 + $0x89] sm:$0xff]
      %v3655 = vld [vmem:[%s470 + $0x91] sm:$0xff]
      %v3656 = vld [vmem:[%s470 + $0x99] sm:$0xff]
      %v3657 = vld [vmem:[%s470 + $0xa1] sm:$0xff]
      %v3658 = vld [vmem:[%s470 + $0xa9] sm:$0xff]
      %v3659 = vld [vmem:[%s470 + $0xb1] sm:$0xff]
      %v3660 = vld [vmem:[%s470 + $0xb9] sm:$0xff]
      %v3661 = vld [vmem:[%s470 + $0xc1] sm:$0xff]
      %v3662 = vld [vmem:[%s470 + $0xc9] sm:$0xff]
      %v3663 = vld [vmem:[%s470 + $0xd1] sm:$0xff]
      %v3664 = vld [vmem:[%s470 + $0xd9] sm:$0xff]
      %v3665 = vld [vmem:[%s470 + $0xe1] sm:$0xff]
      %v3666 = vld [vmem:[%s470 + $0xe9] sm:$0xff]
      %v3667 = vld [vmem:[%s470 + $0xf1] sm:$0xff]
      %v3668 = vld [vmem:[%s470 + $0xf9] sm:$0xff]
      %v3669 = vpack.c.bf16 %v3638, %v3637
      %v3670 = vpack.c.bf16 %v3640, %v3639
      %v3671 = vpack.c.bf16 %v3642, %v3641
      %v3672 = vpack.c.bf16 %v3644, %v3643
      %v3673 = vpack.c.bf16 %v3646, %v3645
      %v3674 = vpack.c.bf16 %v3648, %v3647
      %v3675 = vpack.c.bf16 %v3650, %v3649
      %v3676 = vpack.c.bf16 %v3652, %v3651
      %v3677 = vpack.c.bf16 %v3654, %v3653
      %v3678 = vpack.c.bf16 %v3656, %v3655
      %v3679 = vpack.c.bf16 %v3658, %v3657
      %v3680 = vpack.c.bf16 %v3660, %v3659
      %v3681 = vpack.c.bf16 %v3662, %v3661
      %v3682 = vpack.c.bf16 %v3664, %v3663
      %v3683 = vpack.c.bf16 %v3666, %v3665
      %v3684 = vpack.c.bf16 %v3668, %v3667
      %s3685 = scalar_lea.vmem %s7, 16
      %v3686 = vld [vmem:[%s3685] sm:$0xf]
      %v3687 = vld [vmem:[%s3685 + $0x4] sm:$0xf]
      %v3688 = vld [vmem:[%s3685 + $0x8] sm:$0xf]
      %v3689 = vld [vmem:[%s3685 + $0xc] sm:$0xf]
      %v3694 = vunpack.c.l.b16 %v3686
      %v3695 = vunpack.c.l.b16 %v3687
      %v3696 = vunpack.c.l.b16 %v3688
      %v3697 = vunpack.c.l.b16 %v3689
      %v3698 = vpack.c.b16 %v3695, %v3694
      %v3699 = vpack.c.b16 %v3697, %v3696
      %vm3702 = vcmask 261120
      %v3704 = vsel %vm3702, %v3669, 0
      %v3707 = vsel %vm3702, %v3670, 0
      %v3710 = vsel %vm3702, %v3671, 0
      %v3713 = vsel %vm3702, %v3672, 0
      %v3716 = vsel %vm3702, %v3673, 0
      %v3719 = vsel %vm3702, %v3674, 0
      %v3722 = vsel %vm3702, %v3675, 0
      %v3725 = vsel %vm3702, %v3676, 0
      %v3728 = vsel %vm3702, %v3677, 0
      %v3731 = vsel %vm3702, %v3678, 0
      %v3734 = vsel %vm3702, %v3679, 0
      %v3737 = vsel %vm3702, %v3680, 0
      %v3740 = vsel %vm3702, %v3681, 0
      %v3743 = vsel %vm3702, %v3682, 0
      %v3746 = vsel %vm3702, %v3683, 0
      %v3749 = vsel %vm3702, %v3684, 0
      %3751 = vmatprep.subr.bf16.mxu0 0
      %3752 = vmatpush1.bf16.msra.mxu0 %v3698
      %3753 = vmatprep.subr.bf16.mxu0 0
      %3754 = vmatpush1.bf16.msra.mxu0 %v3699
      %3755 = vmatprep.subr.bf16.mxu0 0
      %3756 = vmatpush1.bf16.msra.mxu0 0
      %3757 = vmatprep.subr.bf16.mxu0 0
      %3758 = vmatpush1.bf16.msra.mxu0 0
      %3759 = vmatprep.subr.bf16.mxu0 0
      %3760 = vmatpush1.bf16.msra.mxu0 0
      %3761 = vmatprep.subr.bf16.mxu0 0
      %3762 = vmatpush1.bf16.msra.mxu0 0
      %3763 = vmatprep.subr.bf16.mxu0 0
      %3764 = vmatpush1.bf16.msra.mxu0 0
      %3765 = vmatprep.subr.bf16.mxu0 0
      %3766 = vmatpush1.bf16.msra.mxu0 0
      %3767 = vmatprep.subr.bf16.mxu0 0
      %3768 = vmatpush1.bf16.msra.mxu0 0
      %3769 = vmatprep.subr.bf16.mxu0 0
      %3770 = vmatpush1.bf16.msra.mxu0 0
      %3771 = vmatprep.subr.bf16.mxu0 0
      %3772 = vmatpush1.bf16.msra.mxu0 0
      %3773 = vmatprep.subr.bf16.mxu0 0
      %3774 = vmatpush1.bf16.msra.mxu0 0
      %3775 = vmatprep.subr.bf16.mxu0 0
      %3776 = vmatpush1.bf16.msra.mxu0 0
      %3777 = vmatprep.subr.bf16.mxu0 0
      %3778 = vmatpush1.bf16.msra.mxu0 0
      %3779 = vmatprep.subr.bf16.mxu0 0
      %3780 = vmatpush1.bf16.msra.mxu0 0
      %3781 = vmatprep.subr.bf16.mxu0 0
      %3782 = vmatpush1.bf16.msra.mxu0 0
      %3783 = vmatprep.mubr.bf16.mxu0 0
      %3784 = vmatmul.mubr.bf16.gmra.mrb[0].mxu0 %v3704
      %v3785 = vpop.f32.mrb[0].mxu0
      %v3786 = vadd.f32 0.0, %v3785
      %v3787 = vpop.f32.mrb[0].mxu0
      %v3788 = vpop.f32.mrb[0].mxu0
      %v3789 = vadd.f32 0.0, %v3788
      %v3790 = vpop.f32.mrb[0].mxu0
      %3791 = vmatprep.mubr.bf16.mxu0 0
      %3792 = vmatmul.mubr.bf16.gmra.mrb[0].mxu0 %v3707
      %v3793 = vpop.f32.mrb[0].mxu0
      %v3794 = vadd.f32 0.0, %v3793
      %v3795 = vpop.f32.mrb[0].mxu0
      %v3796 = vpop.f32.mrb[0].mxu0
      %v3797 = vadd.f32 0.0, %v3796
      %v3798 = vpop.f32.mrb[0].mxu0
      %3799 = vmatprep.mubr.bf16.mxu0 0
      %3800 = vmatmul.mubr.bf16.gmra.mrb[0].mxu0 %v3710
      %v3801 = vpop.f32.mrb[0].mxu0
      %v3802 = vadd.f32 0.0, %v3801
      %v3803 = vpop.f32.mrb[0].mxu0
      %v3804 = vpop.f32.mrb[0].mxu0
      %v3805 = vadd.f32 0.0, %v3804
      %v3806 = vpop.f32.mrb[0].mxu0
      %3807 = vmatprep.mubr.bf16.mxu0 0
      %3808 = vmatmul.mubr.bf16.gmra.mrb[0].mxu0 %v3713
      %v3809 = vpop.f32.mrb[0].mxu0
      %v3810 = vadd.f32 0.0, %v3809
      %v3811 = vpop.f32.mrb[0].mxu0
      %v3812 = vpop.f32.mrb[0].mxu0
      %v3813 = vadd.f32 0.0, %v3812
      %v3814 = vpop.f32.mrb[0].mxu0
      %3815 = vmatprep.mubr.bf16.mxu0 0
      %3816 = vmatmul.mubr.bf16.gmra.mrb[0].mxu0 %v3716
      %v3817 = vpop.f32.mrb[0].mxu0
      %v3818 = vadd.f32 0.0, %v3817
      %v3819 = vpop.f32.mrb[0].mxu0
      %v3820 = vpop.f32.mrb[0].mxu0
      %v3821 = vadd.f32 0.0, %v3820
      %v3822 = vpop.f32.mrb[0].mxu0
      %3823 = vmatprep.mubr.bf16.mxu0 0
      %3824 = vmatmul.mubr.bf16.gmra.mrb[0].mxu0 %v3719
      %v3825 = vpop.f32.mrb[0].mxu0
      %v3826 = vadd.f32 0.0, %v3825
      %v3827 = vpop.f32.mrb[0].mxu0
      %v3828 = vpop.f32.mrb[0].mxu0
      %v3829 = vadd.f32 0.0, %v3828
      %v3830 = vpop.f32.mrb[0].mxu0
      %3831 = vmatprep.mubr.bf16.mxu0 0
      %3832 = vmatmul.mubr.bf16.gmra.mrb[0].mxu0 %v3722
      %v3833 = vpop.f32.mrb[0].mxu0
      %v3834 = vadd.f32 0.0, %v3833
      %v3835 = vpop.f32.mrb[0].mxu0
      %v3836 = vpop.f32.mrb[0].mxu0
      %v3837 = vadd.f32 0.0, %v3836
      %v3838 = vpop.f32.mrb[0].mxu0
      %3839 = vmatprep.mubr.bf16.mxu0 0
      %3840 = vmatmul.mubr.bf16.gmra.mrb[0].mxu0 %v3725
      %v3841 = vpop.f32.mrb[0].mxu0
      %v3842 = vadd.f32 0.0, %v3841
      %v3843 = vpop.f32.mrb[0].mxu0
      %v3844 = vpop.f32.mrb[0].mxu0
      %v3845 = vadd.f32 0.0, %v3844
      %v3846 = vpop.f32.mrb[0].mxu0
      %3847 = vmatprep.mubr.bf16.mxu0 0
      %3848 = vmatmul.mubr.bf16.gmra.mrb[0].mxu0 %v3728
      %v3849 = vpop.f32.mrb[0].mxu0
      %v3850 = vadd.f32 0.0, %v3849
      %v3851 = vpop.f32.mrb[0].mxu0
      %v3852 = vpop.f32.mrb[0].mxu0
      %v3853 = vadd.f32 0.0, %v3852
      %v3854 = vpop.f32.mrb[0].mxu0
      %3855 = vmatprep.mubr.bf16.mxu0 0
      %3856 = vmatmul.mubr.bf16.gmra.mrb[0].mxu0 %v3731
      %v3857 = vpop.f32.mrb[0].mxu0
      %v3858 = vadd.f32 0.0, %v3857
      %v3859 = vpop.f32.mrb[0].mxu0
      %v3860 = vpop.f32.mrb[0].mxu0
      %v3861 = vadd.f32 0.0, %v3860
      %v3862 = vpop.f32.mrb[0].mxu0
      %3863 = vmatprep.mubr.bf16.mxu0 0
      %3864 = vmatmul.mubr.bf16.gmra.mrb[0].mxu0 %v3734
      %v3865 = vpop.f32.mrb[0].mxu0
      %v3866 = vadd.f32 0.0, %v3865
      %v3867 = vpop.f32.mrb[0].mxu0
      %v3868 = vpop.f32.mrb[0].mxu0
      %v3869 = vadd.f32 0.0, %v3868
      %v3870 = vpop.f32.mrb[0].mxu0
      %3871 = vmatprep.mubr.bf16.mxu0 0
      %3872 = vmatmul.mubr.bf16.gmra.mrb[0].mxu0 %v3737
      %v3873 = vpop.f32.mrb[0].mxu0
      %v3874 = vadd.f32 0.0, %v3873
      %v3875 = vpop.f32.mrb[0].mxu0
      %v3876 = vpop.f32.mrb[0].mxu0
      %v3877 = vadd.f32 0.0, %v3876
      %v3878 = vpop.f32.mrb[0].mxu0
      %3879 = vmatprep.mubr.bf16.mxu0 0
      %3880 = vmatmul.mubr.bf16.gmra.mrb[0].mxu0 %v3740
      %v3881 = vpop.f32.mrb[0].mxu0
      %v3882 = vadd.f32 0.0, %v3881
      %v3883 = vpop.f32.mrb[0].mxu0
      %v3884 = vpop.f32.mrb[0].mxu0
      %v3885 = vadd.f32 0.0, %v3884
      %v3886 = vpop.f32.mrb[0].mxu0
      %3887 = vmatprep.mubr.bf16.mxu0 0
      %3888 = vmatmul.mubr.bf16.gmra.mrb[0].mxu0 %v3743
      %v3889 = vpop.f32.mrb[0].mxu0
      %v3890 = vadd.f32 0.0, %v3889
      %v3891 = vpop.f32.mrb[0].mxu0
      %v3892 = vpop.f32.mrb[0].mxu0
      %v3893 = vadd.f32 0.0, %v3892
      %v3894 = vpop.f32.mrb[0].mxu0
      %3895 = vmatprep.mubr.bf16.mxu0 0
      %3896 = vmatmul.mubr.bf16.gmra.mrb[0].mxu0 %v3746
      %v3897 = vpop.f32.mrb[0].mxu0
      %v3898 = vadd.f32 0.0, %v3897
      %v3899 = vpop.f32.mrb[0].mxu0
      %v3900 = vpop.f32.mrb[0].mxu0
      %v3901 = vadd.f32 0.0, %v3900
      %v3902 = vpop.f32.mrb[0].mxu0
      %3903 = vmatprep.mubr.bf16.mxu0 0
      %3904 = vmatmul.mubr.bf16.gmra.mrb[0].mxu0 %v3749
      %v3905 = vpop.f32.mrb[0].mxu0
      %v3906 = vadd.f32 0.0, %v3905
      %v3907 = vpop.f32.mrb[0].mxu0
      %v3908 = vpop.f32.mrb[0].mxu0
      %v3909 = vadd.f32 0.0, %v3908
      %v3910 = vpop.f32.mrb[0].mxu0
      %3911 = vdwg.mxu0
      %v3916 = vunpack.c.l.b16 %v3633
      %v3917 = vunpack.c.l.b16 %v3634
      %v3918 = vunpack.c.l.b16 %v3635
      %v3919 = vunpack.c.l.b16 %v3636
      %v3920 = vpack.c.b16 %v3917, %v3916
      %v3921 = vpack.c.b16 %v3919, %v3918
      %v3925 = vsel %vm3702, %v3617, 0
      %v3928 = vsel %vm3702, %v3618, 0
      %v3931 = vsel %vm3702, %v3619, 0
      %v3934 = vsel %vm3702, %v3620, 0
      %v3937 = vsel %vm3702, %v3621, 0
      %v3940 = vsel %vm3702, %v3622, 0
      %v3943 = vsel %vm3702, %v3623, 0
      %v3946 = vsel %vm3702, %v3624, 0
      %v3949 = vsel %vm3702, %v3625, 0
      %v3952 = vsel %vm3702, %v3626, 0
      %v3955 = vsel %vm3702, %v3627, 0
      %v3958 = vsel %vm3702, %v3628, 0
      %v3961 = vsel %vm3702, %v3629, 0
      %v3964 = vsel %vm3702, %v3630, 0
      %v3967 = vsel %vm3702, %v3631, 0
      %v3970 = vsel %vm3702, %v3632, 0
      %3972 = vmatprep.subr.bf16.mxu0 0
      %3973 = vmatpush1.bf16.msra.mxu0 %v3920
      %3974 = vmatprep.subr.bf16.mxu0 0
      %3975 = vmatpush1.bf16.msra.mxu0 %v3921
      %3976 = vmatprep.subr.bf16.mxu0 0
      %3977 = vmatpush1.bf16.msra.mxu0 0
      %3978 = vmatprep.subr.bf16.mxu0 0
      %3979 = vmatpush1.bf16.msra.mxu0 0
      %3980 = vmatprep.subr.bf16.mxu0 0
      %3981 = vmatpush1.bf16.msra.mxu0 0
      %3982 = vmatprep.subr.bf16.mxu0 0
      %3983 = vmatpush1.bf16.msra.mxu0 0
      %3984 = vmatprep.subr.bf16.mxu0 0
      %3985 = vmatpush1.bf16.msra.mxu0 0
      %3986 = vmatprep.subr.bf16.mxu0 0
      %3987 = vmatpush1.bf16.msra.mxu0 0
      %3988 = vmatprep.subr.bf16.mxu0 0
      %3989 = vmatpush1.bf16.msra.mxu0 0
      %3990 = vmatprep.subr.bf16.mxu0 0
      %3991 = vmatpush1.bf16.msra.mxu0 0
      %3992 = vmatprep.subr.bf16.mxu0 0
      %3993 = vmatpush1.bf16.msra.mxu0 0
      %3994 = vmatprep.subr.bf16.mxu0 0
      %3995 = vmatpush1.bf16.msra.mxu0 0
      %3996 = vmatprep.subr.bf16.mxu0 0
      %3997 = vmatpush1.bf16.msra.mxu0 0
      %3998 = vmatprep.subr.bf16.mxu0 0
      %3999 = vmatpush1.bf16.msra.mxu0 0
      %4000 = vmatprep.subr.bf16.mxu0 0
      %4001 = vmatpush1.bf16.msra.mxu0 0
      %4002 = vmatprep.subr.bf16.mxu0 0
      %4003 = vmatpush1.bf16.msra.mxu0 0
      %4004 = vmatprep.mubr.bf16.mxu0 0
      %4005 = vmatmul.mubr.bf16.gmra.mrb[0].mxu0 %v3925
      %v4006 = vpop.f32.mrb[0].mxu0
      %v4007 = vadd.f32 %v3786, %v4006
      %v4008 = vpop.f32.mrb[0].mxu0
      %v4009 = vpop.f32.mrb[0].mxu0
      %v4010 = vadd.f32 %v3789, %v4009
      %v4011 = vpop.f32.mrb[0].mxu0
      %4012 = vmatprep.mubr.bf16.mxu0 0
      %4013 = vmatmul.mubr.bf16.gmra.mrb[0].mxu0 %v3928
      %v4014 = vpop.f32.mrb[0].mxu0
      %v4015 = vadd.f32 %v3794, %v4014
      %v4016 = vpop.f32.mrb[0].mxu0
      %v4017 = vpop.f32.mrb[0].mxu0
      %v4018 = vadd.f32 %v3797, %v4017
      %v4019 = vpop.f32.mrb[0].mxu0
      %4020 = vmatprep.mubr.bf16.mxu0 0
      %4021 = vmatmul.mubr.bf16.gmra.mrb[0].mxu0 %v3931
      %v4022 = vpop.f32.mrb[0].mxu0
      %v4023 = vadd.f32 %v3802, %v4022
      %v4024 = vpop.f32.mrb[0].mxu0
      %v4025 = vpop.f32.mrb[0].mxu0
      %v4026 = vadd.f32 %v3805, %v4025
      %v4027 = vpop.f32.mrb[0].mxu0
      %4028 = vmatprep.mubr.bf16.mxu0 0
      %4029 = vmatmul.mubr.bf16.gmra.mrb[0].mxu0 %v3934
      %v4030 = vpop.f32.mrb[0].mxu0
      %v4031 = vadd.f32 %v3810, %v4030
      %v4032 = vpop.f32.mrb[0].mxu0
      %v4033 = vpop.f32.mrb[0].mxu0
      %v4034 = vadd.f32 %v3813, %v4033
      %v4035 = vpop.f32.mrb[0].mxu0
      %4036 = vmatprep.mubr.bf16.mxu0 0
      %4037 = vmatmul.mubr.bf16.gmra.mrb[0].mxu0 %v3937
      %v4038 = vpop.f32.mrb[0].mxu0
      %v4039 = vadd.f32 %v3818, %v4038
      %v4040 = vpop.f32.mrb[0].mxu0
      %v4041 = vpop.f32.mrb[0].mxu0
      %v4042 = vadd.f32 %v3821, %v4041
      %v4043 = vpop.f32.mrb[0].mxu0
      %4044 = vmatprep.mubr.bf16.mxu0 0
      %4045 = vmatmul.mubr.bf16.gmra.mrb[0].mxu0 %v3940
      %v4046 = vpop.f32.mrb[0].mxu0
      %v4047 = vadd.f32 %v3826, %v4046
      %v4048 = vpop.f32.mrb[0].mxu0
      %v4049 = vpop.f32.mrb[0].mxu0
      %v4050 = vadd.f32 %v3829, %v4049
      %v4051 = vpop.f32.mrb[0].mxu0
      %4052 = vmatprep.mubr.bf16.mxu0 0
      %4053 = vmatmul.mubr.bf16.gmra.mrb[0].mxu0 %v3943
      %v4054 = vpop.f32.mrb[0].mxu0
      %v4055 = vadd.f32 %v3834, %v4054
      %v4056 = vpop.f32.mrb[0].mxu0
      %v4057 = vpop.f32.mrb[0].mxu0
      %v4058 = vadd.f32 %v3837, %v4057
      %v4059 = vpop.f32.mrb[0].mxu0
      %4060 = vmatprep.mubr.bf16.mxu0 0
      %4061 = vmatmul.mubr.bf16.gmra.mrb[0].mxu0 %v3946
      %v4062 = vpop.f32.mrb[0].mxu0
      %v4063 = vadd.f32 %v3842, %v4062
      %v4064 = vpop.f32.mrb[0].mxu0
      %v4065 = vpop.f32.mrb[0].mxu0
      %v4066 = vadd.f32 %v3845, %v4065
      %v4067 = vpop.f32.mrb[0].mxu0
      %4068 = vmatprep.mubr.bf16.mxu0 0
      %4069 = vmatmul.mubr.bf16.gmra.mrb[0].mxu0 %v3949
      %v4070 = vpop.f32.mrb[0].mxu0
      %v4071 = vadd.f32 %v3850, %v4070
      %v4072 = vpop.f32.mrb[0].mxu0
      %v4073 = vpop.f32.mrb[0].mxu0
      %v4074 = vadd.f32 %v3853, %v4073
      %v4075 = vpop.f32.mrb[0].mxu0
      %4076 = vmatprep.mubr.bf16.mxu0 0
      %4077 = vmatmul.mubr.bf16.gmra.mrb[0].mxu0 %v3952
      %v4078 = vpop.f32.mrb[0].mxu0
      %v4079 = vadd.f32 %v3858, %v4078
      %v4080 = vpop.f32.mrb[0].mxu0
      %v4081 = vpop.f32.mrb[0].mxu0
      %v4082 = vadd.f32 %v3861, %v4081
      %v4083 = vpop.f32.mrb[0].mxu0
      %4084 = vmatprep.mubr.bf16.mxu0 0
      %4085 = vmatmul.mubr.bf16.gmra.mrb[0].mxu0 %v3955
      %v4086 = vpop.f32.mrb[0].mxu0
      %v4087 = vadd.f32 %v3866, %v4086
      %v4088 = vpop.f32.mrb[0].mxu0
      %v4089 = vpop.f32.mrb[0].mxu0
      %v4090 = vadd.f32 %v3869, %v4089
      %v4091 = vpop.f32.mrb[0].mxu0
      %4092 = vmatprep.mubr.bf16.mxu0 0
      %4093 = vmatmul.mubr.bf16.gmra.mrb[0].mxu0 %v3958
      %v4094 = vpop.f32.mrb[0].mxu0
      %v4095 = vadd.f32 %v3874, %v4094
      %v4096 = vpop.f32.mrb[0].mxu0
      %v4097 = vpop.f32.mrb[0].mxu0
      %v4098 = vadd.f32 %v3877, %v4097
      %v4099 = vpop.f32.mrb[0].mxu0
      %4100 = vmatprep.mubr.bf16.mxu0 0
      %4101 = vmatmul.mubr.bf16.gmra.mrb[0].mxu0 %v3961
      %v4102 = vpop.f32.mrb[0].mxu0
      %v4103 = vadd.f32 %v3882, %v4102
      %v4104 = vpop.f32.mrb[0].mxu0
      %v4105 = vpop.f32.mrb[0].mxu0
      %v4106 = vadd.f32 %v3885, %v4105
      %v4107 = vpop.f32.mrb[0].mxu0
      %4108 = vmatprep.mubr.bf16.mxu0 0
      %4109 = vmatmul.mubr.bf16.gmra.mrb[0].mxu0 %v3964
      %v4110 = vpop.f32.mrb[0].mxu0
      %v4111 = vadd.f32 %v3890, %v4110
      %v4112 = vpop.f32.mrb[0].mxu0
      %v4113 = vpop.f32.mrb[0].mxu0
      %v4114 = vadd.f32 %v3893, %v4113
      %v4115 = vpop.f32.mrb[0].mxu0
      %4116 = vmatprep.mubr.bf16.mxu0 0
      %4117 = vmatmul.mubr.bf16.gmra.mrb[0].mxu0 %v3967
      %v4118 = vpop.f32.mrb[0].mxu0
      %v4119 = vadd.f32 %v3898, %v4118
      %v4120 = vpop.f32.mrb[0].mxu0
      %v4121 = vpop.f32.mrb[0].mxu0
      %v4122 = vadd.f32 %v3901, %v4121
      %v4123 = vpop.f32.mrb[0].mxu0
      %4124 = vmatprep.mubr.bf16.mxu0 0
      %4125 = vmatmul.mubr.bf16.gmra.mrb[0].mxu0 %v3970
      %v4126 = vpop.f32.mrb[0].mxu0
      %v4127 = vadd.f32 %v3906, %v4126
      %v4128 = vpop.f32.mrb[0].mxu0
      %v4129 = vpop.f32.mrb[0].mxu0
      %v4130 = vadd.f32 %v3909, %v4129
      %v4131 = vpop.f32.mrb[0].mxu0
      %4132 = vdwg.mxu0
      %v4133 = vld [vmem:[%s470 + $0x2] sm:$0xff]
      %v4134 = vld [vmem:[%s470 + $0xa] sm:$0xff]
      %v4135 = vld [vmem:[%s470 + $0x12] sm:$0xff]
      %v4136 = vld [vmem:[%s470 + $0x1a] sm:$0xff]
      %v4137 = vld [vmem:[%s470 + $0x22] sm:$0xff]
      %v4138 = vld [vmem:[%s470 + $0x2a] sm:$0xff]
      %v4139 = vld [vmem:[%s470 + $0x32] sm:$0xff]
      %v4140 = vld [vmem:[%s470 + $0x3a] sm:$0xff]
      %v4141 = vld [vmem:[%s470 + $0x42] sm:$0xff]
      %v4142 = vld [vmem:[%s470 + $0x4a] sm:$0xff]
      %v4143 = vld [vmem:[%s470 + $0x52] sm:$0xff]
      %v4144 = vld [vmem:[%s470 + $0x5a] sm:$0xff]
      %v4145 = vld [vmem:[%s470 + $0x62] sm:$0xff]
      %v4146 = vld [vmem:[%s470 + $0x6a] sm:$0xff]
      %v4147 = vld [vmem:[%s470 + $0x72] sm:$0xff]
      %v4148 = vld [vmem:[%s470 + $0x7a] sm:$0xff]
      %v4149 = vld [vmem:[%s470 + $0x82] sm:$0xff]
      %v4150 = vld [vmem:[%s470 + $0x8a] sm:$0xff]
      %v4151 = vld [vmem:[%s470 + $0x92] sm:$0xff]
      %v4152 = vld [vmem:[%s470 + $0x9a] sm:$0xff]
      %v4153 = vld [vmem:[%s470 + $0xa2] sm:$0xff]
      %v4154 = vld [vmem:[%s470 + $0xaa] sm:$0xff]
      %v4155 = vld [vmem:[%s470 + $0xb2] sm:$0xff]
      %v4156 = vld [vmem:[%s470 + $0xba] sm:$0xff]
      %v4157 = vld [vmem:[%s470 + $0xc2] sm:$0xff]
      %v4158 = vld [vmem:[%s470 + $0xca] sm:$0xff]
      %v4159 = vld [vmem:[%s470 + $0xd2] sm:$0xff]
      %v4160 = vld [vmem:[%s470 + $0xda] sm:$0xff]
      %v4161 = vld [vmem:[%s470 + $0xe2] sm:$0xff]
      %v4162 = vld [vmem:[%s470 + $0xea] sm:$0xff]
      %v4163 = vld [vmem:[%s470 + $0xf2] sm:$0xff]
      %v4164 = vld [vmem:[%s470 + $0xfa] sm:$0xff]
      %v4165 = vsel %vm1296, %v4133, 0.0
      %v4166 = vsel %vm1297, %v4134, 0.0
      %v4167 = vsel %vm1298, %v4135, 0.0
      %v4168 = vsel %vm1299, %v4136, 0.0
      %v4169 = vsel %vm1300, %v4137, 0.0
      %v4170 = vsel %vm1301, %v4138, 0.0
      %v4171 = vsel %vm1302, %v4139, 0.0
      %v4172 = vsel %vm1303, %v4140, 0.0
      %v4173 = vsel %vm1304, %v4141, 0.0
      %v4174 = vsel %vm1305, %v4142, 0.0
      %v4175 = vsel %vm1306, %v4143, 0.0
      %v4176 = vsel %vm1307, %v4144, 0.0
      %v4177 = vsel %vm1308, %v4145, 0.0
      %v4178 = vsel %vm1309, %v4146, 0.0
      %v4179 = vsel %vm1310, %v4147, 0.0
      %v4180 = vsel %vm1311, %v4148, 0.0
      %v4181 = vsel %vm1312, %v4149, 0.0
      %v4182 = vsel %vm1313, %v4150, 0.0
      %v4183 = vsel %vm1314, %v4151, 0.0
      %v4184 = vsel %vm1315, %v4152, 0.0
      %v4185 = vsel %vm1316, %v4153, 0.0
      %v4186 = vsel %vm1317, %v4154, 0.0
      %v4187 = vsel %vm1318, %v4155, 0.0
      %v4188 = vsel %vm1319, %v4156, 0.0
      %v4189 = vsel %vm1320, %v4157, 0.0
      %v4190 = vsel %vm1321, %v4158, 0.0
      %v4191 = vsel %vm1322, %v4159, 0.0
      %v4192 = vsel %vm1323, %v4160, 0.0
      %v4193 = vsel %vm1324, %v4161, 0.0
      %v4194 = vsel %vm1325, %v4162, 0.0
      %v4195 = vsel %vm1326, %v4163, 0.0
      %v4196 = vsel %vm1327, %v4164, 0.0
      %v4197 = vpack.c.bf16 %v4166, %v4165
      %v4198 = vpack.c.bf16 %v4168, %v4167
      %v4199 = vpack.c.bf16 %v4170, %v4169
      %v4200 = vpack.c.bf16 %v4172, %v4171
      %v4201 = vpack.c.bf16 %v4174, %v4173
      %v4202 = vpack.c.bf16 %v4176, %v4175
      %v4203 = vpack.c.bf16 %v4178, %v4177
      %v4204 = vpack.c.bf16 %v4180, %v4179
      %v4205 = vpack.c.bf16 %v4182, %v4181
      %v4206 = vpack.c.bf16 %v4184, %v4183
      %v4207 = vpack.c.bf16 %v4186, %v4185
      %v4208 = vpack.c.bf16 %v4188, %v4187
      %v4209 = vpack.c.bf16 %v4190, %v4189
      %v4210 = vpack.c.bf16 %v4192, %v4191
      %v4211 = vpack.c.bf16 %v4194, %v4193
      %v4212 = vpack.c.bf16 %v4196, %v4195
      %s4213 = scalar_lea.vmem %s7, 32
      %v4214 = vld [vmem:[%s4213] sm:$0xf]
      %v4215 = vld [vmem:[%s4213 + $0x4] sm:$0xf]
      %v4216 = vld [vmem:[%s4213 + $0x8] sm:$0xf]
      %v4217 = vld [vmem:[%s4213 + $0xc] sm:$0xf]
      %v4222 = vunpack.c.l.b16 %v4214
      %v4223 = vunpack.c.l.b16 %v4215
      %v4224 = vunpack.c.l.b16 %v4216
      %v4225 = vunpack.c.l.b16 %v4217
      %v4226 = vpack.c.b16 %v4223, %v4222
      %v4227 = vpack.c.b16 %v4225, %v4224
      %v4231 = vsel %vm3702, %v4197, 0
      %v4234 = vsel %vm3702, %v4198, 0
      %v4237 = vsel %vm3702, %v4199, 0
      %v4240 = vsel %vm3702, %v4200, 0
      %v4243 = vsel %vm3702, %v4201, 0
      %v4246 = vsel %vm3702, %v4202, 0
      %v4249 = vsel %vm3702, %v4203, 0
      %v4252 = vsel %vm3702, %v4204, 0
      %v4255 = vsel %vm3702, %v4205, 0
      %v4258 = vsel %vm3702, %v4206, 0
      %v4261 = vsel %vm3702, %v4207, 0
      %v4264 = vsel %vm3702, %v4208, 0
      %v4267 = vsel %vm3702, %v4209, 0
      %v4270 = vsel %vm3702, %v4210, 0
      %v4273 = vsel %vm3702, %v4211, 0
      %v4276 = vsel %vm3702, %v4212, 0
      %4278 = vmatprep.subr.bf16.mxu0 0
      %4279 = vmatpush1.bf16.msra.mxu0 %v4226
      %4280 = vmatprep.subr.bf16.mxu0 0
      %4281 = vmatpush1.bf16.msra.mxu0 %v4227
      %4282 = vmatprep.subr.bf16.mxu0 0
      %4283 = vmatpush1.bf16.msra.mxu0 0
      %4284 = vmatprep.subr.bf16.mxu0 0
      %4285 = vmatpush1.bf16.msra.mxu0 0
      %4286 = vmatprep.subr.bf16.mxu0 0
      %4287 = vmatpush1.bf16.msra.mxu0 0
      %4288 = vmatprep.subr.bf16.mxu0 0
      %4289 = vmatpush1.bf16.msra.mxu0 0
      %4290 = vmatprep.subr.bf16.mxu0 0
      %4291 = vmatpush1.bf16.msra.mxu0 0
      %4292 = vmatprep.subr.bf16.mxu0 0
      %4293 = vmatpush1.bf16.msra.mxu0 0
      %4294 = vmatprep.subr.bf16.mxu0 0
      %4295 = vmatpush1.bf16.msra.mxu0 0
      %4296 = vmatprep.subr.bf16.mxu0 0
      %4297 = vmatpush1.bf16.msra.mxu0 0
      %4298 = vmatprep.subr.bf16.mxu0 0
      %4299 = vmatpush1.bf16.msra.mxu0 0
      %4300 = vmatprep.subr.bf16.mxu0 0
      %4301 = vmatpush1.bf16.msra.mxu0 0
      %4302 = vmatprep.subr.bf16.mxu0 0
      %4303 = vmatpush1.bf16.msra.mxu0 0
      %4304 = vmatprep.subr.bf16.mxu0 0
      %4305 = vmatpush1.bf16.msra.mxu0 0
      %4306 = vmatprep.subr.bf16.mxu0 0
      %4307 = vmatpush1.bf16.msra.mxu0 0
      %4308 = vmatprep.subr.bf16.mxu0 0
      %4309 = vmatpush1.bf16.msra.mxu0 0
      %4310 = vmatprep.mubr.bf16.mxu0 0
      %4311 = vmatmul.mubr.bf16.gmra.mrb[0].mxu0 %v4231
      %v4312 = vpop.f32.mrb[0].mxu0
      %v4313 = vadd.f32 0.0, %v4312
      %v4314 = vpop.f32.mrb[0].mxu0
      %v4315 = vpop.f32.mrb[0].mxu0
      %v4316 = vadd.f32 0.0, %v4315
      %v4317 = vpop.f32.mrb[0].mxu0
      %4318 = vmatprep.mubr.bf16.mxu0 0
      %4319 = vmatmul.mubr.bf16.gmra.mrb[0].mxu0 %v4234
      %v4320 = vpop.f32.mrb[0].mxu0
      %v4321 = vadd.f32 0.0, %v4320
      %v4322 = vpop.f32.mrb[0].mxu0
      %v4323 = vpop.f32.mrb[0].mxu0
      %v4324 = vadd.f32 0.0, %v4323
      %v4325 = vpop.f32.mrb[0].mxu0
      %4326 = vmatprep.mubr.bf16.mxu0 0
      %4327 = vmatmul.mubr.bf16.gmra.mrb[0].mxu0 %v4237
      %v4328 = vpop.f32.mrb[0].mxu0
      %v4329 = vadd.f32 0.0, %v4328
      %v4330 = vpop.f32.mrb[0].mxu0
      %v4331 = vpop.f32.mrb[0].mxu0
      %v4332 = vadd.f32 0.0, %v4331
      %v4333 = vpop.f32.mrb[0].mxu0
      %4334 = vmatprep.mubr.bf16.mxu0 0
      %4335 = vmatmul.mubr.bf16.gmra.mrb[0].mxu0 %v4240
      %v4336 = vpop.f32.mrb[0].mxu0
      %v4337 = vadd.f32 0.0, %v4336
      %v4338 = vpop.f32.mrb[0].mxu0
      %v4339 = vpop.f32.mrb[0].mxu0
      %v4340 = vadd.f32 0.0, %v4339
      %v4341 = vpop.f32.mrb[0].mxu0
      %4342 = vmatprep.mubr.bf16.mxu0 0
      %4343 = vmatmul.mubr.bf16.gmra.mrb[0].mxu0 %v4243
      %v4344 = vpop.f32.mrb[0].mxu0
      %v4345 = vadd.f32 0.0, %v4344
      %v4346 = vpop.f32.mrb[0].mxu0
      %v4347 = vpop.f32.mrb[0].mxu0
      %v4348 = vadd.f32 0.0, %v4347
      %v4349 = vpop.f32.mrb[0].mxu0
      %4350 = vmatprep.mubr.bf16.mxu0 0
      %4351 = vmatmul.mubr.bf16.gmra.mrb[0].mxu0 %v4246
      %v4352 = vpop.f32.mrb[0].mxu0
      %v4353 = vadd.f32 0.0, %v4352
      %v4354 = vpop.f32.mrb[0].mxu0
      %v4355 = vpop.f32.mrb[0].mxu0
      %v4356 = vadd.f32 0.0, %v4355
      %v4357 = vpop.f32.mrb[0].mxu0
      %4358 = vmatprep.mubr.bf16.mxu0 0
      %4359 = vmatmul.mubr.bf16.gmra.mrb[0].mxu0 %v4249
      %v4360 = vpop.f32.mrb[0].mxu0
      %v4361 = vadd.f32 0.0, %v4360
      %v4362 = vpop.f32.mrb[0].mxu0
      %v4363 = vpop.f32.mrb[0].mxu0
      %v4364 = vadd.f32 0.0, %v4363
      %v4365 = vpop.f32.mrb[0].mxu0
      %4366 = vmatprep.mubr.bf16.mxu0 0
      %4367 = vmatmul.mubr.bf16.gmra.mrb[0].mxu0 %v4252
      %v4368 = vpop.f32.mrb[0].mxu0
      %v4369 = vadd.f32 0.0, %v4368
      %v4370 = vpop.f32.mrb[0].mxu0
      %v4371 = vpop.f32.mrb[0].mxu0
      %v4372 = vadd.f32 0.0, %v4371
      %v4373 = vpop.f32.mrb[0].mxu0
      %4374 = vmatprep.mubr.bf16.mxu0 0
      %4375 = vmatmul.mubr.bf16.gmra.mrb[0].mxu0 %v4255
      %v4376 = vpop.f32.mrb[0].mxu0
      %v4377 = vadd.f32 0.0, %v4376
      %v4378 = vpop.f32.mrb[0].mxu0
      %v4379 = vpop.f32.mrb[0].mxu0
      %v4380 = vadd.f32 0.0, %v4379
      %v4381 = vpop.f32.mrb[0].mxu0
      %4382 = vmatprep.mubr.bf16.mxu0 0
      %4383 = vmatmul.mubr.bf16.gmra.mrb[0].mxu0 %v4258
      %v4384 = vpop.f32.mrb[0].mxu0
      %v4385 = vadd.f32 0.0, %v4384
      %v4386 = vpop.f32.mrb[0].mxu0
      %v4387 = vpop.f32.mrb[0].mxu0
      %v4388 = vadd.f32 0.0, %v4387
      %v4389 = vpop.f32.mrb[0].mxu0
      %4390 = vmatprep.mubr.bf16.mxu0 0
      %4391 = vmatmul.mubr.bf16.gmra.mrb[0].mxu0 %v4261
      %v4392 = vpop.f32.mrb[0].mxu0
      %v4393 = vadd.f32 0.0, %v4392
      %v4394 = vpop.f32.mrb[0].mxu0
      %v4395 = vpop.f32.mrb[0].mxu0
      %v4396 = vadd.f32 0.0, %v4395
      %v4397 = vpop.f32.mrb[0].mxu0
      %4398 = vmatprep.mubr.bf16.mxu0 0
      %4399 = vmatmul.mubr.bf16.gmra.mrb[0].mxu0 %v4264
      %v4400 = vpop.f32.mrb[0].mxu0
      %v4401 = vadd.f32 0.0, %v4400
      %v4402 = vpop.f32.mrb[0].mxu0
      %v4403 = vpop.f32.mrb[0].mxu0
      %v4404 = vadd.f32 0.0, %v4403
      %v4405 = vpop.f32.mrb[0].mxu0
      %4406 = vmatprep.mubr.bf16.mxu0 0
      %4407 = vmatmul.mubr.bf16.gmra.mrb[0].mxu0 %v4267
      %v4408 = vpop.f32.mrb[0].mxu0
      %v4409 = vadd.f32 0.0, %v4408
      %v4410 = vpop.f32.mrb[0].mxu0
      %v4411 = vpop.f32.mrb[0].mxu0
      %v4412 = vadd.f32 0.0, %v4411
      %v4413 = vpop.f32.mrb[0].mxu0
      %4414 = vmatprep.mubr.bf16.mxu0 0
      %4415 = vmatmul.mubr.bf16.gmra.mrb[0].mxu0 %v4270
      %v4416 = vpop.f32.mrb[0].mxu0
      %v4417 = vadd.f32 0.0, %v4416
      %v4418 = vpop.f32.mrb[0].mxu0
      %v4419 = vpop.f32.mrb[0].mxu0
      %v4420 = vadd.f32 0.0, %v4419
      %v4421 = vpop.f32.mrb[0].mxu0
      %4422 = vmatprep.mubr.bf16.mxu0 0
      %4423 = vmatmul.mubr.bf16.gmra.mrb[0].mxu0 %v4273
      %v4424 = vpop.f32.mrb[0].mxu0
      %v4425 = vadd.f32 0.0, %v4424
      %v4426 = vpop.f32.mrb[0].mxu0
      %v4427 = vpop.f32.mrb[0].mxu0
      %v4428 = vadd.f32 0.0, %v4427
      %v4429 = vpop.f32.mrb[0].mxu0
      %4430 = vmatprep.mubr.bf16.mxu0 0
      %4431 = vmatmul.mubr.bf16.gmra.mrb[0].mxu0 %v4276
      %v4432 = vpop.f32.mrb[0].mxu0
      %v4433 = vadd.f32 0.0, %v4432
      %v4434 = vpop.f32.mrb[0].mxu0
      %v4435 = vpop.f32.mrb[0].mxu0
      %v4436 = vadd.f32 0.0, %v4435
      %v4437 = vpop.f32.mrb[0].mxu0
      %4438 = vdwg.mxu0
      %v4439 = vadd.f32 %v4007, %v4313
      %v4440 = vadd.f32 %v4010, %v4316
      %v4441 = vadd.f32 %v4015, %v4321
      %v4442 = vadd.f32 %v4018, %v4324
      %v4443 = vadd.f32 %v4023, %v4329
      %v4444 = vadd.f32 %v4026, %v4332
      %v4445 = vadd.f32 %v4031, %v4337
      %v4446 = vadd.f32 %v4034, %v4340
      %v4447 = vadd.f32 %v4039, %v4345
      %v4448 = vadd.f32 %v4042, %v4348
      %v4449 = vadd.f32 %v4047, %v4353
      %v4450 = vadd.f32 %v4050, %v4356
      %v4451 = vadd.f32 %v4055, %v4361
      %v4452 = vadd.f32 %v4058, %v4364
      %v4453 = vadd.f32 %v4063, %v4369
      %v4454 = vadd.f32 %v4066, %v4372
      %v4455 = vadd.f32 %v4071, %v4377
      %v4456 = vadd.f32 %v4074, %v4380
      %v4457 = vadd.f32 %v4079, %v4385
      %v4458 = vadd.f32 %v4082, %v4388
      %v4459 = vadd.f32 %v4087, %v4393
      %v4460 = vadd.f32 %v4090, %v4396
      %v4461 = vadd.f32 %v4095, %v4401
      %v4462 = vadd.f32 %v4098, %v4404
      %v4463 = vadd.f32 %v4103, %v4409
      %v4464 = vadd.f32 %v4106, %v4412
      %v4465 = vadd.f32 %v4111, %v4417
      %v4466 = vadd.f32 %v4114, %v4420
      %v4467 = vadd.f32 %v4119, %v4425
      %v4468 = vadd.f32 %v4122, %v4428
      %v4469 = vadd.f32 %v4127, %v4433
      %v4470 = vadd.f32 %v4130, %v4436
      %v4471 = vld [vmem:[%s470 + $0x10] sm:$0xff]
      %v4472 = vld [vmem:[%s470 + $0x18] sm:$0xff]
      %v4473 = vld [vmem:[%s470 + $0x20] sm:$0xff]
      %v4474 = vld [vmem:[%s470 + $0x28] sm:$0xff]
      %v4475 = vld [vmem:[%s470 + $0x30] sm:$0xff]
      %v4476 = vld [vmem:[%s470 + $0x38] sm:$0xff]
      %v4477 = vld [vmem:[%s470 + $0x40] sm:$0xff]
      %v4478 = vld [vmem:[%s470 + $0x48] sm:$0xff]
      %v4479 = vld [vmem:[%s470 + $0x50] sm:$0xff]
      %v4480 = vld [vmem:[%s470 + $0x58] sm:$0xff]
      %v4481 = vld [vmem:[%s470 + $0x60] sm:$0xff]
      %v4482 = vld [vmem:[%s470 + $0x68] sm:$0xff]
      %v4483 = vld [vmem:[%s470 + $0x70] sm:$0xff]
      %v4484 = vld [vmem:[%s470 + $0x78] sm:$0xff]
      %v4485 = vld [vmem:[%s470 + $0x80] sm:$0xff]
      %v4486 = vld [vmem:[%s470 + $0x88] sm:$0xff]
      %v4487 = vld [vmem:[%s470 + $0x90] sm:$0xff]
      %v4488 = vld [vmem:[%s470 + $0x98] sm:$0xff]
      %v4489 = vld [vmem:[%s470 + $0xa0] sm:$0xff]
      %v4490 = vld [vmem:[%s470 + $0xa8] sm:$0xff]
      %v4491 = vld [vmem:[%s470 + $0xb0] sm:$0xff]
      %v4492 = vld [vmem:[%s470 + $0xb8] sm:$0xff]
      %v4493 = vld [vmem:[%s470 + $0xc0] sm:$0xff]
      %v4494 = vld [vmem:[%s470 + $0xc8] sm:$0xff]
      %v4495 = vld [vmem:[%s470 + $0xd0] sm:$0xff]
      %v4496 = vld [vmem:[%s470 + $0xd8] sm:$0xff]
      %v4497 = vld [vmem:[%s470 + $0xe0] sm:$0xff]
      %v4498 = vld [vmem:[%s470 + $0xe8] sm:$0xff]
      %v4499 = vld [vmem:[%s470 + $0xf0] sm:$0xff]
      %v4500 = vld [vmem:[%s470 + $0xf8] sm:$0xff]
      %v4501 = vld [vmem:[%s470 + $0x100] sm:$0xff]
      %v4502 = vld [vmem:[%s470 + $0x108] sm:$0xff]
      %v4503 = vsel %vm675, %v4471, 0.0
      %v4504 = vsel %vm676, %v4472, 0.0
      %v4505 = vsel %vm677, %v4473, 0.0
      %v4506 = vsel %vm678, %v4474, 0.0
      %v4507 = vsel %vm679, %v4475, 0.0
      %v4508 = vsel %vm680, %v4476, 0.0
      %v4509 = vsel %vm681, %v4477, 0.0
      %v4510 = vsel %vm682, %v4478, 0.0
      %v4511 = vsel %vm683, %v4479, 0.0
      %v4512 = vsel %vm684, %v4480, 0.0
      %v4513 = vsel %vm685, %v4481, 0.0
      %v4514 = vsel %vm686, %v4482, 0.0
      %v4515 = vsel %vm687, %v4483, 0.0
      %v4516 = vsel %vm688, %v4484, 0.0
      %v4517 = vsel %vm689, %v4485, 0.0
      %v4518 = vsel %vm690, %v4486, 0.0
      %v4519 = vsel %vm691, %v4487, 0.0
      %v4520 = vsel %vm692, %v4488, 0.0
      %v4521 = vsel %vm693, %v4489, 0.0
      %v4522 = vsel %vm694, %v4490, 0.0
      %v4523 = vsel %vm695, %v4491, 0.0
      %v4524 = vsel %vm696, %v4492, 0.0
      %v4525 = vsel %vm697, %v4493, 0.0
      %v4526 = vsel %vm698, %v4494, 0.0
      %v4527 = vsel %vm699, %v4495, 0.0
      %v4528 = vsel %vm700, %v4496, 0.0
      %v4529 = vsel %vm701, %v4497, 0.0
      %v4530 = vsel %vm702, %v4498, 0.0
      %v4531 = vsel %vm703, %v4499, 0.0
      %v4532 = vsel %vm704, %v4500, 0.0
      %v4533 = vsel %vm705, %v4501, 0.0
      %v4534 = vsel %vm706, %v4502, 0.0
      %v4535 = vpack.c.bf16 %v4504, %v4503
      %v4536 = vpack.c.bf16 %v4506, %v4505
      %v4537 = vpack.c.bf16 %v4508, %v4507
      %v4538 = vpack.c.bf16 %v4510, %v4509
      %v4539 = vpack.c.bf16 %v4512, %v4511
      %v4540 = vpack.c.bf16 %v4514, %v4513
      %v4541 = vpack.c.bf16 %v4516, %v4515
      %v4542 = vpack.c.bf16 %v4518, %v4517
      %v4543 = vpack.c.bf16 %v4520, %v4519
      %v4544 = vpack.c.bf16 %v4522, %v4521
      %v4545 = vpack.c.bf16 %v4524, %v4523
      %v4546 = vpack.c.bf16 %v4526, %v4525
      %v4547 = vpack.c.bf16 %v4528, %v4527
      %v4548 = vpack.c.bf16 %v4530, %v4529
      %v4549 = vpack.c.bf16 %v4532, %v4531
      %v4550 = vpack.c.bf16 %v4534, %v4533
      %s4551 = scalar_lea.vmem %s7, 48
      %v4552 = vld [vmem:[%s4551] sm:$0xf]
      %v4553 = vld [vmem:[%s4551 + $0x4] sm:$0xf]
      %v4554 = vld [vmem:[%s4551 + $0x8] sm:$0xf]
      %v4555 = vld [vmem:[%s4551 + $0xc] sm:$0xf]
      %v4560 = vunpack.c.l.b16 %v4552
      %v4561 = vunpack.c.l.b16 %v4553
      %v4562 = vunpack.c.l.b16 %v4554
      %v4563 = vunpack.c.l.b16 %v4555
      %v4564 = vpack.c.b16 %v4561, %v4560
      %v4565 = vpack.c.b16 %v4563, %v4562
      %v4569 = vsel %vm3702, %v4535, 0
      %v4572 = vsel %vm3702, %v4536, 0
      %v4575 = vsel %vm3702, %v4537, 0
      %v4578 = vsel %vm3702, %v4538, 0
      %v4581 = vsel %vm3702, %v4539, 0
      %v4584 = vsel %vm3702, %v4540, 0
      %v4587 = vsel %vm3702, %v4541, 0
      %v4590 = vsel %vm3702, %v4542, 0
      %v4593 = vsel %vm3702, %v4543, 0
      %v4596 = vsel %vm3702, %v4544, 0
      %v4599 = vsel %vm3702, %v4545, 0
      %v4602 = vsel %vm3702, %v4546, 0
      %v4605 = vsel %vm3702, %v4547, 0
      %v4608 = vsel %vm3702, %v4548, 0
      %v4611 = vsel %vm3702, %v4549, 0
      %v4614 = vsel %vm3702, %v4550, 0
      %4616 = vmatprep.subr.bf16.mxu0 0
      %4617 = vmatpush1.bf16.msra.mxu0 %v4564
      %4618 = vmatprep.subr.bf16.mxu0 0
      %4619 = vmatpush1.bf16.msra.mxu0 %v4565
      %4620 = vmatprep.subr.bf16.mxu0 0
      %4621 = vmatpush1.bf16.msra.mxu0 0
      %4622 = vmatprep.subr.bf16.mxu0 0
      %4623 = vmatpush1.bf16.msra.mxu0 0
      %4624 = vmatprep.subr.bf16.mxu0 0
      %4625 = vmatpush1.bf16.msra.mxu0 0
      %4626 = vmatprep.subr.bf16.mxu0 0
      %4627 = vmatpush1.bf16.msra.mxu0 0
      %4628 = vmatprep.subr.bf16.mxu0 0
      %4629 = vmatpush1.bf16.msra.mxu0 0
      %4630 = vmatprep.subr.bf16.mxu0 0
      %4631 = vmatpush1.bf16.msra.mxu0 0
      %4632 = vmatprep.subr.bf16.mxu0 0
      %4633 = vmatpush1.bf16.msra.mxu0 0
      %4634 = vmatprep.subr.bf16.mxu0 0
      %4635 = vmatpush1.bf16.msra.mxu0 0
      %4636 = vmatprep.subr.bf16.mxu0 0
      %4637 = vmatpush1.bf16.msra.mxu0 0
      %4638 = vmatprep.subr.bf16.mxu0 0
      %4639 = vmatpush1.bf16.msra.mxu0 0
      %4640 = vmatprep.subr.bf16.mxu0 0
      %4641 = vmatpush1.bf16.msra.mxu0 0
      %4642 = vmatprep.subr.bf16.mxu0 0
      %4643 = vmatpush1.bf16.msra.mxu0 0
      %4644 = vmatprep.subr.bf16.mxu0 0
      %4645 = vmatpush1.bf16.msra.mxu0 0
      %4646 = vmatprep.subr.bf16.mxu0 0
      %4647 = vmatpush1.bf16.msra.mxu0 0
      %4648 = vmatprep.mubr.bf16.mxu0 0
      %4649 = vmatmul.mubr.bf16.gmra.mrb[0].mxu0 %v4569
      %v4650 = vpop.f32.mrb[0].mxu0
      %v4651 = vadd.f32 0.0, %v4650
      %v4652 = vpop.f32.mrb[0].mxu0
      %v4653 = vpop.f32.mrb[0].mxu0
      %v4654 = vadd.f32 0.0, %v4653
      %v4655 = vpop.f32.mrb[0].mxu0
      %4656 = vmatprep.mubr.bf16.mxu0 0
      %4657 = vmatmul.mubr.bf16.gmra.mrb[0].mxu0 %v4572
      %v4658 = vpop.f32.mrb[0].mxu0
      %v4659 = vadd.f32 0.0, %v4658
      %v4660 = vpop.f32.mrb[0].mxu0
      %v4661 = vpop.f32.mrb[0].mxu0
      %v4662 = vadd.f32 0.0, %v4661
      %v4663 = vpop.f32.mrb[0].mxu0
      %4664 = vmatprep.mubr.bf16.mxu0 0
      %4665 = vmatmul.mubr.bf16.gmra.mrb[0].mxu0 %v4575
      %v4666 = vpop.f32.mrb[0].mxu0
      %v4667 = vadd.f32 0.0, %v4666
      %v4668 = vpop.f32.mrb[0].mxu0
      %v4669 = vpop.f32.mrb[0].mxu0
      %v4670 = vadd.f32 0.0, %v4669
      %v4671 = vpop.f32.mrb[0].mxu0
      %4672 = vmatprep.mubr.bf16.mxu0 0
      %4673 = vmatmul.mubr.bf16.gmra.mrb[0].mxu0 %v4578
      %v4674 = vpop.f32.mrb[0].mxu0
      %v4675 = vadd.f32 0.0, %v4674
      %v4676 = vpop.f32.mrb[0].mxu0
      %v4677 = vpop.f32.mrb[0].mxu0
      %v4678 = vadd.f32 0.0, %v4677
      %v4679 = vpop.f32.mrb[0].mxu0
      %4680 = vmatprep.mubr.bf16.mxu0 0
      %4681 = vmatmul.mubr.bf16.gmra.mrb[0].mxu0 %v4581
      %v4682 = vpop.f32.mrb[0].mxu0
      %v4683 = vadd.f32 0.0, %v4682
      %v4684 = vpop.f32.mrb[0].mxu0
      %v4685 = vpop.f32.mrb[0].mxu0
      %v4686 = vadd.f32 0.0, %v4685
      %v4687 = vpop.f32.mrb[0].mxu0
      %4688 = vmatprep.mubr.bf16.mxu0 0
      %4689 = vmatmul.mubr.bf16.gmra.mrb[0].mxu0 %v4584
      %v4690 = vpop.f32.mrb[0].mxu0
      %v4691 = vadd.f32 0.0, %v4690
      %v4692 = vpop.f32.mrb[0].mxu0
      %v4693 = vpop.f32.mrb[0].mxu0
      %v4694 = vadd.f32 0.0, %v4693
      %v4695 = vpop.f32.mrb[0].mxu0
      %4696 = vmatprep.mubr.bf16.mxu0 0
      %4697 = vmatmul.mubr.bf16.gmra.mrb[0].mxu0 %v4587
      %v4698 = vpop.f32.mrb[0].mxu0
      %v4699 = vadd.f32 0.0, %v4698
      %v4700 = vpop.f32.mrb[0].mxu0
      %v4701 = vpop.f32.mrb[0].mxu0
      %v4702 = vadd.f32 0.0, %v4701
      %v4703 = vpop.f32.mrb[0].mxu0
      %4704 = vmatprep.mubr.bf16.mxu0 0
      %4705 = vmatmul.mubr.bf16.gmra.mrb[0].mxu0 %v4590
      %v4706 = vpop.f32.mrb[0].mxu0
      %v4707 = vadd.f32 0.0, %v4706
      %v4708 = vpop.f32.mrb[0].mxu0
      %v4709 = vpop.f32.mrb[0].mxu0
      %v4710 = vadd.f32 0.0, %v4709
      %v4711 = vpop.f32.mrb[0].mxu0
      %4712 = vmatprep.mubr.bf16.mxu0 0
      %4713 = vmatmul.mubr.bf16.gmra.mrb[0].mxu0 %v4593
      %v4714 = vpop.f32.mrb[0].mxu0
      %v4715 = vadd.f32 0.0, %v4714
      %v4716 = vpop.f32.mrb[0].mxu0
      %v4717 = vpop.f32.mrb[0].mxu0
      %v4718 = vadd.f32 0.0, %v4717
      %v4719 = vpop.f32.mrb[0].mxu0
      %4720 = vmatprep.mubr.bf16.mxu0 0
      %4721 = vmatmul.mubr.bf16.gmra.mrb[0].mxu0 %v4596
      %v4722 = vpop.f32.mrb[0].mxu0
      %v4723 = vadd.f32 0.0, %v4722
      %v4724 = vpop.f32.mrb[0].mxu0
      %v4725 = vpop.f32.mrb[0].mxu0
      %v4726 = vadd.f32 0.0, %v4725
      %v4727 = vpop.f32.mrb[0].mxu0
      %4728 = vmatprep.mubr.bf16.mxu0 0
      %4729 = vmatmul.mubr.bf16.gmra.mrb[0].mxu0 %v4599
      %v4730 = vpop.f32.mrb[0].mxu0
      %v4731 = vadd.f32 0.0, %v4730
      %v4732 = vpop.f32.mrb[0].mxu0
      %v4733 = vpop.f32.mrb[0].mxu0
      %v4734 = vadd.f32 0.0, %v4733
      %v4735 = vpop.f32.mrb[0].mxu0
      %4736 = vmatprep.mubr.bf16.mxu0 0
      %4737 = vmatmul.mubr.bf16.gmra.mrb[0].mxu0 %v4602
      %v4738 = vpop.f32.mrb[0].mxu0
      %v4739 = vadd.f32 0.0, %v4738
      %v4740 = vpop.f32.mrb[0].mxu0
      %v4741 = vpop.f32.mrb[0].mxu0
      %v4742 = vadd.f32 0.0, %v4741
      %v4743 = vpop.f32.mrb[0].mxu0
      %4744 = vmatprep.mubr.bf16.mxu0 0
      %4745 = vmatmul.mubr.bf16.gmra.mrb[0].mxu0 %v4605
      %v4746 = vpop.f32.mrb[0].mxu0
      %v4747 = vadd.f32 0.0, %v4746
      %v4748 = vpop.f32.mrb[0].mxu0
      %v4749 = vpop.f32.mrb[0].mxu0
      %v4750 = vadd.f32 0.0, %v4749
      %v4751 = vpop.f32.mrb[0].mxu0
      %4752 = vmatprep.mubr.bf16.mxu0 0
      %4753 = vmatmul.mubr.bf16.gmra.mrb[0].mxu0 %v4608
      %v4754 = vpop.f32.mrb[0].mxu0
      %v4755 = vadd.f32 0.0, %v4754
      %v4756 = vpop.f32.mrb[0].mxu0
      %v4757 = vpop.f32.mrb[0].mxu0
      %v4758 = vadd.f32 0.0, %v4757
      %v4759 = vpop.f32.mrb[0].mxu0
      %4760 = vmatprep.mubr.bf16.mxu0 0
      %4761 = vmatmul.mubr.bf16.gmra.mrb[0].mxu0 %v4611
      %v4762 = vpop.f32.mrb[0].mxu0
      %v4763 = vadd.f32 0.0, %v4762
      %v4764 = vpop.f32.mrb[0].mxu0
      %v4765 = vpop.f32.mrb[0].mxu0
      %v4766 = vadd.f32 0.0, %v4765
      %v4767 = vpop.f32.mrb[0].mxu0
      %4768 = vmatprep.mubr.bf16.mxu0 0
      %4769 = vmatmul.mubr.bf16.gmra.mrb[0].mxu0 %v4614
      %v4770 = vpop.f32.mrb[0].mxu0
      %v4771 = vadd.f32 0.0, %v4770
      %v4772 = vpop.f32.mrb[0].mxu0
      %v4773 = vpop.f32.mrb[0].mxu0
      %v4774 = vadd.f32 0.0, %v4773
      %v4775 = vpop.f32.mrb[0].mxu0
      %4776 = vdwg.mxu0
      %v4777 = vadd.f32 %v4439, %v4651
      %v4778 = vadd.f32 %v4440, %v4654
      %v4779 = vadd.f32 %v4441, %v4659
      %v4780 = vadd.f32 %v4442, %v4662
      %v4781 = vadd.f32 %v4443, %v4667
      %v4782 = vadd.f32 %v4444, %v4670
      %v4783 = vadd.f32 %v4445, %v4675
      %v4784 = vadd.f32 %v4446, %v4678
      %v4785 = vadd.f32 %v4447, %v4683
      %v4786 = vadd.f32 %v4448, %v4686
      %v4787 = vadd.f32 %v4449, %v4691
      %v4788 = vadd.f32 %v4450, %v4694
      %v4789 = vadd.f32 %v4451, %v4699
      %v4790 = vadd.f32 %v4452, %v4702
      %v4791 = vadd.f32 %v4453, %v4707
      %v4792 = vadd.f32 %v4454, %v4710
      %v4793 = vadd.f32 %v4455, %v4715
      %v4794 = vadd.f32 %v4456, %v4718
      %v4795 = vadd.f32 %v4457, %v4723
      %v4796 = vadd.f32 %v4458, %v4726
      %v4797 = vadd.f32 %v4459, %v4731
      %v4798 = vadd.f32 %v4460, %v4734
      %v4799 = vadd.f32 %v4461, %v4739
      %v4800 = vadd.f32 %v4462, %v4742
      %v4801 = vadd.f32 %v4463, %v4747
      %v4802 = vadd.f32 %v4464, %v4750
      %v4803 = vadd.f32 %v4465, %v4755
      %v4804 = vadd.f32 %v4466, %v4758
      %v4805 = vadd.f32 %v4467, %v4763
      %v4806 = vadd.f32 %v4468, %v4766
      %v4807 = vadd.f32 %v4469, %v4771
      %v4808 = vadd.f32 %v4470, %v4774
      %v4809 = vld [vmem:[%s470 + $0x11] sm:$0xff]
      %v4810 = vld [vmem:[%s470 + $0x19] sm:$0xff]
      %v4811 = vld [vmem:[%s470 + $0x21] sm:$0xff]
      %v4812 = vld [vmem:[%s470 + $0x29] sm:$0xff]
      %v4813 = vld [vmem:[%s470 + $0x31] sm:$0xff]
      %v4814 = vld [vmem:[%s470 + $0x39] sm:$0xff]
      %v4815 = vld [vmem:[%s470 + $0x41] sm:$0xff]
      %v4816 = vld [vmem:[%s470 + $0x49] sm:$0xff]
      %v4817 = vld [vmem:[%s470 + $0x51] sm:$0xff]
      %v4818 = vld [vmem:[%s470 + $0x59] sm:$0xff]
      %v4819 = vld [vmem:[%s470 + $0x61] sm:$0xff]
      %v4820 = vld [vmem:[%s470 + $0x69] sm:$0xff]
      %v4821 = vld [vmem:[%s470 + $0x71] sm:$0xff]
      %v4822 = vld [vmem:[%s470 + $0x79] sm:$0xff]
      %v4823 = vld [vmem:[%s470 + $0x81] sm:$0xff]
      %v4824 = vld [vmem:[%s470 + $0x89] sm:$0xff]
      %v4825 = vld [vmem:[%s470 + $0x91] sm:$0xff]
      %v4826 = vld [vmem:[%s470 + $0x99] sm:$0xff]
      %v4827 = vld [vmem:[%s470 + $0xa1] sm:$0xff]
      %v4828 = vld [vmem:[%s470 + $0xa9] sm:$0xff]
      %v4829 = vld [vmem:[%s470 + $0xb1] sm:$0xff]
      %v4830 = vld [vmem:[%s470 + $0xb9] sm:$0xff]
      %v4831 = vld [vmem:[%s470 + $0xc1] sm:$0xff]
      %v4832 = vld [vmem:[%s470 + $0xc9] sm:$0xff]
      %v4833 = vld [vmem:[%s470 + $0xd1] sm:$0xff]
      %v4834 = vld [vmem:[%s470 + $0xd9] sm:$0xff]
      %v4835 = vld [vmem:[%s470 + $0xe1] sm:$0xff]
      %v4836 = vld [vmem:[%s470 + $0xe9] sm:$0xff]
      %v4837 = vld [vmem:[%s470 + $0xf1] sm:$0xff]
      %v4838 = vld [vmem:[%s470 + $0xf9] sm:$0xff]
      %v4839 = vld [vmem:[%s470 + $0x101] sm:$0xff]
      %v4840 = vld [vmem:[%s470 + $0x109] sm:$0xff]
      %v4841 = vpack.c.bf16 %v4810, %v4809
      %v4842 = vpack.c.bf16 %v4812, %v4811
      %v4843 = vpack.c.bf16 %v4814, %v4813
      %v4844 = vpack.c.bf16 %v4816, %v4815
      %v4845 = vpack.c.bf16 %v4818, %v4817
      %v4846 = vpack.c.bf16 %v4820, %v4819
      %v4847 = vpack.c.bf16 %v4822, %v4821
      %v4848 = vpack.c.bf16 %v4824, %v4823
      %v4849 = vpack.c.bf16 %v4826, %v4825
      %v4850 = vpack.c.bf16 %v4828, %v4827
      %v4851 = vpack.c.bf16 %v4830, %v4829
      %v4852 = vpack.c.bf16 %v4832, %v4831
      %v4853 = vpack.c.bf16 %v4834, %v4833
      %v4854 = vpack.c.bf16 %v4836, %v4835
      %v4855 = vpack.c.bf16 %v4838, %v4837
      %v4856 = vpack.c.bf16 %v4840, %v4839
      %s4857 = scalar_lea.vmem %s7, 64
      %v4858 = vld [vmem:[%s4857] sm:$0xf]
      %v4859 = vld [vmem:[%s4857 + $0x4] sm:$0xf]
      %v4860 = vld [vmem:[%s4857 + $0x8] sm:$0xf]
      %v4861 = vld [vmem:[%s4857 + $0xc] sm:$0xf]
      %v4866 = vunpack.c.l.b16 %v4858
      %v4867 = vunpack.c.l.b16 %v4859
      %v4868 = vunpack.c.l.b16 %v4860
      %v4869 = vunpack.c.l.b16 %v4861
      %v4870 = vpack.c.b16 %v4867, %v4866
      %v4871 = vpack.c.b16 %v4869, %v4868
      %v4875 = vsel %vm3702, %v4841, 0
      %v4878 = vsel %vm3702, %v4842, 0
      %v4881 = vsel %vm3702, %v4843, 0
      %v4884 = vsel %vm3702, %v4844, 0
      %v4887 = vsel %vm3702, %v4845, 0
      %v4890 = vsel %vm3702, %v4846, 0
      %v4893 = vsel %vm3702, %v4847, 0
      %v4896 = vsel %vm3702, %v4848, 0
      %v4899 = vsel %vm3702, %v4849, 0
      %v4902 = vsel %vm3702, %v4850, 0
      %v4905 = vsel %vm3702, %v4851, 0
      %v4908 = vsel %vm3702, %v4852, 0
      %v4911 = vsel %vm3702, %v4853, 0
      %v4914 = vsel %vm3702, %v4854, 0
      %v4917 = vsel %vm3702, %v4855, 0
      %v4920 = vsel %vm3702, %v4856, 0
      %4922 = vmatprep.subr.bf16.mxu0 0
      %4923 = vmatpush1.bf16.msra.mxu0 %v4870
      %4924 = vmatprep.subr.bf16.mxu0 0
      %4925 = vmatpush1.bf16.msra.mxu0 %v4871
      %4926 = vmatprep.subr.bf16.mxu0 0
      %4927 = vmatpush1.bf16.msra.mxu0 0
      %4928 = vmatprep.subr.bf16.mxu0 0
      %4929 = vmatpush1.bf16.msra.mxu0 0
      %4930 = vmatprep.subr.bf16.mxu0 0
      %4931 = vmatpush1.bf16.msra.mxu0 0
      %4932 = vmatprep.subr.bf16.mxu0 0
      %4933 = vmatpush1.bf16.msra.mxu0 0
      %4934 = vmatprep.subr.bf16.mxu0 0
      %4935 = vmatpush1.bf16.msra.mxu0 0
      %4936 = vmatprep.subr.bf16.mxu0 0
      %4937 = vmatpush1.bf16.msra.mxu0 0
      %4938 = vmatprep.subr.bf16.mxu0 0
      %4939 = vmatpush1.bf16.msra.mxu0 0
      %4940 = vmatprep.subr.bf16.mxu0 0
      %4941 = vmatpush1.bf16.msra.mxu0 0
      %4942 = vmatprep.subr.bf16.mxu0 0
      %4943 = vmatpush1.bf16.msra.mxu0 0
      %4944 = vmatprep.subr.bf16.mxu0 0
      %4945 = vmatpush1.bf16.msra.mxu0 0
      %4946 = vmatprep.subr.bf16.mxu0 0
      %4947 = vmatpush1.bf16.msra.mxu0 0
      %4948 = vmatprep.subr.bf16.mxu0 0
      %4949 = vmatpush1.bf16.msra.mxu0 0
      %4950 = vmatprep.subr.bf16.mxu0 0
      %4951 = vmatpush1.bf16.msra.mxu0 0
      %4952 = vmatprep.subr.bf16.mxu0 0
      %4953 = vmatpush1.bf16.msra.mxu0 0
      %4954 = vmatprep.mubr.bf16.mxu0 0
      %4955 = vmatmul.mubr.bf16.gmra.mrb[0].mxu0 %v4875
      %v4956 = vpop.f32.mrb[0].mxu0
      %v4957 = vadd.f32 0.0, %v4956
      %v4958 = vpop.f32.mrb[0].mxu0
      %v4959 = vpop.f32.mrb[0].mxu0
      %v4960 = vadd.f32 0.0, %v4959
      %v4961 = vpop.f32.mrb[0].mxu0
      %4962 = vmatprep.mubr.bf16.mxu0 0
      %4963 = vmatmul.mubr.bf16.gmra.mrb[0].mxu0 %v4878
      %v4964 = vpop.f32.mrb[0].mxu0
      %v4965 = vadd.f32 0.0, %v4964
      %v4966 = vpop.f32.mrb[0].mxu0
      %v4967 = vpop.f32.mrb[0].mxu0
      %v4968 = vadd.f32 0.0, %v4967
      %v4969 = vpop.f32.mrb[0].mxu0
      %4970 = vmatprep.mubr.bf16.mxu0 0
      %4971 = vmatmul.mubr.bf16.gmra.mrb[0].mxu0 %v4881
      %v4972 = vpop.f32.mrb[0].mxu0
      %v4973 = vadd.f32 0.0, %v4972
      %v4974 = vpop.f32.mrb[0].mxu0
      %v4975 = vpop.f32.mrb[0].mxu0
      %v4976 = vadd.f32 0.0, %v4975
      %v4977 = vpop.f32.mrb[0].mxu0
      %4978 = vmatprep.mubr.bf16.mxu0 0
      %4979 = vmatmul.mubr.bf16.gmra.mrb[0].mxu0 %v4884
      %v4980 = vpop.f32.mrb[0].mxu0
      %v4981 = vadd.f32 0.0, %v4980
      %v4982 = vpop.f32.mrb[0].mxu0
      %v4983 = vpop.f32.mrb[0].mxu0
      %v4984 = vadd.f32 0.0, %v4983
      %v4985 = vpop.f32.mrb[0].mxu0
      %4986 = vmatprep.mubr.bf16.mxu0 0
      %4987 = vmatmul.mubr.bf16.gmra.mrb[0].mxu0 %v4887
      %v4988 = vpop.f32.mrb[0].mxu0
      %v4989 = vadd.f32 0.0, %v4988
      %v4990 = vpop.f32.mrb[0].mxu0
      %v4991 = vpop.f32.mrb[0].mxu0
      %v4992 = vadd.f32 0.0, %v4991
      %v4993 = vpop.f32.mrb[0].mxu0
      %4994 = vmatprep.mubr.bf16.mxu0 0
      %4995 = vmatmul.mubr.bf16.gmra.mrb[0].mxu0 %v4890
      %v4996 = vpop.f32.mrb[0].mxu0
      %v4997 = vadd.f32 0.0, %v4996
      %v4998 = vpop.f32.mrb[0].mxu0
      %v4999 = vpop.f32.mrb[0].mxu0
      %v5000 = vadd.f32 0.0, %v4999
      %v5001 = vpop.f32.mrb[0].mxu0
      %5002 = vmatprep.mubr.bf16.mxu0 0
      %5003 = vmatmul.mubr.bf16.gmra.mrb[0].mxu0 %v4893
      %v5004 = vpop.f32.mrb[0].mxu0
      %v5005 = vadd.f32 0.0, %v5004
      %v5006 = vpop.f32.mrb[0].mxu0
      %v5007 = vpop.f32.mrb[0].mxu0
      %v5008 = vadd.f32 0.0, %v5007
      %v5009 = vpop.f32.mrb[0].mxu0
      %5010 = vmatprep.mubr.bf16.mxu0 0
      %5011 = vmatmul.mubr.bf16.gmra.mrb[0].mxu0 %v4896
      %v5012 = vpop.f32.mrb[0].mxu0
      %v5013 = vadd.f32 0.0, %v5012
      %v5014 = vpop.f32.mrb[0].mxu0
      %v5015 = vpop.f32.mrb[0].mxu0
      %v5016 = vadd.f32 0.0, %v5015
      %v5017 = vpop.f32.mrb[0].mxu0
      %5018 = vmatprep.mubr.bf16.mxu0 0
      %5019 = vmatmul.mubr.bf16.gmra.mrb[0].mxu0 %v4899
      %v5020 = vpop.f32.mrb[0].mxu0
      %v5021 = vadd.f32 0.0, %v5020
      %v5022 = vpop.f32.mrb[0].mxu0
      %v5023 = vpop.f32.mrb[0].mxu0
      %v5024 = vadd.f32 0.0, %v5023
      %v5025 = vpop.f32.mrb[0].mxu0
      %5026 = vmatprep.mubr.bf16.mxu0 0
      %5027 = vmatmul.mubr.bf16.gmra.mrb[0].mxu0 %v4902
      %v5028 = vpop.f32.mrb[0].mxu0
      %v5029 = vadd.f32 0.0, %v5028
      %v5030 = vpop.f32.mrb[0].mxu0
      %v5031 = vpop.f32.mrb[0].mxu0
      %v5032 = vadd.f32 0.0, %v5031
      %v5033 = vpop.f32.mrb[0].mxu0
      %5034 = vmatprep.mubr.bf16.mxu0 0
      %5035 = vmatmul.mubr.bf16.gmra.mrb[0].mxu0 %v4905
      %v5036 = vpop.f32.mrb[0].mxu0
      %v5037 = vadd.f32 0.0, %v5036
      %v5038 = vpop.f32.mrb[0].mxu0
      %v5039 = vpop.f32.mrb[0].mxu0
      %v5040 = vadd.f32 0.0, %v5039
      %v5041 = vpop.f32.mrb[0].mxu0
      %5042 = vmatprep.mubr.bf16.mxu0 0
      %5043 = vmatmul.mubr.bf16.gmra.mrb[0].mxu0 %v4908
      %v5044 = vpop.f32.mrb[0].mxu0
      %v5045 = vadd.f32 0.0, %v5044
      %v5046 = vpop.f32.mrb[0].mxu0
      %v5047 = vpop.f32.mrb[0].mxu0
      %v5048 = vadd.f32 0.0, %v5047
      %v5049 = vpop.f32.mrb[0].mxu0
      %5050 = vmatprep.mubr.bf16.mxu0 0
      %5051 = vmatmul.mubr.bf16.gmra.mrb[0].mxu0 %v4911
      %v5052 = vpop.f32.mrb[0].mxu0
      %v5053 = vadd.f32 0.0, %v5052
      %v5054 = vpop.f32.mrb[0].mxu0
      %v5055 = vpop.f32.mrb[0].mxu0
      %v5056 = vadd.f32 0.0, %v5055
      %v5057 = vpop.f32.mrb[0].mxu0
      %5058 = vmatprep.mubr.bf16.mxu0 0
      %5059 = vmatmul.mubr.bf16.gmra.mrb[0].mxu0 %v4914
      %v5060 = vpop.f32.mrb[0].mxu0
      %v5061 = vadd.f32 0.0, %v5060
      %v5062 = vpop.f32.mrb[0].mxu0
      %v5063 = vpop.f32.mrb[0].mxu0
      %v5064 = vadd.f32 0.0, %v5063
      %v5065 = vpop.f32.mrb[0].mxu0
      %5066 = vmatprep.mubr.bf16.mxu0 0
      %5067 = vmatmul.mubr.bf16.gmra.mrb[0].mxu0 %v4917
      %v5068 = vpop.f32.mrb[0].mxu0
      %v5069 = vadd.f32 0.0, %v5068
      %v5070 = vpop.f32.mrb[0].mxu0
      %v5071 = vpop.f32.mrb[0].mxu0
      %v5072 = vadd.f32 0.0, %v5071
      %v5073 = vpop.f32.mrb[0].mxu0
      %5074 = vmatprep.mubr.bf16.mxu0 0
      %5075 = vmatmul.mubr.bf16.gmra.mrb[0].mxu0 %v4920
      %v5076 = vpop.f32.mrb[0].mxu0
      %v5077 = vadd.f32 0.0, %v5076
      %v5078 = vpop.f32.mrb[0].mxu0
      %v5079 = vpop.f32.mrb[0].mxu0
      %v5080 = vadd.f32 0.0, %v5079
      %v5081 = vpop.f32.mrb[0].mxu0
      %5082 = vdwg.mxu0
      %v5083 = vadd.f32 %v4777, %v4957
      %v5084 = vadd.f32 %v4778, %v4960
      %v5085 = vadd.f32 %v4779, %v4965
      %v5086 = vadd.f32 %v4780, %v4968
      %v5087 = vadd.f32 %v4781, %v4973
      %v5088 = vadd.f32 %v4782, %v4976
      %v5089 = vadd.f32 %v4783, %v4981
      %v5090 = vadd.f32 %v4784, %v4984
      %v5091 = vadd.f32 %v4785, %v4989
      %v5092 = vadd.f32 %v4786, %v4992
      %v5093 = vadd.f32 %v4787, %v4997
      %v5094 = vadd.f32 %v4788, %v5000
      %v5095 = vadd.f32 %v4789, %v5005
      %v5096 = vadd.f32 %v4790, %v5008
      %v5097 = vadd.f32 %v4791, %v5013
      %v5098 = vadd.f32 %v4792, %v5016
      %v5099 = vadd.f32 %v4793, %v5021
      %v5100 = vadd.f32 %v4794, %v5024
      %v5101 = vadd.f32 %v4795, %v5029
      %v5102 = vadd.f32 %v4796, %v5032
      %v5103 = vadd.f32 %v4797, %v5037
      %v5104 = vadd.f32 %v4798, %v5040
      %v5105 = vadd.f32 %v4799, %v5045
      %v5106 = vadd.f32 %v4800, %v5048
      %v5107 = vadd.f32 %v4801, %v5053
      %v5108 = vadd.f32 %v4802, %v5056
      %v5109 = vadd.f32 %v4803, %v5061
      %v5110 = vadd.f32 %v4804, %v5064
      %v5111 = vadd.f32 %v4805, %v5069
      %v5112 = vadd.f32 %v4806, %v5072
      %v5113 = vadd.f32 %v4807, %v5077
      %v5114 = vadd.f32 %v4808, %v5080
      %v5115 = vld [vmem:[%s470 + $0x12] sm:$0xff]
      %v5116 = vld [vmem:[%s470 + $0x1a] sm:$0xff]
      %v5117 = vld [vmem:[%s470 + $0x22] sm:$0xff]
      %v5118 = vld [vmem:[%s470 + $0x2a] sm:$0xff]
      %v5119 = vld [vmem:[%s470 + $0x32] sm:$0xff]
      %v5120 = vld [vmem:[%s470 + $0x3a] sm:$0xff]
      %v5121 = vld [vmem:[%s470 + $0x42] sm:$0xff]
      %v5122 = vld [vmem:[%s470 + $0x4a] sm:$0xff]
      %v5123 = vld [vmem:[%s470 + $0x52] sm:$0xff]
      %v5124 = vld [vmem:[%s470 + $0x5a] sm:$0xff]
      %v5125 = vld [vmem:[%s470 + $0x62] sm:$0xff]
      %v5126 = vld [vmem:[%s470 + $0x6a] sm:$0xff]
      %v5127 = vld [vmem:[%s470 + $0x72] sm:$0xff]
      %v5128 = vld [vmem:[%s470 + $0x7a] sm:$0xff]
      %v5129 = vld [vmem:[%s470 + $0x82] sm:$0xff]
      %v5130 = vld [vmem:[%s470 + $0x8a] sm:$0xff]
      %v5131 = vld [vmem:[%s470 + $0x92] sm:$0xff]
      %v5132 = vld [vmem:[%s470 + $0x9a] sm:$0xff]
      %v5133 = vld [vmem:[%s470 + $0xa2] sm:$0xff]
      %v5134 = vld [vmem:[%s470 + $0xaa] sm:$0xff]
      %v5135 = vld [vmem:[%s470 + $0xb2] sm:$0xff]
      %v5136 = vld [vmem:[%s470 + $0xba] sm:$0xff]
      %v5137 = vld [vmem:[%s470 + $0xc2] sm:$0xff]
      %v5138 = vld [vmem:[%s470 + $0xca] sm:$0xff]
      %v5139 = vld [vmem:[%s470 + $0xd2] sm:$0xff]
      %v5140 = vld [vmem:[%s470 + $0xda] sm:$0xff]
      %v5141 = vld [vmem:[%s470 + $0xe2] sm:$0xff]
      %v5142 = vld [vmem:[%s470 + $0xea] sm:$0xff]
      %v5143 = vld [vmem:[%s470 + $0xf2] sm:$0xff]
      %v5144 = vld [vmem:[%s470 + $0xfa] sm:$0xff]
      %v5145 = vld [vmem:[%s470 + $0x102] sm:$0xff]
      %v5146 = vld [vmem:[%s470 + $0x10a] sm:$0xff]
      %v5147 = vsel %vm1296, %v5115, 0.0
      %v5148 = vsel %vm1297, %v5116, 0.0
      %v5149 = vsel %vm1298, %v5117, 0.0
      %v5150 = vsel %vm1299, %v5118, 0.0
      %v5151 = vsel %vm1300, %v5119, 0.0
      %v5152 = vsel %vm1301, %v5120, 0.0
      %v5153 = vsel %vm1302, %v5121, 0.0
      %v5154 = vsel %vm1303, %v5122, 0.0
      %v5155 = vsel %vm1304, %v5123, 0.0
      %v5156 = vsel %vm1305, %v5124, 0.0
      %v5157 = vsel %vm1306, %v5125, 0.0
      %v5158 = vsel %vm1307, %v5126, 0.0
      %v5159 = vsel %vm1308, %v5127, 0.0
      %v5160 = vsel %vm1309, %v5128, 0.0
      %v5161 = vsel %vm1310, %v5129, 0.0
      %v5162 = vsel %vm1311, %v5130, 0.0
      %v5163 = vsel %vm1312, %v5131, 0.0
      %v5164 = vsel %vm1313, %v5132, 0.0
      %v5165 = vsel %vm1314, %v5133, 0.0
      %v5166 = vsel %vm1315, %v5134, 0.0
      %v5167 = vsel %vm1316, %v5135, 0.0
      %v5168 = vsel %vm1317, %v5136, 0.0
      %v5169 = vsel %vm1318, %v5137, 0.0
      %v5170 = vsel %vm1319, %v5138, 0.0
      %v5171 = vsel %vm1320, %v5139, 0.0
      %v5172 = vsel %vm1321, %v5140, 0.0
      %v5173 = vsel %vm1322, %v5141, 0.0
      %v5174 = vsel %vm1323, %v5142, 0.0
      %v5175 = vsel %vm1324, %v5143, 0.0
      %v5176 = vsel %vm1325, %v5144, 0.0
      %v5177 = vsel %vm1326, %v5145, 0.0
      %v5178 = vsel %vm1327, %v5146, 0.0
      %v5179 = vpack.c.bf16 %v5148, %v5147
      %v5180 = vpack.c.bf16 %v5150, %v5149
      %v5181 = vpack.c.bf16 %v5152, %v5151
      %v5182 = vpack.c.bf16 %v5154, %v5153
      %v5183 = vpack.c.bf16 %v5156, %v5155
      %v5184 = vpack.c.bf16 %v5158, %v5157
      %v5185 = vpack.c.bf16 %v5160, %v5159
      %v5186 = vpack.c.bf16 %v5162, %v5161
      %v5187 = vpack.c.bf16 %v5164, %v5163
      %v5188 = vpack.c.bf16 %v5166, %v5165
      %v5189 = vpack.c.bf16 %v5168, %v5167
      %v5190 = vpack.c.bf16 %v5170, %v5169
      %v5191 = vpack.c.bf16 %v5172, %v5171
      %v5192 = vpack.c.bf16 %v5174, %v5173
      %v5193 = vpack.c.bf16 %v5176, %v5175
      %v5194 = vpack.c.bf16 %v5178, %v5177
      %s5195 = scalar_lea.vmem %s7, 80
      %v5196 = vld [vmem:[%s5195] sm:$0xf]
      %v5197 = vld [vmem:[%s5195 + $0x4] sm:$0xf]
      %v5198 = vld [vmem:[%s5195 + $0x8] sm:$0xf]
      %v5199 = vld [vmem:[%s5195 + $0xc] sm:$0xf]
      %v5204 = vunpack.c.l.b16 %v5196
      %v5205 = vunpack.c.l.b16 %v5197
      %v5206 = vunpack.c.l.b16 %v5198
      %v5207 = vunpack.c.l.b16 %v5199
      %v5208 = vpack.c.b16 %v5205, %v5204
      %v5209 = vpack.c.b16 %v5207, %v5206
      %v5213 = vsel %vm3702, %v5179, 0
      %v5216 = vsel %vm3702, %v5180, 0
      %v5219 = vsel %vm3702, %v5181, 0
      %v5222 = vsel %vm3702, %v5182, 0
      %v5225 = vsel %vm3702, %v5183, 0
      %v5228 = vsel %vm3702, %v5184, 0
      %v5231 = vsel %vm3702, %v5185, 0
      %v5234 = vsel %vm3702, %v5186, 0
      %v5237 = vsel %vm3702, %v5187, 0
      %v5240 = vsel %vm3702, %v5188, 0
      %v5243 = vsel %vm3702, %v5189, 0
      %v5246 = vsel %vm3702, %v5190, 0
      %v5249 = vsel %vm3702, %v5191, 0
      %v5252 = vsel %vm3702, %v5192, 0
      %v5255 = vsel %vm3702, %v5193, 0
      %v5258 = vsel %vm3702, %v5194, 0
      %5260 = vmatprep.subr.bf16.mxu0 0
      %5261 = vmatpush1.bf16.msra.mxu0 %v5208
      %5262 = vmatprep.subr.bf16.mxu0 0
      %5263 = vmatpush1.bf16.msra.mxu0 %v5209
      %5264 = vmatprep.subr.bf16.mxu0 0
      %5265 = vmatpush1.bf16.msra.mxu0 0
      %5266 = vmatprep.subr.bf16.mxu0 0
      %5267 = vmatpush1.bf16.msra.mxu0 0
      %5268 = vmatprep.subr.bf16.mxu0 0
      %5269 = vmatpush1.bf16.msra.mxu0 0
      %5270 = vmatprep.subr.bf16.mxu0 0
      %5271 = vmatpush1.bf16.msra.mxu0 0
      %5272 = vmatprep.subr.bf16.mxu0 0
      %5273 = vmatpush1.bf16.msra.mxu0 0
      %5274 = vmatprep.subr.bf16.mxu0 0
      %5275 = vmatpush1.bf16.msra.mxu0 0
      %5276 = vmatprep.subr.bf16.mxu0 0
      %5277 = vmatpush1.bf16.msra.mxu0 0
      %5278 = vmatprep.subr.bf16.mxu0 0
      %5279 = vmatpush1.bf16.msra.mxu0 0
      %5280 = vmatprep.subr.bf16.mxu0 0
      %5281 = vmatpush1.bf16.msra.mxu0 0
      %5282 = vmatprep.subr.bf16.mxu0 0
      %5283 = vmatpush1.bf16.msra.mxu0 0
      %5284 = vmatprep.subr.bf16.mxu0 0
      %5285 = vmatpush1.bf16.msra.mxu0 0
      %5286 = vmatprep.subr.bf16.mxu0 0
      %5287 = vmatpush1.bf16.msra.mxu0 0
      %5288 = vmatprep.subr.bf16.mxu0 0
      %5289 = vmatpush1.bf16.msra.mxu0 0
      %5290 = vmatprep.subr.bf16.mxu0 0
      %5291 = vmatpush1.bf16.msra.mxu0 0
      %5292 = vmatprep.mubr.bf16.mxu0 0
      %5293 = vmatmul.mubr.bf16.gmra.mrb[0].mxu0 %v5213
      %v5294 = vpop.f32.mrb[0].mxu0
      %v5295 = vadd.f32 0.0, %v5294
      %v5296 = vpop.f32.mrb[0].mxu0
      %v5297 = vpop.f32.mrb[0].mxu0
      %v5298 = vadd.f32 0.0, %v5297
      %v5299 = vpop.f32.mrb[0].mxu0
      %5300 = vmatprep.mubr.bf16.mxu0 0
      %5301 = vmatmul.mubr.bf16.gmra.mrb[0].mxu0 %v5216
      %v5302 = vpop.f32.mrb[0].mxu0
      %v5303 = vadd.f32 0.0, %v5302
      %v5304 = vpop.f32.mrb[0].mxu0
      %v5305 = vpop.f32.mrb[0].mxu0
      %v5306 = vadd.f32 0.0, %v5305
      %v5307 = vpop.f32.mrb[0].mxu0
      %5308 = vmatprep.mubr.bf16.mxu0 0
      %5309 = vmatmul.mubr.bf16.gmra.mrb[0].mxu0 %v5219
      %v5310 = vpop.f32.mrb[0].mxu0
      %v5311 = vadd.f32 0.0, %v5310
      %v5312 = vpop.f32.mrb[0].mxu0
      %v5313 = vpop.f32.mrb[0].mxu0
      %v5314 = vadd.f32 0.0, %v5313
      %v5315 = vpop.f32.mrb[0].mxu0
      %5316 = vmatprep.mubr.bf16.mxu0 0
      %5317 = vmatmul.mubr.bf16.gmra.mrb[0].mxu0 %v5222
      %v5318 = vpop.f32.mrb[0].mxu0
      %v5319 = vadd.f32 0.0, %v5318
      %v5320 = vpop.f32.mrb[0].mxu0
      %v5321 = vpop.f32.mrb[0].mxu0
      %v5322 = vadd.f32 0.0, %v5321
      %v5323 = vpop.f32.mrb[0].mxu0
      %5324 = vmatprep.mubr.bf16.mxu0 0
      %5325 = vmatmul.mubr.bf16.gmra.mrb[0].mxu0 %v5225
      %v5326 = vpop.f32.mrb[0].mxu0
      %v5327 = vadd.f32 0.0, %v5326
      %v5328 = vpop.f32.mrb[0].mxu0
      %v5329 = vpop.f32.mrb[0].mxu0
      %v5330 = vadd.f32 0.0, %v5329
      %v5331 = vpop.f32.mrb[0].mxu0
      %5332 = vmatprep.mubr.bf16.mxu0 0
      %5333 = vmatmul.mubr.bf16.gmra.mrb[0].mxu0 %v5228
      %v5334 = vpop.f32.mrb[0].mxu0
      %v5335 = vadd.f32 0.0, %v5334
      %v5336 = vpop.f32.mrb[0].mxu0
      %v5337 = vpop.f32.mrb[0].mxu0
      %v5338 = vadd.f32 0.0, %v5337
      %v5339 = vpop.f32.mrb[0].mxu0
      %5340 = vmatprep.mubr.bf16.mxu0 0
      %5341 = vmatmul.mubr.bf16.gmra.mrb[0].mxu0 %v5231
      %v5342 = vpop.f32.mrb[0].mxu0
      %v5343 = vadd.f32 0.0, %v5342
      %v5344 = vpop.f32.mrb[0].mxu0
      %v5345 = vpop.f32.mrb[0].mxu0
      %v5346 = vadd.f32 0.0, %v5345
      %v5347 = vpop.f32.mrb[0].mxu0
      %5348 = vmatprep.mubr.bf16.mxu0 0
      %5349 = vmatmul.mubr.bf16.gmra.mrb[0].mxu0 %v5234
      %v5350 = vpop.f32.mrb[0].mxu0
      %v5351 = vadd.f32 0.0, %v5350
      %v5352 = vpop.f32.mrb[0].mxu0
      %v5353 = vpop.f32.mrb[0].mxu0
      %v5354 = vadd.f32 0.0, %v5353
      %v5355 = vpop.f32.mrb[0].mxu0
      %5356 = vmatprep.mubr.bf16.mxu0 0
      %5357 = vmatmul.mubr.bf16.gmra.mrb[0].mxu0 %v5237
      %v5358 = vpop.f32.mrb[0].mxu0
      %v5359 = vadd.f32 0.0, %v5358
      %v5360 = vpop.f32.mrb[0].mxu0
      %v5361 = vpop.f32.mrb[0].mxu0
      %v5362 = vadd.f32 0.0, %v5361
      %v5363 = vpop.f32.mrb[0].mxu0
      %5364 = vmatprep.mubr.bf16.mxu0 0
      %5365 = vmatmul.mubr.bf16.gmra.mrb[0].mxu0 %v5240
      %v5366 = vpop.f32.mrb[0].mxu0
      %v5367 = vadd.f32 0.0, %v5366
      %v5368 = vpop.f32.mrb[0].mxu0
      %v5369 = vpop.f32.mrb[0].mxu0
      %v5370 = vadd.f32 0.0, %v5369
      %v5371 = vpop.f32.mrb[0].mxu0
      %5372 = vmatprep.mubr.bf16.mxu0 0
      %5373 = vmatmul.mubr.bf16.gmra.mrb[0].mxu0 %v5243
      %v5374 = vpop.f32.mrb[0].mxu0
      %v5375 = vadd.f32 0.0, %v5374
      %v5376 = vpop.f32.mrb[0].mxu0
      %v5377 = vpop.f32.mrb[0].mxu0
      %v5378 = vadd.f32 0.0, %v5377
      %v5379 = vpop.f32.mrb[0].mxu0
      %5380 = vmatprep.mubr.bf16.mxu0 0
      %5381 = vmatmul.mubr.bf16.gmra.mrb[0].mxu0 %v5246
      %v5382 = vpop.f32.mrb[0].mxu0
      %v5383 = vadd.f32 0.0, %v5382
      %v5384 = vpop.f32.mrb[0].mxu0
      %v5385 = vpop.f32.mrb[0].mxu0
      %v5386 = vadd.f32 0.0, %v5385
      %v5387 = vpop.f32.mrb[0].mxu0
      %5388 = vmatprep.mubr.bf16.mxu0 0
      %5389 = vmatmul.mubr.bf16.gmra.mrb[0].mxu0 %v5249
      %v5390 = vpop.f32.mrb[0].mxu0
      %v5391 = vadd.f32 0.0, %v5390
      %v5392 = vpop.f32.mrb[0].mxu0
      %v5393 = vpop.f32.mrb[0].mxu0
      %v5394 = vadd.f32 0.0, %v5393
      %v5395 = vpop.f32.mrb[0].mxu0
      %5396 = vmatprep.mubr.bf16.mxu0 0
      %5397 = vmatmul.mubr.bf16.gmra.mrb[0].mxu0 %v5252
      %v5398 = vpop.f32.mrb[0].mxu0
      %v5399 = vadd.f32 0.0, %v5398
      %v5400 = vpop.f32.mrb[0].mxu0
      %v5401 = vpop.f32.mrb[0].mxu0
      %v5402 = vadd.f32 0.0, %v5401
      %v5403 = vpop.f32.mrb[0].mxu0
      %5404 = vmatprep.mubr.bf16.mxu0 0
      %5405 = vmatmul.mubr.bf16.gmra.mrb[0].mxu0 %v5255
      %v5406 = vpop.f32.mrb[0].mxu0
      %v5407 = vadd.f32 0.0, %v5406
      %v5408 = vpop.f32.mrb[0].mxu0
      %v5409 = vpop.f32.mrb[0].mxu0
      %v5410 = vadd.f32 0.0, %v5409
      %v5411 = vpop.f32.mrb[0].mxu0
      %5412 = vmatprep.mubr.bf16.mxu0 0
      %5413 = vmatmul.mubr.bf16.gmra.mrb[0].mxu0 %v5258
      %v5414 = vpop.f32.mrb[0].mxu0
      %v5415 = vadd.f32 0.0, %v5414
      %v5416 = vpop.f32.mrb[0].mxu0
      %v5417 = vpop.f32.mrb[0].mxu0
      %v5418 = vadd.f32 0.0, %v5417
      %v5419 = vpop.f32.mrb[0].mxu0
      %5420 = vdwg.mxu0
      %v5421 = vadd.f32 %v5083, %v5295
      %v5422 = vadd.f32 %v5084, %v5298
      %v5423 = vadd.f32 %v5085, %v5303
      %v5424 = vadd.f32 %v5086, %v5306
      %v5425 = vadd.f32 %v5087, %v5311
      %v5426 = vadd.f32 %v5088, %v5314
      %v5427 = vadd.f32 %v5089, %v5319
      %v5428 = vadd.f32 %v5090, %v5322
      %v5429 = vadd.f32 %v5091, %v5327
      %v5430 = vadd.f32 %v5092, %v5330
      %v5431 = vadd.f32 %v5093, %v5335
      %v5432 = vadd.f32 %v5094, %v5338
      %v5433 = vadd.f32 %v5095, %v5343
      %v5434 = vadd.f32 %v5096, %v5346
      %v5435 = vadd.f32 %v5097, %v5351
      %v5436 = vadd.f32 %v5098, %v5354
      %v5437 = vadd.f32 %v5099, %v5359
      %v5438 = vadd.f32 %v5100, %v5362
      %v5439 = vadd.f32 %v5101, %v5367
      %v5440 = vadd.f32 %v5102, %v5370
      %v5441 = vadd.f32 %v5103, %v5375
      %v5442 = vadd.f32 %v5104, %v5378
      %v5443 = vadd.f32 %v5105, %v5383
      %v5444 = vadd.f32 %v5106, %v5386
      %v5445 = vadd.f32 %v5107, %v5391
      %v5446 = vadd.f32 %v5108, %v5394
      %v5447 = vadd.f32 %v5109, %v5399
      %v5448 = vadd.f32 %v5110, %v5402
      %v5449 = vadd.f32 %v5111, %v5407
      %v5450 = vadd.f32 %v5112, %v5410
      %v5451 = vadd.f32 %v5113, %v5415
      %v5452 = vadd.f32 %v5114, %v5418
      %v5453 = vld [vmem:[%s470 + $0x20] sm:$0xff]
      %v5454 = vld [vmem:[%s470 + $0x28] sm:$0xff]
      %v5455 = vld [vmem:[%s470 + $0x30] sm:$0xff]
      %v5456 = vld [vmem:[%s470 + $0x38] sm:$0xff]
      %v5457 = vld [vmem:[%s470 + $0x40] sm:$0xff]
      %v5458 = vld [vmem:[%s470 + $0x48] sm:$0xff]
      %v5459 = vld [vmem:[%s470 + $0x50] sm:$0xff]
      %v5460 = vld [vmem:[%s470 + $0x58] sm:$0xff]
      %v5461 = vld [vmem:[%s470 + $0x60] sm:$0xff]
      %v5462 = vld [vmem:[%s470 + $0x68] sm:$0xff]
      %v5463 = vld [vmem:[%s470 + $0x70] sm:$0xff]
      %v5464 = vld [vmem:[%s470 + $0x78] sm:$0xff]
      %v5465 = vld [vmem:[%s470 + $0x80] sm:$0xff]
      %v5466 = vld [vmem:[%s470 + $0x88] sm:$0xff]
      %v5467 = vld [vmem:[%s470 + $0x90] sm:$0xff]
      %v5468 = vld [vmem:[%s470 + $0x98] sm:$0xff]
      %v5469 = vld [vmem:[%s470 + $0xa0] sm:$0xff]
      %v5470 = vld [vmem:[%s470 + $0xa8] sm:$0xff]
      %v5471 = vld [vmem:[%s470 + $0xb0] sm:$0xff]
      %v5472 = vld [vmem:[%s470 + $0xb8] sm:$0xff]
      %v5473 = vld [vmem:[%s470 + $0xc0] sm:$0xff]
      %v5474 = vld [vmem:[%s470 + $0xc8] sm:$0xff]
      %v5475 = vld [vmem:[%s470 + $0xd0] sm:$0xff]
      %v5476 = vld [vmem:[%s470 + $0xd8] sm:$0xff]
      %v5477 = vld [vmem:[%s470 + $0xe0] sm:$0xff]
      %v5478 = vld [vmem:[%s470 + $0xe8] sm:$0xff]
      %v5479 = vld [vmem:[%s470 + $0xf0] sm:$0xff]
      %v5480 = vld [vmem:[%s470 + $0xf8] sm:$0xff]
      %v5481 = vld [vmem:[%s470 + $0x100] sm:$0xff]
      %v5482 = vld [vmem:[%s470 + $0x108] sm:$0xff]
      %v5483 = vld [vmem:[%s470 + $0x110] sm:$0xff]
      %v5484 = vld [vmem:[%s470 + $0x118] sm:$0xff]
      %v5485 = vsel %vm675, %v5453, 0.0
      %v5486 = vsel %vm676, %v5454, 0.0
      %v5487 = vsel %vm677, %v5455, 0.0
      %v5488 = vsel %vm678, %v5456, 0.0
      %v5489 = vsel %vm679, %v5457, 0.0
      %v5490 = vsel %vm680, %v5458, 0.0
      %v5491 = vsel %vm681, %v5459, 0.0
      %v5492 = vsel %vm682, %v5460, 0.0
      %v5493 = vsel %vm683, %v5461, 0.0
      %v5494 = vsel %vm684, %v5462, 0.0
      %v5495 = vsel %vm685, %v5463, 0.0
      %v5496 = vsel %vm686, %v5464, 0.0
      %v5497 = vsel %vm687, %v5465, 0.0
      %v5498 = vsel %vm688, %v5466, 0.0
      %v5499 = vsel %vm689, %v5467, 0.0
      %v5500 = vsel %vm690, %v5468, 0.0
      %v5501 = vsel %vm691, %v5469, 0.0
      %v5502 = vsel %vm692, %v5470, 0.0
      %v5503 = vsel %vm693, %v5471, 0.0
      %v5504 = vsel %vm694, %v5472, 0.0
      %v5505 = vsel %vm695, %v5473, 0.0
      %v5506 = vsel %vm696, %v5474, 0.0
      %v5507 = vsel %vm697, %v5475, 0.0
      %v5508 = vsel %vm698, %v5476, 0.0
      %v5509 = vsel %vm699, %v5477, 0.0
      %v5510 = vsel %vm700, %v5478, 0.0
      %v5511 = vsel %vm701, %v5479, 0.0
      %v5512 = vsel %vm702, %v5480, 0.0
      %v5513 = vsel %vm703, %v5481, 0.0
      %v5514 = vsel %vm704, %v5482, 0.0
      %v5515 = vsel %vm705, %v5483, 0.0
      %v5516 = vsel %vm706, %v5484, 0.0
      %v5517 = vpack.c.bf16 %v5486, %v5485
      %v5518 = vpack.c.bf16 %v5488, %v5487
      %v5519 = vpack.c.bf16 %v5490, %v5489
      %v5520 = vpack.c.bf16 %v5492, %v5491
      %v5521 = vpack.c.bf16 %v5494, %v5493
      %v5522 = vpack.c.bf16 %v5496, %v5495
      %v5523 = vpack.c.bf16 %v5498, %v5497
      %v5524 = vpack.c.bf16 %v5500, %v5499
      %v5525 = vpack.c.bf16 %v5502, %v5501
      %v5526 = vpack.c.bf16 %v5504, %v5503
      %v5527 = vpack.c.bf16 %v5506, %v5505
      %v5528 = vpack.c.bf16 %v5508, %v5507
      %v5529 = vpack.c.bf16 %v5510, %v5509
      %v5530 = vpack.c.bf16 %v5512, %v5511
      %v5531 = vpack.c.bf16 %v5514, %v5513
      %v5532 = vpack.c.bf16 %v5516, %v5515
      %s5533 = scalar_lea.vmem %s7, 96
      %v5534 = vld [vmem:[%s5533] sm:$0xf]
      %v5535 = vld [vmem:[%s5533 + $0x4] sm:$0xf]
      %v5536 = vld [vmem:[%s5533 + $0x8] sm:$0xf]
      %v5537 = vld [vmem:[%s5533 + $0xc] sm:$0xf]
      %v5542 = vunpack.c.l.b16 %v5534
      %v5543 = vunpack.c.l.b16 %v5535
      %v5544 = vunpack.c.l.b16 %v5536
      %v5545 = vunpack.c.l.b16 %v5537
      %v5546 = vpack.c.b16 %v5543, %v5542
      %v5547 = vpack.c.b16 %v5545, %v5544
      %v5551 = vsel %vm3702, %v5517, 0
      %v5554 = vsel %vm3702, %v5518, 0
      %v5557 = vsel %vm3702, %v5519, 0
      %v5560 = vsel %vm3702, %v5520, 0
      %v5563 = vsel %vm3702, %v5521, 0
      %v5566 = vsel %vm3702, %v5522, 0
      %v5569 = vsel %vm3702, %v5523, 0
      %v5572 = vsel %vm3702, %v5524, 0
      %v5575 = vsel %vm3702, %v5525, 0
      %v5578 = vsel %vm3702, %v5526, 0
      %v5581 = vsel %vm3702, %v5527, 0
      %v5584 = vsel %vm3702, %v5528, 0
      %v5587 = vsel %vm3702, %v5529, 0
      %v5590 = vsel %vm3702, %v5530, 0
      %v5593 = vsel %vm3702, %v5531, 0
      %v5596 = vsel %vm3702, %v5532, 0
      %5598 = vmatprep.subr.bf16.mxu0 0
      %5599 = vmatpush1.bf16.msra.mxu0 %v5546
      %5600 = vmatprep.subr.bf16.mxu0 0
      %5601 = vmatpush1.bf16.msra.mxu0 %v5547
      %5602 = vmatprep.subr.bf16.mxu0 0
      %5603 = vmatpush1.bf16.msra.mxu0 0
      %5604 = vmatprep.subr.bf16.mxu0 0
      %5605 = vmatpush1.bf16.msra.mxu0 0
      %5606 = vmatprep.subr.bf16.mxu0 0
      %5607 = vmatpush1.bf16.msra.mxu0 0
      %5608 = vmatprep.subr.bf16.mxu0 0
      %5609 = vmatpush1.bf16.msra.mxu0 0
      %5610 = vmatprep.subr.bf16.mxu0 0
      %5611 = vmatpush1.bf16.msra.mxu0 0
      %5612 = vmatprep.subr.bf16.mxu0 0
      %5613 = vmatpush1.bf16.msra.mxu0 0
      %5614 = vmatprep.subr.bf16.mxu0 0
      %5615 = vmatpush1.bf16.msra.mxu0 0
      %5616 = vmatprep.subr.bf16.mxu0 0
      %5617 = vmatpush1.bf16.msra.mxu0 0
      %5618 = vmatprep.subr.bf16.mxu0 0
      %5619 = vmatpush1.bf16.msra.mxu0 0
      %5620 = vmatprep.subr.bf16.mxu0 0
      %5621 = vmatpush1.bf16.msra.mxu0 0
      %5622 = vmatprep.subr.bf16.mxu0 0
      %5623 = vmatpush1.bf16.msra.mxu0 0
      %5624 = vmatprep.subr.bf16.mxu0 0
      %5625 = vmatpush1.bf16.msra.mxu0 0
      %5626 = vmatprep.subr.bf16.mxu0 0
      %5627 = vmatpush1.bf16.msra.mxu0 0
      %5628 = vmatprep.subr.bf16.mxu0 0
      %5629 = vmatpush1.bf16.msra.mxu0 0
      %5630 = vmatprep.mubr.bf16.mxu0 0
      %5631 = vmatmul.mubr.bf16.gmra.mrb[0].mxu0 %v5551
      %v5632 = vpop.f32.mrb[0].mxu0
      %v5633 = vadd.f32 0.0, %v5632
      %v5634 = vpop.f32.mrb[0].mxu0
      %v5635 = vpop.f32.mrb[0].mxu0
      %v5636 = vadd.f32 0.0, %v5635
      %v5637 = vpop.f32.mrb[0].mxu0
      %5638 = vmatprep.mubr.bf16.mxu0 0
      %5639 = vmatmul.mubr.bf16.gmra.mrb[0].mxu0 %v5554
      %v5640 = vpop.f32.mrb[0].mxu0
      %v5641 = vadd.f32 0.0, %v5640
      %v5642 = vpop.f32.mrb[0].mxu0
      %v5643 = vpop.f32.mrb[0].mxu0
      %v5644 = vadd.f32 0.0, %v5643
      %v5645 = vpop.f32.mrb[0].mxu0
      %5646 = vmatprep.mubr.bf16.mxu0 0
      %5647 = vmatmul.mubr.bf16.gmra.mrb[0].mxu0 %v5557
      %v5648 = vpop.f32.mrb[0].mxu0
      %v5649 = vadd.f32 0.0, %v5648
      %v5650 = vpop.f32.mrb[0].mxu0
      %v5651 = vpop.f32.mrb[0].mxu0
      %v5652 = vadd.f32 0.0, %v5651
      %v5653 = vpop.f32.mrb[0].mxu0
      %5654 = vmatprep.mubr.bf16.mxu0 0
      %5655 = vmatmul.mubr.bf16.gmra.mrb[0].mxu0 %v5560
      %v5656 = vpop.f32.mrb[0].mxu0
      %v5657 = vadd.f32 0.0, %v5656
      %v5658 = vpop.f32.mrb[0].mxu0
      %v5659 = vpop.f32.mrb[0].mxu0
      %v5660 = vadd.f32 0.0, %v5659
      %v5661 = vpop.f32.mrb[0].mxu0
      %5662 = vmatprep.mubr.bf16.mxu0 0
      %5663 = vmatmul.mubr.bf16.gmra.mrb[0].mxu0 %v5563
      %v5664 = vpop.f32.mrb[0].mxu0
      %v5665 = vadd.f32 0.0, %v5664
      %v5666 = vpop.f32.mrb[0].mxu0
      %v5667 = vpop.f32.mrb[0].mxu0
      %v5668 = vadd.f32 0.0, %v5667
      %v5669 = vpop.f32.mrb[0].mxu0
      %5670 = vmatprep.mubr.bf16.mxu0 0
      %5671 = vmatmul.mubr.bf16.gmra.mrb[0].mxu0 %v5566
      %v5672 = vpop.f32.mrb[0].mxu0
      %v5673 = vadd.f32 0.0, %v5672
      %v5674 = vpop.f32.mrb[0].mxu0
      %v5675 = vpop.f32.mrb[0].mxu0
      %v5676 = vadd.f32 0.0, %v5675
      %v5677 = vpop.f32.mrb[0].mxu0
      %5678 = vmatprep.mubr.bf16.mxu0 0
      %5679 = vmatmul.mubr.bf16.gmra.mrb[0].mxu0 %v5569
      %v5680 = vpop.f32.mrb[0].mxu0
      %v5681 = vadd.f32 0.0, %v5680
      %v5682 = vpop.f32.mrb[0].mxu0
      %v5683 = vpop.f32.mrb[0].mxu0
      %v5684 = vadd.f32 0.0, %v5683
      %v5685 = vpop.f32.mrb[0].mxu0
      %5686 = vmatprep.mubr.bf16.mxu0 0
      %5687 = vmatmul.mubr.bf16.gmra.mrb[0].mxu0 %v5572
      %v5688 = vpop.f32.mrb[0].mxu0
      %v5689 = vadd.f32 0.0, %v5688
      %v5690 = vpop.f32.mrb[0].mxu0
      %v5691 = vpop.f32.mrb[0].mxu0
      %v5692 = vadd.f32 0.0, %v5691
      %v5693 = vpop.f32.mrb[0].mxu0
      %5694 = vmatprep.mubr.bf16.mxu0 0
      %5695 = vmatmul.mubr.bf16.gmra.mrb[0].mxu0 %v5575
      %v5696 = vpop.f32.mrb[0].mxu0
      %v5697 = vadd.f32 0.0, %v5696
      %v5698 = vpop.f32.mrb[0].mxu0
      %v5699 = vpop.f32.mrb[0].mxu0
      %v5700 = vadd.f32 0.0, %v5699
      %v5701 = vpop.f32.mrb[0].mxu0
      %5702 = vmatprep.mubr.bf16.mxu0 0
      %5703 = vmatmul.mubr.bf16.gmra.mrb[0].mxu0 %v5578
      %v5704 = vpop.f32.mrb[0].mxu0
      %v5705 = vadd.f32 0.0, %v5704
      %v5706 = vpop.f32.mrb[0].mxu0
      %v5707 = vpop.f32.mrb[0].mxu0
      %v5708 = vadd.f32 0.0, %v5707
      %v5709 = vpop.f32.mrb[0].mxu0
      %5710 = vmatprep.mubr.bf16.mxu0 0
      %5711 = vmatmul.mubr.bf16.gmra.mrb[0].mxu0 %v5581
      %v5712 = vpop.f32.mrb[0].mxu0
      %v5713 = vadd.f32 0.0, %v5712
      %v5714 = vpop.f32.mrb[0].mxu0
      %v5715 = vpop.f32.mrb[0].mxu0
      %v5716 = vadd.f32 0.0, %v5715
      %v5717 = vpop.f32.mrb[0].mxu0
      %5718 = vmatprep.mubr.bf16.mxu0 0
      %5719 = vmatmul.mubr.bf16.gmra.mrb[0].mxu0 %v5584
      %v5720 = vpop.f32.mrb[0].mxu0
      %v5721 = vadd.f32 0.0, %v5720
      %v5722 = vpop.f32.mrb[0].mxu0
      %v5723 = vpop.f32.mrb[0].mxu0
      %v5724 = vadd.f32 0.0, %v5723
      %v5725 = vpop.f32.mrb[0].mxu0
      %5726 = vmatprep.mubr.bf16.mxu0 0
      %5727 = vmatmul.mubr.bf16.gmra.mrb[0].mxu0 %v5587
      %v5728 = vpop.f32.mrb[0].mxu0
      %v5729 = vadd.f32 0.0, %v5728
      %v5730 = vpop.f32.mrb[0].mxu0
      %v5731 = vpop.f32.mrb[0].mxu0
      %v5732 = vadd.f32 0.0, %v5731
      %v5733 = vpop.f32.mrb[0].mxu0
      %5734 = vmatprep.mubr.bf16.mxu0 0
      %5735 = vmatmul.mubr.bf16.gmra.mrb[0].mxu0 %v5590
      %v5736 = vpop.f32.mrb[0].mxu0
      %v5737 = vadd.f32 0.0, %v5736
      %v5738 = vpop.f32.mrb[0].mxu0
      %v5739 = vpop.f32.mrb[0].mxu0
      %v5740 = vadd.f32 0.0, %v5739
      %v5741 = vpop.f32.mrb[0].mxu0
      %5742 = vmatprep.mubr.bf16.mxu0 0
      %5743 = vmatmul.mubr.bf16.gmra.mrb[0].mxu0 %v5593
      %v5744 = vpop.f32.mrb[0].mxu0
      %v5745 = vadd.f32 0.0, %v5744
      %v5746 = vpop.f32.mrb[0].mxu0
      %v5747 = vpop.f32.mrb[0].mxu0
      %v5748 = vadd.f32 0.0, %v5747
      %v5749 = vpop.f32.mrb[0].mxu0
      %5750 = vmatprep.mubr.bf16.mxu0 0
      %5751 = vmatmul.mubr.bf16.gmra.mrb[0].mxu0 %v5596
      %v5752 = vpop.f32.mrb[0].mxu0
      %v5753 = vadd.f32 0.0, %v5752
      %v5754 = vpop.f32.mrb[0].mxu0
      %v5755 = vpop.f32.mrb[0].mxu0
      %v5756 = vadd.f32 0.0, %v5755
      %v5757 = vpop.f32.mrb[0].mxu0
      %5758 = vdwg.mxu0
      %v5759 = vadd.f32 %v5421, %v5633
      %v5760 = vadd.f32 %v5422, %v5636
      %v5761 = vadd.f32 %v5423, %v5641
      %v5762 = vadd.f32 %v5424, %v5644
      %v5763 = vadd.f32 %v5425, %v5649
      %v5764 = vadd.f32 %v5426, %v5652
      %v5765 = vadd.f32 %v5427, %v5657
      %v5766 = vadd.f32 %v5428, %v5660
      %v5767 = vadd.f32 %v5429, %v5665
      %v5768 = vadd.f32 %v5430, %v5668
      %v5769 = vadd.f32 %v5431, %v5673
      %v5770 = vadd.f32 %v5432, %v5676
      %v5771 = vadd.f32 %v5433, %v5681
      %v5772 = vadd.f32 %v5434, %v5684
      %v5773 = vadd.f32 %v5435, %v5689
      %v5774 = vadd.f32 %v5436, %v5692
      %v5775 = vadd.f32 %v5437, %v5697
      %v5776 = vadd.f32 %v5438, %v5700
      %v5777 = vadd.f32 %v5439, %v5705
      %v5778 = vadd.f32 %v5440, %v5708
      %v5779 = vadd.f32 %v5441, %v5713
      %v5780 = vadd.f32 %v5442, %v5716
      %v5781 = vadd.f32 %v5443, %v5721
      %v5782 = vadd.f32 %v5444, %v5724
      %v5783 = vadd.f32 %v5445, %v5729
      %v5784 = vadd.f32 %v5446, %v5732
      %v5785 = vadd.f32 %v5447, %v5737
      %v5786 = vadd.f32 %v5448, %v5740
      %v5787 = vadd.f32 %v5449, %v5745
      %v5788 = vadd.f32 %v5450, %v5748
      %v5789 = vadd.f32 %v5451, %v5753
      %v5790 = vadd.f32 %v5452, %v5756
      %v5791 = vld [vmem:[%s470 + $0x21] sm:$0xff]
      %v5792 = vld [vmem:[%s470 + $0x29] sm:$0xff]
      %v5793 = vld [vmem:[%s470 + $0x31] sm:$0xff]
      %v5794 = vld [vmem:[%s470 + $0x39] sm:$0xff]
      %v5795 = vld [vmem:[%s470 + $0x41] sm:$0xff]
      %v5796 = vld [vmem:[%s470 + $0x49] sm:$0xff]
      %v5797 = vld [vmem:[%s470 + $0x51] sm:$0xff]
      %v5798 = vld [vmem:[%s470 + $0x59] sm:$0xff]
      %v5799 = vld [vmem:[%s470 + $0x61] sm:$0xff]
      %v5800 = vld [vmem:[%s470 + $0x69] sm:$0xff]
      %v5801 = vld [vmem:[%s470 + $0x71] sm:$0xff]
      %v5802 = vld [vmem:[%s470 + $0x79] sm:$0xff]
      %v5803 = vld [vmem:[%s470 + $0x81] sm:$0xff]
      %v5804 = vld [vmem:[%s470 + $0x89] sm:$0xff]
      %v5805 = vld [vmem:[%s470 + $0x91] sm:$0xff]
      %v5806 = vld [vmem:[%s470 + $0x99] sm:$0xff]
      %v5807 = vld [vmem:[%s470 + $0xa1] sm:$0xff]
      %v5808 = vld [vmem:[%s470 + $0xa9] sm:$0xff]
      %v5809 = vld [vmem:[%s470 + $0xb1] sm:$0xff]
      %v5810 = vld [vmem:[%s470 + $0xb9] sm:$0xff]
      %v5811 = vld [vmem:[%s470 + $0xc1] sm:$0xff]
      %v5812 = vld [vmem:[%s470 + $0xc9] sm:$0xff]
      %v5813 = vld [vmem:[%s470 + $0xd1] sm:$0xff]
      %v5814 = vld [vmem:[%s470 + $0xd9] sm:$0xff]
      %v5815 = vld [vmem:[%s470 + $0xe1] sm:$0xff]
      %v5816 = vld [vmem:[%s470 + $0xe9] sm:$0xff]
      %v5817 = vld [vmem:[%s470 + $0xf1] sm:$0xff]
      %v5818 = vld [vmem:[%s470 + $0xf9] sm:$0xff]
      %v5819 = vld [vmem:[%s470 + $0x101] sm:$0xff]
      %v5820 = vld [vmem:[%s470 + $0x109] sm:$0xff]
      %v5821 = vld [vmem:[%s470 + $0x111] sm:$0xff]
      %v5822 = vld [vmem:[%s470 + $0x119] sm:$0xff]
      %v5823 = vpack.c.bf16 %v5792, %v5791
      %v5824 = vpack.c.bf16 %v5794, %v5793
      %v5825 = vpack.c.bf16 %v5796, %v5795
      %v5826 = vpack.c.bf16 %v5798, %v5797
      %v5827 = vpack.c.bf16 %v5800, %v5799
      %v5828 = vpack.c.bf16 %v5802, %v5801
      %v5829 = vpack.c.bf16 %v5804, %v5803
      %v5830 = vpack.c.bf16 %v5806, %v5805
      %v5831 = vpack.c.bf16 %v5808, %v5807
      %v5832 = vpack.c.bf16 %v5810, %v5809
      %v5833 = vpack.c.bf16 %v5812, %v5811
      %v5834 = vpack.c.bf16 %v5814, %v5813
      %v5835 = vpack.c.bf16 %v5816, %v5815
      %v5836 = vpack.c.bf16 %v5818, %v5817
      %v5837 = vpack.c.bf16 %v5820, %v5819
      %v5838 = vpack.c.bf16 %v5822, %v5821
      %s5839 = scalar_lea.vmem %s7, 112
      %v5840 = vld [vmem:[%s5839] sm:$0xf]
      %v5841 = vld [vmem:[%s5839 + $0x4] sm:$0xf]
      %v5842 = vld [vmem:[%s5839 + $0x8] sm:$0xf]
      %v5843 = vld [vmem:[%s5839 + $0xc] sm:$0xf]
      %v5848 = vunpack.c.l.b16 %v5840
      %v5849 = vunpack.c.l.b16 %v5841
      %v5850 = vunpack.c.l.b16 %v5842
      %v5851 = vunpack.c.l.b16 %v5843
      %v5852 = vpack.c.b16 %v5849, %v5848
      %v5853 = vpack.c.b16 %v5851, %v5850
      %v5857 = vsel %vm3702, %v5823, 0
      %v5860 = vsel %vm3702, %v5824, 0
      %v5863 = vsel %vm3702, %v5825, 0
      %v5866 = vsel %vm3702, %v5826, 0
      %v5869 = vsel %vm3702, %v5827, 0
      %v5872 = vsel %vm3702, %v5828, 0
      %v5875 = vsel %vm3702, %v5829, 0
      %v5878 = vsel %vm3702, %v5830, 0
      %v5881 = vsel %vm3702, %v5831, 0
      %v5884 = vsel %vm3702, %v5832, 0
      %v5887 = vsel %vm3702, %v5833, 0
      %v5890 = vsel %vm3702, %v5834, 0
      %v5893 = vsel %vm3702, %v5835, 0
      %v5896 = vsel %vm3702, %v5836, 0
      %v5899 = vsel %vm3702, %v5837, 0
      %v5902 = vsel %vm3702, %v5838, 0
      %5904 = vmatprep.subr.bf16.mxu0 0
      %5905 = vmatpush1.bf16.msra.mxu0 %v5852
      %5906 = vmatprep.subr.bf16.mxu0 0
      %5907 = vmatpush1.bf16.msra.mxu0 %v5853
      %5908 = vmatprep.subr.bf16.mxu0 0
      %5909 = vmatpush1.bf16.msra.mxu0 0
      %5910 = vmatprep.subr.bf16.mxu0 0
      %5911 = vmatpush1.bf16.msra.mxu0 0
      %5912 = vmatprep.subr.bf16.mxu0 0
      %5913 = vmatpush1.bf16.msra.mxu0 0
      %5914 = vmatprep.subr.bf16.mxu0 0
      %5915 = vmatpush1.bf16.msra.mxu0 0
      %5916 = vmatprep.subr.bf16.mxu0 0
      %5917 = vmatpush1.bf16.msra.mxu0 0
      %5918 = vmatprep.subr.bf16.mxu0 0
      %5919 = vmatpush1.bf16.msra.mxu0 0
      %5920 = vmatprep.subr.bf16.mxu0 0
      %5921 = vmatpush1.bf16.msra.mxu0 0
      %5922 = vmatprep.subr.bf16.mxu0 0
      %5923 = vmatpush1.bf16.msra.mxu0 0
      %5924 = vmatprep.subr.bf16.mxu0 0
      %5925 = vmatpush1.bf16.msra.mxu0 0
      %5926 = vmatprep.subr.bf16.mxu0 0
      %5927 = vmatpush1.bf16.msra.mxu0 0
      %5928 = vmatprep.subr.bf16.mxu0 0
      %5929 = vmatpush1.bf16.msra.mxu0 0
      %5930 = vmatprep.subr.bf16.mxu0 0
      %5931 = vmatpush1.bf16.msra.mxu0 0
      %5932 = vmatprep.subr.bf16.mxu0 0
      %5933 = vmatpush1.bf16.msra.mxu0 0
      %5934 = vmatprep.subr.bf16.mxu0 0
      %5935 = vmatpush1.bf16.msra.mxu0 0
      %5936 = vmatprep.mubr.bf16.mxu0 0
      %5937 = vmatmul.mubr.bf16.gmra.mrb[0].mxu0 %v5857
      %v5938 = vpop.f32.mrb[0].mxu0
      %v5939 = vadd.f32 0.0, %v5938
      %v5940 = vpop.f32.mrb[0].mxu0
      %v5941 = vpop.f32.mrb[0].mxu0
      %v5942 = vadd.f32 0.0, %v5941
      %v5943 = vpop.f32.mrb[0].mxu0
      %5944 = vmatprep.mubr.bf16.mxu0 0
      %5945 = vmatmul.mubr.bf16.gmra.mrb[0].mxu0 %v5860
      %v5946 = vpop.f32.mrb[0].mxu0
      %v5947 = vadd.f32 0.0, %v5946
      %v5948 = vpop.f32.mrb[0].mxu0
      %v5949 = vpop.f32.mrb[0].mxu0
      %v5950 = vadd.f32 0.0, %v5949
      %v5951 = vpop.f32.mrb[0].mxu0
      %5952 = vmatprep.mubr.bf16.mxu0 0
      %5953 = vmatmul.mubr.bf16.gmra.mrb[0].mxu0 %v5863
      %v5954 = vpop.f32.mrb[0].mxu0
      %v5955 = vadd.f32 0.0, %v5954
      %v5956 = vpop.f32.mrb[0].mxu0
      %v5957 = vpop.f32.mrb[0].mxu0
      %v5958 = vadd.f32 0.0, %v5957
      %v5959 = vpop.f32.mrb[0].mxu0
      %5960 = vmatprep.mubr.bf16.mxu0 0
      %5961 = vmatmul.mubr.bf16.gmra.mrb[0].mxu0 %v5866
      %v5962 = vpop.f32.mrb[0].mxu0
      %v5963 = vadd.f32 0.0, %v5962
      %v5964 = vpop.f32.mrb[0].mxu0
      %v5965 = vpop.f32.mrb[0].mxu0
      %v5966 = vadd.f32 0.0, %v5965
      %v5967 = vpop.f32.mrb[0].mxu0
      %5968 = vmatprep.mubr.bf16.mxu0 0
      %5969 = vmatmul.mubr.bf16.gmra.mrb[0].mxu0 %v5869
      %v5970 = vpop.f32.mrb[0].mxu0
      %v5971 = vadd.f32 0.0, %v5970
      %v5972 = vpop.f32.mrb[0].mxu0
      %v5973 = vpop.f32.mrb[0].mxu0
      %v5974 = vadd.f32 0.0, %v5973
      %v5975 = vpop.f32.mrb[0].mxu0
      %5976 = vmatprep.mubr.bf16.mxu0 0
      %5977 = vmatmul.mubr.bf16.gmra.mrb[0].mxu0 %v5872
      %v5978 = vpop.f32.mrb[0].mxu0
      %v5979 = vadd.f32 0.0, %v5978
      %v5980 = vpop.f32.mrb[0].mxu0
      %v5981 = vpop.f32.mrb[0].mxu0
      %v5982 = vadd.f32 0.0, %v5981
      %v5983 = vpop.f32.mrb[0].mxu0
      %5984 = vmatprep.mubr.bf16.mxu0 0
      %5985 = vmatmul.mubr.bf16.gmra.mrb[0].mxu0 %v5875
      %v5986 = vpop.f32.mrb[0].mxu0
      %v5987 = vadd.f32 0.0, %v5986
      %v5988 = vpop.f32.mrb[0].mxu0
      %v5989 = vpop.f32.mrb[0].mxu0
      %v5990 = vadd.f32 0.0, %v5989
      %v5991 = vpop.f32.mrb[0].mxu0
      %5992 = vmatprep.mubr.bf16.mxu0 0
      %5993 = vmatmul.mubr.bf16.gmra.mrb[0].mxu0 %v5878
      %v5994 = vpop.f32.mrb[0].mxu0
      %v5995 = vadd.f32 0.0, %v5994
      %v5996 = vpop.f32.mrb[0].mxu0
      %v5997 = vpop.f32.mrb[0].mxu0
      %v5998 = vadd.f32 0.0, %v5997
      %v5999 = vpop.f32.mrb[0].mxu0
      %6000 = vmatprep.mubr.bf16.mxu0 0
      %6001 = vmatmul.mubr.bf16.gmra.mrb[0].mxu0 %v5881
      %v6002 = vpop.f32.mrb[0].mxu0
      %v6003 = vadd.f32 0.0, %v6002
      %v6004 = vpop.f32.mrb[0].mxu0
      %v6005 = vpop.f32.mrb[0].mxu0
      %v6006 = vadd.f32 0.0, %v6005
      %v6007 = vpop.f32.mrb[0].mxu0
      %6008 = vmatprep.mubr.bf16.mxu0 0
      %6009 = vmatmul.mubr.bf16.gmra.mrb[0].mxu0 %v5884
      %v6010 = vpop.f32.mrb[0].mxu0
      %v6011 = vadd.f32 0.0, %v6010
      %v6012 = vpop.f32.mrb[0].mxu0
      %v6013 = vpop.f32.mrb[0].mxu0
      %v6014 = vadd.f32 0.0, %v6013
      %v6015 = vpop.f32.mrb[0].mxu0
      %6016 = vmatprep.mubr.bf16.mxu0 0
      %6017 = vmatmul.mubr.bf16.gmra.mrb[0].mxu0 %v5887
      %v6018 = vpop.f32.mrb[0].mxu0
      %v6019 = vadd.f32 0.0, %v6018
      %v6020 = vpop.f32.mrb[0].mxu0
      %v6021 = vpop.f32.mrb[0].mxu0
      %v6022 = vadd.f32 0.0, %v6021
      %v6023 = vpop.f32.mrb[0].mxu0
      %6024 = vmatprep.mubr.bf16.mxu0 0
      %6025 = vmatmul.mubr.bf16.gmra.mrb[0].mxu0 %v5890
      %v6026 = vpop.f32.mrb[0].mxu0
      %v6027 = vadd.f32 0.0, %v6026
      %v6028 = vpop.f32.mrb[0].mxu0
      %v6029 = vpop.f32.mrb[0].mxu0
      %v6030 = vadd.f32 0.0, %v6029
      %v6031 = vpop.f32.mrb[0].mxu0
      %6032 = vmatprep.mubr.bf16.mxu0 0
      %6033 = vmatmul.mubr.bf16.gmra.mrb[0].mxu0 %v5893
      %v6034 = vpop.f32.mrb[0].mxu0
      %v6035 = vadd.f32 0.0, %v6034
      %v6036 = vpop.f32.mrb[0].mxu0
      %v6037 = vpop.f32.mrb[0].mxu0
      %v6038 = vadd.f32 0.0, %v6037
      %v6039 = vpop.f32.mrb[0].mxu0
      %6040 = vmatprep.mubr.bf16.mxu0 0
      %6041 = vmatmul.mubr.bf16.gmra.mrb[0].mxu0 %v5896
      %v6042 = vpop.f32.mrb[0].mxu0
      %v6043 = vadd.f32 0.0, %v6042
      %v6044 = vpop.f32.mrb[0].mxu0
      %v6045 = vpop.f32.mrb[0].mxu0
      %v6046 = vadd.f32 0.0, %v6045
      %v6047 = vpop.f32.mrb[0].mxu0
      %6048 = vmatprep.mubr.bf16.mxu0 0
      %6049 = vmatmul.mubr.bf16.gmra.mrb[0].mxu0 %v5899
      %v6050 = vpop.f32.mrb[0].mxu0
      %v6051 = vadd.f32 0.0, %v6050
      %v6052 = vpop.f32.mrb[0].mxu0
      %v6053 = vpop.f32.mrb[0].mxu0
      %v6054 = vadd.f32 0.0, %v6053
      %v6055 = vpop.f32.mrb[0].mxu0
      %6056 = vmatprep.mubr.bf16.mxu0 0
      %6057 = vmatmul.mubr.bf16.gmra.mrb[0].mxu0 %v5902
      %v6058 = vpop.f32.mrb[0].mxu0
      %v6059 = vadd.f32 0.0, %v6058
      %v6060 = vpop.f32.mrb[0].mxu0
      %v6061 = vpop.f32.mrb[0].mxu0
      %v6062 = vadd.f32 0.0, %v6061
      %v6063 = vpop.f32.mrb[0].mxu0
      %6064 = vdwg.mxu0
      %v6065 = vadd.f32 %v5759, %v5939
      %v6066 = vadd.f32 %v5760, %v5942
      %v6067 = vadd.f32 %v5761, %v5947
      %v6068 = vadd.f32 %v5762, %v5950
      %v6069 = vadd.f32 %v5763, %v5955
      %v6070 = vadd.f32 %v5764, %v5958
      %v6071 = vadd.f32 %v5765, %v5963
      %v6072 = vadd.f32 %v5766, %v5966
      %v6073 = vadd.f32 %v5767, %v5971
      %v6074 = vadd.f32 %v5768, %v5974
      %v6075 = vadd.f32 %v5769, %v5979
      %v6076 = vadd.f32 %v5770, %v5982
      %v6077 = vadd.f32 %v5771, %v5987
      %v6078 = vadd.f32 %v5772, %v5990
      %v6079 = vadd.f32 %v5773, %v5995
      %v6080 = vadd.f32 %v5774, %v5998
      %v6081 = vadd.f32 %v5775, %v6003
      %v6082 = vadd.f32 %v5776, %v6006
      %v6083 = vadd.f32 %v5777, %v6011
      %v6084 = vadd.f32 %v5778, %v6014
      %v6085 = vadd.f32 %v5779, %v6019
      %v6086 = vadd.f32 %v5780, %v6022
      %v6087 = vadd.f32 %v5781, %v6027
      %v6088 = vadd.f32 %v5782, %v6030
      %v6089 = vadd.f32 %v5783, %v6035
      %v6090 = vadd.f32 %v5784, %v6038
      %v6091 = vadd.f32 %v5785, %v6043
      %v6092 = vadd.f32 %v5786, %v6046
      %v6093 = vadd.f32 %v5787, %v6051
      %v6094 = vadd.f32 %v5788, %v6054
      %v6095 = vadd.f32 %v5789, %v6059
      %v6096 = vadd.f32 %v5790, %v6062
      %v6097 = vld [vmem:[%s470 + $0x22] sm:$0xff]
      %v6098 = vld [vmem:[%s470 + $0x2a] sm:$0xff]
      %v6099 = vld [vmem:[%s470 + $0x32] sm:$0xff]
      %v6100 = vld [vmem:[%s470 + $0x3a] sm:$0xff]
      %v6101 = vld [vmem:[%s470 + $0x42] sm:$0xff]
      %v6102 = vld [vmem:[%s470 + $0x4a] sm:$0xff]
      %v6103 = vld [vmem:[%s470 + $0x52] sm:$0xff]
      %v6104 = vld [vmem:[%s470 + $0x5a] sm:$0xff]
      %v6105 = vld [vmem:[%s470 + $0x62] sm:$0xff]
      %v6106 = vld [vmem:[%s470 + $0x6a] sm:$0xff]
      %v6107 = vld [vmem:[%s470 + $0x72] sm:$0xff]
      %v6108 = vld [vmem:[%s470 + $0x7a] sm:$0xff]
      %v6109 = vld [vmem:[%s470 + $0x82] sm:$0xff]
      %v6110 = vld [vmem:[%s470 + $0x8a] sm:$0xff]
      %v6111 = vld [vmem:[%s470 + $0x92] sm:$0xff]
      %v6112 = vld [vmem:[%s470 + $0x9a] sm:$0xff]
      %v6113 = vld [vmem:[%s470 + $0xa2] sm:$0xff]
      %v6114 = vld [vmem:[%s470 + $0xaa] sm:$0xff]
      %v6115 = vld [vmem:[%s470 + $0xb2] sm:$0xff]
      %v6116 = vld [vmem:[%s470 + $0xba] sm:$0xff]
      %v6117 = vld [vmem:[%s470 + $0xc2] sm:$0xff]
      %v6118 = vld [vmem:[%s470 + $0xca] sm:$0xff]
      %v6119 = vld [vmem:[%s470 + $0xd2] sm:$0xff]
      %v6120 = vld [vmem:[%s470 + $0xda] sm:$0xff]
      %v6121 = vld [vmem:[%s470 + $0xe2] sm:$0xff]
      %v6122 = vld [vmem:[%s470 + $0xea] sm:$0xff]
      %v6123 = vld [vmem:[%s470 + $0xf2] sm:$0xff]
      %v6124 = vld [vmem:[%s470 + $0xfa] sm:$0xff]
      %v6125 = vld [vmem:[%s470 + $0x102] sm:$0xff]
      %v6126 = vld [vmem:[%s470 + $0x10a] sm:$0xff]
      %v6127 = vld [vmem:[%s470 + $0x112] sm:$0xff]
      %v6128 = vld [vmem:[%s470 + $0x11a] sm:$0xff]
      %v6129 = vsel %vm1296, %v6097, 0.0
      %v6130 = vsel %vm1297, %v6098, 0.0
      %v6131 = vsel %vm1298, %v6099, 0.0
      %v6132 = vsel %vm1299, %v6100, 0.0
      %v6133 = vsel %vm1300, %v6101, 0.0
      %v6134 = vsel %vm1301, %v6102, 0.0
      %v6135 = vsel %vm1302, %v6103, 0.0
      %v6136 = vsel %vm1303, %v6104, 0.0
      %v6137 = vsel %vm1304, %v6105, 0.0
      %v6138 = vsel %vm1305, %v6106, 0.0
      %v6139 = vsel %vm1306, %v6107, 0.0
      %v6140 = vsel %vm1307, %v6108, 0.0
      %v6141 = vsel %vm1308, %v6109, 0.0
      %v6142 = vsel %vm1309, %v6110, 0.0
      %v6143 = vsel %vm1310, %v6111, 0.0
      %v6144 = vsel %vm1311, %v6112, 0.0
      %v6145 = vsel %vm1312, %v6113, 0.0
      %v6146 = vsel %vm1313, %v6114, 0.0
      %v6147 = vsel %vm1314, %v6115, 0.0
      %v6148 = vsel %vm1315, %v6116, 0.0
      %v6149 = vsel %vm1316, %v6117, 0.0
      %v6150 = vsel %vm1317, %v6118, 0.0
      %v6151 = vsel %vm1318, %v6119, 0.0
      %v6152 = vsel %vm1319, %v6120, 0.0
      %v6153 = vsel %vm1320, %v6121, 0.0
      %v6154 = vsel %vm1321, %v6122, 0.0
      %v6155 = vsel %vm1322, %v6123, 0.0
      %v6156 = vsel %vm1323, %v6124, 0.0
      %v6157 = vsel %vm1324, %v6125, 0.0
      %v6158 = vsel %vm1325, %v6126, 0.0
      %v6159 = vsel %vm1326, %v6127, 0.0
      %v6160 = vsel %vm1327, %v6128, 0.0
      %v6161 = vpack.c.bf16 %v6130, %v6129
      %v6162 = vpack.c.bf16 %v6132, %v6131
      %v6163 = vpack.c.bf16 %v6134, %v6133
      %v6164 = vpack.c.bf16 %v6136, %v6135
      %v6165 = vpack.c.bf16 %v6138, %v6137
      %v6166 = vpack.c.bf16 %v6140, %v6139
      %v6167 = vpack.c.bf16 %v6142, %v6141
      %v6168 = vpack.c.bf16 %v6144, %v6143
      %v6169 = vpack.c.bf16 %v6146, %v6145
      %v6170 = vpack.c.bf16 %v6148, %v6147
      %v6171 = vpack.c.bf16 %v6150, %v6149
      %v6172 = vpack.c.bf16 %v6152, %v6151
      %v6173 = vpack.c.bf16 %v6154, %v6153
      %v6174 = vpack.c.bf16 %v6156, %v6155
      %v6175 = vpack.c.bf16 %v6158, %v6157
      %v6176 = vpack.c.bf16 %v6160, %v6159
      %s6177 = scalar_lea.vmem %s7, 128
      %v6178 = vld [vmem:[%s6177] sm:$0xf]
      %v6179 = vld [vmem:[%s6177 + $0x4] sm:$0xf]
      %v6180 = vld [vmem:[%s6177 + $0x8] sm:$0xf]
      %v6181 = vld [vmem:[%s6177 + $0xc] sm:$0xf]
      %v6186 = vunpack.c.l.b16 %v6178
      %v6187 = vunpack.c.l.b16 %v6179
      %v6188 = vunpack.c.l.b16 %v6180
      %v6189 = vunpack.c.l.b16 %v6181
      %v6190 = vpack.c.b16 %v6187, %v6186
      %v6191 = vpack.c.b16 %v6189, %v6188
      %v6195 = vsel %vm3702, %v6161, 0
      %v6198 = vsel %vm3702, %v6162, 0
      %v6201 = vsel %vm3702, %v6163, 0
      %v6204 = vsel %vm3702, %v6164, 0
      %v6207 = vsel %vm3702, %v6165, 0
      %v6210 = vsel %vm3702, %v6166, 0
      %v6213 = vsel %vm3702, %v6167, 0
      %v6216 = vsel %vm3702, %v6168, 0
      %v6219 = vsel %vm3702, %v6169, 0
      %v6222 = vsel %vm3702, %v6170, 0
      %v6225 = vsel %vm3702, %v6171, 0
      %v6228 = vsel %vm3702, %v6172, 0
      %v6231 = vsel %vm3702, %v6173, 0
      %v6234 = vsel %vm3702, %v6174, 0
      %v6237 = vsel %vm3702, %v6175, 0
      %v6240 = vsel %vm3702, %v6176, 0
      %6242 = vmatprep.subr.bf16.mxu0 0
      %6243 = vmatpush1.bf16.msra.mxu0 %v6190
      %6244 = vmatprep.subr.bf16.mxu0 0
      %6245 = vmatpush1.bf16.msra.mxu0 %v6191
      %6246 = vmatprep.subr.bf16.mxu0 0
      %6247 = vmatpush1.bf16.msra.mxu0 0
      %6248 = vmatprep.subr.bf16.mxu0 0
      %6249 = vmatpush1.bf16.msra.mxu0 0
      %6250 = vmatprep.subr.bf16.mxu0 0
      %6251 = vmatpush1.bf16.msra.mxu0 0
      %6252 = vmatprep.subr.bf16.mxu0 0
      %6253 = vmatpush1.bf16.msra.mxu0 0
      %6254 = vmatprep.subr.bf16.mxu0 0
      %6255 = vmatpush1.bf16.msra.mxu0 0
      %6256 = vmatprep.subr.bf16.mxu0 0
      %6257 = vmatpush1.bf16.msra.mxu0 0
      %6258 = vmatprep.subr.bf16.mxu0 0
      %6259 = vmatpush1.bf16.msra.mxu0 0
      %6260 = vmatprep.subr.bf16.mxu0 0
      %6261 = vmatpush1.bf16.msra.mxu0 0
      %6262 = vmatprep.subr.bf16.mxu0 0
      %6263 = vmatpush1.bf16.msra.mxu0 0
      %6264 = vmatprep.subr.bf16.mxu0 0
      %6265 = vmatpush1.bf16.msra.mxu0 0
      %6266 = vmatprep.subr.bf16.mxu0 0
      %6267 = vmatpush1.bf16.msra.mxu0 0
      %6268 = vmatprep.subr.bf16.mxu0 0
      %6269 = vmatpush1.bf16.msra.mxu0 0
      %6270 = vmatprep.subr.bf16.mxu0 0
      %6271 = vmatpush1.bf16.msra.mxu0 0
      %6272 = vmatprep.subr.bf16.mxu0 0
      %6273 = vmatpush1.bf16.msra.mxu0 0
      %6274 = vmatprep.mubr.bf16.mxu0 0
      %6275 = vmatmul.mubr.bf16.gmra.mrb[0].mxu0 %v6195
      %v6276 = vpop.f32.mrb[0].mxu0
      %v6277 = vadd.f32 0.0, %v6276
      %v6278 = vpop.f32.mrb[0].mxu0
      %v6279 = vpop.f32.mrb[0].mxu0
      %v6280 = vadd.f32 0.0, %v6279
      %v6281 = vpop.f32.mrb[0].mxu0
      %6282 = vmatprep.mubr.bf16.mxu0 0
      %6283 = vmatmul.mubr.bf16.gmra.mrb[0].mxu0 %v6198
      %v6284 = vpop.f32.mrb[0].mxu0
      %v6285 = vadd.f32 0.0, %v6284
      %v6286 = vpop.f32.mrb[0].mxu0
      %v6287 = vpop.f32.mrb[0].mxu0
      %v6288 = vadd.f32 0.0, %v6287
      %v6289 = vpop.f32.mrb[0].mxu0
      %6290 = vmatprep.mubr.bf16.mxu0 0
      %6291 = vmatmul.mubr.bf16.gmra.mrb[0].mxu0 %v6201
      %v6292 = vpop.f32.mrb[0].mxu0
      %v6293 = vadd.f32 0.0, %v6292
      %v6294 = vpop.f32.mrb[0].mxu0
      %v6295 = vpop.f32.mrb[0].mxu0
      %v6296 = vadd.f32 0.0, %v6295
      %v6297 = vpop.f32.mrb[0].mxu0
      %6298 = vmatprep.mubr.bf16.mxu0 0
      %6299 = vmatmul.mubr.bf16.gmra.mrb[0].mxu0 %v6204
      %v6300 = vpop.f32.mrb[0].mxu0
      %v6301 = vadd.f32 0.0, %v6300
      %v6302 = vpop.f32.mrb[0].mxu0
      %v6303 = vpop.f32.mrb[0].mxu0
      %v6304 = vadd.f32 0.0, %v6303
      %v6305 = vpop.f32.mrb[0].mxu0
      %6306 = vmatprep.mubr.bf16.mxu0 0
      %6307 = vmatmul.mubr.bf16.gmra.mrb[0].mxu0 %v6207
      %v6308 = vpop.f32.mrb[0].mxu0
      %v6309 = vadd.f32 0.0, %v6308
      %v6310 = vpop.f32.mrb[0].mxu0
      %v6311 = vpop.f32.mrb[0].mxu0
      %v6312 = vadd.f32 0.0, %v6311
      %v6313 = vpop.f32.mrb[0].mxu0
      %6314 = vmatprep.mubr.bf16.mxu0 0
      %6315 = vmatmul.mubr.bf16.gmra.mrb[0].mxu0 %v6210
      %v6316 = vpop.f32.mrb[0].mxu0
      %v6317 = vadd.f32 0.0, %v6316
      %v6318 = vpop.f32.mrb[0].mxu0
      %v6319 = vpop.f32.mrb[0].mxu0
      %v6320 = vadd.f32 0.0, %v6319
      %v6321 = vpop.f32.mrb[0].mxu0
      %6322 = vmatprep.mubr.bf16.mxu0 0
      %6323 = vmatmul.mubr.bf16.gmra.mrb[0].mxu0 %v6213
      %v6324 = vpop.f32.mrb[0].mxu0
      %v6325 = vadd.f32 0.0, %v6324
      %v6326 = vpop.f32.mrb[0].mxu0
      %v6327 = vpop.f32.mrb[0].mxu0
      %v6328 = vadd.f32 0.0, %v6327
      %v6329 = vpop.f32.mrb[0].mxu0
      %6330 = vmatprep.mubr.bf16.mxu0 0
      %6331 = vmatmul.mubr.bf16.gmra.mrb[0].mxu0 %v6216
      %v6332 = vpop.f32.mrb[0].mxu0
      %v6333 = vadd.f32 0.0, %v6332
      %v6334 = vpop.f32.mrb[0].mxu0
      %v6335 = vpop.f32.mrb[0].mxu0
      %v6336 = vadd.f32 0.0, %v6335
      %v6337 = vpop.f32.mrb[0].mxu0
      %6338 = vmatprep.mubr.bf16.mxu0 0
      %6339 = vmatmul.mubr.bf16.gmra.mrb[0].mxu0 %v6219
      %v6340 = vpop.f32.mrb[0].mxu0
      %v6341 = vadd.f32 0.0, %v6340
      %v6342 = vpop.f32.mrb[0].mxu0
      %v6343 = vpop.f32.mrb[0].mxu0
      %v6344 = vadd.f32 0.0, %v6343
      %v6345 = vpop.f32.mrb[0].mxu0
      %6346 = vmatprep.mubr.bf16.mxu0 0
      %6347 = vmatmul.mubr.bf16.gmra.mrb[0].mxu0 %v6222
      %v6348 = vpop.f32.mrb[0].mxu0
      %v6349 = vadd.f32 0.0, %v6348
      %v6350 = vpop.f32.mrb[0].mxu0
      %v6351 = vpop.f32.mrb[0].mxu0
      %v6352 = vadd.f32 0.0, %v6351
      %v6353 = vpop.f32.mrb[0].mxu0
      %6354 = vmatprep.mubr.bf16.mxu0 0
      %6355 = vmatmul.mubr.bf16.gmra.mrb[0].mxu0 %v6225
      %v6356 = vpop.f32.mrb[0].mxu0
      %v6357 = vadd.f32 0.0, %v6356
      %v6358 = vpop.f32.mrb[0].mxu0
      %v6359 = vpop.f32.mrb[0].mxu0
      %v6360 = vadd.f32 0.0, %v6359
      %v6361 = vpop.f32.mrb[0].mxu0
      %6362 = vmatprep.mubr.bf16.mxu0 0
      %6363 = vmatmul.mubr.bf16.gmra.mrb[0].mxu0 %v6228
      %v6364 = vpop.f32.mrb[0].mxu0
      %v6365 = vadd.f32 0.0, %v6364
      %v6366 = vpop.f32.mrb[0].mxu0
      %v6367 = vpop.f32.mrb[0].mxu0
      %v6368 = vadd.f32 0.0, %v6367
      %v6369 = vpop.f32.mrb[0].mxu0
      %6370 = vmatprep.mubr.bf16.mxu0 0
      %6371 = vmatmul.mubr.bf16.gmra.mrb[0].mxu0 %v6231
      %v6372 = vpop.f32.mrb[0].mxu0
      %v6373 = vadd.f32 0.0, %v6372
      %v6374 = vpop.f32.mrb[0].mxu0
      %v6375 = vpop.f32.mrb[0].mxu0
      %v6376 = vadd.f32 0.0, %v6375
      %v6377 = vpop.f32.mrb[0].mxu0
      %6378 = vmatprep.mubr.bf16.mxu0 0
      %6379 = vmatmul.mubr.bf16.gmra.mrb[0].mxu0 %v6234
      %v6380 = vpop.f32.mrb[0].mxu0
      %v6381 = vadd.f32 0.0, %v6380
      %v6382 = vpop.f32.mrb[0].mxu0
      %v6383 = vpop.f32.mrb[0].mxu0
      %v6384 = vadd.f32 0.0, %v6383
      %v6385 = vpop.f32.mrb[0].mxu0
      %6386 = vmatprep.mubr.bf16.mxu0 0
      %6387 = vmatmul.mubr.bf16.gmra.mrb[0].mxu0 %v6237
      %v6388 = vpop.f32.mrb[0].mxu0
      %v6389 = vadd.f32 0.0, %v6388
      %v6390 = vpop.f32.mrb[0].mxu0
      %v6391 = vpop.f32.mrb[0].mxu0
      %v6392 = vadd.f32 0.0, %v6391
      %v6393 = vpop.f32.mrb[0].mxu0
      %6394 = vmatprep.mubr.bf16.mxu0 0
      %6395 = vmatmul.mubr.bf16.gmra.mrb[0].mxu0 %v6240
      %v6396 = vpop.f32.mrb[0].mxu0
      %v6397 = vadd.f32 0.0, %v6396
      %v6398 = vpop.f32.mrb[0].mxu0
      %v6399 = vpop.f32.mrb[0].mxu0
      %v6400 = vadd.f32 0.0, %v6399
      %v6401 = vpop.f32.mrb[0].mxu0
      %6402 = vdwg.mxu0
      %v6403 = vadd.f32 %v6065, %v6277
      %v6404 = vadd.f32 %v6066, %v6280
      %v6405 = vadd.f32 %v6067, %v6285
      %v6406 = vadd.f32 %v6068, %v6288
      %v6407 = vadd.f32 %v6069, %v6293
      %v6408 = vadd.f32 %v6070, %v6296
      %v6409 = vadd.f32 %v6071, %v6301
      %v6410 = vadd.f32 %v6072, %v6304
      %v6411 = vadd.f32 %v6073, %v6309
      %v6412 = vadd.f32 %v6074, %v6312
      %v6413 = vadd.f32 %v6075, %v6317
      %v6414 = vadd.f32 %v6076, %v6320
      %v6415 = vadd.f32 %v6077, %v6325
      %v6416 = vadd.f32 %v6078, %v6328
      %v6417 = vadd.f32 %v6079, %v6333
      %v6418 = vadd.f32 %v6080, %v6336
      %v6419 = vadd.f32 %v6081, %v6341
      %v6420 = vadd.f32 %v6082, %v6344
      %v6421 = vadd.f32 %v6083, %v6349
      %v6422 = vadd.f32 %v6084, %v6352
      %v6423 = vadd.f32 %v6085, %v6357
      %v6424 = vadd.f32 %v6086, %v6360
      %v6425 = vadd.f32 %v6087, %v6365
      %v6426 = vadd.f32 %v6088, %v6368
      %v6427 = vadd.f32 %v6089, %v6373
      %v6428 = vadd.f32 %v6090, %v6376
      %v6429 = vadd.f32 %v6091, %v6381
      %v6430 = vadd.f32 %v6092, %v6384
      %v6431 = vadd.f32 %v6093, %v6389
      %v6432 = vadd.f32 %v6094, %v6392
      %v6433 = vadd.f32 %v6095, %v6397
      %v6434 = vadd.f32 %v6096, %v6400
      %v6435 = vld [vmem:[%s8] sm:$0x1]
      %v6437 = vlaneseq
      %v6438 = vshrl.u32 %v6437, 7
      %v6439 = vsub.s32 0, %v6438
      %v6440 = vrot.slane %v6435, %v6439
      %v6442 = vadd.f32 %v6403, %v6440
      %v6443 = vadd.f32 %v6404, %v6440
      %v6444 = vadd.f32 %v6405, %v6440
      %v6445 = vadd.f32 %v6406, %v6440
      %v6446 = vadd.f32 %v6407, %v6440
      %v6447 = vadd.f32 %v6408, %v6440
      %v6448 = vadd.f32 %v6409, %v6440
      %v6449 = vadd.f32 %v6410, %v6440
      %v6450 = vadd.f32 %v6411, %v6440
      %v6451 = vadd.f32 %v6412, %v6440
      %v6452 = vadd.f32 %v6413, %v6440
      %v6453 = vadd.f32 %v6414, %v6440
      %v6454 = vadd.f32 %v6415, %v6440
      %v6455 = vadd.f32 %v6416, %v6440
      %v6456 = vadd.f32 %v6417, %v6440
      %v6457 = vadd.f32 %v6418, %v6440
      %v6458 = vadd.f32 %v6419, %v6440
      %v6459 = vadd.f32 %v6420, %v6440
      %v6460 = vadd.f32 %v6421, %v6440
      %v6461 = vadd.f32 %v6422, %v6440
      %v6462 = vadd.f32 %v6423, %v6440
      %v6463 = vadd.f32 %v6424, %v6440
      %v6464 = vadd.f32 %v6425, %v6440
      %v6465 = vadd.f32 %v6426, %v6440
      %v6466 = vadd.f32 %v6427, %v6440
      %v6467 = vadd.f32 %v6428, %v6440
      %v6468 = vadd.f32 %v6429, %v6440
      %v6469 = vadd.f32 %v6430, %v6440
      %v6470 = vadd.f32 %v6431, %v6440
      %v6471 = vadd.f32 %v6432, %v6440
      %v6472 = vadd.f32 %v6433, %v6440
      %v6473 = vadd.f32 %v6434, %v6440
      %v6474 = vadd.f32 %v3521, %v3522
      %v6475 = vadd.f32 %v6474, %v3523
      %v6476 = vadd.f32 %v6475, %v3524
      %v6477 = vadd.f32 %v6476, %v3525
      %v6478 = vadd.f32 %v6477, %v3526
      %v6479 = vadd.f32 %v6478, %v3527
      %v6480 = vadd.f32 %v6479, %v3528
      %v6481 = vadd.f32 %v6480, %v3529
      %v6482 = vadd.f32 %v6481, %v3530
      %v6483 = vadd.f32 %v6482, %v3531
      %v6484 = vadd.f32 %v6483, %v3532
      %v6485 = vadd.f32 %v6484, %v3533
      %v6486 = vadd.f32 %v6485, %v3534
      %v6487 = vadd.f32 %v6486, %v3535
      %v6488 = vadd.f32 %v6487, %v3536
      %v6489 = vadd.f32 %v6488, %v3537
      %v6490 = vadd.f32 %v6489, %v3538
      %v6491 = vadd.f32 %v6490, %v3539
      %v6492 = vadd.f32 %v6491, %v3540
      %v6493 = vadd.f32 %v6492, %v3541
      %v6494 = vadd.f32 %v6493, %v3542
      %v6495 = vadd.f32 %v6494, %v3543
      %v6496 = vadd.f32 %v6495, %v3544
      %v6497 = vadd.f32 %v6496, %v3545
      %v6498 = vadd.f32 %v6497, %v3546
      %v6499 = vadd.f32 %v6498, %v3547
      %v6500 = vadd.f32 %v6499, %v3548
      %v6501 = vadd.f32 %v6500, %v3549
      %v6502 = vadd.f32 %v6501, %v3550
      %v6503 = vadd.f32 %v6502, %v3551
      %v6504 = vadd.f32 %v6503, %v3552
      %6505 = vadd.xlane.f32.xlu0 %v6504
      %v6506 = vpop.xlane.xlu0 %6505
      %v6507 = vrot.slane %v6506, 4
      %v6508 = vadd.f32 %v6506, %v6507
      %v6509 = vrot.slane %v6508, 2
      %v6510 = vadd.f32 %v6508, %v6509
      %v6511 = vrot.slane %v6510, 1
      %v6512 = vadd.f32 %v6510, %v6511
      %s6513 = vtos %v6512
      %v6514 = vrcp.pop 32768.0
      %s6515 = vtos %v6514
      %s6516 = smul.f32 %s6513, %s6515
      %v6517 = vstv %s6516
      %v6518 = vsub.f32 %v3521, %v6517
      %v6519 = vsub.f32 %v3522, %v6517
      %v6520 = vsub.f32 %v3523, %v6517
      %v6521 = vsub.f32 %v3524, %v6517
      %v6522 = vsub.f32 %v3525, %v6517
      %v6523 = vsub.f32 %v3526, %v6517
      %v6524 = vsub.f32 %v3527, %v6517
      %v6525 = vsub.f32 %v3528, %v6517
      %v6526 = vsub.f32 %v3529, %v6517
      %v6527 = vsub.f32 %v3530, %v6517
      %v6528 = vsub.f32 %v3531, %v6517
      %v6529 = vsub.f32 %v3532, %v6517
      %v6530 = vsub.f32 %v3533, %v6517
      %v6531 = vsub.f32 %v3534, %v6517
      %v6532 = vsub.f32 %v3535, %v6517
      %v6533 = vsub.f32 %v3536, %v6517
      %v6534 = vsub.f32 %v3537, %v6517
      %v6535 = vsub.f32 %v3538, %v6517
      %v6536 = vsub.f32 %v3539, %v6517
      %v6537 = vsub.f32 %v3540, %v6517
      %v6538 = vsub.f32 %v3541, %v6517
      %v6539 = vsub.f32 %v3542, %v6517
      %v6540 = vsub.f32 %v3543, %v6517
      %v6541 = vsub.f32 %v3544, %v6517
      %v6542 = vsub.f32 %v3545, %v6517
      %v6543 = vsub.f32 %v3546, %v6517
      %v6544 = vsub.f32 %v3547, %v6517
      %v6545 = vsub.f32 %v3548, %v6517
      %v6546 = vsub.f32 %v3549, %v6517
      %v6547 = vsub.f32 %v3550, %v6517
      %v6548 = vsub.f32 %v3551, %v6517
      %v6549 = vsub.f32 %v3552, %v6517
      %v6550 = vmul.f32 %v6518, %v6518
      %v6551 = vmul.f32 %v6519, %v6519
      %v6552 = vmul.f32 %v6520, %v6520
      %v6553 = vmul.f32 %v6521, %v6521
      %v6554 = vmul.f32 %v6522, %v6522
      %v6555 = vmul.f32 %v6523, %v6523
      %v6556 = vmul.f32 %v6524, %v6524
      %v6557 = vmul.f32 %v6525, %v6525
      %v6558 = vmul.f32 %v6526, %v6526
      %v6559 = vmul.f32 %v6527, %v6527
      %v6560 = vmul.f32 %v6528, %v6528
      %v6561 = vmul.f32 %v6529, %v6529
      %v6562 = vmul.f32 %v6530, %v6530
      %v6563 = vmul.f32 %v6531, %v6531
      %v6564 = vmul.f32 %v6532, %v6532
      %v6565 = vmul.f32 %v6533, %v6533
      %v6566 = vmul.f32 %v6534, %v6534
      %v6567 = vmul.f32 %v6535, %v6535
      %v6568 = vmul.f32 %v6536, %v6536
      %v6569 = vmul.f32 %v6537, %v6537
      %v6570 = vmul.f32 %v6538, %v6538
      %v6571 = vmul.f32 %v6539, %v6539
      %v6572 = vmul.f32 %v6540, %v6540
      %v6573 = vmul.f32 %v6541, %v6541
      %v6574 = vmul.f32 %v6542, %v6542
      %v6575 = vmul.f32 %v6543, %v6543
      %v6576 = vmul.f32 %v6544, %v6544
      %v6577 = vmul.f32 %v6545, %v6545
      %v6578 = vmul.f32 %v6546, %v6546
      %v6579 = vmul.f32 %v6547, %v6547
      %v6580 = vmul.f32 %v6548, %v6548
      %v6581 = vmul.f32 %v6549, %v6549
      %v6582 = vadd.f32 %v6550, %v6551
      %v6583 = vadd.f32 %v6582, %v6552
      %v6584 = vadd.f32 %v6583, %v6553
      %v6585 = vadd.f32 %v6584, %v6554
      %v6586 = vadd.f32 %v6585, %v6555
      %v6587 = vadd.f32 %v6586, %v6556
      %v6588 = vadd.f32 %v6587, %v6557
      %v6589 = vadd.f32 %v6588, %v6558
      %v6590 = vadd.f32 %v6589, %v6559
      %v6591 = vadd.f32 %v6590, %v6560
      %v6592 = vadd.f32 %v6591, %v6561
      %v6593 = vadd.f32 %v6592, %v6562
      %v6594 = vadd.f32 %v6593, %v6563
      %v6595 = vadd.f32 %v6594, %v6564
      %v6596 = vadd.f32 %v6595, %v6565
      %v6597 = vadd.f32 %v6596, %v6566
      %v6598 = vadd.f32 %v6597, %v6567
      %v6599 = vadd.f32 %v6598, %v6568
      %v6600 = vadd.f32 %v6599, %v6569
      %v6601 = vadd.f32 %v6600, %v6570
      %v6602 = vadd.f32 %v6601, %v6571
      %v6603 = vadd.f32 %v6602, %v6572
      %v6604 = vadd.f32 %v6603, %v6573
      %v6605 = vadd.f32 %v6604, %v6574
      %v6606 = vadd.f32 %v6605, %v6575
      %v6607 = vadd.f32 %v6606, %v6576
      %v6608 = vadd.f32 %v6607, %v6577
      %v6609 = vadd.f32 %v6608, %v6578
      %v6610 = vadd.f32 %v6609, %v6579
      %v6611 = vadd.f32 %v6610, %v6580
      %v6612 = vadd.f32 %v6611, %v6581
      %6613 = vadd.xlane.f32.xlu0 %v6612
      %v6614 = vpop.xlane.xlu0 %6613
      %v6615 = vrot.slane %v6614, 4
      %v6616 = vadd.f32 %v6614, %v6615
      %v6617 = vrot.slane %v6616, 2
      %v6618 = vadd.f32 %v6616, %v6617
      %v6619 = vrot.slane %v6618, 1
      %v6620 = vadd.f32 %v6618, %v6619
      %s6621 = vtos %v6620
      %v6622 = vrcp.pop 32768.0
      %s6623 = vtos %v6622
      %s6624 = smul.f32 %s6621, %s6623
      %s6625 = sadd.f32 %s6624, 1e-05
      %v6626 = vstv %s6625
      %v6627 = vrsqrt.pop %v6626
      %s6628 = vtos %v6627
      %v6629 = vadd.f32 %v6442, %v6443
      %v6630 = vadd.f32 %v6629, %v6444
      %v6631 = vadd.f32 %v6630, %v6445
      %v6632 = vadd.f32 %v6631, %v6446
      %v6633 = vadd.f32 %v6632, %v6447
      %v6634 = vadd.f32 %v6633, %v6448
      %v6635 = vadd.f32 %v6634, %v6449
      %v6636 = vadd.f32 %v6635, %v6450
      %v6637 = vadd.f32 %v6636, %v6451
      %v6638 = vadd.f32 %v6637, %v6452
      %v6639 = vadd.f32 %v6638, %v6453
      %v6640 = vadd.f32 %v6639, %v6454
      %v6641 = vadd.f32 %v6640, %v6455
      %v6642 = vadd.f32 %v6641, %v6456
      %v6643 = vadd.f32 %v6642, %v6457
      %v6644 = vadd.f32 %v6643, %v6458
      %v6645 = vadd.f32 %v6644, %v6459
      %v6646 = vadd.f32 %v6645, %v6460
      %v6647 = vadd.f32 %v6646, %v6461
      %v6648 = vadd.f32 %v6647, %v6462
      %v6649 = vadd.f32 %v6648, %v6463
      %v6650 = vadd.f32 %v6649, %v6464
      %v6651 = vadd.f32 %v6650, %v6465
      %v6652 = vadd.f32 %v6651, %v6466
      %v6653 = vadd.f32 %v6652, %v6467
      %v6654 = vadd.f32 %v6653, %v6468
      %v6655 = vadd.f32 %v6654, %v6469
      %v6656 = vadd.f32 %v6655, %v6470
      %v6657 = vadd.f32 %v6656, %v6471
      %v6658 = vadd.f32 %v6657, %v6472
      %v6659 = vadd.f32 %v6658, %v6473
      %6660 = vadd.xlane.f32.xlu0 %v6659
      %v6661 = vpop.xlane.xlu0 %6660
      %v6662 = vrot.slane %v6661, 4
      %v6663 = vadd.f32 %v6661, %v6662
      %v6664 = vrot.slane %v6663, 2
      %v6665 = vadd.f32 %v6663, %v6664
      %v6666 = vrot.slane %v6665, 1
      %v6667 = vadd.f32 %v6665, %v6666
      %s6668 = vtos %v6667
      %v6669 = vrcp.pop 32768.0
      %s6670 = vtos %v6669
      %s6671 = smul.f32 %s6668, %s6670
      %v6672 = vstv %s6671
      %v6673 = vsub.f32 %v6442, %v6672
      %v6674 = vsub.f32 %v6443, %v6672
      %v6675 = vsub.f32 %v6444, %v6672
      %v6676 = vsub.f32 %v6445, %v6672
      %v6677 = vsub.f32 %v6446, %v6672
      %v6678 = vsub.f32 %v6447, %v6672
      %v6679 = vsub.f32 %v6448, %v6672
      %v6680 = vsub.f32 %v6449, %v6672
      %v6681 = vsub.f32 %v6450, %v6672
      %v6682 = vsub.f32 %v6451, %v6672
      %v6683 = vsub.f32 %v6452, %v6672
      %v6684 = vsub.f32 %v6453, %v6672
      %v6685 = vsub.f32 %v6454, %v6672
      %v6686 = vsub.f32 %v6455, %v6672
      %v6687 = vsub.f32 %v6456, %v6672
      %v6688 = vsub.f32 %v6457, %v6672
      %v6689 = vsub.f32 %v6458, %v6672
      %v6690 = vsub.f32 %v6459, %v6672
      %v6691 = vsub.f32 %v6460, %v6672
      %v6692 = vsub.f32 %v6461, %v6672
      %v6693 = vsub.f32 %v6462, %v6672
      %v6694 = vsub.f32 %v6463, %v6672
      %v6695 = vsub.f32 %v6464, %v6672
      %v6696 = vsub.f32 %v6465, %v6672
      %v6697 = vsub.f32 %v6466, %v6672
      %v6698 = vsub.f32 %v6467, %v6672
      %v6699 = vsub.f32 %v6468, %v6672
      %v6700 = vsub.f32 %v6469, %v6672
      %v6701 = vsub.f32 %v6470, %v6672
      %v6702 = vsub.f32 %v6471, %v6672
      %v6703 = vsub.f32 %v6472, %v6672
      %v6704 = vsub.f32 %v6473, %v6672
      %v6705 = vmul.f32 %v6673, %v6673
      %v6706 = vmul.f32 %v6674, %v6674
      %v6707 = vmul.f32 %v6675, %v6675
      %v6708 = vmul.f32 %v6676, %v6676
      %v6709 = vmul.f32 %v6677, %v6677
      %v6710 = vmul.f32 %v6678, %v6678
      %v6711 = vmul.f32 %v6679, %v6679
      %v6712 = vmul.f32 %v6680, %v6680
      %v6713 = vmul.f32 %v6681, %v6681
      %v6714 = vmul.f32 %v6682, %v6682
      %v6715 = vmul.f32 %v6683, %v6683
      %v6716 = vmul.f32 %v6684, %v6684
      %v6717 = vmul.f32 %v6685, %v6685
      %v6718 = vmul.f32 %v6686, %v6686
      %v6719 = vmul.f32 %v6687, %v6687
      %v6720 = vmul.f32 %v6688, %v6688
      %v6721 = vmul.f32 %v6689, %v6689
      %v6722 = vmul.f32 %v6690, %v6690
      %v6723 = vmul.f32 %v6691, %v6691
      %v6724 = vmul.f32 %v6692, %v6692
      %v6725 = vmul.f32 %v6693, %v6693
      %v6726 = vmul.f32 %v6694, %v6694
      %v6727 = vmul.f32 %v6695, %v6695
      %v6728 = vmul.f32 %v6696, %v6696
      %v6729 = vmul.f32 %v6697, %v6697
      %v6730 = vmul.f32 %v6698, %v6698
      %v6731 = vmul.f32 %v6699, %v6699
      %v6732 = vmul.f32 %v6700, %v6700
      %v6733 = vmul.f32 %v6701, %v6701
      %v6734 = vmul.f32 %v6702, %v6702
      %v6735 = vmul.f32 %v6703, %v6703
      %v6736 = vmul.f32 %v6704, %v6704
      %v6737 = vadd.f32 %v6705, %v6706
      %v6738 = vadd.f32 %v6737, %v6707
      %v6739 = vadd.f32 %v6738, %v6708
      %v6740 = vadd.f32 %v6739, %v6709
      %v6741 = vadd.f32 %v6740, %v6710
      %v6742 = vadd.f32 %v6741, %v6711
      %v6743 = vadd.f32 %v6742, %v6712
      %v6744 = vadd.f32 %v6743, %v6713
      %v6745 = vadd.f32 %v6744, %v6714
      %v6746 = vadd.f32 %v6745, %v6715
      %v6747 = vadd.f32 %v6746, %v6716
      %v6748 = vadd.f32 %v6747, %v6717
      %v6749 = vadd.f32 %v6748, %v6718
      %v6750 = vadd.f32 %v6749, %v6719
      %v6751 = vadd.f32 %v6750, %v6720
      %v6752 = vadd.f32 %v6751, %v6721
      %v6753 = vadd.f32 %v6752, %v6722
      %v6754 = vadd.f32 %v6753, %v6723
      %v6755 = vadd.f32 %v6754, %v6724
      %v6756 = vadd.f32 %v6755, %v6725
      %v6757 = vadd.f32 %v6756, %v6726
      %v6758 = vadd.f32 %v6757, %v6727
      %v6759 = vadd.f32 %v6758, %v6728
      %v6760 = vadd.f32 %v6759, %v6729
      %v6761 = vadd.f32 %v6760, %v6730
      %v6762 = vadd.f32 %v6761, %v6731
      %v6763 = vadd.f32 %v6762, %v6732
      %v6764 = vadd.f32 %v6763, %v6733
      %v6765 = vadd.f32 %v6764, %v6734
      %v6766 = vadd.f32 %v6765, %v6735
      %v6767 = vadd.f32 %v6766, %v6736
      %6768 = vadd.xlane.f32.xlu0 %v6767
      %v6769 = vpop.xlane.xlu0 %6768
      %v6770 = vrot.slane %v6769, 4
      %v6771 = vadd.f32 %v6769, %v6770
      %v6772 = vrot.slane %v6771, 2
      %v6773 = vadd.f32 %v6771, %v6772
      %v6774 = vrot.slane %v6773, 1
      %v6775 = vadd.f32 %v6773, %v6774
      %s6776 = vtos %v6775
      %v6777 = vrcp.pop 32768.0
      %s6778 = vtos %v6777
      %s6779 = smul.f32 %s6776, %s6778
      %s6780 = sadd.f32 %s6779, 1e-05
      %v6781 = vstv %s6780
      %v6782 = vrsqrt.pop %v6781
      %s6783 = vtos %v6782
      %v6784 = vld [vmem:[%s5] sm:$0x1]
      %v6785 = vstv %s6628
      %v6786 = vmul.f32 %v6785, %v6784
      %v6787 = vld [vmem:[%s9] sm:$0x1]
      %v6788 = vstv %s6783
      %v6789 = vmul.f32 %v6788, %v6787
      %v6790 = vld [vmem:[%s6] sm:$0x1]
      %v6791 = vld [vmem:[%s10] sm:$0x1]
      %v6792 = vadd.f32 %v6790, %v6791
      %v6793 = vmul.f32 %v6517, %v6786
      %v6794 = vsub.f32 %v6792, %v6793
      %v6795 = vmul.f32 %v6672, %v6789
      %v6796 = vsub.f32 %v6794, %v6795
      %v6798 = vlaneseq
      %v6799 = vshrl.u32 %v6798, 7
      %v6800 = vsub.s32 0, %v6799
      %v6801 = vrot.slane %v6786, %v6800
      %v6803 = vmul.f32 %v3521, %v6801
      %v6804 = vmul.f32 %v3522, %v6801
      %v6805 = vmul.f32 %v3523, %v6801
      %v6806 = vmul.f32 %v3524, %v6801
      %v6807 = vmul.f32 %v3525, %v6801
      %v6808 = vmul.f32 %v3526, %v6801
      %v6809 = vmul.f32 %v3527, %v6801
      %v6810 = vmul.f32 %v3528, %v6801
      %v6811 = vmul.f32 %v3529, %v6801
      %v6812 = vmul.f32 %v3530, %v6801
      %v6813 = vmul.f32 %v3531, %v6801
      %v6814 = vmul.f32 %v3532, %v6801
      %v6815 = vmul.f32 %v3533, %v6801
      %v6816 = vmul.f32 %v3534, %v6801
      %v6817 = vmul.f32 %v3535, %v6801
      %v6818 = vmul.f32 %v3536, %v6801
      %v6819 = vmul.f32 %v3537, %v6801
      %v6820 = vmul.f32 %v3538, %v6801
      %v6821 = vmul.f32 %v3539, %v6801
      %v6822 = vmul.f32 %v3540, %v6801
      %v6823 = vmul.f32 %v3541, %v6801
      %v6824 = vmul.f32 %v3542, %v6801
      %v6825 = vmul.f32 %v3543, %v6801
      %v6826 = vmul.f32 %v3544, %v6801
      %v6827 = vmul.f32 %v3545, %v6801
      %v6828 = vmul.f32 %v3546, %v6801
      %v6829 = vmul.f32 %v3547, %v6801
      %v6830 = vmul.f32 %v3548, %v6801
      %v6831 = vmul.f32 %v3549, %v6801
      %v6832 = vmul.f32 %v3550, %v6801
      %v6833 = vmul.f32 %v3551, %v6801
      %v6834 = vmul.f32 %v3552, %v6801
      %v6836 = vlaneseq
      %v6837 = vshrl.u32 %v6836, 7
      %v6838 = vsub.s32 0, %v6837
      %v6839 = vrot.slane %v6789, %v6838
      %v6841 = vmul.f32 %v6442, %v6839
      %v6842 = vmul.f32 %v6443, %v6839
      %v6843 = vmul.f32 %v6444, %v6839
      %v6844 = vmul.f32 %v6445, %v6839
      %v6845 = vmul.f32 %v6446, %v6839
      %v6846 = vmul.f32 %v6447, %v6839
      %v6847 = vmul.f32 %v6448, %v6839
      %v6848 = vmul.f32 %v6449, %v6839
      %v6849 = vmul.f32 %v6450, %v6839
      %v6850 = vmul.f32 %v6451, %v6839
      %v6851 = vmul.f32 %v6452, %v6839
      %v6852 = vmul.f32 %v6453, %v6839
      %v6853 = vmul.f32 %v6454, %v6839
      %v6854 = vmul.f32 %v6455, %v6839
      %v6855 = vmul.f32 %v6456, %v6839
      %v6856 = vmul.f32 %v6457, %v6839
      %v6857 = vmul.f32 %v6458, %v6839
      %v6858 = vmul.f32 %v6459, %v6839
      %v6859 = vmul.f32 %v6460, %v6839
      %v6860 = vmul.f32 %v6461, %v6839
      %v6861 = vmul.f32 %v6462, %v6839
      %v6862 = vmul.f32 %v6463, %v6839
      %v6863 = vmul.f32 %v6464, %v6839
      %v6864 = vmul.f32 %v6465, %v6839
      %v6865 = vmul.f32 %v6466, %v6839
      %v6866 = vmul.f32 %v6467, %v6839
      %v6867 = vmul.f32 %v6468, %v6839
      %v6868 = vmul.f32 %v6469, %v6839
      %v6869 = vmul.f32 %v6470, %v6839
      %v6870 = vmul.f32 %v6471, %v6839
      %v6871 = vmul.f32 %v6472, %v6839
      %v6872 = vmul.f32 %v6473, %v6839
      %v6873 = vadd.f32 %v6803, %v6841
      %v6874 = vadd.f32 %v6804, %v6842
      %v6875 = vadd.f32 %v6805, %v6843
      %v6876 = vadd.f32 %v6806, %v6844
      %v6877 = vadd.f32 %v6807, %v6845
      %v6878 = vadd.f32 %v6808, %v6846
      %v6879 = vadd.f32 %v6809, %v6847
      %v6880 = vadd.f32 %v6810, %v6848
      %v6881 = vadd.f32 %v6811, %v6849
      %v6882 = vadd.f32 %v6812, %v6850
      %v6883 = vadd.f32 %v6813, %v6851
      %v6884 = vadd.f32 %v6814, %v6852
      %v6885 = vadd.f32 %v6815, %v6853
      %v6886 = vadd.f32 %v6816, %v6854
      %v6887 = vadd.f32 %v6817, %v6855
      %v6888 = vadd.f32 %v6818, %v6856
      %v6889 = vadd.f32 %v6819, %v6857
      %v6890 = vadd.f32 %v6820, %v6858
      %v6891 = vadd.f32 %v6821, %v6859
      %v6892 = vadd.f32 %v6822, %v6860
      %v6893 = vadd.f32 %v6823, %v6861
      %v6894 = vadd.f32 %v6824, %v6862
      %v6895 = vadd.f32 %v6825, %v6863
      %v6896 = vadd.f32 %v6826, %v6864
      %v6897 = vadd.f32 %v6827, %v6865
      %v6898 = vadd.f32 %v6828, %v6866
      %v6899 = vadd.f32 %v6829, %v6867
      %v6900 = vadd.f32 %v6830, %v6868
      %v6901 = vadd.f32 %v6831, %v6869
      %v6902 = vadd.f32 %v6832, %v6870
      %v6903 = vadd.f32 %v6833, %v6871
      %v6904 = vadd.f32 %v6834, %v6872
      %v6906 = vlaneseq
      %v6907 = vshrl.u32 %v6906, 7
      %v6908 = vsub.s32 0, %v6907
      %v6909 = vrot.slane %v6796, %v6908
      %v6911 = vadd.f32 %v6873, %v6909
      %v6912 = vadd.f32 %v6874, %v6909
      %v6913 = vadd.f32 %v6875, %v6909
      %v6914 = vadd.f32 %v6876, %v6909
      %v6915 = vadd.f32 %v6877, %v6909
      %v6916 = vadd.f32 %v6878, %v6909
      %v6917 = vadd.f32 %v6879, %v6909
      %v6918 = vadd.f32 %v6880, %v6909
      %v6919 = vadd.f32 %v6881, %v6909
      %v6920 = vadd.f32 %v6882, %v6909
      %v6921 = vadd.f32 %v6883, %v6909
      %v6922 = vadd.f32 %v6884, %v6909
      %v6923 = vadd.f32 %v6885, %v6909
      %v6924 = vadd.f32 %v6886, %v6909
      %v6925 = vadd.f32 %v6887, %v6909
      %v6926 = vadd.f32 %v6888, %v6909
      %v6927 = vadd.f32 %v6889, %v6909
      %v6928 = vadd.f32 %v6890, %v6909
      %v6929 = vadd.f32 %v6891, %v6909
      %v6930 = vadd.f32 %v6892, %v6909
      %v6931 = vadd.f32 %v6893, %v6909
      %v6932 = vadd.f32 %v6894, %v6909
      %v6933 = vadd.f32 %v6895, %v6909
      %v6934 = vadd.f32 %v6896, %v6909
      %v6935 = vadd.f32 %v6897, %v6909
      %v6936 = vadd.f32 %v6898, %v6909
      %v6937 = vadd.f32 %v6899, %v6909
      %v6938 = vadd.f32 %v6900, %v6909
      %v6939 = vadd.f32 %v6901, %v6909
      %v6940 = vadd.f32 %v6902, %v6909
      %v6941 = vadd.f32 %v6903, %v6909
      %v6942 = vadd.f32 %v6904, %v6909
      %v6943 = vxor.u32 %v6911, 2147483648
      %v6944 = vxor.u32 %v6912, 2147483648
      %v6945 = vxor.u32 %v6913, 2147483648
      %v6946 = vxor.u32 %v6914, 2147483648
      %v6947 = vxor.u32 %v6915, 2147483648
      %v6948 = vxor.u32 %v6916, 2147483648
      %v6949 = vxor.u32 %v6917, 2147483648
      %v6950 = vxor.u32 %v6918, 2147483648
      %v6951 = vxor.u32 %v6919, 2147483648
      %v6952 = vxor.u32 %v6920, 2147483648
      %v6953 = vxor.u32 %v6921, 2147483648
      %v6954 = vxor.u32 %v6922, 2147483648
      %v6955 = vxor.u32 %v6923, 2147483648
      %v6956 = vxor.u32 %v6924, 2147483648
      %v6957 = vxor.u32 %v6925, 2147483648
      %v6958 = vxor.u32 %v6926, 2147483648
      %v6959 = vxor.u32 %v6927, 2147483648
      %v6960 = vxor.u32 %v6928, 2147483648
      %v6961 = vxor.u32 %v6929, 2147483648
      %v6962 = vxor.u32 %v6930, 2147483648
      %v6963 = vxor.u32 %v6931, 2147483648
      %v6964 = vxor.u32 %v6932, 2147483648
      %v6965 = vxor.u32 %v6933, 2147483648
      %v6966 = vxor.u32 %v6934, 2147483648
      %v6967 = vxor.u32 %v6935, 2147483648
      %v6968 = vxor.u32 %v6936, 2147483648
      %v6969 = vxor.u32 %v6937, 2147483648
      %v6970 = vxor.u32 %v6938, 2147483648
      %v6971 = vxor.u32 %v6939, 2147483648
      %v6972 = vxor.u32 %v6940, 2147483648
      %v6973 = vxor.u32 %v6941, 2147483648
      %v6974 = vxor.u32 %v6942, 2147483648
      %v6975 = vmul.f32 %v6943, 1.442695
      %v6976 = vpow.pop %v6975
      %v6977 = vmul.f32 %v6944, 1.442695
      %v6978 = vpow.pop %v6977
      %v6979 = vmul.f32 %v6945, 1.442695
      %v6980 = vpow.pop %v6979
      %v6981 = vmul.f32 %v6946, 1.442695
      %v6982 = vpow.pop %v6981
      %v6983 = vmul.f32 %v6947, 1.442695
      %v6984 = vpow.pop %v6983
      %v6985 = vmul.f32 %v6948, 1.442695
      %v6986 = vpow.pop %v6985
      %v6987 = vmul.f32 %v6949, 1.442695
      %v6988 = vpow.pop %v6987
      %v6989 = vmul.f32 %v6950, 1.442695
      %v6990 = vpow.pop %v6989
      %v6991 = vmul.f32 %v6951, 1.442695
      %v6992 = vpow.pop %v6991
      %v6993 = vmul.f32 %v6952, 1.442695
      %v6994 = vpow.pop %v6993
      %v6995 = vmul.f32 %v6953, 1.442695
      %v6996 = vpow.pop %v6995
      %v6997 = vmul.f32 %v6954, 1.442695
      %v6998 = vpow.pop %v6997
      %v6999 = vmul.f32 %v6955, 1.442695
      %v7000 = vpow.pop %v6999
      %v7001 = vmul.f32 %v6956, 1.442695
      %v7002 = vpow.pop %v7001
      %v7003 = vmul.f32 %v6957, 1.442695
      %v7004 = vpow.pop %v7003
      %v7005 = vmul.f32 %v6958, 1.442695
      %v7006 = vpow.pop %v7005
      %v7007 = vmul.f32 %v6959, 1.442695
      %v7008 = vpow.pop %v7007
      %v7009 = vmul.f32 %v6960, 1.442695
      %v7010 = vpow.pop %v7009
      %v7011 = vmul.f32 %v6961, 1.442695
      %v7012 = vpow.pop %v7011
      %v7013 = vmul.f32 %v6962, 1.442695
      %v7014 = vpow.pop %v7013
      %v7015 = vmul.f32 %v6963, 1.442695
      %v7016 = vpow.pop %v7015
      %v7017 = vmul.f32 %v6964, 1.442695
      %v7018 = vpow.pop %v7017
      %v7019 = vmul.f32 %v6965, 1.442695
      %v7020 = vpow.pop %v7019
      %v7021 = vmul.f32 %v6966, 1.442695
      %v7022 = vpow.pop %v7021
      %v7023 = vmul.f32 %v6967, 1.442695
      %v7024 = vpow.pop %v7023
      %v7025 = vmul.f32 %v6968, 1.442695
      %v7026 = vpow.pop %v7025
      %v7027 = vmul.f32 %v6969, 1.442695
      %v7028 = vpow.pop %v7027
      %v7029 = vmul.f32 %v6970, 1.442695
      %v7030 = vpow.pop %v7029
      %v7031 = vmul.f32 %v6971, 1.442695
      %v7032 = vpow.pop %v7031
      %v7033 = vmul.f32 %v6972, 1.442695
      %v7034 = vpow.pop %v7033
      %v7035 = vmul.f32 %v6973, 1.442695
      %v7036 = vpow.pop %v7035
      %v7037 = vmul.f32 %v6974, 1.442695
      %v7038 = vpow.pop %v7037
      %v7039 = vadd.f32 %v6976, 1.0
      %v7040 = vadd.f32 %v6978, 1.0
      %v7041 = vadd.f32 %v6980, 1.0
      %v7042 = vadd.f32 %v6982, 1.0
      %v7043 = vadd.f32 %v6984, 1.0
      %v7044 = vadd.f32 %v6986, 1.0
      %v7045 = vadd.f32 %v6988, 1.0
      %v7046 = vadd.f32 %v6990, 1.0
      %v7047 = vadd.f32 %v6992, 1.0
      %v7048 = vadd.f32 %v6994, 1.0
      %v7049 = vadd.f32 %v6996, 1.0
      %v7050 = vadd.f32 %v6998, 1.0
      %v7051 = vadd.f32 %v7000, 1.0
      %v7052 = vadd.f32 %v7002, 1.0
      %v7053 = vadd.f32 %v7004, 1.0
      %v7054 = vadd.f32 %v7006, 1.0
      %v7055 = vadd.f32 %v7008, 1.0
      %v7056 = vadd.f32 %v7010, 1.0
      %v7057 = vadd.f32 %v7012, 1.0
      %v7058 = vadd.f32 %v7014, 1.0
      %v7059 = vadd.f32 %v7016, 1.0
      %v7060 = vadd.f32 %v7018, 1.0
      %v7061 = vadd.f32 %v7020, 1.0
      %v7062 = vadd.f32 %v7022, 1.0
      %v7063 = vadd.f32 %v7024, 1.0
      %v7064 = vadd.f32 %v7026, 1.0
      %v7065 = vadd.f32 %v7028, 1.0
      %v7066 = vadd.f32 %v7030, 1.0
      %v7067 = vadd.f32 %v7032, 1.0
      %v7068 = vadd.f32 %v7034, 1.0
      %v7069 = vadd.f32 %v7036, 1.0
      %v7070 = vadd.f32 %v7038, 1.0
      %v7071 = vrcp.pop %v7039
      %v7072 = vmul.f32 1.0, %v7071
      %v7073 = vrcp.pop %v7040
      %v7074 = vmul.f32 1.0, %v7073
      %v7075 = vrcp.pop %v7041
      %v7076 = vmul.f32 1.0, %v7075
      %v7077 = vrcp.pop %v7042
      %v7078 = vmul.f32 1.0, %v7077
      %v7079 = vrcp.pop %v7043
      %v7080 = vmul.f32 1.0, %v7079
      %v7081 = vrcp.pop %v7044
      %v7082 = vmul.f32 1.0, %v7081
      %v7083 = vrcp.pop %v7045
      %v7084 = vmul.f32 1.0, %v7083
      %v7085 = vrcp.pop %v7046
      %v7086 = vmul.f32 1.0, %v7085
      %v7087 = vrcp.pop %v7047
      %v7088 = vmul.f32 1.0, %v7087
      %v7089 = vrcp.pop %v7048
      %v7090 = vmul.f32 1.0, %v7089
      %v7091 = vrcp.pop %v7049
      %v7092 = vmul.f32 1.0, %v7091
      %v7093 = vrcp.pop %v7050
      %v7094 = vmul.f32 1.0, %v7093
      %v7095 = vrcp.pop %v7051
      %v7096 = vmul.f32 1.0, %v7095
      %v7097 = vrcp.pop %v7052
      %v7098 = vmul.f32 1.0, %v7097
      %v7099 = vrcp.pop %v7053
      %v7100 = vmul.f32 1.0, %v7099
      %v7101 = vrcp.pop %v7054
      %v7102 = vmul.f32 1.0, %v7101
      %v7103 = vrcp.pop %v7055
      %v7104 = vmul.f32 1.0, %v7103
      %v7105 = vrcp.pop %v7056
      %v7106 = vmul.f32 1.0, %v7105
      %v7107 = vrcp.pop %v7057
      %v7108 = vmul.f32 1.0, %v7107
      %v7109 = vrcp.pop %v7058
      %v7110 = vmul.f32 1.0, %v7109
      %v7111 = vrcp.pop %v7059
      %v7112 = vmul.f32 1.0, %v7111
      %v7113 = vrcp.pop %v7060
      %v7114 = vmul.f32 1.0, %v7113
      %v7115 = vrcp.pop %v7061
      %v7116 = vmul.f32 1.0, %v7115
      %v7117 = vrcp.pop %v7062
      %v7118 = vmul.f32 1.0, %v7117
      %v7119 = vrcp.pop %v7063
      %v7120 = vmul.f32 1.0, %v7119
      %v7121 = vrcp.pop %v7064
      %v7122 = vmul.f32 1.0, %v7121
      %v7123 = vrcp.pop %v7065
      %v7124 = vmul.f32 1.0, %v7123
      %v7125 = vrcp.pop %v7066
      %v7126 = vmul.f32 1.0, %v7125
      %v7127 = vrcp.pop %v7067
      %v7128 = vmul.f32 1.0, %v7127
      %v7129 = vrcp.pop %v7068
      %v7130 = vmul.f32 1.0, %v7129
      %v7131 = vrcp.pop %v7069
      %v7132 = vmul.f32 1.0, %v7131
      %v7133 = vrcp.pop %v7070
      %v7134 = vmul.f32 1.0, %v7133
      %v7135 = vtanh.pop %v6911
      %v7136 = vtanh.pop %v6912
      %v7137 = vtanh.pop %v6913
      %v7138 = vtanh.pop %v6914
      %v7139 = vtanh.pop %v6915
      %v7140 = vtanh.pop %v6916
      %v7141 = vtanh.pop %v6917
      %v7142 = vtanh.pop %v6918
      %v7143 = vtanh.pop %v6919
      %v7144 = vtanh.pop %v6920
      %v7145 = vtanh.pop %v6921
      %v7146 = vtanh.pop %v6922
      %v7147 = vtanh.pop %v6923
      %v7148 = vtanh.pop %v6924
      %v7149 = vtanh.pop %v6925
      %v7150 = vtanh.pop %v6926
      %v7151 = vtanh.pop %v6927
      %v7152 = vtanh.pop %v6928
      %v7153 = vtanh.pop %v6929
      %v7154 = vtanh.pop %v6930
      %v7155 = vtanh.pop %v6931
      %v7156 = vtanh.pop %v6932
      %v7157 = vtanh.pop %v6933
      %v7158 = vtanh.pop %v6934
      %v7159 = vtanh.pop %v6935
      %v7160 = vtanh.pop %v6936
      %v7161 = vtanh.pop %v6937
      %v7162 = vtanh.pop %v6938
      %v7163 = vtanh.pop %v6939
      %v7164 = vtanh.pop %v6940
      %v7165 = vtanh.pop %v6941
      %v7166 = vtanh.pop %v6942
      %v7167 = vld [vmem:[%s475] sm:$0xff]
      %v7168 = vld [vmem:[%s475 + $0x8] sm:$0xff]
      %v7169 = vld [vmem:[%s475 + $0x10] sm:$0xff]
      %v7170 = vld [vmem:[%s475 + $0x18] sm:$0xff]
      %v7171 = vld [vmem:[%s475 + $0x20] sm:$0xff]
      %v7172 = vld [vmem:[%s475 + $0x28] sm:$0xff]
      %v7173 = vld [vmem:[%s475 + $0x30] sm:$0xff]
      %v7174 = vld [vmem:[%s475 + $0x38] sm:$0xff]
      %v7175 = vld [vmem:[%s475 + $0x40] sm:$0xff]
      %v7176 = vld [vmem:[%s475 + $0x48] sm:$0xff]
      %v7177 = vld [vmem:[%s475 + $0x50] sm:$0xff]
      %v7178 = vld [vmem:[%s475 + $0x58] sm:$0xff]
      %v7179 = vld [vmem:[%s475 + $0x60] sm:$0xff]
      %v7180 = vld [vmem:[%s475 + $0x68] sm:$0xff]
      %v7181 = vld [vmem:[%s475 + $0x70] sm:$0xff]
      %v7182 = vld [vmem:[%s475 + $0x78] sm:$0xff]
      %v7183 = vld [vmem:[%s475 + $0x80] sm:$0xff]
      %v7184 = vld [vmem:[%s475 + $0x88] sm:$0xff]
      %v7185 = vld [vmem:[%s475 + $0x90] sm:$0xff]
      %v7186 = vld [vmem:[%s475 + $0x98] sm:$0xff]
      %v7187 = vld [vmem:[%s475 + $0xa0] sm:$0xff]
      %v7188 = vld [vmem:[%s475 + $0xa8] sm:$0xff]
      %v7189 = vld [vmem:[%s475 + $0xb0] sm:$0xff]
      %v7190 = vld [vmem:[%s475 + $0xb8] sm:$0xff]
      %v7191 = vld [vmem:[%s475 + $0xc0] sm:$0xff]
      %v7192 = vld [vmem:[%s475 + $0xc8] sm:$0xff]
      %v7193 = vld [vmem:[%s475 + $0xd0] sm:$0xff]
      %v7194 = vld [vmem:[%s475 + $0xd8] sm:$0xff]
      %v7195 = vld [vmem:[%s475 + $0xe0] sm:$0xff]
      %v7196 = vld [vmem:[%s475 + $0xe8] sm:$0xff]
      %v7197 = vld [vmem:[%s475 + $0xf0] sm:$0xff]
      %v7198 = vld [vmem:[%s475 + $0xf8] sm:$0xff]
      %7231 = vrot.lane.b32.xlu0 %v7167, 32
      %v7232 = vpop.permute.xlu0 %7231
      %7233 = vrot.lane.b32.xlu0 %v7168, 32
      %v7234 = vpop.permute.xlu0 %7233
      %7235 = vrot.lane.b32.xlu0 %v7169, 32
      %v7236 = vpop.permute.xlu0 %7235
      %7237 = vrot.lane.b32.xlu0 %v7170, 32
      %v7238 = vpop.permute.xlu0 %7237
      %7239 = vrot.lane.b32.xlu0 %v7171, 32
      %v7240 = vpop.permute.xlu0 %7239
      %7241 = vrot.lane.b32.xlu0 %v7172, 32
      %v7242 = vpop.permute.xlu0 %7241
      %7243 = vrot.lane.b32.xlu0 %v7173, 32
      %v7244 = vpop.permute.xlu0 %7243
      %7245 = vrot.lane.b32.xlu0 %v7174, 32
      %v7246 = vpop.permute.xlu0 %7245
      %7247 = vrot.lane.b32.xlu0 %v7175, 32
      %v7248 = vpop.permute.xlu0 %7247
      %7249 = vrot.lane.b32.xlu0 %v7176, 32
      %v7250 = vpop.permute.xlu0 %7249
      %7251 = vrot.lane.b32.xlu0 %v7177, 32
      %v7252 = vpop.permute.xlu0 %7251
      %7253 = vrot.lane.b32.xlu0 %v7178, 32
      %v7254 = vpop.permute.xlu0 %7253
      %7255 = vrot.lane.b32.xlu0 %v7179, 32
      %v7256 = vpop.permute.xlu0 %7255
      %7257 = vrot.lane.b32.xlu0 %v7180, 32
      %v7258 = vpop.permute.xlu0 %7257
      %7259 = vrot.lane.b32.xlu0 %v7181, 32
      %v7260 = vpop.permute.xlu0 %7259
      %7261 = vrot.lane.b32.xlu0 %v7182, 32
      %v7262 = vpop.permute.xlu0 %7261
      %7263 = vrot.lane.b32.xlu0 %v7183, 32
      %v7264 = vpop.permute.xlu0 %7263
      %7265 = vrot.lane.b32.xlu0 %v7184, 32
      %v7266 = vpop.permute.xlu0 %7265
      %7267 = vrot.lane.b32.xlu0 %v7185, 32
      %v7268 = vpop.permute.xlu0 %7267
      %7269 = vrot.lane.b32.xlu0 %v7186, 32
      %v7270 = vpop.permute.xlu0 %7269
      %7271 = vrot.lane.b32.xlu0 %v7187, 32
      %v7272 = vpop.permute.xlu0 %7271
      %7273 = vrot.lane.b32.xlu0 %v7188, 32
      %v7274 = vpop.permute.xlu0 %7273
      %7275 = vrot.lane.b32.xlu0 %v7189, 32
      %v7276 = vpop.permute.xlu0 %7275
      %7277 = vrot.lane.b32.xlu0 %v7190, 32
      %v7278 = vpop.permute.xlu0 %7277
      %7279 = vrot.lane.b32.xlu0 %v7191, 32
      %v7280 = vpop.permute.xlu0 %7279
      %7281 = vrot.lane.b32.xlu0 %v7192, 32
      %v7282 = vpop.permute.xlu0 %7281
      %7283 = vrot.lane.b32.xlu0 %v7193, 32
      %v7284 = vpop.permute.xlu0 %7283
      %7285 = vrot.lane.b32.xlu0 %v7194, 32
      %v7286 = vpop.permute.xlu0 %7285
      %7287 = vrot.lane.b32.xlu0 %v7195, 32
      %v7288 = vpop.permute.xlu0 %7287
      %7289 = vrot.lane.b32.xlu0 %v7196, 32
      %v7290 = vpop.permute.xlu0 %7289
      %7291 = vrot.lane.b32.xlu0 %v7197, 32
      %v7292 = vpop.permute.xlu0 %7291
      %7293 = vrot.lane.b32.xlu0 %v7198, 32
      %v7294 = vpop.permute.xlu0 %7293
      %v7327 = vmul.f32 %v7072, %v7232
      %v7328 = vmul.f32 %v7074, %v7234
      %v7329 = vmul.f32 %v7076, %v7236
      %v7330 = vmul.f32 %v7078, %v7238
      %v7331 = vmul.f32 %v7080, %v7240
      %v7332 = vmul.f32 %v7082, %v7242
      %v7333 = vmul.f32 %v7084, %v7244
      %v7334 = vmul.f32 %v7086, %v7246
      %v7335 = vmul.f32 %v7088, %v7248
      %v7336 = vmul.f32 %v7090, %v7250
      %v7337 = vmul.f32 %v7092, %v7252
      %v7338 = vmul.f32 %v7094, %v7254
      %v7339 = vmul.f32 %v7096, %v7256
      %v7340 = vmul.f32 %v7098, %v7258
      %v7341 = vmul.f32 %v7100, %v7260
      %v7342 = vmul.f32 %v7102, %v7262
      %v7343 = vmul.f32 %v7104, %v7264
      %v7344 = vmul.f32 %v7106, %v7266
      %v7345 = vmul.f32 %v7108, %v7268
      %v7346 = vmul.f32 %v7110, %v7270
      %v7347 = vmul.f32 %v7112, %v7272
      %v7348 = vmul.f32 %v7114, %v7274
      %v7349 = vmul.f32 %v7116, %v7276
      %v7350 = vmul.f32 %v7118, %v7278
      %v7351 = vmul.f32 %v7120, %v7280
      %v7352 = vmul.f32 %v7122, %v7282
      %v7353 = vmul.f32 %v7124, %v7284
      %v7354 = vmul.f32 %v7126, %v7286
      %v7355 = vmul.f32 %v7128, %v7288
      %v7356 = vmul.f32 %v7130, %v7290
      %v7357 = vmul.f32 %v7132, %v7292
      %v7358 = vmul.f32 %v7134, %v7294
      %7391 = vrot.lane.b32.xlu0 %v7135, 32
      %v7392 = vpop.permute.xlu0 %7391
      %7393 = vrot.lane.b32.xlu0 %v7136, 32
      %v7394 = vpop.permute.xlu0 %7393
      %7395 = vrot.lane.b32.xlu0 %v7137, 32
      %v7396 = vpop.permute.xlu0 %7395
      %7397 = vrot.lane.b32.xlu0 %v7138, 32
      %v7398 = vpop.permute.xlu0 %7397
      %7399 = vrot.lane.b32.xlu0 %v7139, 32
      %v7400 = vpop.permute.xlu0 %7399
      %7401 = vrot.lane.b32.xlu0 %v7140, 32
      %v7402 = vpop.permute.xlu0 %7401
      %7403 = vrot.lane.b32.xlu0 %v7141, 32
      %v7404 = vpop.permute.xlu0 %7403
      %7405 = vrot.lane.b32.xlu0 %v7142, 32
      %v7406 = vpop.permute.xlu0 %7405
      %7407 = vrot.lane.b32.xlu0 %v7143, 32
      %v7408 = vpop.permute.xlu0 %7407
      %7409 = vrot.lane.b32.xlu0 %v7144, 32
      %v7410 = vpop.permute.xlu0 %7409
      %7411 = vrot.lane.b32.xlu0 %v7145, 32
      %v7412 = vpop.permute.xlu0 %7411
      %7413 = vrot.lane.b32.xlu0 %v7146, 32
      %v7414 = vpop.permute.xlu0 %7413
      %7415 = vrot.lane.b32.xlu0 %v7147, 32
      %v7416 = vpop.permute.xlu0 %7415
      %7417 = vrot.lane.b32.xlu0 %v7148, 32
      %v7418 = vpop.permute.xlu0 %7417
      %7419 = vrot.lane.b32.xlu0 %v7149, 32
      %v7420 = vpop.permute.xlu0 %7419
      %7421 = vrot.lane.b32.xlu0 %v7150, 32
      %v7422 = vpop.permute.xlu0 %7421
      %7423 = vrot.lane.b32.xlu0 %v7151, 32
      %v7424 = vpop.permute.xlu0 %7423
      %7425 = vrot.lane.b32.xlu0 %v7152, 32
      %v7426 = vpop.permute.xlu0 %7425
      %7427 = vrot.lane.b32.xlu0 %v7153, 32
      %v7428 = vpop.permute.xlu0 %7427
      %7429 = vrot.lane.b32.xlu0 %v7154, 32
      %v7430 = vpop.permute.xlu0 %7429
      %7431 = vrot.lane.b32.xlu0 %v7155, 32
      %v7432 = vpop.permute.xlu0 %7431
      %7433 = vrot.lane.b32.xlu0 %v7156, 32
      %v7434 = vpop.permute.xlu0 %7433
      %7435 = vrot.lane.b32.xlu0 %v7157, 32
      %v7436 = vpop.permute.xlu0 %7435
      %7437 = vrot.lane.b32.xlu0 %v7158, 32
      %v7438 = vpop.permute.xlu0 %7437
      %7439 = vrot.lane.b32.xlu0 %v7159, 32
      %v7440 = vpop.permute.xlu0 %7439
      %7441 = vrot.lane.b32.xlu0 %v7160, 32
      %v7442 = vpop.permute.xlu0 %7441
      %7443 = vrot.lane.b32.xlu0 %v7161, 32
      %v7444 = vpop.permute.xlu0 %7443
      %7445 = vrot.lane.b32.xlu0 %v7162, 32
      %v7446 = vpop.permute.xlu0 %7445
      %7447 = vrot.lane.b32.xlu0 %v7163, 32
      %v7448 = vpop.permute.xlu0 %7447
      %7449 = vrot.lane.b32.xlu0 %v7164, 32
      %v7450 = vpop.permute.xlu0 %7449
      %7451 = vrot.lane.b32.xlu0 %v7165, 32
      %v7452 = vpop.permute.xlu0 %7451
      %7453 = vrot.lane.b32.xlu0 %v7166, 32
      %v7454 = vpop.permute.xlu0 %7453
      %v7487 = vmul.f32 %v7072, %v7392
      %v7488 = vmul.f32 %v7074, %v7394
      %v7489 = vmul.f32 %v7076, %v7396
      %v7490 = vmul.f32 %v7078, %v7398
      %v7491 = vmul.f32 %v7080, %v7400
      %v7492 = vmul.f32 %v7082, %v7402
      %v7493 = vmul.f32 %v7084, %v7404
      %v7494 = vmul.f32 %v7086, %v7406
      %v7495 = vmul.f32 %v7088, %v7408
      %v7496 = vmul.f32 %v7090, %v7410
      %v7497 = vmul.f32 %v7092, %v7412
      %v7498 = vmul.f32 %v7094, %v7414
      %v7499 = vmul.f32 %v7096, %v7416
      %v7500 = vmul.f32 %v7098, %v7418
      %v7501 = vmul.f32 %v7100, %v7420
      %v7502 = vmul.f32 %v7102, %v7422
      %v7503 = vmul.f32 %v7104, %v7424
      %v7504 = vmul.f32 %v7106, %v7426
      %v7505 = vmul.f32 %v7108, %v7428
      %v7506 = vmul.f32 %v7110, %v7430
      %v7507 = vmul.f32 %v7112, %v7432
      %v7508 = vmul.f32 %v7114, %v7434
      %v7509 = vmul.f32 %v7116, %v7436
      %v7510 = vmul.f32 %v7118, %v7438
      %v7511 = vmul.f32 %v7120, %v7440
      %v7512 = vmul.f32 %v7122, %v7442
      %v7513 = vmul.f32 %v7124, %v7444
      %v7514 = vmul.f32 %v7126, %v7446
      %v7515 = vmul.f32 %v7128, %v7448
      %v7516 = vmul.f32 %v7130, %v7450
      %v7517 = vmul.f32 %v7132, %v7452
      %v7518 = vmul.f32 %v7134, %v7454
      %7551 = vrot.lane.b32.xlu0 %v7487, 32
      %v7552 = vpop.permute.xlu0 %7551
      %7553 = vrot.lane.b32.xlu0 %v7488, 32
      %v7554 = vpop.permute.xlu0 %7553
      %7555 = vrot.lane.b32.xlu0 %v7489, 32
      %v7556 = vpop.permute.xlu0 %7555
      %7557 = vrot.lane.b32.xlu0 %v7490, 32
      %v7558 = vpop.permute.xlu0 %7557
      %7559 = vrot.lane.b32.xlu0 %v7491, 32
      %v7560 = vpop.permute.xlu0 %7559
      %7561 = vrot.lane.b32.xlu0 %v7492, 32
      %v7562 = vpop.permute.xlu0 %7561
      %7563 = vrot.lane.b32.xlu0 %v7493, 32
      %v7564 = vpop.permute.xlu0 %7563
      %7565 = vrot.lane.b32.xlu0 %v7494, 32
      %v7566 = vpop.permute.xlu0 %7565
      %7567 = vrot.lane.b32.xlu0 %v7495, 32
      %v7568 = vpop.permute.xlu0 %7567
      %7569 = vrot.lane.b32.xlu0 %v7496, 32
      %v7570 = vpop.permute.xlu0 %7569
      %7571 = vrot.lane.b32.xlu0 %v7497, 32
      %v7572 = vpop.permute.xlu0 %7571
      %7573 = vrot.lane.b32.xlu0 %v7498, 32
      %v7574 = vpop.permute.xlu0 %7573
      %7575 = vrot.lane.b32.xlu0 %v7499, 32
      %v7576 = vpop.permute.xlu0 %7575
      %7577 = vrot.lane.b32.xlu0 %v7500, 32
      %v7578 = vpop.permute.xlu0 %7577
      %7579 = vrot.lane.b32.xlu0 %v7501, 32
      %v7580 = vpop.permute.xlu0 %7579
      %7581 = vrot.lane.b32.xlu0 %v7502, 32
      %v7582 = vpop.permute.xlu0 %7581
      %7583 = vrot.lane.b32.xlu0 %v7503, 32
      %v7584 = vpop.permute.xlu0 %7583
      %7585 = vrot.lane.b32.xlu0 %v7504, 32
      %v7586 = vpop.permute.xlu0 %7585
      %7587 = vrot.lane.b32.xlu0 %v7505, 32
      %v7588 = vpop.permute.xlu0 %7587
      %7589 = vrot.lane.b32.xlu0 %v7506, 32
      %v7590 = vpop.permute.xlu0 %7589
      %7591 = vrot.lane.b32.xlu0 %v7507, 32
      %v7592 = vpop.permute.xlu0 %7591
      %7593 = vrot.lane.b32.xlu0 %v7508, 32
      %v7594 = vpop.permute.xlu0 %7593
      %7595 = vrot.lane.b32.xlu0 %v7509, 32
      %v7596 = vpop.permute.xlu0 %7595
      %7597 = vrot.lane.b32.xlu0 %v7510, 32
      %v7598 = vpop.permute.xlu0 %7597
      %7599 = vrot.lane.b32.xlu0 %v7511, 32
      %v7600 = vpop.permute.xlu0 %7599
      %7601 = vrot.lane.b32.xlu0 %v7512, 32
      %v7602 = vpop.permute.xlu0 %7601
      %7603 = vrot.lane.b32.xlu0 %v7513, 32
      %v7604 = vpop.permute.xlu0 %7603
      %7605 = vrot.lane.b32.xlu0 %v7514, 32
      %v7606 = vpop.permute.xlu0 %7605
      %7607 = vrot.lane.b32.xlu0 %v7515, 32
      %v7608 = vpop.permute.xlu0 %7607
      %7609 = vrot.lane.b32.xlu0 %v7516, 32
      %v7610 = vpop.permute.xlu0 %7609
      %7611 = vrot.lane.b32.xlu0 %v7517, 32
      %v7612 = vpop.permute.xlu0 %7611
      %7613 = vrot.lane.b32.xlu0 %v7518, 32
      %v7614 = vpop.permute.xlu0 %7613
      %v7647 = vadd.f32 %v7327, %v7552
      %v7648 = vadd.f32 %v7328, %v7554
      %v7649 = vadd.f32 %v7329, %v7556
      %v7650 = vadd.f32 %v7330, %v7558
      %v7651 = vadd.f32 %v7331, %v7560
      %v7652 = vadd.f32 %v7332, %v7562
      %v7653 = vadd.f32 %v7333, %v7564
      %v7654 = vadd.f32 %v7334, %v7566
      %v7655 = vadd.f32 %v7335, %v7568
      %v7656 = vadd.f32 %v7336, %v7570
      %v7657 = vadd.f32 %v7337, %v7572
      %v7658 = vadd.f32 %v7338, %v7574
      %v7659 = vadd.f32 %v7339, %v7576
      %v7660 = vadd.f32 %v7340, %v7578
      %v7661 = vadd.f32 %v7341, %v7580
      %v7662 = vadd.f32 %v7342, %v7582
      %v7663 = vadd.f32 %v7343, %v7584
      %v7664 = vadd.f32 %v7344, %v7586
      %v7665 = vadd.f32 %v7345, %v7588
      %v7666 = vadd.f32 %v7346, %v7590
      %v7667 = vadd.f32 %v7347, %v7592
      %v7668 = vadd.f32 %v7348, %v7594
      %v7669 = vadd.f32 %v7349, %v7596
      %v7670 = vadd.f32 %v7350, %v7598
      %v7671 = vadd.f32 %v7351, %v7600
      %v7672 = vadd.f32 %v7352, %v7602
      %v7673 = vadd.f32 %v7353, %v7604
      %v7674 = vadd.f32 %v7354, %v7606
      %v7675 = vadd.f32 %v7355, %v7608
      %v7676 = vadd.f32 %v7356, %v7610
      %v7677 = vadd.f32 %v7357, %v7612
      %v7678 = vadd.f32 %v7358, %v7614
      %7711 = vrot.lane.b32.xlu0 %v7647, 96
      %v7712 = vpop.permute.xlu0 %7711
      %7713 = vrot.lane.b32.xlu0 %v7648, 96
      %v7714 = vpop.permute.xlu0 %7713
      %7715 = vrot.lane.b32.xlu0 %v7649, 96
      %v7716 = vpop.permute.xlu0 %7715
      %7717 = vrot.lane.b32.xlu0 %v7650, 96
      %v7718 = vpop.permute.xlu0 %7717
      %7719 = vrot.lane.b32.xlu0 %v7651, 96
      %v7720 = vpop.permute.xlu0 %7719
      %7721 = vrot.lane.b32.xlu0 %v7652, 96
      %v7722 = vpop.permute.xlu0 %7721
      %7723 = vrot.lane.b32.xlu0 %v7653, 96
      %v7724 = vpop.permute.xlu0 %7723
      %7725 = vrot.lane.b32.xlu0 %v7654, 96
      %v7726 = vpop.permute.xlu0 %7725
      %7727 = vrot.lane.b32.xlu0 %v7655, 96
      %v7728 = vpop.permute.xlu0 %7727
      %7729 = vrot.lane.b32.xlu0 %v7656, 96
      %v7730 = vpop.permute.xlu0 %7729
      %7731 = vrot.lane.b32.xlu0 %v7657, 96
      %v7732 = vpop.permute.xlu0 %7731
      %7733 = vrot.lane.b32.xlu0 %v7658, 96
      %v7734 = vpop.permute.xlu0 %7733
      %7735 = vrot.lane.b32.xlu0 %v7659, 96
      %v7736 = vpop.permute.xlu0 %7735
      %7737 = vrot.lane.b32.xlu0 %v7660, 96
      %v7738 = vpop.permute.xlu0 %7737
      %7739 = vrot.lane.b32.xlu0 %v7661, 96
      %v7740 = vpop.permute.xlu0 %7739
      %7741 = vrot.lane.b32.xlu0 %v7662, 96
      %v7742 = vpop.permute.xlu0 %7741
      %7743 = vrot.lane.b32.xlu0 %v7663, 96
      %v7744 = vpop.permute.xlu0 %7743
      %7745 = vrot.lane.b32.xlu0 %v7664, 96
      %v7746 = vpop.permute.xlu0 %7745
      %7747 = vrot.lane.b32.xlu0 %v7665, 96
      %v7748 = vpop.permute.xlu0 %7747
      %7749 = vrot.lane.b32.xlu0 %v7666, 96
      %v7750 = vpop.permute.xlu0 %7749
      %7751 = vrot.lane.b32.xlu0 %v7667, 96
      %v7752 = vpop.permute.xlu0 %7751
      %7753 = vrot.lane.b32.xlu0 %v7668, 96
      %v7754 = vpop.permute.xlu0 %7753
      %7755 = vrot.lane.b32.xlu0 %v7669, 96
      %v7756 = vpop.permute.xlu0 %7755
      %7757 = vrot.lane.b32.xlu0 %v7670, 96
      %v7758 = vpop.permute.xlu0 %7757
      %7759 = vrot.lane.b32.xlu0 %v7671, 96
      %v7760 = vpop.permute.xlu0 %7759
      %7761 = vrot.lane.b32.xlu0 %v7672, 96
      %v7762 = vpop.permute.xlu0 %7761
      %7763 = vrot.lane.b32.xlu0 %v7673, 96
      %v7764 = vpop.permute.xlu0 %7763
      %7765 = vrot.lane.b32.xlu0 %v7674, 96
      %v7766 = vpop.permute.xlu0 %7765
      %7767 = vrot.lane.b32.xlu0 %v7675, 96
      %v7768 = vpop.permute.xlu0 %7767
      %7769 = vrot.lane.b32.xlu0 %v7676, 96
      %v7770 = vpop.permute.xlu0 %7769
      %7771 = vrot.lane.b32.xlu0 %v7677, 96
      %v7772 = vpop.permute.xlu0 %7771
      %7773 = vrot.lane.b32.xlu0 %v7678, 96
      %v7774 = vpop.permute.xlu0 %7773
      %v7807 = vsel %vm3702, %v7712, 0.0
      %v7808 = vsel %vm3702, %v7714, 0.0
      %v7809 = vadd.f32 %v7807, %v7808
      %v7810 = vsel %vm3702, %v7716, 0.0
      %v7811 = vadd.f32 %v7809, %v7810
      %v7812 = vsel %vm3702, %v7718, 0.0
      %v7813 = vadd.f32 %v7811, %v7812
      %v7814 = vsel %vm3702, %v7720, 0.0
      %v7815 = vadd.f32 %v7813, %v7814
      %v7816 = vsel %vm3702, %v7722, 0.0
      %v7817 = vadd.f32 %v7815, %v7816
      %v7818 = vsel %vm3702, %v7724, 0.0
      %v7819 = vadd.f32 %v7817, %v7818
      %v7820 = vsel %vm3702, %v7726, 0.0
      %v7821 = vadd.f32 %v7819, %v7820
      %v7822 = vsel %vm3702, %v7728, 0.0
      %v7823 = vadd.f32 %v7821, %v7822
      %v7824 = vsel %vm3702, %v7730, 0.0
      %v7825 = vadd.f32 %v7823, %v7824
      %v7826 = vsel %vm3702, %v7732, 0.0
      %v7827 = vadd.f32 %v7825, %v7826
      %v7828 = vsel %vm3702, %v7734, 0.0
      %v7829 = vadd.f32 %v7827, %v7828
      %v7830 = vsel %vm3702, %v7736, 0.0
      %v7831 = vadd.f32 %v7829, %v7830
      %v7832 = vsel %vm3702, %v7738, 0.0
      %v7833 = vadd.f32 %v7831, %v7832
      %v7834 = vsel %vm3702, %v7740, 0.0
      %v7835 = vadd.f32 %v7833, %v7834
      %v7836 = vsel %vm3702, %v7742, 0.0
      %v7837 = vadd.f32 %v7835, %v7836
      %v7838 = vsel %vm3702, %v7744, 0.0
      %v7839 = vadd.f32 %v7837, %v7838
      %v7840 = vsel %vm3702, %v7746, 0.0
      %v7841 = vadd.f32 %v7839, %v7840
      %v7842 = vsel %vm3702, %v7748, 0.0
      %v7843 = vadd.f32 %v7841, %v7842
      %v7844 = vsel %vm3702, %v7750, 0.0
      %v7845 = vadd.f32 %v7843, %v7844
      %v7846 = vsel %vm3702, %v7752, 0.0
      %v7847 = vadd.f32 %v7845, %v7846
      %v7848 = vsel %vm3702, %v7754, 0.0
      %v7849 = vadd.f32 %v7847, %v7848
      %v7850 = vsel %vm3702, %v7756, 0.0
      %v7851 = vadd.f32 %v7849, %v7850
      %v7852 = vsel %vm3702, %v7758, 0.0
      %v7853 = vadd.f32 %v7851, %v7852
      %v7854 = vsel %vm3702, %v7760, 0.0
      %v7855 = vadd.f32 %v7853, %v7854
      %v7856 = vsel %vm3702, %v7762, 0.0
      %v7857 = vadd.f32 %v7855, %v7856
      %v7858 = vsel %vm3702, %v7764, 0.0
      %v7859 = vadd.f32 %v7857, %v7858
      %v7860 = vsel %vm3702, %v7766, 0.0
      %v7861 = vadd.f32 %v7859, %v7860
      %v7862 = vsel %vm3702, %v7768, 0.0
      %v7863 = vadd.f32 %v7861, %v7862
      %v7864 = vsel %vm3702, %v7770, 0.0
      %v7865 = vadd.f32 %v7863, %v7864
      %v7866 = vsel %vm3702, %v7772, 0.0
      %v7867 = vadd.f32 %v7865, %v7866
      %v7868 = vsel %vm3702, %v7774, 0.0
      %v7869 = vadd.f32 %v7867, %v7868
      %7870 = vadd.xlane.f32.xlu0 %v7869
      %v7871 = vpop.xlane.xlu0 %7870
      %v7872 = vrot.slane %v7871, 4
      %v7873 = vadd.f32 %v7871, %v7872
      %v7874 = vrot.slane %v7873, 2
      %v7875 = vadd.f32 %v7873, %v7874
      %v7876 = vrot.slane %v7875, 1
      %v7877 = vadd.f32 %v7875, %v7876
      %s7878 = vtos %v7877
      %v7879 = vrcp.pop 8192.0
      %s7880 = vtos %v7879
      %s7881 = smul.f32 %s7878, %s7880
      %v7882 = vstv %s7881
      %v7883 = vsub.f32 %v7647, %v7882
      %v7884 = vsub.f32 %v7648, %v7882
      %v7885 = vsub.f32 %v7649, %v7882
      %v7886 = vsub.f32 %v7650, %v7882
      %v7887 = vsub.f32 %v7651, %v7882
      %v7888 = vsub.f32 %v7652, %v7882
      %v7889 = vsub.f32 %v7653, %v7882
      %v7890 = vsub.f32 %v7654, %v7882
      %v7891 = vsub.f32 %v7655, %v7882
      %v7892 = vsub.f32 %v7656, %v7882
      %v7893 = vsub.f32 %v7657, %v7882
      %v7894 = vsub.f32 %v7658, %v7882
      %v7895 = vsub.f32 %v7659, %v7882
      %v7896 = vsub.f32 %v7660, %v7882
      %v7897 = vsub.f32 %v7661, %v7882
      %v7898 = vsub.f32 %v7662, %v7882
      %v7899 = vsub.f32 %v7663, %v7882
      %v7900 = vsub.f32 %v7664, %v7882
      %v7901 = vsub.f32 %v7665, %v7882
      %v7902 = vsub.f32 %v7666, %v7882
      %v7903 = vsub.f32 %v7667, %v7882
      %v7904 = vsub.f32 %v7668, %v7882
      %v7905 = vsub.f32 %v7669, %v7882
      %v7906 = vsub.f32 %v7670, %v7882
      %v7907 = vsub.f32 %v7671, %v7882
      %v7908 = vsub.f32 %v7672, %v7882
      %v7909 = vsub.f32 %v7673, %v7882
      %v7910 = vsub.f32 %v7674, %v7882
      %v7911 = vsub.f32 %v7675, %v7882
      %v7912 = vsub.f32 %v7676, %v7882
      %v7913 = vsub.f32 %v7677, %v7882
      %v7914 = vsub.f32 %v7678, %v7882
      %v7915 = vmul.f32 %v7883, %v7883
      %v7916 = vmul.f32 %v7884, %v7884
      %v7917 = vmul.f32 %v7885, %v7885
      %v7918 = vmul.f32 %v7886, %v7886
      %v7919 = vmul.f32 %v7887, %v7887
      %v7920 = vmul.f32 %v7888, %v7888
      %v7921 = vmul.f32 %v7889, %v7889
      %v7922 = vmul.f32 %v7890, %v7890
      %v7923 = vmul.f32 %v7891, %v7891
      %v7924 = vmul.f32 %v7892, %v7892
      %v7925 = vmul.f32 %v7893, %v7893
      %v7926 = vmul.f32 %v7894, %v7894
      %v7927 = vmul.f32 %v7895, %v7895
      %v7928 = vmul.f32 %v7896, %v7896
      %v7929 = vmul.f32 %v7897, %v7897
      %v7930 = vmul.f32 %v7898, %v7898
      %v7931 = vmul.f32 %v7899, %v7899
      %v7932 = vmul.f32 %v7900, %v7900
      %v7933 = vmul.f32 %v7901, %v7901
      %v7934 = vmul.f32 %v7902, %v7902
      %v7935 = vmul.f32 %v7903, %v7903
      %v7936 = vmul.f32 %v7904, %v7904
      %v7937 = vmul.f32 %v7905, %v7905
      %v7938 = vmul.f32 %v7906, %v7906
      %v7939 = vmul.f32 %v7907, %v7907
      %v7940 = vmul.f32 %v7908, %v7908
      %v7941 = vmul.f32 %v7909, %v7909
      %v7942 = vmul.f32 %v7910, %v7910
      %v7943 = vmul.f32 %v7911, %v7911
      %v7944 = vmul.f32 %v7912, %v7912
      %v7945 = vmul.f32 %v7913, %v7913
      %v7946 = vmul.f32 %v7914, %v7914
      %7979 = vrot.lane.b32.xlu0 %v7915, 96
      %v7980 = vpop.permute.xlu0 %7979
      %7981 = vrot.lane.b32.xlu0 %v7916, 96
      %v7982 = vpop.permute.xlu0 %7981
      %7983 = vrot.lane.b32.xlu0 %v7917, 96
      %v7984 = vpop.permute.xlu0 %7983
      %7985 = vrot.lane.b32.xlu0 %v7918, 96
      %v7986 = vpop.permute.xlu0 %7985
      %7987 = vrot.lane.b32.xlu0 %v7919, 96
      %v7988 = vpop.permute.xlu0 %7987
      %7989 = vrot.lane.b32.xlu0 %v7920, 96
      %v7990 = vpop.permute.xlu0 %7989
      %7991 = vrot.lane.b32.xlu0 %v7921, 96
      %v7992 = vpop.permute.xlu0 %7991
      %7993 = vrot.lane.b32.xlu0 %v7922, 96
      %v7994 = vpop.permute.xlu0 %7993
      %7995 = vrot.lane.b32.xlu0 %v7923, 96
      %v7996 = vpop.permute.xlu0 %7995
      %7997 = vrot.lane.b32.xlu0 %v7924, 96
      %v7998 = vpop.permute.xlu0 %7997
      %7999 = vrot.lane.b32.xlu0 %v7925, 96
      %v8000 = vpop.permute.xlu0 %7999
      %8001 = vrot.lane.b32.xlu0 %v7926, 96
      %v8002 = vpop.permute.xlu0 %8001
      %8003 = vrot.lane.b32.xlu0 %v7927, 96
      %v8004 = vpop.permute.xlu0 %8003
      %8005 = vrot.lane.b32.xlu0 %v7928, 96
      %v8006 = vpop.permute.xlu0 %8005
      %8007 = vrot.lane.b32.xlu0 %v7929, 96
      %v8008 = vpop.permute.xlu0 %8007
      %8009 = vrot.lane.b32.xlu0 %v7930, 96
      %v8010 = vpop.permute.xlu0 %8009
      %8011 = vrot.lane.b32.xlu0 %v7931, 96
      %v8012 = vpop.permute.xlu0 %8011
      %8013 = vrot.lane.b32.xlu0 %v7932, 96
      %v8014 = vpop.permute.xlu0 %8013
      %8015 = vrot.lane.b32.xlu0 %v7933, 96
      %v8016 = vpop.permute.xlu0 %8015
      %8017 = vrot.lane.b32.xlu0 %v7934, 96
      %v8018 = vpop.permute.xlu0 %8017
      %8019 = vrot.lane.b32.xlu0 %v7935, 96
      %v8020 = vpop.permute.xlu0 %8019
      %8021 = vrot.lane.b32.xlu0 %v7936, 96
      %v8022 = vpop.permute.xlu0 %8021
      %8023 = vrot.lane.b32.xlu0 %v7937, 96
      %v8024 = vpop.permute.xlu0 %8023
      %8025 = vrot.lane.b32.xlu0 %v7938, 96
      %v8026 = vpop.permute.xlu0 %8025
      %8027 = vrot.lane.b32.xlu0 %v7939, 96
      %v8028 = vpop.permute.xlu0 %8027
      %8029 = vrot.lane.b32.xlu0 %v7940, 96
      %v8030 = vpop.permute.xlu0 %8029
      %8031 = vrot.lane.b32.xlu0 %v7941, 96
      %v8032 = vpop.permute.xlu0 %8031
      %8033 = vrot.lane.b32.xlu0 %v7942, 96
      %v8034 = vpop.permute.xlu0 %8033
      %8035 = vrot.lane.b32.xlu0 %v7943, 96
      %v8036 = vpop.permute.xlu0 %8035
      %8037 = vrot.lane.b32.xlu0 %v7944, 96
      %v8038 = vpop.permute.xlu0 %8037
      %8039 = vrot.lane.b32.xlu0 %v7945, 96
      %v8040 = vpop.permute.xlu0 %8039
      %8041 = vrot.lane.b32.xlu0 %v7946, 96
      %v8042 = vpop.permute.xlu0 %8041
      %v8075 = vsel %vm3702, %v7980, 0.0
      %v8076 = vsel %vm3702, %v7982, 0.0
      %v8077 = vadd.f32 %v8075, %v8076
      %v8078 = vsel %vm3702, %v7984, 0.0
      %v8079 = vadd.f32 %v8077, %v8078
      %v8080 = vsel %vm3702, %v7986, 0.0
      %v8081 = vadd.f32 %v8079, %v8080
      %v8082 = vsel %vm3702, %v7988, 0.0
      %v8083 = vadd.f32 %v8081, %v8082
      %v8084 = vsel %vm3702, %v7990, 0.0
      %v8085 = vadd.f32 %v8083, %v8084
      %v8086 = vsel %vm3702, %v7992, 0.0
      %v8087 = vadd.f32 %v8085, %v8086
      %v8088 = vsel %vm3702, %v7994, 0.0
      %v8089 = vadd.f32 %v8087, %v8088
      %v8090 = vsel %vm3702, %v7996, 0.0
      %v8091 = vadd.f32 %v8089, %v8090
      %v8092 = vsel %vm3702, %v7998, 0.0
      %v8093 = vadd.f32 %v8091, %v8092
      %v8094 = vsel %vm3702, %v8000, 0.0
      %v8095 = vadd.f32 %v8093, %v8094
      %v8096 = vsel %vm3702, %v8002, 0.0
      %v8097 = vadd.f32 %v8095, %v8096
      %v8098 = vsel %vm3702, %v8004, 0.0
      %v8099 = vadd.f32 %v8097, %v8098
      %v8100 = vsel %vm3702, %v8006, 0.0
      %v8101 = vadd.f32 %v8099, %v8100
      %v8102 = vsel %vm3702, %v8008, 0.0
      %v8103 = vadd.f32 %v8101, %v8102
      %v8104 = vsel %vm3702, %v8010, 0.0
      %v8105 = vadd.f32 %v8103, %v8104
      %v8106 = vsel %vm3702, %v8012, 0.0
      %v8107 = vadd.f32 %v8105, %v8106
      %v8108 = vsel %vm3702, %v8014, 0.0
      %v8109 = vadd.f32 %v8107, %v8108
      %v8110 = vsel %vm3702, %v8016, 0.0
      %v8111 = vadd.f32 %v8109, %v8110
      %v8112 = vsel %vm3702, %v8018, 0.0
      %v8113 = vadd.f32 %v8111, %v8112
      %v8114 = vsel %vm3702, %v8020, 0.0
      %v8115 = vadd.f32 %v8113, %v8114
      %v8116 = vsel %vm3702, %v8022, 0.0
      %v8117 = vadd.f32 %v8115, %v8116
      %v8118 = vsel %vm3702, %v8024, 0.0
      %v8119 = vadd.f32 %v8117, %v8118
      %v8120 = vsel %vm3702, %v8026, 0.0
      %v8121 = vadd.f32 %v8119, %v8120
      %v8122 = vsel %vm3702, %v8028, 0.0
      %v8123 = vadd.f32 %v8121, %v8122
      %v8124 = vsel %vm3702, %v8030, 0.0
      %v8125 = vadd.f32 %v8123, %v8124
      %v8126 = vsel %vm3702, %v8032, 0.0
      %v8127 = vadd.f32 %v8125, %v8126
      %v8128 = vsel %vm3702, %v8034, 0.0
      %v8129 = vadd.f32 %v8127, %v8128
      %v8130 = vsel %vm3702, %v8036, 0.0
      %v8131 = vadd.f32 %v8129, %v8130
      %v8132 = vsel %vm3702, %v8038, 0.0
      %v8133 = vadd.f32 %v8131, %v8132
      %v8134 = vsel %vm3702, %v8040, 0.0
      %v8135 = vadd.f32 %v8133, %v8134
      %v8136 = vsel %vm3702, %v8042, 0.0
      %v8137 = vadd.f32 %v8135, %v8136
      %8138 = vadd.xlane.f32.xlu0 %v8137
      %v8139 = vpop.xlane.xlu0 %8138
      %v8140 = vrot.slane %v8139, 4
      %v8141 = vadd.f32 %v8139, %v8140
      %v8142 = vrot.slane %v8141, 2
      %v8143 = vadd.f32 %v8141, %v8142
      %v8144 = vrot.slane %v8143, 1
      %v8145 = vadd.f32 %v8143, %v8144
      %s8146 = vtos %v8145
      %v8147 = vrcp.pop 8192.0
      %s8148 = vtos %v8147
      %s8149 = smul.f32 %s8146, %s8148
      %s8150 = sadd.f32 %s8149, 1e-05
      %v8151 = vstv %s8150
      %v8152 = vrsqrt.pop %v8151
      %s8153 = vtos %v8152
      %v8154 = vld [vmem:[%s11] sm:$0x1]
      %v8155 = vstv %s8153
      %v8156 = vmul.f32 %v8155, %v8154
      %v8158 = vlaneseq
      %v8159 = vshrl.u32 %v8158, 7
      %v8160 = vsub.s32 0, %v8159
      %v8161 = vrot.slane %v8156, %v8160
      %8162 = vrot.lane.b32.xlu0 %v8161, 32
      %v8163 = vpop.permute.xlu0 %8162
      %v8165 = vmul.f32 %v7883, %v8163
      %v8166 = vmul.f32 %v7884, %v8163
      %v8167 = vmul.f32 %v7885, %v8163
      %v8168 = vmul.f32 %v7886, %v8163
      %v8169 = vmul.f32 %v7887, %v8163
      %v8170 = vmul.f32 %v7888, %v8163
      %v8171 = vmul.f32 %v7889, %v8163
      %v8172 = vmul.f32 %v7890, %v8163
      %v8173 = vmul.f32 %v7891, %v8163
      %v8174 = vmul.f32 %v7892, %v8163
      %v8175 = vmul.f32 %v7893, %v8163
      %v8176 = vmul.f32 %v7894, %v8163
      %v8177 = vmul.f32 %v7895, %v8163
      %v8178 = vmul.f32 %v7896, %v8163
      %v8179 = vmul.f32 %v7897, %v8163
      %v8180 = vmul.f32 %v7898, %v8163
      %v8181 = vmul.f32 %v7899, %v8163
      %v8182 = vmul.f32 %v7900, %v8163
      %v8183 = vmul.f32 %v7901, %v8163
      %v8184 = vmul.f32 %v7902, %v8163
      %v8185 = vmul.f32 %v7903, %v8163
      %v8186 = vmul.f32 %v7904, %v8163
      %v8187 = vmul.f32 %v7905, %v8163
      %v8188 = vmul.f32 %v7906, %v8163
      %v8189 = vmul.f32 %v7907, %v8163
      %v8190 = vmul.f32 %v7908, %v8163
      %v8191 = vmul.f32 %v7909, %v8163
      %v8192 = vmul.f32 %v7910, %v8163
      %v8193 = vmul.f32 %v7911, %v8163
      %v8194 = vmul.f32 %v7912, %v8163
      %v8195 = vmul.f32 %v7913, %v8163
      %v8196 = vmul.f32 %v7914, %v8163
      %v8197 = vld [vmem:[%s12] sm:$0x1]
      %v8199 = vlaneseq
      %v8200 = vshrl.u32 %v8199, 7
      %v8201 = vsub.s32 0, %v8200
      %v8202 = vrot.slane %v8197, %v8201
      %8203 = vrot.lane.b32.xlu0 %v8202, 32
      %v8204 = vpop.permute.xlu0 %8203
      %v8206 = vadd.f32 %v8165, %v8204
      %v8207 = vadd.f32 %v8166, %v8204
      %v8208 = vadd.f32 %v8167, %v8204
      %v8209 = vadd.f32 %v8168, %v8204
      %v8210 = vadd.f32 %v8169, %v8204
      %v8211 = vadd.f32 %v8170, %v8204
      %v8212 = vadd.f32 %v8171, %v8204
      %v8213 = vadd.f32 %v8172, %v8204
      %v8214 = vadd.f32 %v8173, %v8204
      %v8215 = vadd.f32 %v8174, %v8204
      %v8216 = vadd.f32 %v8175, %v8204
      %v8217 = vadd.f32 %v8176, %v8204
      %v8218 = vadd.f32 %v8177, %v8204
      %v8219 = vadd.f32 %v8178, %v8204
      %v8220 = vadd.f32 %v8179, %v8204
      %v8221 = vadd.f32 %v8180, %v8204
      %v8222 = vadd.f32 %v8181, %v8204
      %v8223 = vadd.f32 %v8182, %v8204
      %v8224 = vadd.f32 %v8183, %v8204
      %v8225 = vadd.f32 %v8184, %v8204
      %v8226 = vadd.f32 %v8185, %v8204
      %v8227 = vadd.f32 %v8186, %v8204
      %v8228 = vadd.f32 %v8187, %v8204
      %v8229 = vadd.f32 %v8188, %v8204
      %v8230 = vadd.f32 %v8189, %v8204
      %v8231 = vadd.f32 %v8190, %v8204
      %v8232 = vadd.f32 %v8191, %v8204
      %v8233 = vadd.f32 %v8192, %v8204
      %v8234 = vadd.f32 %v8193, %v8204
      %v8235 = vadd.f32 %v8194, %v8204
      %v8236 = vadd.f32 %v8195, %v8204
      %v8237 = vadd.f32 %v8196, %v8204
      %v8238 = vtanh.pop %v8206
      %v8239 = vtanh.pop %v8207
      %v8240 = vtanh.pop %v8208
      %v8241 = vtanh.pop %v8209
      %v8242 = vtanh.pop %v8210
      %v8243 = vtanh.pop %v8211
      %v8244 = vtanh.pop %v8212
      %v8245 = vtanh.pop %v8213
      %v8246 = vtanh.pop %v8214
      %v8247 = vtanh.pop %v8215
      %v8248 = vtanh.pop %v8216
      %v8249 = vtanh.pop %v8217
      %v8250 = vtanh.pop %v8218
      %v8251 = vtanh.pop %v8219
      %v8252 = vtanh.pop %v8220
      %v8253 = vtanh.pop %v8221
      %v8254 = vtanh.pop %v8222
      %v8255 = vtanh.pop %v8223
      %v8256 = vtanh.pop %v8224
      %v8257 = vtanh.pop %v8225
      %v8258 = vtanh.pop %v8226
      %v8259 = vtanh.pop %v8227
      %v8260 = vtanh.pop %v8228
      %v8261 = vtanh.pop %v8229
      %v8262 = vtanh.pop %v8230
      %v8263 = vtanh.pop %v8231
      %v8264 = vtanh.pop %v8232
      %v8265 = vtanh.pop %v8233
      %v8266 = vtanh.pop %v8234
      %v8267 = vtanh.pop %v8235
      %v8268 = vtanh.pop %v8236
      %v8269 = vtanh.pop %v8237
      %8302 = vrot.lane.b32.xlu0 %v8238, 32
      %v8303 = vpop.permute.xlu0 %8302
      %8304 = vrot.lane.b32.xlu0 %v8239, 32
      %v8305 = vpop.permute.xlu0 %8304
      %8306 = vrot.lane.b32.xlu0 %v8240, 32
      %v8307 = vpop.permute.xlu0 %8306
      %8308 = vrot.lane.b32.xlu0 %v8241, 32
      %v8309 = vpop.permute.xlu0 %8308
      %8310 = vrot.lane.b32.xlu0 %v8242, 32
      %v8311 = vpop.permute.xlu0 %8310
      %8312 = vrot.lane.b32.xlu0 %v8243, 32
      %v8313 = vpop.permute.xlu0 %8312
      %8314 = vrot.lane.b32.xlu0 %v8244, 32
      %v8315 = vpop.permute.xlu0 %8314
      %8316 = vrot.lane.b32.xlu0 %v8245, 32
      %v8317 = vpop.permute.xlu0 %8316
      %8318 = vrot.lane.b32.xlu0 %v8246, 32
      %v8319 = vpop.permute.xlu0 %8318
      %8320 = vrot.lane.b32.xlu0 %v8247, 32
      %v8321 = vpop.permute.xlu0 %8320
      %8322 = vrot.lane.b32.xlu0 %v8248, 32
      %v8323 = vpop.permute.xlu0 %8322
      %8324 = vrot.lane.b32.xlu0 %v8249, 32
      %v8325 = vpop.permute.xlu0 %8324
      %8326 = vrot.lane.b32.xlu0 %v8250, 32
      %v8327 = vpop.permute.xlu0 %8326
      %8328 = vrot.lane.b32.xlu0 %v8251, 32
      %v8329 = vpop.permute.xlu0 %8328
      %8330 = vrot.lane.b32.xlu0 %v8252, 32
      %v8331 = vpop.permute.xlu0 %8330
      %8332 = vrot.lane.b32.xlu0 %v8253, 32
      %v8333 = vpop.permute.xlu0 %8332
      %8334 = vrot.lane.b32.xlu0 %v8254, 32
      %v8335 = vpop.permute.xlu0 %8334
      %8336 = vrot.lane.b32.xlu0 %v8255, 32
      %v8337 = vpop.permute.xlu0 %8336
      %8338 = vrot.lane.b32.xlu0 %v8256, 32
      %v8339 = vpop.permute.xlu0 %8338
      %8340 = vrot.lane.b32.xlu0 %v8257, 32
      %v8341 = vpop.permute.xlu0 %8340
      %8342 = vrot.lane.b32.xlu0 %v8258, 32
      %v8343 = vpop.permute.xlu0 %8342
      %8344 = vrot.lane.b32.xlu0 %v8259, 32
      %v8345 = vpop.permute.xlu0 %8344
      %8346 = vrot.lane.b32.xlu0 %v8260, 32
      %v8347 = vpop.permute.xlu0 %8346
      %8348 = vrot.lane.b32.xlu0 %v8261, 32
      %v8349 = vpop.permute.xlu0 %8348
      %8350 = vrot.lane.b32.xlu0 %v8262, 32
      %v8351 = vpop.permute.xlu0 %8350
      %8352 = vrot.lane.b32.xlu0 %v8263, 32
      %v8353 = vpop.permute.xlu0 %8352
      %8354 = vrot.lane.b32.xlu0 %v8264, 32
      %v8355 = vpop.permute.xlu0 %8354
      %8356 = vrot.lane.b32.xlu0 %v8265, 32
      %v8357 = vpop.permute.xlu0 %8356
      %8358 = vrot.lane.b32.xlu0 %v8266, 32
      %v8359 = vpop.permute.xlu0 %8358
      %8360 = vrot.lane.b32.xlu0 %v8267, 32
      %v8361 = vpop.permute.xlu0 %8360
      %8362 = vrot.lane.b32.xlu0 %v8268, 32
      %v8363 = vpop.permute.xlu0 %8362
      %8364 = vrot.lane.b32.xlu0 %v8269, 32
      %v8365 = vpop.permute.xlu0 %8364
      %v8398 = vmul.f32 %v7072, %v8303
      %v8399 = vmul.f32 %v7074, %v8305
      %v8400 = vmul.f32 %v7076, %v8307
      %v8401 = vmul.f32 %v7078, %v8309
      %v8402 = vmul.f32 %v7080, %v8311
      %v8403 = vmul.f32 %v7082, %v8313
      %v8404 = vmul.f32 %v7084, %v8315
      %v8405 = vmul.f32 %v7086, %v8317
      %v8406 = vmul.f32 %v7088, %v8319
      %v8407 = vmul.f32 %v7090, %v8321
      %v8408 = vmul.f32 %v7092, %v8323
      %v8409 = vmul.f32 %v7094, %v8325
      %v8410 = vmul.f32 %v7096, %v8327
      %v8411 = vmul.f32 %v7098, %v8329
      %v8412 = vmul.f32 %v7100, %v8331
      %v8413 = vmul.f32 %v7102, %v8333
      %v8414 = vmul.f32 %v7104, %v8335
      %v8415 = vmul.f32 %v7106, %v8337
      %v8416 = vmul.f32 %v7108, %v8339
      %v8417 = vmul.f32 %v7110, %v8341
      %v8418 = vmul.f32 %v7112, %v8343
      %v8419 = vmul.f32 %v7114, %v8345
      %v8420 = vmul.f32 %v7116, %v8347
      %v8421 = vmul.f32 %v7118, %v8349
      %v8422 = vmul.f32 %v7120, %v8351
      %v8423 = vmul.f32 %v7122, %v8353
      %v8424 = vmul.f32 %v7124, %v8355
      %v8425 = vmul.f32 %v7126, %v8357
      %v8426 = vmul.f32 %v7128, %v8359
      %v8427 = vmul.f32 %v7130, %v8361
      %v8428 = vmul.f32 %v7132, %v8363
      %v8429 = vmul.f32 %v7134, %v8365
      %8462 = vrot.lane.b32.xlu0 %v8398, 64
      %v8463 = vpop.permute.xlu0 %8462
      %8464 = vrot.lane.b32.xlu0 %v8399, 64
      %v8465 = vpop.permute.xlu0 %8464
      %8466 = vrot.lane.b32.xlu0 %v8400, 64
      %v8467 = vpop.permute.xlu0 %8466
      %8468 = vrot.lane.b32.xlu0 %v8401, 64
      %v8469 = vpop.permute.xlu0 %8468
      %8470 = vrot.lane.b32.xlu0 %v8402, 64
      %v8471 = vpop.permute.xlu0 %8470
      %8472 = vrot.lane.b32.xlu0 %v8403, 64
      %v8473 = vpop.permute.xlu0 %8472
      %8474 = vrot.lane.b32.xlu0 %v8404, 64
      %v8475 = vpop.permute.xlu0 %8474
      %8476 = vrot.lane.b32.xlu0 %v8405, 64
      %v8477 = vpop.permute.xlu0 %8476
      %8478 = vrot.lane.b32.xlu0 %v8406, 64
      %v8479 = vpop.permute.xlu0 %8478
      %8480 = vrot.lane.b32.xlu0 %v8407, 64
      %v8481 = vpop.permute.xlu0 %8480
      %8482 = vrot.lane.b32.xlu0 %v8408, 64
      %v8483 = vpop.permute.xlu0 %8482
      %8484 = vrot.lane.b32.xlu0 %v8409, 64
      %v8485 = vpop.permute.xlu0 %8484
      %8486 = vrot.lane.b32.xlu0 %v8410, 64
      %v8487 = vpop.permute.xlu0 %8486
      %8488 = vrot.lane.b32.xlu0 %v8411, 64
      %v8489 = vpop.permute.xlu0 %8488
      %8490 = vrot.lane.b32.xlu0 %v8412, 64
      %v8491 = vpop.permute.xlu0 %8490
      %8492 = vrot.lane.b32.xlu0 %v8413, 64
      %v8493 = vpop.permute.xlu0 %8492
      %8494 = vrot.lane.b32.xlu0 %v8414, 64
      %v8495 = vpop.permute.xlu0 %8494
      %8496 = vrot.lane.b32.xlu0 %v8415, 64
      %v8497 = vpop.permute.xlu0 %8496
      %8498 = vrot.lane.b32.xlu0 %v8416, 64
      %v8499 = vpop.permute.xlu0 %8498
      %8500 = vrot.lane.b32.xlu0 %v8417, 64
      %v8501 = vpop.permute.xlu0 %8500
      %8502 = vrot.lane.b32.xlu0 %v8418, 64
      %v8503 = vpop.permute.xlu0 %8502
      %8504 = vrot.lane.b32.xlu0 %v8419, 64
      %v8505 = vpop.permute.xlu0 %8504
      %8506 = vrot.lane.b32.xlu0 %v8420, 64
      %v8507 = vpop.permute.xlu0 %8506
      %8508 = vrot.lane.b32.xlu0 %v8421, 64
      %v8509 = vpop.permute.xlu0 %8508
      %8510 = vrot.lane.b32.xlu0 %v8422, 64
      %v8511 = vpop.permute.xlu0 %8510
      %8512 = vrot.lane.b32.xlu0 %v8423, 64
      %v8513 = vpop.permute.xlu0 %8512
      %8514 = vrot.lane.b32.xlu0 %v8424, 64
      %v8515 = vpop.permute.xlu0 %8514
      %8516 = vrot.lane.b32.xlu0 %v8425, 64
      %v8517 = vpop.permute.xlu0 %8516
      %8518 = vrot.lane.b32.xlu0 %v8426, 64
      %v8519 = vpop.permute.xlu0 %8518
      %8520 = vrot.lane.b32.xlu0 %v8427, 64
      %v8521 = vpop.permute.xlu0 %8520
      %8522 = vrot.lane.b32.xlu0 %v8428, 64
      %v8523 = vpop.permute.xlu0 %8522
      %8524 = vrot.lane.b32.xlu0 %v8429, 64
      %v8525 = vpop.permute.xlu0 %8524
      %v8558 = vsel %vm3702, %v8463, %v8206
      %v8559 = vsel %vm3702, %v8465, %v8207
      %v8560 = vsel %vm3702, %v8467, %v8208
      %v8561 = vsel %vm3702, %v8469, %v8209
      %v8562 = vsel %vm3702, %v8471, %v8210
      %v8563 = vsel %vm3702, %v8473, %v8211
      %v8564 = vsel %vm3702, %v8475, %v8212
      %v8565 = vsel %vm3702, %v8477, %v8213
      %v8566 = vsel %vm3702, %v8479, %v8214
      %v8567 = vsel %vm3702, %v8481, %v8215
      %v8568 = vsel %vm3702, %v8483, %v8216
      %v8569 = vsel %vm3702, %v8485, %v8217
      %v8570 = vsel %vm3702, %v8487, %v8218
      %v8571 = vsel %vm3702, %v8489, %v8219
      %v8572 = vsel %vm3702, %v8491, %v8220
      %v8573 = vsel %vm3702, %v8493, %v8221
      %v8574 = vsel %vm3702, %v8495, %v8222
      %v8575 = vsel %vm3702, %v8497, %v8223
      %v8576 = vsel %vm3702, %v8499, %v8224
      %v8577 = vsel %vm3702, %v8501, %v8225
      %v8578 = vsel %vm3702, %v8503, %v8226
      %v8579 = vsel %vm3702, %v8505, %v8227
      %v8580 = vsel %vm3702, %v8507, %v8228
      %v8581 = vsel %vm3702, %v8509, %v8229
      %v8582 = vsel %vm3702, %v8511, %v8230
      %v8583 = vsel %vm3702, %v8513, %v8231
      %v8584 = vsel %vm3702, %v8515, %v8232
      %v8585 = vsel %vm3702, %v8517, %v8233
      %v8586 = vsel %vm3702, %v8519, %v8234
      %v8587 = vsel %vm3702, %v8521, %v8235
      %v8588 = vsel %vm3702, %v8523, %v8236
      %v8589 = vsel %vm3702, %v8525, %v8237
      %vm8590 = vcmask 523264
      %8591 = vst.msk [vmem:[%s480] sm:$0xff] %vm8590, %v8558
      %8592 = vst.msk [vmem:[%s480 + $0x8] sm:$0xff] %vm8590, %v8559
      %8593 = vst.msk [vmem:[%s480 + $0x10] sm:$0xff] %vm8590, %v8560
      %8594 = vst.msk [vmem:[%s480 + $0x18] sm:$0xff] %vm8590, %v8561
      %8595 = vst.msk [vmem:[%s480 + $0x20] sm:$0xff] %vm8590, %v8562
      %8596 = vst.msk [vmem:[%s480 + $0x28] sm:$0xff] %vm8590, %v8563
      %8597 = vst.msk [vmem:[%s480 + $0x30] sm:$0xff] %vm8590, %v8564
      %8598 = vst.msk [vmem:[%s480 + $0x38] sm:$0xff] %vm8590, %v8565
      %8599 = vst.msk [vmem:[%s480 + $0x40] sm:$0xff] %vm8590, %v8566
      %8600 = vst.msk [vmem:[%s480 + $0x48] sm:$0xff] %vm8590, %v8567
      %8601 = vst.msk [vmem:[%s480 + $0x50] sm:$0xff] %vm8590, %v8568
      %8602 = vst.msk [vmem:[%s480 + $0x58] sm:$0xff] %vm8590, %v8569
      %8603 = vst.msk [vmem:[%s480 + $0x60] sm:$0xff] %vm8590, %v8570
      %8604 = vst.msk [vmem:[%s480 + $0x68] sm:$0xff] %vm8590, %v8571
      %8605 = vst.msk [vmem:[%s480 + $0x70] sm:$0xff] %vm8590, %v8572
      %8606 = vst.msk [vmem:[%s480 + $0x78] sm:$0xff] %vm8590, %v8573
      %8607 = vst.msk [vmem:[%s480 + $0x80] sm:$0xff] %vm8590, %v8574
      %8608 = vst.msk [vmem:[%s480 + $0x88] sm:$0xff] %vm8590, %v8575
      %8609 = vst.msk [vmem:[%s480 + $0x90] sm:$0xff] %vm8590, %v8576
      %8610 = vst.msk [vmem:[%s480 + $0x98] sm:$0xff] %vm8590, %v8577
      %8611 = vst.msk [vmem:[%s480 + $0xa0] sm:$0xff] %vm8590, %v8578
      %8612 = vst.msk [vmem:[%s480 + $0xa8] sm:$0xff] %vm8590, %v8579
      %8613 = vst.msk [vmem:[%s480 + $0xb0] sm:$0xff] %vm8590, %v8580
      %8614 = vst.msk [vmem:[%s480 + $0xb8] sm:$0xff] %vm8590, %v8581
      %8615 = vst.msk [vmem:[%s480 + $0xc0] sm:$0xff] %vm8590, %v8582
      %8616 = vst.msk [vmem:[%s480 + $0xc8] sm:$0xff] %vm8590, %v8583
      %8617 = vst.msk [vmem:[%s480 + $0xd0] sm:$0xff] %vm8590, %v8584
      %8618 = vst.msk [vmem:[%s480 + $0xd8] sm:$0xff] %vm8590, %v8585
      %8619 = vst.msk [vmem:[%s480 + $0xe0] sm:$0xff] %vm8590, %v8586
      %8620 = vst.msk [vmem:[%s480 + $0xe8] sm:$0xff] %vm8590, %v8587
      %8621 = vst.msk [vmem:[%s480 + $0xf0] sm:$0xff] %vm8590, %v8588
      %8622 = vst.msk [vmem:[%s480 + $0xf8] sm:$0xff] %vm8590, %v8589
      %p8623 = scmp.lt.s32.totalorder %s24, 1
      %s8624 = scalar_select %p8623, %s24, 1
      %s8625 = smul.addr %s8624, 32
      %s8626 = smul.addr %s8625, 8
      %s8627 = scalar_lea.vmem %s13, %s8626
      // Predicated region
      $region73: #{tpu_custom_call.1} parent=71 // pred_check
        %p8628 = pneg %p330
      $region74: #{tpu_custom_call.1} parent=71 // pred_check_branch
        %8630 = sbr.rel (%p8628) target = $region76
      $region75: #{tpu_custom_call.1} parent=71 // pred_region
        _
      $region76: #{tpu_custom_call.1} parent=71 // pred_fallthru
        _
    $region72: #{tpu_custom_call.1} parent=5 // pred_fallthru
      _
    %p8631 = scmp.le.s32.totalorder 2, %s19
    // Predicated region
    $region77: #{tpu_custom_call.1} parent=5 // pred_check
      %p8632 = pneg %p8631
    $region78: #{tpu_custom_call.1} parent=5 // pred_check_branch
      %8634 = sbr.rel (%p8632) target = $region80
    $region79: #{tpu_custom_call.1} parent=5 // pred_region
      %s8635 = ssub.s32 %s19, 2
      // Predicated region
      $region81: #{tpu_custom_call.1} parent=79 // pred_check
        %p8636 = pneg %p336
      $region82: #{tpu_custom_call.1} parent=79 // pred_check_branch
        %8638 = sbr.rel (%p8636) target = $region84
      $region83: #{tpu_custom_call.1} parent=79 // pred_region
        %p8639 = scmp.lt.s32.totalorder %s25, 1
        %s8640 = scalar_select %p8639, %s25, 1
        %s8641 = smul.addr %s8640, 32
        %s8642 = smul.addr %s8641, 8
        %s8643 = scalar_lea.vmem %s13, %s8642
      $region84: #{tpu_custom_call.1} parent=79 // pred_fallthru
        _
    $region80: #{tpu_custom_call.1} parent=5 // pred_fallthru
      _
  $region6: #{tpu_custom_call.1} parent=0 // loop_footer
    %s23 = sadd.s32 1, %s19
  $region7: #{tpu_custom_call.1} parent=0 // loop_footer_branch
    %18 = sbr.rel target = $region3
  $region8: #{tpu_custom_call.1} parent=0 // loop_exit
    _

</llo_original>
